<compile_context>
chip_gen: v7x
topology: tpu7x:2x2x1
jax: 0.10.0
libtpu: 0.0.40
codegen_flags: <defaults>
</compile_context>

<pallas_src>
import functools
import math

import jax
import jax.numpy as jnp
from jax.experimental import pallas as pl
from jax.experimental.pallas import tpu as pltpu

# ----------------------------- config (small) --------------------------------
BN_EPS = 1e-5
IN_CHANNELS = 3
BACKBONE_OUT_DIM = 32        # backbone.OUTPUT_DIM == dim_in
ASPP_OUTDIM = 32             # cfg.MODEL_ASPP_OUTDIM
PROJ_DIM = 16                # cfg.MODEL_PROJ_DIM
NUM_CLASSES = 5              # cfg.MODEL_NUM_CLASSES
MEM_SIZE = 8                 # cfg.MODEL_MEM_SIZE
ASPP_RATES = (6, 12, 18)

OUT_PAD = 128                        # packed lane-dense output width (seg|emb)
VMEM_LIMIT = 32 * 1024 * 1024        # explicit, safe on v5e / v6e / v7x


def _round_up(v, m):
    return ((v + m - 1) // m) * m


# ----------------------------- Pallas kernels --------------------------------
def _matmul_affine_kernel(x_ref, w_ref, s_ref, b_ref, o_ref, *, apply_relu):
    """o = relu?((x @ w) * s + b)  -- bf16 operands, f32 accumulate/epilogue."""
    acc = jnp.dot(x_ref[...], w_ref[...], preferred_element_type=jnp.float32)
    y = acc * s_ref[...] + b_ref[...]
    if apply_relu:
        y = jnp.maximum(y, 0.0)
    o_ref[...] = y.astype(o_ref.dtype)


def matmul_affine(x, w, scale, bias, *, relu, tm_cap=512):
    """x:(M,K), w:(K,Cout), scale/bias:(Cout,) -> (M,Cout) f32.

    Fixed row tile (bounded by tm_cap, never the whole M), Cout padded to a
    multiple of 128 so output stores are unmasked full-lane stores; padding is
    sliced off before returning.  Sweep tm_cap (512..2048) on real shapes;
    keep it lower on v7x (64 MiB physical VMEM).
    """
    M, K = x.shape
    Cout = w.shape[1]
    tm = tm_cap if M >= tm_cap else _round_up(M, 16)
    Mp = _round_up(M, tm)
    Cp = _round_up(Cout, 128)

    xb = x.astype(jnp.bfloat16)
    if Mp != M:
        xb = jnp.pad(xb, ((0, Mp - M), (0, 0)))
    wb = jnp.pad(w.astype(jnp.bfloat16), ((0, 0), (0, Cp - Cout)))
    sb = jnp.pad(scale.reshape(1, Cout).astype(jnp.float32),
                 ((0, 0), (0, Cp - Cout)))
    bb = jnp.pad(bias.reshape(1, Cout).astype(jnp.float32),
                 ((0, 0), (0, Cp - Cout)))

    out = pl.pallas_call(
        functools.partial(_matmul_affine_kernel, apply_relu=relu),
        out_shape=jax.ShapeDtypeStruct((Mp, Cp), jnp.float32),
        grid_spec=pltpu.PrefetchScalarGridSpec(
            num_scalar_prefetch=0,
            grid=(Mp // tm,),
            in_specs=[
                pl.BlockSpec((tm, K), lambda i: (i, 0)),
                pl.BlockSpec((K, Cp), lambda i: (0, 0)),
                pl.BlockSpec((1, Cp), lambda i: (0, 0)),
                pl.BlockSpec((1, Cp), lambda i: (0, 0)),
            ],
            out_specs=pl.BlockSpec((tm, Cp), lambda i: (i, 0)),
        ),
        compiler_params=pltpu.CompilerParams(
            dimension_semantics=("parallel",),
            vmem_limit_bytes=VMEM_LIMIT),
    )(xb, wb, sb, bb)
    return out[:M, :Cout]


def _head_kernel(xpad_ref, glob_ref,
                 w_b1_ref, s_b1_ref, b_b1_ref,
                 w_dil_ref, s_dil_ref, b_dil_ref,
                 w_cat_ref, s_cat_ref, b_cat_ref,
                 w_cls_ref, b_cls_ref,
                 w_p1_ref, s_p1_ref, b_p1_ref,
                 w_p2_ref, b_p2_ref,
                 out_ref, *, H, W, C, dmax, rates):
    """Fused ASPP + cat 1x1 + cls_conv + proj_head + L2-norm for ONE image.

    The dilated 3x3 convs are 9 shifted (HW,C)@(C,D) matmuls over the padded
    image resident in VMEM (no HBM im2col).  The global-branch contribution to
    the cat conv arrives pre-computed per image in glob_ref.  seg and the
    normalized embedding land in disjoint lane ranges of one 128-wide output.
    """
    HW = H * W
    D = w_b1_ref.shape[1]

    def tap(oy, ox):
        xs = xpad_ref[0, oy:oy + H, ox:ox + W, :].astype(jnp.float32)
        return xs.reshape(HW, C).astype(jnp.bfloat16)

    x_c = tap(dmax, dmax)                                 # center (HW, C)

    # ---- ASPP branch 0: 1x1 conv + BN + ReLU --------------------------------
    b1 = jnp.dot(x_c, w_b1_ref[...], preferred_element_type=jnp.float32)
    b1 = jnp.maximum(b1 * s_b1_ref[...] + b_b1_ref[...], 0.0)

    # accumulate the concat-conv pre-activation branch by branch (no HBM concat)
    pre = jnp.dot(b1.astype(jnp.bfloat16), w_cat_ref[0],
                  preferred_element_type=jnp.float32)
    pre = pre + glob_ref[0]                               # global branch term

    # ---- ASPP dilated 3x3 branches ------------------------------------------
    for r_idx, d in enumerate(rates):
        acc = None
        for k in range(9):
            ky, kx = k // 3, k % 3
            oy = dmax + (ky - 1) * d
            ox = dmax + (kx - 1) * d
            t = jnp.dot(tap(oy, ox), w_dil_ref[r_idx * 9 + k],
                        preferred_element_type=jnp.float32)
            acc = t if acc is None else acc + t
        br = jnp.maximum(acc * s_dil_ref[r_idx] + b_dil_ref[r_idx], 0.0)
        pre = pre + jnp.dot(br.astype(jnp.bfloat16), w_cat_ref[r_idx + 1],
                            preferred_element_type=jnp.float32)

    feat = jnp.maximum(pre * s_cat_ref[...] + b_cat_ref[...], 0.0)

    # ---- cls_conv: result occupies lanes [0, NUM_CLASSES) -------------------
    seg = jnp.dot(feat.astype(jnp.bfloat16), w_cls_ref[...],
                  preferred_element_type=jnp.float32) + b_cls_ref[...]

    # ---- proj_head + L2 normalize: lanes [NUM_CLASSES, NUM_CLASSES+PROJ_DIM)
    h = jnp.dot(x_c, w_p1_ref[...], preferred_element_type=jnp.float32)
    h = jnp.maximum(h * s_p1_ref[...] + b_p1_ref[...], 0.0)
    emb = jnp.dot(h.astype(jnp.bfloat16), w_p2_ref[...],
                  preferred_element_type=jnp.float32) + b_p2_ref[...]
    nrm = jnp.sqrt(jnp.sum(emb * emb, axis=1, keepdims=True))
    emb = emb / jnp.maximum(nrm, 1e-12)

    # disjoint lane ranges -> the add is a pack; single dense 128-lane store.
    out_ref[0] = seg + emb


def head_forward(hp, x_bottom):
    """x_bottom: (N, H, W, C) f32 -> packed (N, H*W, OUT_PAD) f32."""
    N, H, W, C = x_bottom.shape
    D = ASPP_OUTDIM
    dmax = max(ASPP_RATES)
    Hp, Wp = H + 2 * dmax, W + 2 * dmax
    HW = H * W

    # Global ASPP branch in plain jnp (a (N,C)@(C,D) matmul is pure launch
    # overhead as its own kernel); folded into the fused kernel as the
    # per-image pre-activation contribution  relu(BN(gap@Wg)) @ Wcat[glob].
    gap = jnp.mean(x_bottom, axis=(1, 2))                          # (N, C)
    g = jnp.maximum(gap @ hp["w_glob"] * hp["s_glob"] + hp["b_glob"], 0.0)
    glob_pre = (g @ hp["w_cat_glob"]).reshape(N, 1, D).astype(jnp.float32)

    # zero-pad once by the largest rate; taps of smaller rates read the same
    # zeros PyTorch's per-conv padding would produce.
    xpad = jnp.pad(x_bottom, ((0, 0), (dmax, dmax), (dmax, dmax), (0, 0)))
    xpad = xpad.astype(jnp.bfloat16)

    kern = functools.partial(_head_kernel, H=H, W=W, C=C, dmax=dmax,
                             rates=ASPP_RATES)

    def full(shape):
        return pl.BlockSpec(shape, lambda n: (0,) * len(shape))

    out = pl.pallas_call(
        kern,
        out_shape=jax.ShapeDtypeStruct((N, HW, OUT_PAD), jnp.float32),
        grid_spec=pltpu.PrefetchScalarGridSpec(
            num_scalar_prefetch=0,
            grid=(N,),                       # one image per grid step
            in_specs=[
                pl.BlockSpec((1, Hp, Wp, C), lambda n: (n, 0, 0, 0)),
                pl.BlockSpec((1, 1, D), lambda n: (n, 0, 0)),
                full((C, D)), full((1, D)), full((1, D)),          # aspp b1
                full((27, C, D)), full((3, 1, D)), full((3, 1, D)),  # dilated
                full((4, D, D)), full((1, D)), full((1, D)),       # cat conv
                full((D, OUT_PAD)), full((1, OUT_PAD)),            # cls (packed)
                full((C, C)), full((1, C)), full((1, C)),          # proj1
                full((C, OUT_PAD)), full((1, OUT_PAD)),            # proj2 (packed)
            ],
            out_specs=pl.BlockSpec((1, HW, OUT_PAD), lambda n: (n, 0, 0)),
        ),
        compiler_params=pltpu.CompilerParams(
            dimension_semantics=("parallel",),   # megacore over the batch
            vmem_limit_bytes=VMEM_LIMIT),
    )(xpad, glob_pre,
      hp["w_b1"], hp["s_b1"], hp["b_b1"],
      hp["w_dil"], hp["s_dil"], hp["b_dil"],
      hp["w_cat"], hp["s_cat"], hp["b_cat"],
      hp["w_cls"], hp["b_cls"],
      hp["w_p1"], hp["s_p1"], hp["b_p1"],
      hp["w_p2"], hp["b_p2"])
    return out


# ------------------------------ glue helpers ---------------------------------
def im2col_3x3_stride2_pad1(x_nhwc):
    """3x3, stride 2, pad 1 patches -> (N, Ho, Wo, 9*C) (raw image, tiny)."""
    N, H, W, C = x_nhwc.shape
    Ho = (H + 2 - 3) // 2 + 1
    Wo = (W + 2 - 3) // 2 + 1
    xp = jnp.pad(x_nhwc, ((0, 0), (1, 1), (1, 1), (0, 0)))
    patches = []
    for ky in range(3):
        for kx in range(3):
            patches.append(xp[:, ky:ky + 2 * Ho - 1:2, kx:kx + 2 * Wo - 1:2, :])
    return jnp.concatenate(patches, axis=-1)


def kaiming_conv_params(key, cin, cout, kh=1, kw=1):
    """nn.init.kaiming_normal_(mode='fan_out', relu) weight + default bias."""
    wkey, bkey = jax.random.split(key)
    fan_out = cout * kh * kw
    std = math.sqrt(2.0 / fan_out)
    w = std * jax.random.normal(wkey, (kh, kw, cin, cout), dtype=jnp.float32)
    fan_in = cin * kh * kw
    bound = 1.0 / math.sqrt(fan_in)
    b = jax.random.uniform(bkey, (cout,), minval=-bound, maxval=bound,
                           dtype=jnp.float32)
    return w, b


def fold_bn(conv_bias, cout):
    """Fold conv bias + eval-mode BN (mean=0, var=1, gamma=1, beta=0)."""
    # TODO(synk): recompute from real running stats when available.
    s = jnp.full((cout,), 1.0 / math.sqrt(1.0 + BN_EPS), dtype=jnp.float32)
    return s, conv_bias * s


def _l2n(x, axis):
    n = jnp.sqrt(jnp.sum(x * x, axis=axis, keepdims=True))
    return x / jnp.maximum(n, 1e-12)


# ------------------------------ parameter init -------------------------------
def init_params(seed=0):
    assert NUM_CLASSES + PROJ_DIM <= OUT_PAD
    key = jax.random.PRNGKey(seed)
    ks = iter(jax.random.split(key, 32))
    C, D, P, NC = BACKBONE_OUT_DIM, ASPP_OUTDIM, PROJ_DIM, NUM_CLASSES
    p = {}

    # backbone stub: 3x3 stride-2 conv + BN + ReLU
    w, b = kaiming_conv_params(next(ks), IN_CHANNELS, C, 3, 3)
    s, bb = fold_bn(b, C)
    p["backbone"] = dict(w=w.reshape(-1, C), scale=s, bias=bb)

    head = {}
    # ASPP branch 1 (1x1 conv + BN + ReLU)
    w, b = kaiming_conv_params(next(ks), C, D, 1, 1)
    s, bb = fold_bn(b, D)
    head["w_b1"] = w.reshape(C, D).astype(jnp.bfloat16)
    head["s_b1"] = s.reshape(1, D)
    head["b_b1"] = bb.reshape(1, D)

    # ASPP dilated branches (3x3 dilated conv + BN + ReLU), packed per tap
    w_dil, s_dil, b_dil = [], [], []
    for rate in ASPP_RATES:
        w, b = kaiming_conv_params(next(ks), C, D, 3, 3)   # (3,3,C,D)
        s, bb = fold_bn(b, D)
        w_dil.append(w.reshape(9, C, D))
        s_dil.append(s.reshape(1, D))
        b_dil.append(bb.reshape(1, D))
    head["w_dil"] = jnp.concatenate(w_dil, axis=0).astype(jnp.bfloat16)  # (27,C,D)
    head["s_dil"] = jnp.stack(s_dil, axis=0)                             # (3,1,D)
    head["b_dil"] = jnp.stack(b_dil, axis=0)

    # ASPP global branch (computed in plain jnp, folded into the cat conv)
    w, b = kaiming_conv_params(next(ks), C, D, 1, 1)
    s, bb = fold_bn(b, D)
    head["w_glob"] = w.reshape(C, D)
    head["s_glob"] = s.reshape(1, D)
    head["b_glob"] = bb.reshape(1, D)

    # ASPP concat fuse (1x1 conv + BN + ReLU); split per input branch
    w, b = kaiming_conv_params(next(ks), 5 * D, D, 1, 1)
    s, bb = fold_bn(b, D)
    w = w.reshape(5, D, D)           # input order: [b1, r6, r12, r18, glob]
    head["w_cat"] = w[:4].astype(jnp.bfloat16)
    head["w_cat_glob"] = w[4]
    head["s_cat"] = s.reshape(1, D)
    head["b_cat"] = bb.reshape(1, D)

    # cls_conv (1x1, no BN/ReLU), packed into output lanes [0, NC)
    w, b = kaiming_conv_params(next(ks), D, NC, 1, 1)
    w_cls = jnp.zeros((D, OUT_PAD), jnp.float32).at[:, :NC].set(w.reshape(D, NC))
    b_cls = jnp.zeros((1, OUT_PAD), jnp.float32).at[:, :NC].set(b.reshape(1, NC))
    head["w_cls"] = w_cls.astype(jnp.bfloat16)
    head["b_cls"] = b_cls

    # proj_head: conv1x1 + BN + ReLU + conv1x1; proj2 packed into lanes [NC, NC+P)
    w, b = kaiming_conv_params(next(ks), C, C, 1, 1)
    s, bb = fold_bn(b, C)
    head["w_p1"] = w.reshape(C, C).astype(jnp.bfloat16)
    head["s_p1"] = s.reshape(1, C)
    head["b_p1"] = bb.reshape(1, C)
    w, b = kaiming_conv_params(next(ks), C, P, 1, 1)
    w_p2 = jnp.zeros((C, OUT_PAD), jnp.float32).at[:, NC:NC + P].set(w.reshape(C, P))
    b_p2 = jnp.zeros((1, OUT_PAD), jnp.float32).at[:, NC:NC + P].set(b.reshape(1, P))
    head["w_p2"] = w_p2.astype(jnp.bfloat16)
    head["b_p2"] = b_p2
    p["head"] = head

    # memory buffers (registered but unused in forward) — L2-normalized randn
    sq = jax.random.normal(next(ks), (NC, MEM_SIZE, P), dtype=jnp.float32)
    pq = jax.random.normal(next(ks), (NC, MEM_SIZE, P), dtype=jnp.float32)
    p["segment_queue"] = _l2n(sq, axis=2)
    p["pixel_queue"] = _l2n(pq, axis=2)
    p["segment_queue_ptr"] = jnp.zeros((NC,), jnp.int32)
    p["pixel_queue_ptr"] = jnp.zeros((NC,), jnp.int32)
    return p


# -------------------------------- forward ------------------------------------
def forward(params, x_nchw):
    """Returns {'embed','seg','key'} in NCHW, matching the PyTorch module."""
    x = jnp.transpose(x_nchw.astype(jnp.float32), (0, 2, 3, 1))    # NHWC

    # ----- backbone stub: x_bottom = ReLU(BN(conv3x3_s2(x))) -----
    pat = im2col_3x3_stride2_pad1(x)                               # (N,Ho,Wo,27)
    N, Ho, Wo, K = pat.shape
    M = N * Ho * Wo
    xb = matmul_affine(pat.reshape(M, K), params["backbone"]["w"],
                       params["backbone"]["scale"], params["backbone"]["bias"],
                       relu=True)[:, :BACKBONE_OUT_DIM]
    x_bottom = xb.reshape(N, Ho, Wo, BACKBONE_OUT_DIM)

    # ----- fused ASPP + cls_conv + proj_head + L2-norm -----
    out = head_forward(params["head"], x_bottom)                   # (N,Ho*Wo,128)
    seg = out[:, :, :NUM_CLASSES].reshape(N, Ho, Wo, NUM_CLASSES)
    emb = out[:, :, NUM_CLASSES:NUM_CLASSES + PROJ_DIM].reshape(N, Ho, Wo, PROJ_DIM)
    seg = jnp.transpose(seg, (0, 3, 1, 2))
    embedding = jnp.transpose(emb, (0, 3, 1, 2))

    return {"embed": embedding,
            "seg": seg,
            "key": jax.lax.stop_gradient(embedding)}


# --------------------------------- driver -------------------------------------
if __name__ == "__main__":
    params = init_params(seed=0)
    x = jax.random.normal(jax.random.PRNGKey(0), (2, IN_CHANNELS, 16, 16),
                          dtype=jnp.float32)  # NCHW, as in PyTorch
    out = jax.jit(forward)(params, x)
    jax.block_until_ready(out)
    assert out["embed"].shape == (2, PROJ_DIM, 8, 8)
    assert out["seg"].shape == (2, NUM_CLASSES, 8, 8)
    assert out["key"].shape == (2, PROJ_DIM, 8, 8)
    # embeddings must be unit-norm along the channel dim (F.normalize semantics)
    nrm = jnp.sqrt(jnp.sum(out["embed"].astype(jnp.float32) ** 2, axis=1))
    assert bool(jnp.all(jnp.abs(nrm - 1.0) < 1e-2))
    print("KERNEL_OK")
</pallas_src>

<mosaic_0001>
module attributes {stable_mosaic.version = 11 : i64} {
  func.func @_matmul_affine_kernel(%arg0: i32, %arg1: memref<128x27xbf16, #tpu.memory_space<vmem>>, %arg2: memref<27x128xbf16, #tpu.memory_space<vmem>>, %arg3: memref<1x128xf32, #tpu.memory_space<vmem>>, %arg4: memref<1x128xf32, #tpu.memory_space<vmem>>, %arg5: memref<128x128xf32, #tpu.memory_space<vmem>>) attributes {dimension_semantics = [#tpu.dimension_semantics<parallel>], iteration_bounds = array<i64: 1>, scalar_prefetch = 0 : i64, scratch_operands = 0 : i64, tpu.core_type = #tpu.core_type<tc>, window_params = [{transform_indices = @transform_0, window_bounds = array<i64: 128, 27>}, {pipeline_mode = #tpu.pipeline_mode<synchronous>, transform_indices = @transform_1, window_bounds = array<i64: 27, 128>}, {pipeline_mode = #tpu.pipeline_mode<synchronous>, transform_indices = @transform_2, window_bounds = array<i64: 1, 128>}, {pipeline_mode = #tpu.pipeline_mode<synchronous>, transform_indices = @transform_3, window_bounds = array<i64: 1, 128>}, {transform_indices = @transform_4, window_bounds = array<i64: 128, 128>}]} {
    %c0 = arith.constant 0 : index
    %c0_0 = arith.constant 0 : index
    %0 = vector.load %arg1[%c0, %c0_0] : memref<128x27xbf16, #tpu.memory_space<vmem>>, vector<128x27xbf16>
    %c0_1 = arith.constant 0 : index
    %c0_2 = arith.constant 0 : index
    %1 = vector.load %arg2[%c0_1, %c0_2] : memref<27x128xbf16, #tpu.memory_space<vmem>>, vector<27x128xbf16>
    %cst = arith.constant dense<0.000000e+00> : vector<128x128xf32>
    %2 = tpu.matmul %0, %1, %cst {dimension_numbers = #tpu.dot_dimension_numbers<[1], [0], [0], [1], [0, 0, 1, 1], [], []>} : vector<128x27xbf16>, vector<27x128xbf16>, vector<128x128xf32> -> vector<128x128xf32>
    %c0_3 = arith.constant 0 : index
    %c0_4 = arith.constant 0 : index
    %3 = vector.load %arg3[%c0_3, %c0_4] : memref<1x128xf32, #tpu.memory_space<vmem>>, vector<1x128xf32>
    %4 = vector.broadcast %3 : vector<1x128xf32> to vector<128x128xf32>
    %5 = arith.mulf %2, %4 : vector<128x128xf32>
    %c0_5 = arith.constant 0 : index
    %c0_6 = arith.constant 0 : index
    %6 = vector.load %arg4[%c0_5, %c0_6] : memref<1x128xf32, #tpu.memory_space<vmem>>, vector<1x128xf32>
    %7 = vector.broadcast %6 : vector<1x128xf32> to vector<128x128xf32>
    %8 = arith.addf %5, %7 : vector<128x128xf32>
    %cst_7 = arith.constant 0.000000e+00 : f32
    %9 = vector.broadcast %cst_7 : f32 to vector<128x128xf32>
    %10 = arith.maximumf %8, %9 : vector<128x128xf32>
    %c0_8 = arith.constant 0 : index
    %c0_9 = arith.constant 0 : index
    %11 = vector.load %arg5[%c0_8, %c0_9] : memref<128x128xf32, #tpu.memory_space<vmem>>, vector<128x128xf32>
    tpu.vector_store %arg5[%c0_8, %c0_9], %10 {strides = array<i32>} : memref<128x128xf32, #tpu.memory_space<vmem>>, vector<128x128xf32>,
    return
  }
  func.func @transform_0(%arg0: i32) -> (i32, i32) {
    %c0_i32 = arith.constant 0 : i32
    %c0_i32_0 = arith.constant 0 : i32
    return %arg0, %c0_i32 : i32, i32
  }
  func.func @transform_1(%arg0: i32) -> (i32, i32) {
    %c0_i32 = arith.constant 0 : i32
    %c0_i32_0 = arith.constant 0 : i32
    %c0_i32_1 = arith.constant 0 : i32
    return %c0_i32, %c0_i32_0 : i32, i32
  }
  func.func @transform_2(%arg0: i32) -> (i32, i32) {
    %c0_i32 = arith.constant 0 : i32
    %c0_i32_0 = arith.constant 0 : i32
    %c0_i32_1 = arith.constant 0 : i32
    return %c0_i32, %c0_i32_0 : i32, i32
  }
  func.func @transform_3(%arg0: i32) -> (i32, i32) {
    %c0_i32 = arith.constant 0 : i32
    %c0_i32_0 = arith.constant 0 : i32
    %c0_i32_1 = arith.constant 0 : i32
    return %c0_i32, %c0_i32_0 : i32, i32
  }
  func.func @transform_4(%arg0: i32) -> (i32, i32) {
    %c0_i32 = arith.constant 0 : i32
    %c0_i32_0 = arith.constant 0 : i32
    return %arg0, %c0_i32 : i32, i32
  }
}

module attributes {stable_mosaic.version = 11 : i64} {
  func.func @_head_kernel(%arg0: i32, %arg1: memref<1x44x44x32xbf16, #tpu.memory_space<vmem>>, %arg2: memref<1x1x32xf32, #tpu.memory_space<vmem>>, %arg3: memref<32x32xbf16, #tpu.memory_space<vmem>>, %arg4: memref<1x32xf32, #tpu.memory_space<vmem>>, %arg5: memref<1x32xf32, #tpu.memory_space<vmem>>, %arg6: memref<27x32x32xbf16, #tpu.memory_space<vmem>>, %arg7: memref<3x1x32xf32, #tpu.memory_space<vmem>>, %arg8: memref<3x1x32xf32, #tpu.memory_space<vmem>>, %arg9: memref<4x32x32xbf16, #tpu.memory_space<vmem>>, %arg10: memref<1x32xf32, #tpu.memory_space<vmem>>, %arg11: memref<1x32xf32, #tpu.memory_space<vmem>>, %arg12: memref<32x128xbf16, #tpu.memory_space<vmem>>, %arg13: memref<1x128xf32, #tpu.memory_space<vmem>>, %arg14: memref<32x32xbf16, #tpu.memory_space<vmem>>, %arg15: memref<1x32xf32, #tpu.memory_space<vmem>>, %arg16: memref<1x32xf32, #tpu.memory_space<vmem>>, %arg17: memref<32x128xbf16, #tpu.memory_space<vmem>>, %arg18: memref<1x128xf32, #tpu.memory_space<vmem>>, %arg19: memref<1x64x128xf32, #tpu.memory_space<vmem>>) attributes {dimension_semantics = [#tpu.dimension_semantics<parallel>], iteration_bounds = array<i64: 2>, scalar_prefetch = 0 : i64, scratch_operands = 0 : i64, tpu.core_type = #tpu.core_type<tc>, window_params = [{transform_indices = @transform_0, window_bounds = array<i64: 1, 44, 44, 32>}, {transform_indices = @transform_1, window_bounds = array<i64: 1, 1, 32>}, {pipeline_mode = #tpu.pipeline_mode<synchronous>, transform_indices = @transform_2, window_bounds = array<i64: 32, 32>}, {pipeline_mode = #tpu.pipeline_mode<synchronous>, transform_indices = @transform_3, window_bounds = array<i64: 1, 32>}, {pipeline_mode = #tpu.pipeline_mode<synchronous>, transform_indices = @transform_4, window_bounds = array<i64: 1, 32>}, {pipeline_mode = #tpu.pipeline_mode<synchronous>, transform_indices = @transform_5, window_bounds = array<i64: 27, 32, 32>}, {pipeline_mode = #tpu.pipeline_mode<synchronous>, transform_indices = @transform_6, window_bounds = array<i64: 3, 1, 32>}, {pipeline_mode = #tpu.pipeline_mode<synchronous>, transform_indices = @transform_7, window_bounds = array<i64: 3, 1, 32>}, {pipeline_mode = #tpu.pipeline_mode<synchronous>, transform_indices = @transform_8, window_bounds = array<i64: 4, 32, 32>}, {pipeline_mode = #tpu.pipeline_mode<synchronous>, transform_indices = @transform_9, window_bounds = array<i64: 1, 32>}, {pipeline_mode = #tpu.pipeline_mode<synchronous>, transform_indices = @transform_10, window_bounds = array<i64: 1, 32>}, {pipeline_mode = #tpu.pipeline_mode<synchronous>, transform_indices = @transform_11, window_bounds = array<i64: 32, 128>}, {pipeline_mode = #tpu.pipeline_mode<synchronous>, transform_indices = @transform_12, window_bounds = array<i64: 1, 128>}, {pipeline_mode = #tpu.pipeline_mode<synchronous>, transform_indices = @transform_13, window_bounds = array<i64: 32, 32>}, {pipeline_mode = #tpu.pipeline_mode<synchronous>, transform_indices = @transform_14, window_bounds = array<i64: 1, 32>}, {pipeline_mode = #tpu.pipeline_mode<synchronous>, transform_indices = @transform_15, window_bounds = array<i64: 1, 32>}, {pipeline_mode = #tpu.pipeline_mode<synchronous>, transform_indices = @transform_16, window_bounds = array<i64: 32, 128>}, {pipeline_mode = #tpu.pipeline_mode<synchronous>, transform_indices = @transform_17, window_bounds = array<i64: 1, 128>}, {transform_indices = @transform_18, window_bounds = array<i64: 1, 64, 128>}]} {
    %c0 = arith.constant 0 : index
    %c18 = arith.constant 18 : index
    %c18_0 = arith.constant 18 : index
    %c0_1 = arith.constant 0 : index
    %0 = vector.load %arg1[%c0, %c18, %c18_0, %c0_1] : memref<1x44x44x32xbf16, #tpu.memory_space<vmem>>, vector<1x8x8x32xbf16>
    %1 = vector.shape_cast %0 : vector<1x8x8x32xbf16> to vector<8x8x32xbf16>
    %2 = arith.extf %1 : vector<8x8x32xbf16> to vector<8x8x32xf32>
    %3 = vector.shape_cast %2 : vector<8x8x32xf32> to vector<64x32xf32>
    %4 = arith.truncf %3 : vector<64x32xf32> to vector<64x32xbf16>
    %c0_2 = arith.constant 0 : index
    %c0_3 = arith.constant 0 : index
    %5 = vector.load %arg3[%c0_2, %c0_3] : memref<32x32xbf16, #tpu.memory_space<vmem>>, vector<32x32xbf16>
    %cst = arith.constant dense<0.000000e+00> : vector<64x32xf32>
    %6 = tpu.matmul %4, %5, %cst {dimension_numbers = #tpu.dot_dimension_numbers<[1], [0], [0], [1], [0, 0, 1, 1], [], []>} : vector<64x32xbf16>, vector<32x32xbf16>, vector<64x32xf32> -> vector<64x32xf32>
    %c0_4 = arith.constant 0 : index
    %c0_5 = arith.constant 0 : index
    %7 = vector.load %arg4[%c0_4, %c0_5] : memref<1x32xf32, #tpu.memory_space<vmem>>, vector<1x32xf32>
    %8 = vector.broadcast %7 : vector<1x32xf32> to vector<64x32xf32>
    %9 = arith.mulf %6, %8 : vector<64x32xf32>
    %c0_6 = arith.constant 0 : index
    %c0_7 = arith.constant 0 : index
    %10 = vector.load %arg5[%c0_6, %c0_7] : memref<1x32xf32, #tpu.memory_space<vmem>>, vector<1x32xf32>
    %11 = vector.broadcast %10 : vector<1x32xf32> to vector<64x32xf32>
    %12 = arith.addf %9, %11 : vector<64x32xf32>
    %cst_8 = arith.constant 0.000000e+00 : f32
    %13 = vector.broadcast %cst_8 : f32 to vector<64x32xf32>
    %14 = arith.maximumf %12, %13 : vector<64x32xf32>
    %15 = arith.truncf %14 : vector<64x32xf32> to vector<64x32xbf16>
    %c0_9 = arith.constant 0 : index
    %c0_10 = arith.constant 0 : index
    %c0_11 = arith.constant 0 : index
    %16 = vector.load %arg9[%c0_9, %c0_10, %c0_11] : memref<4x32x32xbf16, #tpu.memory_space<vmem>>, vector<1x32x32xbf16>
    %17 = vector.shape_cast %16 : vector<1x32x32xbf16> to vector<32x32xbf16>
    %cst_12 = arith.constant dense<0.000000e+00> : vector<64x32xf32>
    %18 = tpu.matmul %15, %17, %cst_12 {dimension_numbers = #tpu.dot_dimension_numbers<[1], [0], [0], [1], [0, 0, 1, 1], [], []>} : vector<64x32xbf16>, vector<32x32xbf16>, vector<64x32xf32> -> vector<64x32xf32>
    %c0_13 = arith.constant 0 : index
    %c0_14 = arith.constant 0 : index
    %c0_15 = arith.constant 0 : index
    %19 = vector.load %arg2[%c0_13, %c0_14, %c0_15] : memref<1x1x32xf32, #tpu.memory_space<vmem>>, vector<1x1x32xf32>
    %20 = vector.shape_cast %19 : vector<1x1x32xf32> to vector<1x32xf32>
    %21 = vector.broadcast %20 : vector<1x32xf32> to vector<64x32xf32>
    %22 = arith.addf %18, %21 : vector<64x32xf32>
    %c0_16 = arith.constant 0 : index
    %c12 = arith.constant 12 : index
    %c12_17 = arith.constant 12 : index
    %c0_18 = arith.constant 0 : index
    %23 = vector.load %arg1[%c0_16, %c12, %c12_17, %c0_18] : memref<1x44x44x32xbf16, #tpu.memory_space<vmem>>, vector<1x8x8x32xbf16>
    %24 = vector.shape_cast %23 : vector<1x8x8x32xbf16> to vector<8x8x32xbf16>
    %25 = arith.extf %24 : vector<8x8x32xbf16> to vector<8x8x32xf32>
    %26 = vector.shape_cast %25 : vector<8x8x32xf32> to vector<64x32xf32>
    %27 = arith.truncf %26 : vector<64x32xf32> to vector<64x32xbf16>
    %c0_19 = arith.constant 0 : index
    %c0_20 = arith.constant 0 : index
    %c0_21 = arith.constant 0 : index
    %28 = vector.load %arg6[%c0_19, %c0_20, %c0_21] : memref<27x32x32xbf16, #tpu.memory_space<vmem>>, vector<1x32x32xbf16>
    %29 = vector.shape_cast %28 : vector<1x32x32xbf16> to vector<32x32xbf16>
    %cst_22 = arith.constant dense<0.000000e+00> : vector<64x32xf32>
    %30 = tpu.matmul %27, %29, %cst_22 {dimension_numbers = #tpu.dot_dimension_numbers<[1], [0], [0], [1], [0, 0, 1, 1], [], []>} : vector<64x32xbf16>, vector<32x32xbf16>, vector<64x32xf32> -> vector<64x32xf32>
    %c0_23 = arith.constant 0 : index
    %c12_24 = arith.constant 12 : index
    %c18_25 = arith.constant 18 : index
    %c0_26 = arith.constant 0 : index
    %31 = vector.load %arg1[%c0_23, %c12_24, %c18_25, %c0_26] : memref<1x44x44x32xbf16, #tpu.memory_space<vmem>>, vector<1x8x8x32xbf16>
    %32 = vector.shape_cast %31 : vector<1x8x8x32xbf16> to vector<8x8x32xbf16>
    %33 = arith.extf %32 : vector<8x8x32xbf16> to vector<8x8x32xf32>
    %34 = vector.shape_cast %33 : vector<8x8x32xf32> to vector<64x32xf32>
    %35 = arith.truncf %34 : vector<64x32xf32> to vector<64x32xbf16>
    %c1 = arith.constant 1 : index
    %c0_27 = arith.constant 0 : index
    %c0_28 = arith.constant 0 : index
    %36 = vector.load %arg6[%c1, %c0_27, %c0_28] : memref<27x32x32xbf16, #tpu.memory_space<vmem>>, vector<1x32x32xbf16>
    %37 = vector.shape_cast %36 : vector<1x32x32xbf16> to vector<32x32xbf16>
    %cst_29 = arith.constant dense<0.000000e+00> : vector<64x32xf32>
    %38 = tpu.matmul %35, %37, %cst_29 {dimension_numbers = #tpu.dot_dimension_numbers<[1], [0], [0], [1], [0, 0, 1, 1], [], []>} : vector<64x32xbf16>, vector<32x32xbf16>, vector<64x32xf32> -> vector<64x32xf32>
    %39 = arith.addf %30, %38 : vector<64x32xf32>
    %c0_30 = arith.constant 0 : index
    %c12_31 = arith.constant 12 : index
    %c24 = arith.constant 24 : index
    %c0_32 = arith.constant 0 : index
    %40 = vector.load %arg1[%c0_30, %c12_31, %c24, %c0_32] : memref<1x44x44x32xbf16, #tpu.memory_space<vmem>>, vector<1x8x8x32xbf16>
    %41 = vector.shape_cast %40 : vector<1x8x8x32xbf16> to vector<8x8x32xbf16>
    %42 = arith.extf %41 : vector<8x8x32xbf16> to vector<8x8x32xf32>
    %43 = vector.shape_cast %42 : vector<8x8x32xf32> to vector<64x32xf32>
    %44 = arith.truncf %43 : vector<64x32xf32> to vector<64x32xbf16>
    %c2 = arith.constant 2 : index
    %c0_33 = arith.constant 0 : index
    %c0_34 = arith.constant 0 : index
    %45 = vector.load %arg6[%c2, %c0_33, %c0_34] : memref<27x32x32xbf16, #tpu.memory_space<vmem>>, vector<1x32x32xbf16>
    %46 = vector.shape_cast %45 : vector<1x32x32xbf16> to vector<32x32xbf16>
    %cst_35 = arith.constant dense<0.000000e+00> : vector<64x32xf32>
    %47 = tpu.matmul %44, %46, %cst_35 {dimension_numbers = #tpu.dot_dimension_numbers<[1], [0], [0], [1], [0, 0, 1, 1], [], []>} : vector<64x32xbf16>, vector<32x32xbf16>, vector<64x32xf32> -> vector<64x32xf32>
    %48 = arith.addf %39, %47 : vector<64x32xf32>
    %c0_36 = arith.constant 0 : index
    %c18_37 = arith.constant 18 : index
    %c12_38 = arith.constant 12 : index
    %c0_39 = arith.constant 0 : index
    %49 = vector.load %arg1[%c0_36, %c18_37, %c12_38, %c0_39] : memref<1x44x44x32xbf16, #tpu.memory_space<vmem>>, vector<1x8x8x32xbf16>
    %50 = vector.shape_cast %49 : vector<1x8x8x32xbf16> to vector<8x8x32xbf16>
    %51 = arith.extf %50 : vector<8x8x32xbf16> to vector<8x8x32xf32>
    %52 = vector.shape_cast %51 : vector<8x8x32xf32> to vector<64x32xf32>
    %53 = arith.truncf %52 : vector<64x32xf32> to vector<64x32xbf16>
    %c3 = arith.constant 3 : index
    %c0_40 = arith.constant 0 : index
    %c0_41 = arith.constant 0 : index
    %54 = vector.load %arg6[%c3, %c0_40, %c0_41] : memref<27x32x32xbf16, #tpu.memory_space<vmem>>, vector<1x32x32xbf16>
    %55 = vector.shape_cast %54 : vector<1x32x32xbf16> to vector<32x32xbf16>
    %cst_42 = arith.constant dense<0.000000e+00> : vector<64x32xf32>
    %56 = tpu.matmul %53, %55, %cst_42 {dimension_numbers = #tpu.dot_dimension_numbers<[1], [0], [0], [1], [0, 0, 1, 1], [], []>} : vector<64x32xbf16>, vector<32x32xbf16>, vector<64x32xf32> -> vector<64x32xf32>
    %57 = arith.addf %48, %56 : vector<64x32xf32>
    %c0_43 = arith.constant 0 : index
    %c18_44 = arith.constant 18 : index
    %c18_45 = arith.constant 18 : index
    %c0_46 = arith.constant 0 : index
    %58 = vector.load %arg1[%c0_43, %c18_44, %c18_45, %c0_46] : memref<1x44x44x32xbf16, #tpu.memory_space<vmem>>, vector<1x8x8x32xbf16>
    %59 = vector.shape_cast %58 : vector<1x8x8x32xbf16> to vector<8x8x32xbf16>
    %60 = arith.extf %59 : vector<8x8x32xbf16> to vector<8x8x32xf32>
    %61 = vector.shape_cast %60 : vector<8x8x32xf32> to vector<64x32xf32>
    %62 = arith.truncf %61 : vector<64x32xf32> to vector<64x32xbf16>
    %c4 = arith.constant 4 : index
    %c0_47 = arith.constant 0 : index
    %c0_48 = arith.constant 0 : index
    %63 = vector.load %arg6[%c4, %c0_47, %c0_48] : memref<27x32x32xbf16, #tpu.memory_space<vmem>>, vector<1x32x32xbf16>
    %64 = vector.shape_cast %63 : vector<1x32x32xbf16> to vector<32x32xbf16>
    %cst_49 = arith.constant dense<0.000000e+00> : vector<64x32xf32>
    %65 = tpu.matmul %62, %64, %cst_49 {dimension_numbers = #tpu.dot_dimension_numbers<[1], [0], [0], [1], [0, 0, 1, 1], [], []>} : vector<64x32xbf16>, vector<32x32xbf16>, vector<64x32xf32> -> vector<64x32xf32>
    %66 = arith.addf %57, %65 : vector<64x32xf32>
    %c0_50 = arith.constant 0 : index
    %c18_51 = arith.constant 18 : index
    %c24_52 = arith.constant 24 : index
    %c0_53 = arith.constant 0 : index
    %67 = vector.load %arg1[%c0_50, %c18_51, %c24_52, %c0_53] : memref<1x44x44x32xbf16, #tpu.memory_space<vmem>>, vector<1x8x8x32xbf16>
    %68 = vector.shape_cast %67 : vector<1x8x8x32xbf16> to vector<8x8x32xbf16>
    %69 = arith.extf %68 : vector<8x8x32xbf16> to vector<8x8x32xf32>
    %70 = vector.shape_cast %69 : vector<8x8x32xf32> to vector<64x32xf32>
    %71 = arith.truncf %70 : vector<64x32xf32> to vector<64x32xbf16>
    %c5 = arith.constant 5 : index
    %c0_54 = arith.constant 0 : index
    %c0_55 = arith.constant 0 : index
    %72 = vector.load %arg6[%c5, %c0_54, %c0_55] : memref<27x32x32xbf16, #tpu.memory_space<vmem>>, vector<1x32x32xbf16>
    %73 = vector.shape_cast %72 : vector<1x32x32xbf16> to vector<32x32xbf16>
    %cst_56 = arith.constant dense<0.000000e+00> : vector<64x32xf32>
    %74 = tpu.matmul %71, %73, %cst_56 {dimension_numbers = #tpu.dot_dimension_numbers<[1], [0], [0], [1], [0, 0, 1, 1], [], []>} : vector<64x32xbf16>, vector<32x32xbf16>, vector<64x32xf32> -> vector<64x32xf32>
    %75 = arith.addf %66, %74 : vector<64x32xf32>
    %c0_57 = arith.constant 0 : index
    %c24_58 = arith.constant 24 : index
    %c12_59 = arith.constant 12 : index
    %c0_60 = arith.constant 0 : index
    %76 = vector.load %arg1[%c0_57, %c24_58, %c12_59, %c0_60] : memref<1x44x44x32xbf16, #tpu.memory_space<vmem>>, vector<1x8x8x32xbf16>
    %77 = vector.shape_cast %76 : vector<1x8x8x32xbf16> to vector<8x8x32xbf16>
    %78 = arith.extf %77 : vector<8x8x32xbf16> to vector<8x8x32xf32>
    %79 = vector.shape_cast %78 : vector<8x8x32xf32> to vector<64x32xf32>
    %80 = arith.truncf %79 : vector<64x32xf32> to vector<64x32xbf16>
    %c6 = arith.constant 6 : index
    %c0_61 = arith.constant 0 : index
    %c0_62 = arith.constant 0 : index
    %81 = vector.load %arg6[%c6, %c0_61, %c0_62] : memref<27x32x32xbf16, #tpu.memory_space<vmem>>, vector<1x32x32xbf16>
    %82 = vector.shape_cast %81 : vector<1x32x32xbf16> to vector<32x32xbf16>
    %cst_63 = arith.constant dense<0.000000e+00> : vector<64x32xf32>
    %83 = tpu.matmul %80, %82, %cst_63 {dimension_numbers = #tpu.dot_dimension_numbers<[1], [0], [0], [1], [0, 0, 1, 1], [], []>} : vector<64x32xbf16>, vector<32x32xbf16>, vector<64x32xf32> -> vector<64x32xf32>
    %84 = arith.addf %75, %83 : vector<64x32xf32>
    %c0_64 = arith.constant 0 : index
    %c24_65 = arith.constant 24 : index
    %c18_66 = arith.constant 18 : index
    %c0_67 = arith.constant 0 : index
    %85 = vector.load %arg1[%c0_64, %c24_65, %c18_66, %c0_67] : memref<1x44x44x32xbf16, #tpu.memory_space<vmem>>, vector<1x8x8x32xbf16>
    %86 = vector.shape_cast %85 : vector<1x8x8x32xbf16> to vector<8x8x32xbf16>
    %87 = arith.extf %86 : vector<8x8x32xbf16> to vector<8x8x32xf32>
    %88 = vector.shape_cast %87 : vector<8x8x32xf32> to vector<64x32xf32>
    %89 = arith.truncf %88 : vector<64x32xf32> to vector<64x32xbf16>
    %c7 = arith.constant 7 : index
    %c0_68 = arith.constant 0 : index
    %c0_69 = arith.constant 0 : index
    %90 = vector.load %arg6[%c7, %c0_68, %c0_69] : memref<27x32x32xbf16, #tpu.memory_space<vmem>>, vector<1x32x32xbf16>
    %91 = vector.shape_cast %90 : vector<1x32x32xbf16> to vector<32x32xbf16>
    %cst_70 = arith.constant dense<0.000000e+00> : vector<64x32xf32>
    %92 = tpu.matmul %89, %91, %cst_70 {dimension_numbers = #tpu.dot_dimension_numbers<[1], [0], [0], [1], [0, 0, 1, 1], [], []>} : vector<64x32xbf16>, vector<32x32xbf16>, vector<64x32xf32> -> vector<64x32xf32>
    %93 = arith.addf %84, %92 : vector<64x32xf32>
    %c0_71 = arith.constant 0 : index
    %c24_72 = arith.constant 24 : index
    %c24_73 = arith.constant 24 : index
    %c0_74 = arith.constant 0 : index
    %94 = vector.load %arg1[%c0_71, %c24_72, %c24_73, %c0_74] : memref<1x44x44x32xbf16, #tpu.memory_space<vmem>>, vector<1x8x8x32xbf16>
    %95 = vector.shape_cast %94 : vector<1x8x8x32xbf16> to vector<8x8x32xbf16>
    %96 = arith.extf %95 : vector<8x8x32xbf16> to vector<8x8x32xf32>
    %97 = vector.shape_cast %96 : vector<8x8x32xf32> to vector<64x32xf32>
    %98 = arith.truncf %97 : vector<64x32xf32> to vector<64x32xbf16>
    %c8 = arith.constant 8 : index
    %c0_75 = arith.constant 0 : index
    %c0_76 = arith.constant 0 : index
    %99 = vector.load %arg6[%c8, %c0_75, %c0_76] : memref<27x32x32xbf16, #tpu.memory_space<vmem>>, vector<1x32x32xbf16>
    %100 = vector.shape_cast %99 : vector<1x32x32xbf16> to vector<32x32xbf16>
    %cst_77 = arith.constant dense<0.000000e+00> : vector<64x32xf32>
    %101 = tpu.matmul %98, %100, %cst_77 {dimension_numbers = #tpu.dot_dimension_numbers<[1], [0], [0], [1], [0, 0, 1, 1], [], []>} : vector<64x32xbf16>, vector<32x32xbf16>, vector<64x32xf32> -> vector<64x32xf32>
    %102 = arith.addf %93, %101 : vector<64x32xf32>
    %c0_78 = arith.constant 0 : index
    %c0_79 = arith.constant 0 : index
    %c0_80 = arith.constant 0 : index
    %103 = vector.load %arg7[%c0_78, %c0_79, %c0_80] : memref<3x1x32xf32, #tpu.memory_space<vmem>>, vector<1x1x32xf32>
    %104 = vector.shape_cast %103 : vector<1x1x32xf32> to vector<1x32xf32>
    %105 = vector.broadcast %104 : vector<1x32xf32> to vector<64x32xf32>
    %106 = arith.mulf %102, %105 : vector<64x32xf32>
    %c0_81 = arith.constant 0 : index
    %c0_82 = arith.constant 0 : index
    %c0_83 = arith.constant 0 : index
    %107 = vector.load %arg8[%c0_81, %c0_82, %c0_83] : memref<3x1x32xf32, #tpu.memory_space<vmem>>, vector<1x1x32xf32>
    %108 = vector.shape_cast %107 : vector<1x1x32xf32> to vector<1x32xf32>
    %109 = vector.broadcast %108 : vector<1x32xf32> to vector<64x32xf32>
    %110 = arith.addf %106, %109 : vector<64x32xf32>
    %cst_84 = arith.constant 0.000000e+00 : f32
    %111 = vector.broadcast %cst_84 : f32 to vector<64x32xf32>
    %112 = arith.maximumf %110, %111 : vector<64x32xf32>
    %113 = arith.truncf %112 : vector<64x32xf32> to vector<64x32xbf16>
    %c1_85 = arith.constant 1 : index
    %c0_86 = arith.constant 0 : index
    %c0_87 = arith.constant 0 : index
    %114 = vector.load %arg9[%c1_85, %c0_86, %c0_87] : memref<4x32x32xbf16, #tpu.memory_space<vmem>>, vector<1x32x32xbf16>
    %115 = vector.shape_cast %114 : vector<1x32x32xbf16> to vector<32x32xbf16>
    %cst_88 = arith.constant dense<0.000000e+00> : vector<64x32xf32>
    %116 = tpu.matmul %113, %115, %cst_88 {dimension_numbers = #tpu.dot_dimension_numbers<[1], [0], [0], [1], [0, 0, 1, 1], [], []>} : vector<64x32xbf16>, vector<32x32xbf16>, vector<64x32xf32> -> vector<64x32xf32>
    %117 = arith.addf %22, %116 : vector<64x32xf32>
    %c0_89 = arith.constant 0 : index
    %c6_90 = arith.constant 6 : index
    %c6_91 = arith.constant 6 : index
    %c0_92 = arith.constant 0 : index
    %118 = vector.load %arg1[%c0_89, %c6_90, %c6_91, %c0_92] : memref<1x44x44x32xbf16, #tpu.memory_space<vmem>>, vector<1x8x8x32xbf16>
    %119 = vector.shape_cast %118 : vector<1x8x8x32xbf16> to vector<8x8x32xbf16>
    %120 = arith.extf %119 : vector<8x8x32xbf16> to vector<8x8x32xf32>
    %121 = vector.shape_cast %120 : vector<8x8x32xf32> to vector<64x32xf32>
    %122 = arith.truncf %121 : vector<64x32xf32> to vector<64x32xbf16>
    %c9 = arith.constant 9 : index
    %c0_93 = arith.constant 0 : index
    %c0_94 = arith.constant 0 : index
    %123 = vector.load %arg6[%c9, %c0_93, %c0_94] : memref<27x32x32xbf16, #tpu.memory_space<vmem>>, vector<1x32x32xbf16>
    %124 = vector.shape_cast %123 : vector<1x32x32xbf16> to vector<32x32xbf16>
    %cst_95 = arith.constant dense<0.000000e+00> : vector<64x32xf32>
    %125 = tpu.matmul %122, %124, %cst_95 {dimension_numbers = #tpu.dot_dimension_numbers<[1], [0], [0], [1], [0, 0, 1, 1], [], []>} : vector<64x32xbf16>, vector<32x32xbf16>, vector<64x32xf32> -> vector<64x32xf32>
    %c0_96 = arith.constant 0 : index
    %c6_97 = arith.constant 6 : index
    %c18_98 = arith.constant 18 : index
    %c0_99 = arith.constant 0 : index
    %126 = vector.load %arg1[%c0_96, %c6_97, %c18_98, %c0_99] : memref<1x44x44x32xbf16, #tpu.memory_space<vmem>>, vector<1x8x8x32xbf16>
    %127 = vector.shape_cast %126 : vector<1x8x8x32xbf16> to vector<8x8x32xbf16>
    %128 = arith.extf %127 : vector<8x8x32xbf16> to vector<8x8x32xf32>
    %129 = vector.shape_cast %128 : vector<8x8x32xf32> to vector<64x32xf32>
    %130 = arith.truncf %129 : vector<64x32xf32> to vector<64x32xbf16>
    %c10 = arith.constant 10 : index
    %c0_100 = arith.constant 0 : index
    %c0_101 = arith.constant 0 : index
    %131 = vector.load %arg6[%c10, %c0_100, %c0_101] : memref<27x32x32xbf16, #tpu.memory_space<vmem>>, vector<1x32x32xbf16>
    %132 = vector.shape_cast %131 : vector<1x32x32xbf16> to vector<32x32xbf16>
    %cst_102 = arith.constant dense<0.000000e+00> : vector<64x32xf32>
    %133 = tpu.matmul %130, %132, %cst_102 {dimension_numbers = #tpu.dot_dimension_numbers<[1], [0], [0], [1], [0, 0, 1, 1], [], []>} : vector<64x32xbf16>, vector<32x32xbf16>, vector<64x32xf32> -> vector<64x32xf32>
    %134 = arith.addf %125, %133 : vector<64x32xf32>
    %c0_103 = arith.constant 0 : index
    %c6_104 = arith.constant 6 : index
    %c30 = arith.constant 30 : index
    %c0_105 = arith.constant 0 : index
    %135 = vector.load %arg1[%c0_103, %c6_104, %c30, %c0_105] : memref<1x44x44x32xbf16, #tpu.memory_space<vmem>>, vector<1x8x8x32xbf16>
    %136 = vector.shape_cast %135 : vector<1x8x8x32xbf16> to vector<8x8x32xbf16>
    %137 = arith.extf %136 : vector<8x8x32xbf16> to vector<8x8x32xf32>
    %138 = vector.shape_cast %137 : vector<8x8x32xf32> to vector<64x32xf32>
    %139 = arith.truncf %138 : vector<64x32xf32> to vector<64x32xbf16>
    %c11 = arith.constant 11 : index
    %c0_106 = arith.constant 0 : index
    %c0_107 = arith.constant 0 : index
    %140 = vector.load %arg6[%c11, %c0_106, %c0_107] : memref<27x32x32xbf16, #tpu.memory_space<vmem>>, vector<1x32x32xbf16>
    %141 = vector.shape_cast %140 : vector<1x32x32xbf16> to vector<32x32xbf16>
    %cst_108 = arith.constant dense<0.000000e+00> : vector<64x32xf32>
    %142 = tpu.matmul %139, %141, %cst_108 {dimension_numbers = #tpu.dot_dimension_numbers<[1], [0], [0], [1], [0, 0, 1, 1], [], []>} : vector<64x32xbf16>, vector<32x32xbf16>, vector<64x32xf32> -> vector<64x32xf32>
    %143 = arith.addf %134, %142 : vector<64x32xf32>
    %c0_109 = arith.constant 0 : index
    %c18_110 = arith.constant 18 : index
    %c6_111 = arith.constant 6 : index
    %c0_112 = arith.constant 0 : index
    %144 = vector.load %arg1[%c0_109, %c18_110, %c6_111, %c0_112] : memref<1x44x44x32xbf16, #tpu.memory_space<vmem>>, vector<1x8x8x32xbf16>
    %145 = vector.shape_cast %144 : vector<1x8x8x32xbf16> to vector<8x8x32xbf16>
    %146 = arith.extf %145 : vector<8x8x32xbf16> to vector<8x8x32xf32>
    %147 = vector.shape_cast %146 : vector<8x8x32xf32> to vector<64x32xf32>
    %148 = arith.truncf %147 : vector<64x32xf32> to vector<64x32xbf16>
    %c12_113 = arith.constant 12 : index
    %c0_114 = arith.constant 0 : index
    %c0_115 = arith.constant 0 : index
    %149 = vector.load %arg6[%c12_113, %c0_114, %c0_115] : memref<27x32x32xbf16, #tpu.memory_space<vmem>>, vector<1x32x32xbf16>
    %150 = vector.shape_cast %149 : vector<1x32x32xbf16> to vector<32x32xbf16>
    %cst_116 = arith.constant dense<0.000000e+00> : vector<64x32xf32>
    %151 = tpu.matmul %148, %150, %cst_116 {dimension_numbers = #tpu.dot_dimension_numbers<[1], [0], [0], [1], [0, 0, 1, 1], [], []>} : vector<64x32xbf16>, vector<32x32xbf16>, vector<64x32xf32> -> vector<64x32xf32>
    %152 = arith.addf %143, %151 : vector<64x32xf32>
    %c0_117 = arith.constant 0 : index
    %c18_118 = arith.constant 18 : index
    %c18_119 = arith.constant 18 : index
    %c0_120 = arith.constant 0 : index
    %153 = vector.load %arg1[%c0_117, %c18_118, %c18_119, %c0_120] : memref<1x44x44x32xbf16, #tpu.memory_space<vmem>>, vector<1x8x8x32xbf16>
    %154 = vector.shape_cast %153 : vector<1x8x8x32xbf16> to vector<8x8x32xbf16>
    %155 = arith.extf %154 : vector<8x8x32xbf16> to vector<8x8x32xf32>
    %156 = vector.shape_cast %155 : vector<8x8x32xf32> to vector<64x32xf32>
    %157 = arith.truncf %156 : vector<64x32xf32> to vector<64x32xbf16>
    %c13 = arith.constant 13 : index
    %c0_121 = arith.constant 0 : index
    %c0_122 = arith.constant 0 : index
    %158 = vector.load %arg6[%c13, %c0_121, %c0_122] : memref<27x32x32xbf16, #tpu.memory_space<vmem>>, vector<1x32x32xbf16>
    %159 = vector.shape_cast %158 : vector<1x32x32xbf16> to vector<32x32xbf16>
    %cst_123 = arith.constant dense<0.000000e+00> : vector<64x32xf32>
    %160 = tpu.matmul %157, %159, %cst_123 {dimension_numbers = #tpu.dot_dimension_numbers<[1], [0], [0], [1], [0, 0, 1, 1], [], []>} : vector<64x32xbf16>, vector<32x32xbf16>, vector<64x32xf32> -> vector<64x32xf32>
    %161 = arith.addf %152, %160 : vector<64x32xf32>
    %c0_124 = arith.constant 0 : index
    %c18_125 = arith.constant 18 : index
    %c30_126 = arith.constant 30 : index
    %c0_127 = arith.constant 0 : index
    %162 = vector.load %arg1[%c0_124, %c18_125, %c30_126, %c0_127] : memref<1x44x44x32xbf16, #tpu.memory_space<vmem>>, vector<1x8x8x32xbf16>
    %163 = vector.shape_cast %162 : vector<1x8x8x32xbf16> to vector<8x8x32xbf16>
    %164 = arith.extf %163 : vector<8x8x32xbf16> to vector<8x8x32xf32>
    %165 = vector.shape_cast %164 : vector<8x8x32xf32> to vector<64x32xf32>
    %166 = arith.truncf %165 : vector<64x32xf32> to vector<64x32xbf16>
    %c14 = arith.constant 14 : index
    %c0_128 = arith.constant 0 : index
    %c0_129 = arith.constant 0 : index
    %167 = vector.load %arg6[%c14, %c0_128, %c0_129] : memref<27x32x32xbf16, #tpu.memory_space<vmem>>, vector<1x32x32xbf16>
    %168 = vector.shape_cast %167 : vector<1x32x32xbf16> to vector<32x32xbf16>
    %cst_130 = arith.constant dense<0.000000e+00> : vector<64x32xf32>
    %169 = tpu.matmul %166, %168, %cst_130 {dimension_numbers = #tpu.dot_dimension_numbers<[1], [0], [0], [1], [0, 0, 1, 1], [], []>} : vector<64x32xbf16>, vector<32x32xbf16>, vector<64x32xf32> -> vector<64x32xf32>
    %170 = arith.addf %161, %169 : vector<64x32xf32>
    %c0_131 = arith.constant 0 : index
    %c30_132 = arith.constant 30 : index
    %c6_133 = arith.constant 6 : index
    %c0_134 = arith.constant 0 : index
    %171 = vector.load %arg1[%c0_131, %c30_132, %c6_133, %c0_134] : memref<1x44x44x32xbf16, #tpu.memory_space<vmem>>, vector<1x8x8x32xbf16>
    %172 = vector.shape_cast %171 : vector<1x8x8x32xbf16> to vector<8x8x32xbf16>
    %173 = arith.extf %172 : vector<8x8x32xbf16> to vector<8x8x32xf32>
    %174 = vector.shape_cast %173 : vector<8x8x32xf32> to vector<64x32xf32>
    %175 = arith.truncf %174 : vector<64x32xf32> to vector<64x32xbf16>
    %c15 = arith.constant 15 : index
    %c0_135 = arith.constant 0 : index
    %c0_136 = arith.constant 0 : index
    %176 = vector.load %arg6[%c15, %c0_135, %c0_136] : memref<27x32x32xbf16, #tpu.memory_space<vmem>>, vector<1x32x32xbf16>
    %177 = vector.shape_cast %176 : vector<1x32x32xbf16> to vector<32x32xbf16>
    %cst_137 = arith.constant dense<0.000000e+00> : vector<64x32xf32>
    %178 = tpu.matmul %175, %177, %cst_137 {dimension_numbers = #tpu.dot_dimension_numbers<[1], [0], [0], [1], [0, 0, 1, 1], [], []>} : vector<64x32xbf16>, vector<32x32xbf16>, vector<64x32xf32> -> vector<64x32xf32>
    %179 = arith.addf %170, %178 : vector<64x32xf32>
    %c0_138 = arith.constant 0 : index
    %c30_139 = arith.constant 30 : index
    %c18_140 = arith.constant 18 : index
    %c0_141 = arith.constant 0 : index
    %180 = vector.load %arg1[%c0_138, %c30_139, %c18_140, %c0_141] : memref<1x44x44x32xbf16, #tpu.memory_space<vmem>>, vector<1x8x8x32xbf16>
    %181 = vector.shape_cast %180 : vector<1x8x8x32xbf16> to vector<8x8x32xbf16>
    %182 = arith.extf %181 : vector<8x8x32xbf16> to vector<8x8x32xf32>
    %183 = vector.shape_cast %182 : vector<8x8x32xf32> to vector<64x32xf32>
    %184 = arith.truncf %183 : vector<64x32xf32> to vector<64x32xbf16>
    %c16 = arith.constant 16 : index
    %c0_142 = arith.constant 0 : index
    %c0_143 = arith.constant 0 : index
    %185 = vector.load %arg6[%c16, %c0_142, %c0_143] : memref<27x32x32xbf16, #tpu.memory_space<vmem>>, vector<1x32x32xbf16>
    %186 = vector.shape_cast %185 : vector<1x32x32xbf16> to vector<32x32xbf16>
    %cst_144 = arith.constant dense<0.000000e+00> : vector<64x32xf32>
    %187 = tpu.matmul %184, %186, %cst_144 {dimension_numbers = #tpu.dot_dimension_numbers<[1], [0], [0], [1], [0, 0, 1, 1], [], []>} : vector<64x32xbf16>, vector<32x32xbf16>, vector<64x32xf32> -> vector<64x32xf32>
    %188 = arith.addf %179, %187 : vector<64x32xf32>
    %c0_145 = arith.constant 0 : index
    %c30_146 = arith.constant 30 : index
    %c30_147 = arith.constant 30 : index
    %c0_148 = arith.constant 0 : index
    %189 = vector.load %arg1[%c0_145, %c30_146, %c30_147, %c0_148] : memref<1x44x44x32xbf16, #tpu.memory_space<vmem>>, vector<1x8x8x32xbf16>
    %190 = vector.shape_cast %189 : vector<1x8x8x32xbf16> to vector<8x8x32xbf16>
    %191 = arith.extf %190 : vector<8x8x32xbf16> to vector<8x8x32xf32>
    %192 = vector.shape_cast %191 : vector<8x8x32xf32> to vector<64x32xf32>
    %193 = arith.truncf %192 : vector<64x32xf32> to vector<64x32xbf16>
    %c17 = arith.constant 17 : index
    %c0_149 = arith.constant 0 : index
    %c0_150 = arith.constant 0 : index
    %194 = vector.load %arg6[%c17, %c0_149, %c0_150] : memref<27x32x32xbf16, #tpu.memory_space<vmem>>, vector<1x32x32xbf16>
    %195 = vector.shape_cast %194 : vector<1x32x32xbf16> to vector<32x32xbf16>
    %cst_151 = arith.constant dense<0.000000e+00> : vector<64x32xf32>
    %196 = tpu.matmul %193, %195, %cst_151 {dimension_numbers = #tpu.dot_dimension_numbers<[1], [0], [0], [1], [0, 0, 1, 1], [], []>} : vector<64x32xbf16>, vector<32x32xbf16>, vector<64x32xf32> -> vector<64x32xf32>
    %197 = arith.addf %188, %196 : vector<64x32xf32>
    %c1_152 = arith.constant 1 : index
    %c0_153 = arith.constant 0 : index
    %c0_154 = arith.constant 0 : index
    %198 = vector.load %arg7[%c1_152, %c0_153, %c0_154] : memref<3x1x32xf32, #tpu.memory_space<vmem>>, vector<1x1x32xf32>
    %199 = vector.shape_cast %198 : vector<1x1x32xf32> to vector<1x32xf32>
    %200 = vector.broadcast %199 : vector<1x32xf32> to vector<64x32xf32>
    %201 = arith.mulf %197, %200 : vector<64x32xf32>
    %c1_155 = arith.constant 1 : index
    %c0_156 = arith.constant 0 : index
    %c0_157 = arith.constant 0 : index
    %202 = vector.load %arg8[%c1_155, %c0_156, %c0_157] : memref<3x1x32xf32, #tpu.memory_space<vmem>>, vector<1x1x32xf32>
    %203 = vector.shape_cast %202 : vector<1x1x32xf32> to vector<1x32xf32>
    %204 = vector.broadcast %203 : vector<1x32xf32> to vector<64x32xf32>
    %205 = arith.addf %201, %204 : vector<64x32xf32>
    %cst_158 = arith.constant 0.000000e+00 : f32
    %206 = vector.broadcast %cst_158 : f32 to vector<64x32xf32>
    %207 = arith.maximumf %205, %206 : vector<64x32xf32>
    %208 = arith.truncf %207 : vector<64x32xf32> to vector<64x32xbf16>
    %c2_159 = arith.constant 2 : index
    %c0_160 = arith.constant 0 : index
    %c0_161 = arith.constant 0 : index
    %209 = vector.load %arg9[%c2_159, %c0_160, %c0_161] : memref<4x32x32xbf16, #tpu.memory_space<vmem>>, vector<1x32x32xbf16>
    %210 = vector.shape_cast %209 : vector<1x32x32xbf16> to vector<32x32xbf16>
    %cst_162 = arith.constant dense<0.000000e+00> : vector<64x32xf32>
    %211 = tpu.matmul %208, %210, %cst_162 {dimension_numbers = #tpu.dot_dimension_numbers<[1], [0], [0], [1], [0, 0, 1, 1], [], []>} : vector<64x32xbf16>, vector<32x32xbf16>, vector<64x32xf32> -> vector<64x32xf32>
    %212 = arith.addf %117, %211 : vector<64x32xf32>
    %c0_163 = arith.constant 0 : index
    %c0_164 = arith.constant 0 : index
    %c0_165 = arith.constant 0 : index
    %c0_166 = arith.constant 0 : index
    %213 = vector.load %arg1[%c0_163, %c0_164, %c0_165, %c0_166] : memref<1x44x44x32xbf16, #tpu.memory_space<vmem>>, vector<1x8x8x32xbf16>
    %214 = vector.shape_cast %213 : vector<1x8x8x32xbf16> to vector<8x8x32xbf16>
    %215 = arith.extf %214 : vector<8x8x32xbf16> to vector<8x8x32xf32>
    %216 = vector.shape_cast %215 : vector<8x8x32xf32> to vector<64x32xf32>
    %217 = arith.truncf %216 : vector<64x32xf32> to vector<64x32xbf16>
    %c18_167 = arith.constant 18 : index
    %c0_168 = arith.constant 0 : index
    %c0_169 = arith.constant 0 : index
    %218 = vector.load %arg6[%c18_167, %c0_168, %c0_169] : memref<27x32x32xbf16, #tpu.memory_space<vmem>>, vector<1x32x32xbf16>
    %219 = vector.shape_cast %218 : vector<1x32x32xbf16> to vector<32x32xbf16>
    %cst_170 = arith.constant dense<0.000000e+00> : vector<64x32xf32>
    %220 = tpu.matmul %217, %219, %cst_170 {dimension_numbers = #tpu.dot_dimension_numbers<[1], [0], [0], [1], [0, 0, 1, 1], [], []>} : vector<64x32xbf16>, vector<32x32xbf16>, vector<64x32xf32> -> vector<64x32xf32>
    %c0_171 = arith.constant 0 : index
    %c0_172 = arith.constant 0 : index
    %c18_173 = arith.constant 18 : index
    %c0_174 = arith.constant 0 : index
    %221 = vector.load %arg1[%c0_171, %c0_172, %c18_173, %c0_174] : memref<1x44x44x32xbf16, #tpu.memory_space<vmem>>, vector<1x8x8x32xbf16>
    %222 = vector.shape_cast %221 : vector<1x8x8x32xbf16> to vector<8x8x32xbf16>
    %223 = arith.extf %222 : vector<8x8x32xbf16> to vector<8x8x32xf32>
    %224 = vector.shape_cast %223 : vector<8x8x32xf32> to vector<64x32xf32>
    %225 = arith.truncf %224 : vector<64x32xf32> to vector<64x32xbf16>
    %c19 = arith.constant 19 : index
    %c0_175 = arith.constant 0 : index
    %c0_176 = arith.constant 0 : index
    %226 = vector.load %arg6[%c19, %c0_175, %c0_176] : memref<27x32x32xbf16, #tpu.memory_space<vmem>>, vector<1x32x32xbf16>
    %227 = vector.shape_cast %226 : vector<1x32x32xbf16> to vector<32x32xbf16>
    %cst_177 = arith.constant dense<0.000000e+00> : vector<64x32xf32>
    %228 = tpu.matmul %225, %227, %cst_177 {dimension_numbers = #tpu.dot_dimension_numbers<[1], [0], [0], [1], [0, 0, 1, 1], [], []>} : vector<64x32xbf16>, vector<32x32xbf16>, vector<64x32xf32> -> vector<64x32xf32>
    %229 = arith.addf %220, %228 : vector<64x32xf32>
    %c0_178 = arith.constant 0 : index
    %c0_179 = arith.constant 0 : index
    %c36 = arith.constant 36 : index
    %c0_180 = arith.constant 0 : index
    %230 = vector.load %arg1[%c0_178, %c0_179, %c36, %c0_180] : memref<1x44x44x32xbf16, #tpu.memory_space<vmem>>, vector<1x8x8x32xbf16>
    %231 = vector.shape_cast %230 : vector<1x8x8x32xbf16> to vector<8x8x32xbf16>
    %232 = arith.extf %231 : vector<8x8x32xbf16> to vector<8x8x32xf32>
    %233 = vector.shape_cast %232 : vector<8x8x32xf32> to vector<64x32xf32>
    %234 = arith.truncf %233 : vector<64x32xf32> to vector<64x32xbf16>
    %c20 = arith.constant 20 : index
    %c0_181 = arith.constant 0 : index
    %c0_182 = arith.constant 0 : index
    %235 = vector.load %arg6[%c20, %c0_181, %c0_182] : memref<27x32x32xbf16, #tpu.memory_space<vmem>>, vector<1x32x32xbf16>
    %236 = vector.shape_cast %235 : vector<1x32x32xbf16> to vector<32x32xbf16>
    %cst_183 = arith.constant dense<0.000000e+00> : vector<64x32xf32>
    %237 = tpu.matmul %234, %236, %cst_183 {dimension_numbers = #tpu.dot_dimension_numbers<[1], [0], [0], [1], [0, 0, 1, 1], [], []>} : vector<64x32xbf16>, vector<32x32xbf16>, vector<64x32xf32> -> vector<64x32xf32>
    %238 = arith.addf %229, %237 : vector<64x32xf32>
    %c0_184 = arith.constant 0 : index
    %c18_185 = arith.constant 18 : index
    %c0_186 = arith.constant 0 : index
    %c0_187 = arith.constant 0 : index
    %239 = vector.load %arg1[%c0_184, %c18_185, %c0_186, %c0_187] : memref<1x44x44x32xbf16, #tpu.memory_space<vmem>>, vector<1x8x8x32xbf16>
    %240 = vector.shape_cast %239 : vector<1x8x8x32xbf16> to vector<8x8x32xbf16>
    %241 = arith.extf %240 : vector<8x8x32xbf16> to vector<8x8x32xf32>
    %242 = vector.shape_cast %241 : vector<8x8x32xf32> to vector<64x32xf32>
    %243 = arith.truncf %242 : vector<64x32xf32> to vector<64x32xbf16>
    %c21 = arith.constant 21 : index
    %c0_188 = arith.constant 0 : index
    %c0_189 = arith.constant 0 : index
    %244 = vector.load %arg6[%c21, %c0_188, %c0_189] : memref<27x32x32xbf16, #tpu.memory_space<vmem>>, vector<1x32x32xbf16>
    %245 = vector.shape_cast %244 : vector<1x32x32xbf16> to vector<32x32xbf16>
    %cst_190 = arith.constant dense<0.000000e+00> : vector<64x32xf32>
    %246 = tpu.matmul %243, %245, %cst_190 {dimension_numbers = #tpu.dot_dimension_numbers<[1], [0], [0], [1], [0, 0, 1, 1], [], []>} : vector<64x32xbf16>, vector<32x32xbf16>, vector<64x32xf32> -> vector<64x32xf32>
    %247 = arith.addf %238, %246 : vector<64x32xf32>
    %c0_191 = arith.constant 0 : index
    %c18_192 = arith.constant 18 : index
    %c18_193 = arith.constant 18 : index
    %c0_194 = arith.constant 0 : index
    %248 = vector.load %arg1[%c0_191, %c18_192, %c18_193, %c0_194] : memref<1x44x44x32xbf16, #tpu.memory_space<vmem>>, vector<1x8x8x32xbf16>
    %249 = vector.shape_cast %248 : vector<1x8x8x32xbf16> to vector<8x8x32xbf16>
    %250 = arith.extf %249 : vector<8x8x32xbf16> to vector<8x8x32xf32>
    %251 = vector.shape_cast %250 : vector<8x8x32xf32> to vector<64x32xf32>
    %252 = arith.truncf %251 : vector<64x32xf32> to vector<64x32xbf16>
    %c22 = arith.constant 22 : index
    %c0_195 = arith.constant 0 : index
    %c0_196 = arith.constant 0 : index
    %253 = vector.load %arg6[%c22, %c0_195, %c0_196] : memref<27x32x32xbf16, #tpu.memory_space<vmem>>, vector<1x32x32xbf16>
    %254 = vector.shape_cast %253 : vector<1x32x32xbf16> to vector<32x32xbf16>
    %cst_197 = arith.constant dense<0.000000e+00> : vector<64x32xf32>
    %255 = tpu.matmul %252, %254, %cst_197 {dimension_numbers = #tpu.dot_dimension_numbers<[1], [0], [0], [1], [0, 0, 1, 1], [], []>} : vector<64x32xbf16>, vector<32x32xbf16>, vector<64x32xf32> -> vector<64x32xf32>
    %256 = arith.addf %247, %255 : vector<64x32xf32>
    %c0_198 = arith.constant 0 : index
    %c18_199 = arith.constant 18 : index
    %c36_200 = arith.constant 36 : index
    %c0_201 = arith.constant 0 : index
    %257 = vector.load %arg1[%c0_198, %c18_199, %c36_200, %c0_201] : memref<1x44x44x32xbf16, #tpu.memory_space<vmem>>, vector<1x8x8x32xbf16>
    %258 = vector.shape_cast %257 : vector<1x8x8x32xbf16> to vector<8x8x32xbf16>
    %259 = arith.extf %258 : vector<8x8x32xbf16> to vector<8x8x32xf32>
    %260 = vector.shape_cast %259 : vector<8x8x32xf32> to vector<64x32xf32>
    %261 = arith.truncf %260 : vector<64x32xf32> to vector<64x32xbf16>
    %c23 = arith.constant 23 : index
    %c0_202 = arith.constant 0 : index
    %c0_203 = arith.constant 0 : index
    %262 = vector.load %arg6[%c23, %c0_202, %c0_203] : memref<27x32x32xbf16, #tpu.memory_space<vmem>>, vector<1x32x32xbf16>
    %263 = vector.shape_cast %262 : vector<1x32x32xbf16> to vector<32x32xbf16>
    %cst_204 = arith.constant dense<0.000000e+00> : vector<64x32xf32>
    %264 = tpu.matmul %261, %263, %cst_204 {dimension_numbers = #tpu.dot_dimension_numbers<[1], [0], [0], [1], [0, 0, 1, 1], [], []>} : vector<64x32xbf16>, vector<32x32xbf16>, vector<64x32xf32> -> vector<64x32xf32>
    %265 = arith.addf %256, %264 : vector<64x32xf32>
    %c0_205 = arith.constant 0 : index
    %c36_206 = arith.constant 36 : index
    %c0_207 = arith.constant 0 : index
    %c0_208 = arith.constant 0 : index
    %266 = vector.load %arg1[%c0_205, %c36_206, %c0_207, %c0_208] : memref<1x44x44x32xbf16, #tpu.memory_space<vmem>>, vector<1x8x8x32xbf16>
    %267 = vector.shape_cast %266 : vector<1x8x8x32xbf16> to vector<8x8x32xbf16>
    %268 = arith.extf %267 : vector<8x8x32xbf16> to vector<8x8x32xf32>
    %269 = vector.shape_cast %268 : vector<8x8x32xf32> to vector<64x32xf32>
    %270 = arith.truncf %269 : vector<64x32xf32> to vector<64x32xbf16>
    %c24_209 = arith.constant 24 : index
    %c0_210 = arith.constant 0 : index
    %c0_211 = arith.constant 0 : index
    %271 = vector.load %arg6[%c24_209, %c0_210, %c0_211] : memref<27x32x32xbf16, #tpu.memory_space<vmem>>, vector<1x32x32xbf16>
    %272 = vector.shape_cast %271 : vector<1x32x32xbf16> to vector<32x32xbf16>
    %cst_212 = arith.constant dense<0.000000e+00> : vector<64x32xf32>
    %273 = tpu.matmul %270, %272, %cst_212 {dimension_numbers = #tpu.dot_dimension_numbers<[1], [0], [0], [1], [0, 0, 1, 1], [], []>} : vector<64x32xbf16>, vector<32x32xbf16>, vector<64x32xf32> -> vector<64x32xf32>
    %274 = arith.addf %265, %273 : vector<64x32xf32>
    %c0_213 = arith.constant 0 : index
    %c36_214 = arith.constant 36 : index
    %c18_215 = arith.constant 18 : index
    %c0_216 = arith.constant 0 : index
    %275 = vector.load %arg1[%c0_213, %c36_214, %c18_215, %c0_216] : memref<1x44x44x32xbf16, #tpu.memory_space<vmem>>, vector<1x8x8x32xbf16>
    %276 = vector.shape_cast %275 : vector<1x8x8x32xbf16> to vector<8x8x32xbf16>
    %277 = arith.extf %276 : vector<8x8x32xbf16> to vector<8x8x32xf32>
    %278 = vector.shape_cast %277 : vector<8x8x32xf32> to vector<64x32xf32>
    %279 = arith.truncf %278 : vector<64x32xf32> to vector<64x32xbf16>
    %c25 = arith.constant 25 : index
    %c0_217 = arith.constant 0 : index
    %c0_218 = arith.constant 0 : index
    %280 = vector.load %arg6[%c25, %c0_217, %c0_218] : memref<27x32x32xbf16, #tpu.memory_space<vmem>>, vector<1x32x32xbf16>
    %281 = vector.shape_cast %280 : vector<1x32x32xbf16> to vector<32x32xbf16>
    %cst_219 = arith.constant dense<0.000000e+00> : vector<64x32xf32>
    %282 = tpu.matmul %279, %281, %cst_219 {dimension_numbers = #tpu.dot_dimension_numbers<[1], [0], [0], [1], [0, 0, 1, 1], [], []>} : vector<64x32xbf16>, vector<32x32xbf16>, vector<64x32xf32> -> vector<64x32xf32>
    %283 = arith.addf %274, %282 : vector<64x32xf32>
    %c0_220 = arith.constant 0 : index
    %c36_221 = arith.constant 36 : index
    %c36_222 = arith.constant 36 : index
    %c0_223 = arith.constant 0 : index
    %284 = vector.load %arg1[%c0_220, %c36_221, %c36_222, %c0_223] : memref<1x44x44x32xbf16, #tpu.memory_space<vmem>>, vector<1x8x8x32xbf16>
    %285 = vector.shape_cast %284 : vector<1x8x8x32xbf16> to vector<8x8x32xbf16>
    %286 = arith.extf %285 : vector<8x8x32xbf16> to vector<8x8x32xf32>
    %287 = vector.shape_cast %286 : vector<8x8x32xf32> to vector<64x32xf32>
    %288 = arith.truncf %287 : vector<64x32xf32> to vector<64x32xbf16>
    %c26 = arith.constant 26 : index
    %c0_224 = arith.constant 0 : index
    %c0_225 = arith.constant 0 : index
    %289 = vector.load %arg6[%c26, %c0_224, %c0_225] : memref<27x32x32xbf16, #tpu.memory_space<vmem>>, vector<1x32x32xbf16>
    %290 = vector.shape_cast %289 : vector<1x32x32xbf16> to vector<32x32xbf16>
    %cst_226 = arith.constant dense<0.000000e+00> : vector<64x32xf32>
    %291 = tpu.matmul %288, %290, %cst_226 {dimension_numbers = #tpu.dot_dimension_numbers<[1], [0], [0], [1], [0, 0, 1, 1], [], []>} : vector<64x32xbf16>, vector<32x32xbf16>, vector<64x32xf32> -> vector<64x32xf32>
    %292 = arith.addf %283, %291 : vector<64x32xf32>
    %c2_227 = arith.constant 2 : index
    %c0_228 = arith.constant 0 : index
    %c0_229 = arith.constant 0 : index
    %293 = vector.load %arg7[%c2_227, %c0_228, %c0_229] : memref<3x1x32xf32, #tpu.memory_space<vmem>>, vector<1x1x32xf32>
    %294 = vector.shape_cast %293 : vector<1x1x32xf32> to vector<1x32xf32>
    %295 = vector.broadcast %294 : vector<1x32xf32> to vector<64x32xf32>
    %296 = arith.mulf %292, %295 : vector<64x32xf32>
    %c2_230 = arith.constant 2 : index
    %c0_231 = arith.constant 0 : index
    %c0_232 = arith.constant 0 : index
    %297 = vector.load %arg8[%c2_230, %c0_231, %c0_232] : memref<3x1x32xf32, #tpu.memory_space<vmem>>, vector<1x1x32xf32>
    %298 = vector.shape_cast %297 : vector<1x1x32xf32> to vector<1x32xf32>
    %299 = vector.broadcast %298 : vector<1x32xf32> to vector<64x32xf32>
    %300 = arith.addf %296, %299 : vector<64x32xf32>
    %cst_233 = arith.constant 0.000000e+00 : f32
    %301 = vector.broadcast %cst_233 : f32 to vector<64x32xf32>
    %302 = arith.maximumf %300, %301 : vector<64x32xf32>
    %303 = arith.truncf %302 : vector<64x32xf32> to vector<64x32xbf16>
    %c3_234 = arith.constant 3 : index
    %c0_235 = arith.constant 0 : index
    %c0_236 = arith.constant 0 : index
    %304 = vector.load %arg9[%c3_234, %c0_235, %c0_236] : memref<4x32x32xbf16, #tpu.memory_space<vmem>>, vector<1x32x32xbf16>
    %305 = vector.shape_cast %304 : vector<1x32x32xbf16> to vector<32x32xbf16>
    %cst_237 = arith.constant dense<0.000000e+00> : vector<64x32xf32>
    %306 = tpu.matmul %303, %305, %cst_237 {dimension_numbers = #tpu.dot_dimension_numbers<[1], [0], [0], [1], [0, 0, 1, 1], [], []>} : vector<64x32xbf16>, vector<32x32xbf16>, vector<64x32xf32> -> vector<64x32xf32>
    %307 = arith.addf %212, %306 : vector<64x32xf32>
    %c0_238 = arith.constant 0 : index
    %c0_239 = arith.constant 0 : index
    %308 = vector.load %arg10[%c0_238, %c0_239] : memref<1x32xf32, #tpu.memory_space<vmem>>, vector<1x32xf32>
    %309 = vector.broadcast %308 : vector<1x32xf32> to vector<64x32xf32>
    %310 = arith.mulf %307, %309 : vector<64x32xf32>
    %c0_240 = arith.constant 0 : index
    %c0_241 = arith.constant 0 : index
    %311 = vector.load %arg11[%c0_240, %c0_241] : memref<1x32xf32, #tpu.memory_space<vmem>>, vector<1x32xf32>
    %312 = vector.broadcast %311 : vector<1x32xf32> to vector<64x32xf32>
    %313 = arith.addf %310, %312 : vector<64x32xf32>
    %cst_242 = arith.constant 0.000000e+00 : f32
    %314 = vector.broadcast %cst_242 : f32 to vector<64x32xf32>
    %315 = arith.maximumf %313, %314 : vector<64x32xf32>
    %316 = arith.truncf %315 : vector<64x32xf32> to vector<64x32xbf16>
    %c0_243 = arith.constant 0 : index
    %c0_244 = arith.constant 0 : index
    %317 = vector.load %arg12[%c0_243, %c0_244] : memref<32x128xbf16, #tpu.memory_space<vmem>>, vector<32x128xbf16>
    %cst_245 = arith.constant dense<0.000000e+00> : vector<64x128xf32>
    %318 = tpu.matmul %316, %317, %cst_245 {dimension_numbers = #tpu.dot_dimension_numbers<[1], [0], [0], [1], [0, 0, 1, 1], [], []>} : vector<64x32xbf16>, vector<32x128xbf16>, vector<64x128xf32> -> vector<64x128xf32>
    %c0_246 = arith.constant 0 : index
    %c0_247 = arith.constant 0 : index
    %319 = vector.load %arg13[%c0_246, %c0_247] : memref<1x128xf32, #tpu.memory_space<vmem>>, vector<1x128xf32>
    %320 = vector.broadcast %319 : vector<1x128xf32> to vector<64x128xf32>
    %321 = arith.addf %318, %320 : vector<64x128xf32>
    %c0_248 = arith.constant 0 : index
    %c0_249 = arith.constant 0 : index
    %322 = vector.load %arg14[%c0_248, %c0_249] : memref<32x32xbf16, #tpu.memory_space<vmem>>, vector<32x32xbf16>
    %cst_250 = arith.constant dense<0.000000e+00> : vector<64x32xf32>
    %323 = tpu.matmul %4, %322, %cst_250 {dimension_numbers = #tpu.dot_dimension_numbers<[1], [0], [0], [1], [0, 0, 1, 1], [], []>} : vector<64x32xbf16>, vector<32x32xbf16>, vector<64x32xf32> -> vector<64x32xf32>
    %c0_251 = arith.constant 0 : index
    %c0_252 = arith.constant 0 : index
    %324 = vector.load %arg15[%c0_251, %c0_252] : memref<1x32xf32, #tpu.memory_space<vmem>>, vector<1x32xf32>
    %325 = vector.broadcast %324 : vector<1x32xf32> to vector<64x32xf32>
    %326 = arith.mulf %323, %325 : vector<64x32xf32>
    %c0_253 = arith.constant 0 : index
    %c0_254 = arith.constant 0 : index
    %327 = vector.load %arg16[%c0_253, %c0_254] : memref<1x32xf32, #tpu.memory_space<vmem>>, vector<1x32xf32>
    %328 = vector.broadcast %327 : vector<1x32xf32> to vector<64x32xf32>
    %329 = arith.addf %326, %328 : vector<64x32xf32>
    %cst_255 = arith.constant 0.000000e+00 : f32
    %330 = vector.broadcast %cst_255 : f32 to vector<64x32xf32>
    %331 = arith.maximumf %329, %330 : vector<64x32xf32>
    %332 = arith.truncf %331 : vector<64x32xf32> to vector<64x32xbf16>
    %c0_256 = arith.constant 0 : index
    %c0_257 = arith.constant 0 : index
    %333 = vector.load %arg17[%c0_256, %c0_257] : memref<32x128xbf16, #tpu.memory_space<vmem>>, vector<32x128xbf16>
    %cst_258 = arith.constant dense<0.000000e+00> : vector<64x128xf32>
    %334 = tpu.matmul %332, %333, %cst_258 {dimension_numbers = #tpu.dot_dimension_numbers<[1], [0], [0], [1], [0, 0, 1, 1], [], []>} : vector<64x32xbf16>, vector<32x128xbf16>, vector<64x128xf32> -> vector<64x128xf32>
    %c0_259 = arith.constant 0 : index
    %c0_260 = arith.constant 0 : index
    %335 = vector.load %arg18[%c0_259, %c0_260] : memref<1x128xf32, #tpu.memory_space<vmem>>, vector<1x128xf32>
    %336 = vector.broadcast %335 : vector<1x128xf32> to vector<64x128xf32>
    %337 = arith.addf %334, %336 : vector<64x128xf32>
    %338 = arith.mulf %337, %337 : vector<64x128xf32>
    %cst_261 = arith.constant dense<0.000000e+00> : vector<64xf32>
    %339 = vector.multi_reduction <add>, %338, %cst_261 [1] : vector<64x128xf32> to vector<64xf32>
    %340 = vector.shape_cast %339 : vector<64xf32> to vector<64x1xf32>
    %341 = math.sqrt %340 : vector<64x1xf32>
    %cst_262 = arith.constant 9.99999996E-13 : f32
    %342 = vector.broadcast %cst_262 : f32 to vector<64x1xf32>
    %343 = arith.maximumf %341, %342 : vector<64x1xf32>
    %344 = vector.broadcast %343 : vector<64x1xf32> to vector<64x128xf32>
    %345 = arith.divf %337, %344 : vector<64x128xf32>
    %346 = arith.addf %321, %345 : vector<64x128xf32>
    %c0_263 = arith.constant 0 : index
    %c0_264 = arith.constant 0 : index
    %c0_265 = arith.constant 0 : index
    %347 = vector.load %arg19[%c0_263, %c0_264, %c0_265] : memref<1x64x128xf32, #tpu.memory_space<vmem>>, vector<1x64x128xf32>
    %348 = vector.shape_cast %347 : vector<1x64x128xf32> to vector<64x128xf32>
    %349 = vector.shape_cast %346 : vector<64x128xf32> to vector<1x64x128xf32>
    tpu.vector_store %arg19[%c0_263, %c0_264, %c0_265], %349 {strides = array<i32>} : memref<1x64x128xf32, #tpu.memory_space<vmem>>, vector<1x64x128xf32>,
    return
  }
  func.func @transform_0(%arg0: i32) -> (i32, i32, i32, i32) {
    %c0_i32 = arith.constant 0 : i32
    %c0_i32_0 = arith.constant 0 : i32
    %c0_i32_1 = arith.constant 0 : i32
    %c0_i32_2 = arith.constant 0 : i32
    return %arg0, %c0_i32, %c0_i32_0, %c0_i32_1 : i32, i32, i32, i32
  }
  func.func @transform_1(%arg0: i32) -> (i32, i32, i32) {
    %c0_i32 = arith.constant 0 : i32
    %c0_i32_0 = arith.constant 0 : i32
    %c0_i32_1 = arith.constant 0 : i32
    return %arg0, %c0_i32, %c0_i32_0 : i32, i32, i32
  }
  func.func @transform_2(%arg0: i32) -> (i32, i32) {
    %c0_i32 = arith.constant 0 : i32
    %c0_i32_0 = arith.constant 0 : i32
    %c0_i32_1 = arith.constant 0 : i32
    return %c0_i32, %c0_i32_0 : i32, i32
  }
  func.func @transform_3(%arg0: i32) -> (i32, i32) {
    %c0_i32 = arith.constant 0 : i32
    %c0_i32_0 = arith.constant 0 : i32
    %c0_i32_1 = arith.constant 0 : i32
    return %c0_i32, %c0_i32_0 : i32, i32
  }
  func.func @transform_4(%arg0: i32) -> (i32, i32) {
    %c0_i32 = arith.constant 0 : i32
    %c0_i32_0 = arith.constant 0 : i32
    %c0_i32_1 = arith.constant 0 : i32
    return %c0_i32, %c0_i32_0 : i32, i32
  }
  func.func @transform_5(%arg0: i32) -> (i32, i32, i32) {
    %c0_i32 = arith.constant 0 : i32
    %c0_i32_0 = arith.constant 0 : i32
    %c0_i32_1 = arith.constant 0 : i32
    %c0_i32_2 = arith.constant 0 : i32
    return %c0_i32, %c0_i32_0, %c0_i32_1 : i32, i32, i32
  }
  func.func @transform_6(%arg0: i32) -> (i32, i32, i32) {
    %c0_i32 = arith.constant 0 : i32
    %c0_i32_0 = arith.constant 0 : i32
    %c0_i32_1 = arith.constant 0 : i32
    %c0_i32_2 = arith.constant 0 : i32
    return %c0_i32, %c0_i32_0, %c0_i32_1 : i32, i32, i32
  }
  func.func @transform_7(%arg0: i32) -> (i32, i32, i32) {
    %c0_i32 = arith.constant 0 : i32
    %c0_i32_0 = arith.constant 0 : i32
    %c0_i32_1 = arith.constant 0 : i32
    %c0_i32_2 = arith.constant 0 : i32
    return %c0_i32, %c0_i32_0, %c0_i32_1 : i32, i32, i32
  }
  func.func @transform_8(%arg0: i32) -> (i32, i32, i32) {
    %c0_i32 = arith.constant 0 : i32
    %c0_i32_0 = arith.constant 0 : i32
    %c0_i32_1 = arith.constant 0 : i32
    %c0_i32_2 = arith.constant 0 : i32
    return %c0_i32, %c0_i32_0, %c0_i32_1 : i32, i32, i32
  }
  func.func @transform_9(%arg0: i32) -> (i32, i32) {
    %c0_i32 = arith.constant 0 : i32
    %c0_i32_0 = arith.constant 0 : i32
    %c0_i32_1 = arith.constant 0 : i32
    return %c0_i32, %c0_i32_0 : i32, i32
  }
  func.func @transform_10(%arg0: i32) -> (i32, i32) {
    %c0_i32 = arith.constant 0 : i32
    %c0_i32_0 = arith.constant 0 : i32
    %c0_i32_1 = arith.constant 0 : i32
    return %c0_i32, %c0_i32_0 : i32, i32
  }
  func.func @transform_11(%arg0: i32) -> (i32, i32) {
    %c0_i32 = arith.constant 0 : i32
    %c0_i32_0 = arith.constant 0 : i32
    %c0_i32_1 = arith.constant 0 : i32
    return %c0_i32, %c0_i32_0 : i32, i32
  }
  func.func @transform_12(%arg0: i32) -> (i32, i32) {
    %c0_i32 = arith.constant 0 : i32
    %c0_i32_0 = arith.constant 0 : i32
    %c0_i32_1 = arith.constant 0 : i32
    return %c0_i32, %c0_i32_0 : i32, i32
  }
  func.func @transform_13(%arg0: i32) -> (i32, i32) {
    %c0_i32 = arith.constant 0 : i32
    %c0_i32_0 = arith.constant 0 : i32
    %c0_i32_1 = arith.constant 0 : i32
    return %c0_i32, %c0_i32_0 : i32, i32
  }
  func.func @transform_14(%arg0: i32) -> (i32, i32) {
    %c0_i32 = arith.constant 0 : i32
    %c0_i32_0 = arith.constant 0 : i32
    %c0_i32_1 = arith.constant 0 : i32
    return %c0_i32, %c0_i32_0 : i32, i32
  }
  func.func @transform_15(%arg0: i32) -> (i32, i32) {
    %c0_i32 = arith.constant 0 : i32
    %c0_i32_0 = arith.constant 0 : i32
    %c0_i32_1 = arith.constant 0 : i32
    return %c0_i32, %c0_i32_0 : i32, i32
  }
  func.func @transform_16(%arg0: i32) -> (i32, i32) {
    %c0_i32 = arith.constant 0 : i32
    %c0_i32_0 = arith.constant 0 : i32
    %c0_i32_1 = arith.constant 0 : i32
    return %c0_i32, %c0_i32_0 : i32, i32
  }
  func.func @transform_17(%arg0: i32) -> (i32, i32) {
    %c0_i32 = arith.constant 0 : i32
    %c0_i32_0 = arith.constant 0 : i32
    %c0_i32_1 = arith.constant 0 : i32
    return %c0_i32, %c0_i32_0 : i32, i32
  }
  func.func @transform_18(%arg0: i32) -> (i32, i32, i32) {
    %c0_i32 = arith.constant 0 : i32
    %c0_i32_0 = arith.constant 0 : i32
    %c0_i32_1 = arith.constant 0 : i32
    return %arg0, %c0_i32, %c0_i32_0 : i32, i32, i32
  }
}

</mosaic_0001>

<llo_original>
// kernel: forward.2
$region0: #{forward.2}
  #allocation0 [shape = 'u32[]', space=smem, size = 0x4, offset = 0x4, fixed_abs, tag = 'smem constant byte address 0x4 - core index']
  #allocation1 [shape = 'u32[144,128]{1,0:T(1,128)}', space=vmem, size = 0x12000, scoped, tag = 'internal scratch']
  %s0 = inlined_call_operand.vmem [shape: bf16[128,27], index: 0, kind: input, shape index: {}]
  %s1 = inlined_call_operand.vmem [shape: bf16[27,128], index: 1, kind: input, shape index: {}]
  %s2 = inlined_call_operand.vmem [shape: f32[1,128], index: 2, kind: input, shape index: {}]
  %s3 = inlined_call_operand.vmem [shape: f32[1,128], index: 3, kind: input, shape index: {}]
  %s4 = inlined_call_operand.vmem [shape: f32[128,128], index: 4, kind: output, shape index: {}]
  %s5 = sld [smem:[#allocation0]]
  $region26: #{forward.2} parent=0
    _
  %s7 = ssub.s32 1, %s5
  %s8 = scalar_select 0, %s7, %s5
  // Predicated region
  $region2: #{forward.2} parent=0 // pred_check
    _
  $region3: #{forward.2} parent=0 // pred_check_branch
    %10 = sbr.rel (0) target = $region5
  $region4: #{forward.2} parent=0 // pred_region
    _
  $region5: #{forward.2} parent=0 // pred_fallthru
    _
  // Predicated region
  $region6: #{forward.2} parent=0 // pred_check
    _
  $region7: #{forward.2} parent=0 // pred_check_branch
    %12 = sbr.rel (0) target = $region9
  $region8: #{forward.2} parent=0 // pred_region
    _
  $region9: #{forward.2} parent=0 // pred_fallthru
    _
  // Predicated region
  $region10: #{forward.2} parent=0 // pred_check
    _
  $region11: #{forward.2} parent=0 // pred_check_branch
    %14 = sbr.rel (0) target = $region13
  $region12: #{forward.2} parent=0 // pred_region
    _
  $region13: #{forward.2} parent=0 // pred_fallthru
    _
  // Predicated region
  $region14: #{forward.2} parent=0 // pred_check
    _
  $region15: #{forward.2} parent=0 // pred_check_branch
    %16 = sbr.rel (0) target = $region17
  $region16: #{forward.2} parent=0 // pred_region
    _
  $region17: #{forward.2} parent=0 // pred_fallthru
    _
  %v18 = vld [vmem:[%s0] sm:$0xf]
  %v19 = vld [vmem:[%s0 + $0x4] sm:$0xf]
  %v20 = vld [vmem:[%s0 + $0x8] sm:$0xf]
  %v21 = vld [vmem:[%s0 + $0xc] sm:$0xf]
  %v22 = vld [vmem:[%s0 + $0x10] sm:$0xf]
  %v23 = vld [vmem:[%s0 + $0x14] sm:$0xf]
  %v24 = vld [vmem:[%s0 + $0x18] sm:$0xf]
  %v25 = vld [vmem:[%s0 + $0x1c] sm:$0xf]
  %v26 = vld [vmem:[%s0 + $0x20] sm:$0xf]
  %v27 = vld [vmem:[%s0 + $0x24] sm:$0xf]
  %v28 = vld [vmem:[%s0 + $0x28] sm:$0xf]
  %v29 = vld [vmem:[%s0 + $0x2c] sm:$0xf]
  %v30 = vld [vmem:[%s0 + $0x30] sm:$0xf]
  %v31 = vld [vmem:[%s0 + $0x34] sm:$0xf]
  %v32 = vld [vmem:[%s0 + $0x38] sm:$0xf]
  %v33 = vld [vmem:[%s0 + $0x3c] sm:$0xf]
  %v34 = vld [vmem:[%s1] sm:$0xf]
  %v35 = vld [vmem:[%s1 + $0x4] sm:$0xf]
  %v36 = vld [vmem:[%s1 + $0x8] sm:$0xf]
  %v37 = vld [vmem:[%s1 + $0xc] sm:$0x3]
  %v54 = vunpack.c.l.b16 %v18
  %v55 = vunpack.c.l.b16 %v19
  %v56 = vunpack.c.l.b16 %v20
  %v57 = vunpack.c.l.b16 %v21
  %v58 = vunpack.c.l.b16 %v22
  %v59 = vunpack.c.l.b16 %v23
  %v60 = vunpack.c.l.b16 %v24
  %v61 = vunpack.c.l.b16 %v25
  %v62 = vunpack.c.l.b16 %v26
  %v63 = vunpack.c.l.b16 %v27
  %v64 = vunpack.c.l.b16 %v28
  %v65 = vunpack.c.l.b16 %v29
  %v66 = vunpack.c.l.b16 %v30
  %v67 = vunpack.c.l.b16 %v31
  %v68 = vunpack.c.l.b16 %v32
  %v69 = vunpack.c.l.b16 %v33
  %v70 = vpack.c.b16 %v55, %v54
  %v71 = vpack.c.b16 %v57, %v56
  %v72 = vpack.c.b16 %v59, %v58
  %v73 = vpack.c.b16 %v61, %v60
  %v74 = vpack.c.b16 %v63, %v62
  %v75 = vpack.c.b16 %v65, %v64
  %v76 = vpack.c.b16 %v67, %v66
  %v77 = vpack.c.b16 %v69, %v68
  %v82 = vunpack.c.l.b16 %v34
  %v83 = vunpack.c.l.b16 %v35
  %v84 = vunpack.c.l.b16 %v36
  %v85 = vunpack.c.l.b16 %v37
  %v86 = vpack.c.b16 %v83, %v82
  %v87 = vpack.c.b16 %v85, %v84
  %vm89 = vcmask 220160
  %v91 = vsel %vm89, %v70, 0
  %v94 = vsel %vm89, %v71, 0
  %v97 = vsel %vm89, %v72, 0
  %v100 = vsel %vm89, %v73, 0
  %v103 = vsel %vm89, %v74, 0
  %v106 = vsel %vm89, %v75, 0
  %v109 = vsel %vm89, %v76, 0
  %v112 = vsel %vm89, %v77, 0
  %vm114 = vcmask 1044480
  %vm115 = vcmask 1045504
  %v116 = vsel %vm114, 4294967295, 65535
  %v117 = vsel %vm115, %v116, 0
  %v119 = vand.u32 %v87, %v117
  %121 = vmatprep.subr.bf16.mxu0 0
  %122 = vmatpush1.bf16.msra.mxu0 %v86
  %123 = vmatprep.subr.bf16.mxu0 0
  %124 = vmatpush1.bf16.msra.mxu0 %v119
  %125 = vmatprep.subr.bf16.mxu0 0
  %126 = vmatpush1.bf16.msra.mxu0 0
  %127 = vmatprep.subr.bf16.mxu0 0
  %128 = vmatpush1.bf16.msra.mxu0 0
  %129 = vmatprep.subr.bf16.mxu0 0
  %130 = vmatpush1.bf16.msra.mxu0 0
  %131 = vmatprep.subr.bf16.mxu0 0
  %132 = vmatpush1.bf16.msra.mxu0 0
  %133 = vmatprep.subr.bf16.mxu0 0
  %134 = vmatpush1.bf16.msra.mxu0 0
  %135 = vmatprep.subr.bf16.mxu0 0
  %136 = vmatpush1.bf16.msra.mxu0 0
  %137 = vmatprep.subr.bf16.mxu0 0
  %138 = vmatpush1.bf16.msra.mxu0 0
  %139 = vmatprep.subr.bf16.mxu0 0
  %140 = vmatpush1.bf16.msra.mxu0 0
  %141 = vmatprep.subr.bf16.mxu0 0
  %142 = vmatpush1.bf16.msra.mxu0 0
  %143 = vmatprep.subr.bf16.mxu0 0
  %144 = vmatpush1.bf16.msra.mxu0 0
  %145 = vmatprep.subr.bf16.mxu0 0
  %146 = vmatpush1.bf16.msra.mxu0 0
  %147 = vmatprep.subr.bf16.mxu0 0
  %148 = vmatpush1.bf16.msra.mxu0 0
  %149 = vmatprep.subr.bf16.mxu0 0
  %150 = vmatpush1.bf16.msra.mxu0 0
  %151 = vmatprep.subr.bf16.mxu0 0
  %152 = vmatpush1.bf16.msra.mxu0 0
  %153 = vmatprep.mubr.bf16.mxu0 0
  %154 = vmatmul.mubr.bf16.gmra.mrb[0].mxu0 %v91
  %v155 = vpop.f32.mrb[0].mxu0
  %v156 = vadd.f32 0.0, %v155
  %v157 = vpop.f32.mrb[0].mxu0
  %v158 = vpop.f32.mrb[0].mxu0
  %v159 = vadd.f32 0.0, %v158
  %v160 = vpop.f32.mrb[0].mxu0
  %161 = vmatprep.mubr.bf16.mxu0 0
  %162 = vmatmul.mubr.bf16.gmra.mrb[0].mxu0 %v94
  %v163 = vpop.f32.mrb[0].mxu0
  %v164 = vadd.f32 0.0, %v163
  %v165 = vpop.f32.mrb[0].mxu0
  %v166 = vpop.f32.mrb[0].mxu0
  %v167 = vadd.f32 0.0, %v166
  %v168 = vpop.f32.mrb[0].mxu0
  %169 = vmatprep.mubr.bf16.mxu0 0
  %170 = vmatmul.mubr.bf16.gmra.mrb[0].mxu0 %v97
  %v171 = vpop.f32.mrb[0].mxu0
  %v172 = vadd.f32 0.0, %v171
  %v173 = vpop.f32.mrb[0].mxu0
  %v174 = vpop.f32.mrb[0].mxu0
  %v175 = vadd.f32 0.0, %v174
  %v176 = vpop.f32.mrb[0].mxu0
  %177 = vmatprep.mubr.bf16.mxu0 0
  %178 = vmatmul.mubr.bf16.gmra.mrb[0].mxu0 %v100
  %v179 = vpop.f32.mrb[0].mxu0
  %v180 = vadd.f32 0.0, %v179
  %v181 = vpop.f32.mrb[0].mxu0
  %v182 = vpop.f32.mrb[0].mxu0
  %v183 = vadd.f32 0.0, %v182
  %v184 = vpop.f32.mrb[0].mxu0
  %185 = vmatprep.mubr.bf16.mxu0 0
  %186 = vmatmul.mubr.bf16.gmra.mrb[0].mxu0 %v103
  %v187 = vpop.f32.mrb[0].mxu0
  %v188 = vadd.f32 0.0, %v187
  %v189 = vpop.f32.mrb[0].mxu0
  %v190 = vpop.f32.mrb[0].mxu0
  %v191 = vadd.f32 0.0, %v190
  %v192 = vpop.f32.mrb[0].mxu0
  %193 = vmatprep.mubr.bf16.mxu0 0
  %194 = vmatmul.mubr.bf16.gmra.mrb[0].mxu0 %v106
  %v195 = vpop.f32.mrb[0].mxu0
  %v196 = vadd.f32 0.0, %v195
  %v197 = vpop.f32.mrb[0].mxu0
  %v198 = vpop.f32.mrb[0].mxu0
  %v199 = vadd.f32 0.0, %v198
  %v200 = vpop.f32.mrb[0].mxu0
  %201 = vmatprep.mubr.bf16.mxu0 0
  %202 = vmatmul.mubr.bf16.gmra.mrb[0].mxu0 %v109
  %v203 = vpop.f32.mrb[0].mxu0
  %v204 = vadd.f32 0.0, %v203
  %v205 = vpop.f32.mrb[0].mxu0
  %v206 = vpop.f32.mrb[0].mxu0
  %v207 = vadd.f32 0.0, %v206
  %v208 = vpop.f32.mrb[0].mxu0
  %209 = vmatprep.mubr.bf16.mxu0 0
  %210 = vmatmul.mubr.bf16.gmra.mrb[0].mxu0 %v112
  %v211 = vpop.f32.mrb[0].mxu0
  %v212 = vadd.f32 0.0, %v211
  %v213 = vpop.f32.mrb[0].mxu0
  %v214 = vpop.f32.mrb[0].mxu0
  %v215 = vadd.f32 0.0, %v214
  %v216 = vpop.f32.mrb[0].mxu0
  %217 = vdwg.mxu0
  %v218 = vld [vmem:[%s2] sm:$0x1]
  %v220 = vlaneseq
  %v221 = vshrl.u32 %v220, 7
  %v222 = vsub.s32 0, %v221
  %v223 = vrot.slane %v218, %v222
  %v225 = vmul.f32 %v156, %v223
  %v226 = vmul.f32 %v159, %v223
  %v227 = vmul.f32 %v164, %v223
  %v228 = vmul.f32 %v167, %v223
  %v229 = vmul.f32 %v172, %v223
  %v230 = vmul.f32 %v175, %v223
  %v231 = vmul.f32 %v180, %v223
  %v232 = vmul.f32 %v183, %v223
  %v233 = vmul.f32 %v188, %v223
  %v234 = vmul.f32 %v191, %v223
  %v235 = vmul.f32 %v196, %v223
  %v236 = vmul.f32 %v199, %v223
  %v237 = vmul.f32 %v204, %v223
  %v238 = vmul.f32 %v207, %v223
  %v239 = vmul.f32 %v212, %v223
  %v240 = vmul.f32 %v215, %v223
  %v241 = vld [vmem:[%s3] sm:$0x1]
  %v243 = vlaneseq
  %v244 = vshrl.u32 %v243, 7
  %v245 = vsub.s32 0, %v244
  %v246 = vrot.slane %v241, %v245
  %v248 = vadd.f32 %v225, %v246
  %v249 = vadd.f32 %v226, %v246
  %v250 = vadd.f32 %v227, %v246
  %v251 = vadd.f32 %v228, %v246
  %v252 = vadd.f32 %v229, %v246
  %v253 = vadd.f32 %v230, %v246
  %v254 = vadd.f32 %v231, %v246
  %v255 = vadd.f32 %v232, %v246
  %v256 = vadd.f32 %v233, %v246
  %v257 = vadd.f32 %v234, %v246
  %v258 = vadd.f32 %v235, %v246
  %v259 = vadd.f32 %v236, %v246
  %v260 = vadd.f32 %v237, %v246
  %v261 = vadd.f32 %v238, %v246
  %v262 = vadd.f32 %v239, %v246
  %v263 = vadd.f32 %v240, %v246
  %v264 = vmax.f32 %v248, 0.0
  %v265 = vmax.f32 %v249, 0.0
  %v266 = vmax.f32 %v250, 0.0
  %v267 = vmax.f32 %v251, 0.0
  %v268 = vmax.f32 %v252, 0.0
  %v269 = vmax.f32 %v253, 0.0
  %v270 = vmax.f32 %v254, 0.0
  %v271 = vmax.f32 %v255, 0.0
  %v272 = vmax.f32 %v256, 0.0
  %v273 = vmax.f32 %v257, 0.0
  %v274 = vmax.f32 %v258, 0.0
  %v275 = vmax.f32 %v259, 0.0
  %v276 = vmax.f32 %v260, 0.0
  %v277 = vmax.f32 %v261, 0.0
  %v278 = vmax.f32 %v262, 0.0
  %v279 = vmax.f32 %v263, 0.0
  %280 = vst [vmem:[%s4] sm:$0xff] %v264
  %281 = vst [vmem:[%s4 + $0x8] sm:$0xff] %v265
  %282 = vst [vmem:[%s4 + $0x10] sm:$0xff] %v266
  %283 = vst [vmem:[%s4 + $0x18] sm:$0xff] %v267
  %284 = vst [vmem:[%s4 + $0x20] sm:$0xff] %v268
  %285 = vst [vmem:[%s4 + $0x28] sm:$0xff] %v269
  %286 = vst [vmem:[%s4 + $0x30] sm:$0xff] %v270
  %287 = vst [vmem:[%s4 + $0x38] sm:$0xff] %v271
  %288 = vst [vmem:[%s4 + $0x40] sm:$0xff] %v272
  %289 = vst [vmem:[%s4 + $0x48] sm:$0xff] %v273
  %290 = vst [vmem:[%s4 + $0x50] sm:$0xff] %v274
  %291 = vst [vmem:[%s4 + $0x58] sm:$0xff] %v275
  %292 = vst [vmem:[%s4 + $0x60] sm:$0xff] %v276
  %293 = vst [vmem:[%s4 + $0x68] sm:$0xff] %v277
  %294 = vst [vmem:[%s4 + $0x70] sm:$0xff] %v278
  %295 = vst [vmem:[%s4 + $0x78] sm:$0xff] %v279
  // Predicated region
  $region18: #{forward.2} parent=0 // pred_check
    _
  $region19: #{forward.2} parent=0 // pred_check_branch
    %297 = sbr.rel (0) target = $region21
  $region20: #{forward.2} parent=0 // pred_region
    _
  $region21: #{forward.2} parent=0 // pred_fallthru
    _
  // Predicated region
  $region22: #{forward.2} parent=0 // pred_check
    _
  $region23: #{forward.2} parent=0 // pred_check_branch
    %299 = sbr.rel (0) target = $region25
  $region24: #{forward.2} parent=0 // pred_region
    _
  $region25: #{forward.2} parent=0 // pred_fallthru
    _

// kernel: forward.3
$region0: #{forward.3}
  #allocation0 [shape = 'u32[]', space=smem, size = 0x4, offset = 0x4, fixed_abs, tag = 'smem constant byte address 0x4 - core index']
  #allocation1 [shape = 'u32[144,128]{1,0:T(1,128)}', space=vmem, size = 0x12000, scoped, tag = 'internal scratch']
  %s0 = inlined_call_operand.vmem [shape: bf16[2,44,44,32], index: 0, kind: input, shape index: {}]
  %s1 = inlined_call_operand.vmem [shape: f32[2,1,32], index: 1, kind: input, shape index: {}]
  %s2 = inlined_call_operand.vmem [shape: bf16[32,32], index: 2, kind: input, shape index: {}]
  %s3 = inlined_call_operand.vmem [shape: f32[1,32], index: 3, kind: input, shape index: {}]
  %s4 = inlined_call_operand.vmem [shape: f32[1,32], index: 4, kind: input, shape index: {}]
  %s5 = inlined_call_operand.vmem [shape: bf16[27,32,32], index: 5, kind: input, shape index: {}]
  %s6 = inlined_call_operand.vmem [shape: f32[3,1,32], index: 6, kind: input, shape index: {}]
  %s7 = inlined_call_operand.vmem [shape: f32[3,1,32], index: 7, kind: input, shape index: {}]
  %s8 = inlined_call_operand.vmem [shape: bf16[4,32,32], index: 8, kind: input, shape index: {}]
  %s9 = inlined_call_operand.vmem [shape: f32[1,32], index: 9, kind: input, shape index: {}]
  %s10 = inlined_call_operand.vmem [shape: f32[1,32], index: 10, kind: input, shape index: {}]
  %s11 = inlined_call_operand.vmem [shape: bf16[32,128], index: 11, kind: input, shape index: {}]
  %s12 = inlined_call_operand.vmem [shape: f32[1,128], index: 12, kind: input, shape index: {}]
  %s13 = inlined_call_operand.vmem [shape: bf16[32,32], index: 13, kind: input, shape index: {}]
  %s14 = inlined_call_operand.vmem [shape: f32[1,32], index: 14, kind: input, shape index: {}]
  %s15 = inlined_call_operand.vmem [shape: f32[1,32], index: 15, kind: input, shape index: {}]
  %s16 = inlined_call_operand.vmem [shape: bf16[32,128], index: 16, kind: input, shape index: {}]
  %s17 = inlined_call_operand.vmem [shape: f32[1,128], index: 17, kind: input, shape index: {}]
  %s18 = inlined_call_operand.vmem [shape: f32[2,64,128], index: 18, kind: output, shape index: {}]
  %s19 = sld [smem:[#allocation0]]
  $region105: #{forward.3} parent=0
    _
  %s21 = ssub.s32 1, %s19
  %s22 = scalar_select 0, %s21, %s19
  loop: start=0, step=1, limit=4
  $region2: #{forward.3} parent=0 // loop_pre_header
    _
  $region3: #{forward.3} parent=0 // loop_header
    %s24 = sphi 0, %s28
    %p25 = scmp.ge.s32.totalorder %s24, 4
    %s34 = sphi 0, %s36
    %s37 = sphi 0, %s34
    %s38 = sphi 0, %s37
    %s54 = sphi 0, %s38
    %s60 = sphi 0, %s62
    %s63 = sphi 0, %s60
    %s64 = sphi 0, %s63
    %s80 = sphi 0, %s64
    %s84 = sphi 0, %s84
    %s86 = sphi 0, %s84
    %s87 = sphi 0, %s86
    %s101 = sphi 0, %s87
    %s105 = sphi 0, %s105
    %s107 = sphi 0, %s105
    %s108 = sphi 0, %s107
    %s122 = sphi 0, %s108
    %s126 = sphi 0, %s126
    %s128 = sphi 0, %s126
    %s129 = sphi 0, %s128
    %s143 = sphi 0, %s129
    %s147 = sphi 0, %s147
    %s149 = sphi 0, %s147
    %s150 = sphi 0, %s149
    %s164 = sphi 0, %s150
    %s168 = sphi 0, %s168
    %s170 = sphi 0, %s168
    %s171 = sphi 0, %s170
    %s185 = sphi 0, %s171
    %s189 = sphi 0, %s189
    %s191 = sphi 0, %s189
    %s192 = sphi 0, %s191
    %s206 = sphi 0, %s192
    %s210 = sphi 0, %s210
    %s212 = sphi 0, %s210
    %s213 = sphi 0, %s212
    %s227 = sphi 0, %s213
    %s231 = sphi 0, %s231
    %s233 = sphi 0, %s231
    %s234 = sphi 0, %s233
    %s248 = sphi 0, %s234
    %s252 = sphi 0, %s252
    %s254 = sphi 0, %s252
    %s255 = sphi 0, %s254
    %s269 = sphi 0, %s255
    %s273 = sphi 0, %s273
    %s275 = sphi 0, %s273
    %s276 = sphi 0, %s275
    %s290 = sphi 0, %s276
    %s294 = sphi 0, %s294
    %s296 = sphi 0, %s294
    %s297 = sphi 0, %s296
    %s311 = sphi 0, %s297
    %s315 = sphi 0, %s315
    %s317 = sphi 0, %s315
    %s318 = sphi 0, %s317
    %s332 = sphi 0, %s318
    %s336 = sphi 0, %s336
    %s338 = sphi 0, %s336
    %s339 = sphi 0, %s338
    %s353 = sphi 0, %s339
    %s357 = sphi 0, %s357
    %s359 = sphi 0, %s357
    %s360 = sphi 0, %s359
    %s374 = sphi 0, %s360
    %s378 = sphi 0, %s378
    %s380 = sphi 0, %s378
    %s381 = sphi 0, %s380
    %s395 = sphi 0, %s381
    %s399 = sphi 0, %s399
    %s401 = sphi 0, %s399
    %s402 = sphi 0, %s401
    %s416 = sphi 0, %s402
    %s422 = sphi 0, %s424
    %s425 = sphi 0, %s422
    %s426 = sphi 0, %s425
    %s442 = sphi 0, %s426
  $region4: #{forward.3} parent=0 // loop_header_branch
    %27 = sbr.rel (%p25) target = $region8
  $region5: #{forward.3} parent=0 // loop_body
    %s29 = ssub.s32 %s24, 1
    %s30 = ssub.s32 %s24, 2
    %s31 = sadd.s32 %s24, 1
    %s32 = ssub.s32 %s24, %s31
    %p33 = scmp.eq.s32.totalorder %s32, 0
    %s35 = sadd.s32 %s34, 1
    %s36 = scalar_select %p33, %s34, %s35
    %p39 = pneg %p33
    %p40 = scmp.eq.s32.totalorder %s24, 1
    %p41 = por %p39, %p40
    %p42 = scmp.ne.s32.totalorder %s34, %s37
    %p43 = scmp.eq.s32.totalorder %s24, 0
    %p44 = por %p42, %p43
    %p45 = scmp.ne.s32.totalorder %s34, %s37
    %p46 = scmp.eq.s32.totalorder %s29, 1
    %p47 = por %p45, %p46
    %p48 = scmp.ne.s32.totalorder %s37, %s38
    %p49 = scmp.eq.s32.totalorder %s29, 0
    %p50 = por %p48, %p49
    %p51 = scmp.ne.s32.totalorder %s37, %s38
    %p52 = scmp.eq.s32.totalorder %s30, 1
    %p53 = por %p51, %p52
    %p55 = scmp.ne.s32.totalorder %s38, %s54
    %p56 = scmp.eq.s32.totalorder %s30, 0
    %p57 = por %p55, %p56
    %s58 = ssub.s32 %s24, %s31
    %p59 = scmp.eq.s32.totalorder %s58, 0
    %s61 = sadd.s32 %s60, 1
    %s62 = scalar_select %p59, %s60, %s61
    %p65 = pneg %p59
    %p66 = scmp.eq.s32.totalorder %s24, 1
    %p67 = por %p65, %p66
    %p68 = scmp.ne.s32.totalorder %s60, %s63
    %p69 = scmp.eq.s32.totalorder %s24, 0
    %p70 = por %p68, %p69
    %p71 = scmp.ne.s32.totalorder %s60, %s63
    %p72 = scmp.eq.s32.totalorder %s29, 1
    %p73 = por %p71, %p72
    %p74 = scmp.ne.s32.totalorder %s63, %s64
    %p75 = scmp.eq.s32.totalorder %s29, 0
    %p76 = por %p74, %p75
    %p77 = scmp.ne.s32.totalorder %s63, %s64
    %p78 = scmp.eq.s32.totalorder %s30, 1
    %p79 = por %p77, %p78
    %p81 = scmp.ne.s32.totalorder %s64, %s80
    %p82 = scmp.eq.s32.totalorder %s30, 0
    %p83 = por %p81, %p82
    %s85 = sadd.s32 %s84, 1
    %p88 = scmp.eq.s32.totalorder %s24, 1
    %p89 = scmp.ne.s32.totalorder %s84, %s86
    %p90 = scmp.eq.s32.totalorder %s24, 0
    %p91 = por %p89, %p90
    %p92 = scmp.ne.s32.totalorder %s84, %s86
    %p93 = scmp.eq.s32.totalorder %s29, 1
    %p94 = por %p92, %p93
    %p95 = scmp.ne.s32.totalorder %s86, %s87
    %p96 = scmp.eq.s32.totalorder %s29, 0
    %p97 = por %p95, %p96
    %p98 = scmp.ne.s32.totalorder %s86, %s87
    %p99 = scmp.eq.s32.totalorder %s30, 1
    %p100 = por %p98, %p99
    %p102 = scmp.ne.s32.totalorder %s87, %s101
    %p103 = scmp.eq.s32.totalorder %s30, 0
    %p104 = por %p102, %p103
    %s106 = sadd.s32 %s105, 1
    %p109 = scmp.eq.s32.totalorder %s24, 1
    %p110 = scmp.ne.s32.totalorder %s105, %s107
    %p111 = scmp.eq.s32.totalorder %s24, 0
    %p112 = por %p110, %p111
    %p113 = scmp.ne.s32.totalorder %s105, %s107
    %p114 = scmp.eq.s32.totalorder %s29, 1
    %p115 = por %p113, %p114
    %p116 = scmp.ne.s32.totalorder %s107, %s108
    %p117 = scmp.eq.s32.totalorder %s29, 0
    %p118 = por %p116, %p117
    %p119 = scmp.ne.s32.totalorder %s107, %s108
    %p120 = scmp.eq.s32.totalorder %s30, 1
    %p121 = por %p119, %p120
    %p123 = scmp.ne.s32.totalorder %s108, %s122
    %p124 = scmp.eq.s32.totalorder %s30, 0
    %p125 = por %p123, %p124
    %s127 = sadd.s32 %s126, 1
    %p130 = scmp.eq.s32.totalorder %s24, 1
    %p131 = scmp.ne.s32.totalorder %s126, %s128
    %p132 = scmp.eq.s32.totalorder %s24, 0
    %p133 = por %p131, %p132
    %p134 = scmp.ne.s32.totalorder %s126, %s128
    %p135 = scmp.eq.s32.totalorder %s29, 1
    %p136 = por %p134, %p135
    %p137 = scmp.ne.s32.totalorder %s128, %s129
    %p138 = scmp.eq.s32.totalorder %s29, 0
    %p139 = por %p137, %p138
    %p140 = scmp.ne.s32.totalorder %s128, %s129
    %p141 = scmp.eq.s32.totalorder %s30, 1
    %p142 = por %p140, %p141
    %p144 = scmp.ne.s32.totalorder %s129, %s143
    %p145 = scmp.eq.s32.totalorder %s30, 0
    %p146 = por %p144, %p145
    %s148 = sadd.s32 %s147, 1
    %p151 = scmp.eq.s32.totalorder %s24, 1
    %p152 = scmp.ne.s32.totalorder %s147, %s149
    %p153 = scmp.eq.s32.totalorder %s24, 0
    %p154 = por %p152, %p153
    %p155 = scmp.ne.s32.totalorder %s147, %s149
    %p156 = scmp.eq.s32.totalorder %s29, 1
    %p157 = por %p155, %p156
    %p158 = scmp.ne.s32.totalorder %s149, %s150
    %p159 = scmp.eq.s32.totalorder %s29, 0
    %p160 = por %p158, %p159
    %p161 = scmp.ne.s32.totalorder %s149, %s150
    %p162 = scmp.eq.s32.totalorder %s30, 1
    %p163 = por %p161, %p162
    %p165 = scmp.ne.s32.totalorder %s150, %s164
    %p166 = scmp.eq.s32.totalorder %s30, 0
    %p167 = por %p165, %p166
    %s169 = sadd.s32 %s168, 1
    %p172 = scmp.eq.s32.totalorder %s24, 1
    %p173 = scmp.ne.s32.totalorder %s168, %s170
    %p174 = scmp.eq.s32.totalorder %s24, 0
    %p175 = por %p173, %p174
    %p176 = scmp.ne.s32.totalorder %s168, %s170
    %p177 = scmp.eq.s32.totalorder %s29, 1
    %p178 = por %p176, %p177
    %p179 = scmp.ne.s32.totalorder %s170, %s171
    %p180 = scmp.eq.s32.totalorder %s29, 0
    %p181 = por %p179, %p180
    %p182 = scmp.ne.s32.totalorder %s170, %s171
    %p183 = scmp.eq.s32.totalorder %s30, 1
    %p184 = por %p182, %p183
    %p186 = scmp.ne.s32.totalorder %s171, %s185
    %p187 = scmp.eq.s32.totalorder %s30, 0
    %p188 = por %p186, %p187
    %s190 = sadd.s32 %s189, 1
    %p193 = scmp.eq.s32.totalorder %s24, 1
    %p194 = scmp.ne.s32.totalorder %s189, %s191
    %p195 = scmp.eq.s32.totalorder %s24, 0
    %p196 = por %p194, %p195
    %p197 = scmp.ne.s32.totalorder %s189, %s191
    %p198 = scmp.eq.s32.totalorder %s29, 1
    %p199 = por %p197, %p198
    %p200 = scmp.ne.s32.totalorder %s191, %s192
    %p201 = scmp.eq.s32.totalorder %s29, 0
    %p202 = por %p200, %p201
    %p203 = scmp.ne.s32.totalorder %s191, %s192
    %p204 = scmp.eq.s32.totalorder %s30, 1
    %p205 = por %p203, %p204
    %p207 = scmp.ne.s32.totalorder %s192, %s206
    %p208 = scmp.eq.s32.totalorder %s30, 0
    %p209 = por %p207, %p208
    %s211 = sadd.s32 %s210, 1
    %p214 = scmp.eq.s32.totalorder %s24, 1
    %p215 = scmp.ne.s32.totalorder %s210, %s212
    %p216 = scmp.eq.s32.totalorder %s24, 0
    %p217 = por %p215, %p216
    %p218 = scmp.ne.s32.totalorder %s210, %s212
    %p219 = scmp.eq.s32.totalorder %s29, 1
    %p220 = por %p218, %p219
    %p221 = scmp.ne.s32.totalorder %s212, %s213
    %p222 = scmp.eq.s32.totalorder %s29, 0
    %p223 = por %p221, %p222
    %p224 = scmp.ne.s32.totalorder %s212, %s213
    %p225 = scmp.eq.s32.totalorder %s30, 1
    %p226 = por %p224, %p225
    %p228 = scmp.ne.s32.totalorder %s213, %s227
    %p229 = scmp.eq.s32.totalorder %s30, 0
    %p230 = por %p228, %p229
    %s232 = sadd.s32 %s231, 1
    %p235 = scmp.eq.s32.totalorder %s24, 1
    %p236 = scmp.ne.s32.totalorder %s231, %s233
    %p237 = scmp.eq.s32.totalorder %s24, 0
    %p238 = por %p236, %p237
    %p239 = scmp.ne.s32.totalorder %s231, %s233
    %p240 = scmp.eq.s32.totalorder %s29, 1
    %p241 = por %p239, %p240
    %p242 = scmp.ne.s32.totalorder %s233, %s234
    %p243 = scmp.eq.s32.totalorder %s29, 0
    %p244 = por %p242, %p243
    %p245 = scmp.ne.s32.totalorder %s233, %s234
    %p246 = scmp.eq.s32.totalorder %s30, 1
    %p247 = por %p245, %p246
    %p249 = scmp.ne.s32.totalorder %s234, %s248
    %p250 = scmp.eq.s32.totalorder %s30, 0
    %p251 = por %p249, %p250
    %s253 = sadd.s32 %s252, 1
    %p256 = scmp.eq.s32.totalorder %s24, 1
    %p257 = scmp.ne.s32.totalorder %s252, %s254
    %p258 = scmp.eq.s32.totalorder %s24, 0
    %p259 = por %p257, %p258
    %p260 = scmp.ne.s32.totalorder %s252, %s254
    %p261 = scmp.eq.s32.totalorder %s29, 1
    %p262 = por %p260, %p261
    %p263 = scmp.ne.s32.totalorder %s254, %s255
    %p264 = scmp.eq.s32.totalorder %s29, 0
    %p265 = por %p263, %p264
    %p266 = scmp.ne.s32.totalorder %s254, %s255
    %p267 = scmp.eq.s32.totalorder %s30, 1
    %p268 = por %p266, %p267
    %p270 = scmp.ne.s32.totalorder %s255, %s269
    %p271 = scmp.eq.s32.totalorder %s30, 0
    %p272 = por %p270, %p271
    %s274 = sadd.s32 %s273, 1
    %p277 = scmp.eq.s32.totalorder %s24, 1
    %p278 = scmp.ne.s32.totalorder %s273, %s275
    %p279 = scmp.eq.s32.totalorder %s24, 0
    %p280 = por %p278, %p279
    %p281 = scmp.ne.s32.totalorder %s273, %s275
    %p282 = scmp.eq.s32.totalorder %s29, 1
    %p283 = por %p281, %p282
    %p284 = scmp.ne.s32.totalorder %s275, %s276
    %p285 = scmp.eq.s32.totalorder %s29, 0
    %p286 = por %p284, %p285
    %p287 = scmp.ne.s32.totalorder %s275, %s276
    %p288 = scmp.eq.s32.totalorder %s30, 1
    %p289 = por %p287, %p288
    %p291 = scmp.ne.s32.totalorder %s276, %s290
    %p292 = scmp.eq.s32.totalorder %s30, 0
    %p293 = por %p291, %p292
    %s295 = sadd.s32 %s294, 1
    %p298 = scmp.eq.s32.totalorder %s24, 1
    %p299 = scmp.ne.s32.totalorder %s294, %s296
    %p300 = scmp.eq.s32.totalorder %s24, 0
    %p301 = por %p299, %p300
    %p302 = scmp.ne.s32.totalorder %s294, %s296
    %p303 = scmp.eq.s32.totalorder %s29, 1
    %p304 = por %p302, %p303
    %p305 = scmp.ne.s32.totalorder %s296, %s297
    %p306 = scmp.eq.s32.totalorder %s29, 0
    %p307 = por %p305, %p306
    %p308 = scmp.ne.s32.totalorder %s296, %s297
    %p309 = scmp.eq.s32.totalorder %s30, 1
    %p310 = por %p308, %p309
    %p312 = scmp.ne.s32.totalorder %s297, %s311
    %p313 = scmp.eq.s32.totalorder %s30, 0
    %p314 = por %p312, %p313
    %s316 = sadd.s32 %s315, 1
    %p319 = scmp.eq.s32.totalorder %s24, 1
    %p320 = scmp.ne.s32.totalorder %s315, %s317
    %p321 = scmp.eq.s32.totalorder %s24, 0
    %p322 = por %p320, %p321
    %p323 = scmp.ne.s32.totalorder %s315, %s317
    %p324 = scmp.eq.s32.totalorder %s29, 1
    %p325 = por %p323, %p324
    %p326 = scmp.ne.s32.totalorder %s317, %s318
    %p327 = scmp.eq.s32.totalorder %s29, 0
    %p328 = por %p326, %p327
    %p329 = scmp.ne.s32.totalorder %s317, %s318
    %p330 = scmp.eq.s32.totalorder %s30, 1
    %p331 = por %p329, %p330
    %p333 = scmp.ne.s32.totalorder %s318, %s332
    %p334 = scmp.eq.s32.totalorder %s30, 0
    %p335 = por %p333, %p334
    %s337 = sadd.s32 %s336, 1
    %p340 = scmp.eq.s32.totalorder %s24, 1
    %p341 = scmp.ne.s32.totalorder %s336, %s338
    %p342 = scmp.eq.s32.totalorder %s24, 0
    %p343 = por %p341, %p342
    %p344 = scmp.ne.s32.totalorder %s336, %s338
    %p345 = scmp.eq.s32.totalorder %s29, 1
    %p346 = por %p344, %p345
    %p347 = scmp.ne.s32.totalorder %s338, %s339
    %p348 = scmp.eq.s32.totalorder %s29, 0
    %p349 = por %p347, %p348
    %p350 = scmp.ne.s32.totalorder %s338, %s339
    %p351 = scmp.eq.s32.totalorder %s30, 1
    %p352 = por %p350, %p351
    %p354 = scmp.ne.s32.totalorder %s339, %s353
    %p355 = scmp.eq.s32.totalorder %s30, 0
    %p356 = por %p354, %p355
    %s358 = sadd.s32 %s357, 1
    %p361 = scmp.eq.s32.totalorder %s24, 1
    %p362 = scmp.ne.s32.totalorder %s357, %s359
    %p363 = scmp.eq.s32.totalorder %s24, 0
    %p364 = por %p362, %p363
    %p365 = scmp.ne.s32.totalorder %s357, %s359
    %p366 = scmp.eq.s32.totalorder %s29, 1
    %p367 = por %p365, %p366
    %p368 = scmp.ne.s32.totalorder %s359, %s360
    %p369 = scmp.eq.s32.totalorder %s29, 0
    %p370 = por %p368, %p369
    %p371 = scmp.ne.s32.totalorder %s359, %s360
    %p372 = scmp.eq.s32.totalorder %s30, 1
    %p373 = por %p371, %p372
    %p375 = scmp.ne.s32.totalorder %s360, %s374
    %p376 = scmp.eq.s32.totalorder %s30, 0
    %p377 = por %p375, %p376
    %s379 = sadd.s32 %s378, 1
    %p382 = scmp.eq.s32.totalorder %s24, 1
    %p383 = scmp.ne.s32.totalorder %s378, %s380
    %p384 = scmp.eq.s32.totalorder %s24, 0
    %p385 = por %p383, %p384
    %p386 = scmp.ne.s32.totalorder %s378, %s380
    %p387 = scmp.eq.s32.totalorder %s29, 1
    %p388 = por %p386, %p387
    %p389 = scmp.ne.s32.totalorder %s380, %s381
    %p390 = scmp.eq.s32.totalorder %s29, 0
    %p391 = por %p389, %p390
    %p392 = scmp.ne.s32.totalorder %s380, %s381
    %p393 = scmp.eq.s32.totalorder %s30, 1
    %p394 = por %p392, %p393
    %p396 = scmp.ne.s32.totalorder %s381, %s395
    %p397 = scmp.eq.s32.totalorder %s30, 0
    %p398 = por %p396, %p397
    %s400 = sadd.s32 %s399, 1
    %p403 = scmp.eq.s32.totalorder %s24, 1
    %p404 = scmp.ne.s32.totalorder %s399, %s401
    %p405 = scmp.eq.s32.totalorder %s24, 0
    %p406 = por %p404, %p405
    %p407 = scmp.ne.s32.totalorder %s399, %s401
    %p408 = scmp.eq.s32.totalorder %s29, 1
    %p409 = por %p407, %p408
    %p410 = scmp.ne.s32.totalorder %s401, %s402
    %p411 = scmp.eq.s32.totalorder %s29, 0
    %p412 = por %p410, %p411
    %p413 = scmp.ne.s32.totalorder %s401, %s402
    %p414 = scmp.eq.s32.totalorder %s30, 1
    %p415 = por %p413, %p414
    %p417 = scmp.ne.s32.totalorder %s402, %s416
    %p418 = scmp.eq.s32.totalorder %s30, 0
    %p419 = por %p417, %p418
    %s420 = ssub.s32 %s24, %s31
    %p421 = scmp.eq.s32.totalorder %s420, 0
    %s423 = sadd.s32 %s422, 1
    %s424 = scalar_select %p421, %s422, %s423
    %p427 = pneg %p421
    %p428 = scmp.eq.s32.totalorder %s24, 1
    %p429 = por %p427, %p428
    %p430 = scmp.ne.s32.totalorder %s422, %s425
    %p431 = scmp.eq.s32.totalorder %s24, 0
    %p432 = por %p430, %p431
    %p433 = scmp.ne.s32.totalorder %s422, %s425
    %p434 = scmp.eq.s32.totalorder %s29, 1
    %p435 = por %p433, %p434
    %p436 = scmp.ne.s32.totalorder %s425, %s426
    %p437 = scmp.eq.s32.totalorder %s29, 0
    %p438 = por %p436, %p437
    %p439 = scmp.ne.s32.totalorder %s425, %s426
    %p440 = scmp.eq.s32.totalorder %s30, 1
    %p441 = por %p439, %p440
    %p443 = scmp.ne.s32.totalorder %s426, %s442
    %p444 = scmp.eq.s32.totalorder %s30, 0
    %p445 = por %p443, %p444
    %p446 = scmp.le.s32.totalorder 1, %s24
    %p447 = scmp.lt.s32.totalorder %s24, 3
    %p448 = pnand %p446, %p447
    %p449 = pneg %p448
    // Predicated region
    $region9: #{forward.3} parent=5 // pred_check
      _
    $region10: #{forward.3} parent=5 // pred_check_branch
      %451 = sbr.rel (%p448) target = $region12
    $region11: #{forward.3} parent=5 // pred_region
      %s452 = ssub.s32 %s24, 1
      // Predicated region
      $region13: #{forward.3} parent=11 // pred_check
        %p453 = pneg %p97
      $region14: #{forward.3} parent=11 // pred_check_branch
        %455 = sbr.rel (%p453) target = $region16
      $region15: #{forward.3} parent=11 // pred_region
        _
      $region16: #{forward.3} parent=11 // pred_fallthru
        _
      // Predicated region
      $region17: #{forward.3} parent=11 // pred_check
        %p456 = pneg %p118
      $region18: #{forward.3} parent=11 // pred_check_branch
        %458 = sbr.rel (%p456) target = $region20
      $region19: #{forward.3} parent=11 // pred_region
        _
      $region20: #{forward.3} parent=11 // pred_fallthru
        _
      // Predicated region
      $region21: #{forward.3} parent=11 // pred_check
        %p459 = pneg %p139
      $region22: #{forward.3} parent=11 // pred_check_branch
        %461 = sbr.rel (%p459) target = $region24
      $region23: #{forward.3} parent=11 // pred_region
        _
      $region24: #{forward.3} parent=11 // pred_fallthru
        _
      // Predicated region
      $region25: #{forward.3} parent=11 // pred_check
        %p462 = pneg %p160
      $region26: #{forward.3} parent=11 // pred_check_branch
        %464 = sbr.rel (%p462) target = $region28
      $region27: #{forward.3} parent=11 // pred_region
        _
      $region28: #{forward.3} parent=11 // pred_fallthru
        _
      // Predicated region
      $region29: #{forward.3} parent=11 // pred_check
        %p465 = pneg %p181
      $region30: #{forward.3} parent=11 // pred_check_branch
        %467 = sbr.rel (%p465) target = $region32
      $region31: #{forward.3} parent=11 // pred_region
        _
      $region32: #{forward.3} parent=11 // pred_fallthru
        _
      // Predicated region
      $region33: #{forward.3} parent=11 // pred_check
        %p468 = pneg %p202
      $region34: #{forward.3} parent=11 // pred_check_branch
        %470 = sbr.rel (%p468) target = $region36
      $region35: #{forward.3} parent=11 // pred_region
        _
      $region36: #{forward.3} parent=11 // pred_fallthru
        _
      // Predicated region
      $region37: #{forward.3} parent=11 // pred_check
        %p471 = pneg %p223
      $region38: #{forward.3} parent=11 // pred_check_branch
        %473 = sbr.rel (%p471) target = $region40
      $region39: #{forward.3} parent=11 // pred_region
        _
      $region40: #{forward.3} parent=11 // pred_fallthru
        _
      // Predicated region
      $region41: #{forward.3} parent=11 // pred_check
        %p474 = pneg %p244
      $region42: #{forward.3} parent=11 // pred_check_branch
        %476 = sbr.rel (%p474) target = $region44
      $region43: #{forward.3} parent=11 // pred_region
        _
      $region44: #{forward.3} parent=11 // pred_fallthru
        _
      // Predicated region
      $region45: #{forward.3} parent=11 // pred_check
        %p477 = pneg %p265
      $region46: #{forward.3} parent=11 // pred_check_branch
        %479 = sbr.rel (%p477) target = $region48
      $region47: #{forward.3} parent=11 // pred_region
        _
      $region48: #{forward.3} parent=11 // pred_fallthru
        _
      // Predicated region
      $region49: #{forward.3} parent=11 // pred_check
        %p480 = pneg %p286
      $region50: #{forward.3} parent=11 // pred_check_branch
        %482 = sbr.rel (%p480) target = $region52
      $region51: #{forward.3} parent=11 // pred_region
        _
      $region52: #{forward.3} parent=11 // pred_fallthru
        _
      // Predicated region
      $region53: #{forward.3} parent=11 // pred_check
        %p483 = pneg %p307
      $region54: #{forward.3} parent=11 // pred_check_branch
        %485 = sbr.rel (%p483) target = $region56
      $region55: #{forward.3} parent=11 // pred_region
        _
      $region56: #{forward.3} parent=11 // pred_fallthru
        _
      // Predicated region
      $region57: #{forward.3} parent=11 // pred_check
        %p486 = pneg %p328
      $region58: #{forward.3} parent=11 // pred_check_branch
        %488 = sbr.rel (%p486) target = $region60
      $region59: #{forward.3} parent=11 // pred_region
        _
      $region60: #{forward.3} parent=11 // pred_fallthru
        _
      // Predicated region
      $region61: #{forward.3} parent=11 // pred_check
        %p489 = pneg %p349
      $region62: #{forward.3} parent=11 // pred_check_branch
        %491 = sbr.rel (%p489) target = $region64
      $region63: #{forward.3} parent=11 // pred_region
        _
      $region64: #{forward.3} parent=11 // pred_fallthru
        _
      // Predicated region
      $region65: #{forward.3} parent=11 // pred_check
        %p492 = pneg %p370
      $region66: #{forward.3} parent=11 // pred_check_branch
        %494 = sbr.rel (%p492) target = $region68
      $region67: #{forward.3} parent=11 // pred_region
        _
      $region68: #{forward.3} parent=11 // pred_fallthru
        _
      // Predicated region
      $region69: #{forward.3} parent=11 // pred_check
        %p495 = pneg %p391
      $region70: #{forward.3} parent=11 // pred_check_branch
        %497 = sbr.rel (%p495) target = $region72
      $region71: #{forward.3} parent=11 // pred_region
        _
      $region72: #{forward.3} parent=11 // pred_fallthru
        _
      // Predicated region
      $region73: #{forward.3} parent=11 // pred_check
        %p498 = pneg %p412
      $region74: #{forward.3} parent=11 // pred_check_branch
        %500 = sbr.rel (%p498) target = $region76
      $region75: #{forward.3} parent=11 // pred_region
        _
      $region76: #{forward.3} parent=11 // pred_fallthru
        _
    $region12: #{forward.3} parent=5 // pred_fallthru
      _
    %p501 = scmp.lt.s32.totalorder %s24, 2
    // Predicated region
    $region77: #{forward.3} parent=5 // pred_check
      %p502 = pneg %p501
    $region78: #{forward.3} parent=5 // pred_check_branch
      %504 = sbr.rel (%p502) target = $region80
    $region79: #{forward.3} parent=5 // pred_region
      // Predicated region
      $region81: #{forward.3} parent=79 // pred_check
        %p505 = pneg %p44
      $region82: #{forward.3} parent=79 // pred_check_branch
        %507 = sbr.rel (%p505) target = $region84
      $region83: #{forward.3} parent=79 // pred_region
        %p508 = scmp.lt.s32.totalorder %s24, 1
        %s509 = scalar_select %p508, %s24, 1
        %s510 = smul.addr %s509, 264
        %s511 = smul.addr %s510, 4
        %s512 = scalar_lea.vmem %s0, %s511
      $region84: #{forward.3} parent=79 // pred_fallthru
        _
      // Predicated region
      $region85: #{forward.3} parent=79 // pred_check
        %p513 = pneg %p70
      $region86: #{forward.3} parent=79 // pred_check_branch
        %515 = sbr.rel (%p513) target = $region88
      $region87: #{forward.3} parent=79 // pred_region
        %p516 = scmp.lt.s32.totalorder %s24, 1
        %s517 = scalar_select %p516, %s24, 1
        %s518 = scalar_lea.vmem %s1, %s517
      $region88: #{forward.3} parent=79 // pred_fallthru
        _
    $region80: #{forward.3} parent=5 // pred_fallthru
      _
    %p519 = scmp.le.s32.totalorder 1, %s24
    %p520 = scmp.lt.s32.totalorder %s24, 3
    %p521 = pnand %p519, %p520
    %p522 = pneg %p521
    // Predicated region
    $region89: #{forward.3} parent=5 // pred_check
      _
    $region90: #{forward.3} parent=5 // pred_check_branch
      %524 = sbr.rel (%p521) target = $region92
    $region91: #{forward.3} parent=5 // pred_region
      %s525 = ssub.s32 %s24, 1
      %p526 = scmp.lt.s32.totalorder %s29, 1
      %s527 = scalar_select %p526, %s29, 1
      %s528 = smul.addr %s527, 264
      %s529 = smul.addr %s528, 4
      %s530 = scalar_lea.vmem %s0, %s529
      %p531 = pneg %p50
      %p532 = pneg %p47
      %p533 = scmp.lt.s32.totalorder %s29, 1
      %s534 = scalar_select %p533, %s29, 1
      %s535 = scalar_lea.vmem %s1, %s534
      %p536 = pneg %p76
      %p537 = pneg %p73
      %p538 = pneg %p97
      %p539 = pneg %p94
      %p540 = pneg %p118
      %p541 = pneg %p115
      %p542 = pneg %p139
      %p543 = pneg %p136
      %p544 = pneg %p160
      %p545 = pneg %p157
      %p546 = pneg %p181
      %p547 = pneg %p178
      %p548 = pneg %p202
      %p549 = pneg %p199
      %p550 = pneg %p223
      %p551 = pneg %p220
      %p552 = pneg %p244
      %p553 = pneg %p241
      %p554 = pneg %p265
      %p555 = pneg %p262
      %p556 = pneg %p286
      %p557 = pneg %p283
      %p558 = pneg %p307
      %p559 = pneg %p304
      %p560 = pneg %p328
      %p561 = pneg %p325
      %p562 = pneg %p349
      %p563 = pneg %p346
      %p564 = pneg %p370
      %p565 = pneg %p367
      %p566 = pneg %p391
      %p567 = pneg %p388
      %p568 = pneg %p412
      %p569 = pneg %p409
      %p570 = pneg %p438
      %p571 = pneg %p435
      %p572 = scmp.lt.s32.totalorder %s29, 1
      %s573 = scalar_select %p572, %s29, 1
      %s574 = smul.addr %s573, 8
      %s575 = smul.addr %s574, 8
      %s576 = scalar_lea.vmem %s18, %s575
      %p577 = scmp.lt.s32.totalorder %s29, 1
      %s578 = scalar_select %p577, %s29, 1
      %s579 = smul.addr %s578, 264
      %s580 = smul.addr %s579, 4
      %s581 = scalar_lea.vmem %s0, %s580
      %p582 = scmp.lt.s32.totalorder %s29, 1
      %s583 = scalar_select %p582, %s29, 1
      %s584 = scalar_lea.vmem %s1, %s583
      %p585 = scmp.lt.s32.totalorder %s29, 1
      %s586 = scalar_select %p585, %s29, 1
      %s587 = smul.addr %s586, 8
      %s588 = smul.addr %s587, 8
      %s589 = scalar_lea.vmem %s18, %s588
      %s591 = scalar_lea.vmem %s581, 432
      %v592 = vld [vmem:[%s591 + $0x8] sm:$0xe]
      %v593 = vld [vmem:[%s591 + $0xc] sm:$0x1]
      %v594 = vld [vmem:[%s591 + $0x20] sm:$0xe]
      %v595 = vld [vmem:[%s591 + $0x24] sm:$0x1]
      %v596 = vld [vmem:[%s591 + $0x38] sm:$0xe]
      %v597 = vld [vmem:[%s591 + $0x3c] sm:$0x1]
      %v598 = vld [vmem:[%s591 + $0x50] sm:$0xe]
      %v599 = vld [vmem:[%s591 + $0x54] sm:$0x1]
      %v600 = vld [vmem:[%s591 + $0x68] sm:$0xe]
      %v601 = vld [vmem:[%s591 + $0x6c] sm:$0x1]
      %v602 = vld [vmem:[%s591 + $0x80] sm:$0xe]
      %v603 = vld [vmem:[%s591 + $0x84] sm:$0x1]
      %v604 = vld [vmem:[%s591 + $0x98] sm:$0xe]
      %v605 = vld [vmem:[%s591 + $0x9c] sm:$0x1]
      %v606 = vld [vmem:[%s591 + $0xb0] sm:$0xe]
      %v607 = vld [vmem:[%s591 + $0xb4] sm:$0x1]
      %v608 = vunpack.c.l.bf16 %v592
      %v609 = vunpack.c.l.bf16 %v593
      %v610 = vunpack.c.l.bf16 %v594
      %v611 = vunpack.c.l.bf16 %v595
      %v612 = vunpack.c.l.bf16 %v596
      %v613 = vunpack.c.l.bf16 %v597
      %v614 = vunpack.c.l.bf16 %v598
      %v615 = vunpack.c.l.bf16 %v599
      %v616 = vunpack.c.l.bf16 %v600
      %v617 = vunpack.c.l.bf16 %v601
      %v618 = vunpack.c.l.bf16 %v602
      %v619 = vunpack.c.l.bf16 %v603
      %v620 = vunpack.c.l.bf16 %v604
      %v621 = vunpack.c.l.bf16 %v605
      %v622 = vunpack.c.l.bf16 %v606
      %v623 = vunpack.c.l.bf16 %v607
      %vm640 = vcmask 1045504
      %v641 = vrot.slane %v608, 2
      %v642 = vrot.slane %v609, 2
      %v643 = vsel %vm640, %v641, %v642
      %v644 = vrot.slane %v610, 2
      %v645 = vrot.slane %v611, 2
      %v646 = vsel %vm640, %v644, %v645
      %v647 = vrot.slane %v612, 2
      %v648 = vrot.slane %v613, 2
      %v649 = vsel %vm640, %v647, %v648
      %v650 = vrot.slane %v614, 2
      %v651 = vrot.slane %v615, 2
      %v652 = vsel %vm640, %v650, %v651
      %v653 = vrot.slane %v616, 2
      %v654 = vrot.slane %v617, 2
      %v655 = vsel %vm640, %v653, %v654
      %v656 = vrot.slane %v618, 2
      %v657 = vrot.slane %v619, 2
      %v658 = vsel %vm640, %v656, %v657
      %v659 = vrot.slane %v620, 2
      %v660 = vrot.slane %v621, 2
      %v661 = vsel %vm640, %v659, %v660
      %v662 = vrot.slane %v622, 2
      %v663 = vrot.slane %v623, 2
      %v664 = vsel %vm640, %v662, %v663
      %v673 = vpack.c.bf16 %v646, %v643
      %v674 = vpack.c.bf16 %v652, %v649
      %v675 = vpack.c.bf16 %v658, %v655
      %v676 = vpack.c.bf16 %v664, %v661
      %v677 = vld [vmem:[%s2] sm:$0xf]
      %v678 = vld [vmem:[%s2 + $0x4] sm:$0xf]
      %v679 = vld [vmem:[%s2 + $0x8] sm:$0xf]
      %v680 = vld [vmem:[%s2 + $0xc] sm:$0xf]
      %v685 = vunpack.c.l.b16 %v677
      %v686 = vunpack.c.l.b16 %v678
      %v687 = vunpack.c.l.b16 %v679
      %v688 = vunpack.c.l.b16 %v680
      %v689 = vpack.c.b16 %v686, %v685
      %v690 = vpack.c.b16 %v688, %v687
      %vm693 = vcmask 261120
      %v695 = vsel %vm693, %v673, 0
      %v698 = vsel %vm693, %v674, 0
      %v701 = vsel %vm693, %v675, 0
      %v704 = vsel %vm693, %v676, 0
      %706 = vmatprep.subr.bf16.mxu0 0
      %707 = vmatpush1.bf16.msra.mxu0 %v689
      %708 = vmatprep.subr.bf16.mxu0 0
      %709 = vmatpush1.bf16.msra.mxu0 %v690
      %710 = vmatprep.subr.bf16.mxu0 0
      %711 = vmatpush1.bf16.msra.mxu0 0
      %712 = vmatprep.subr.bf16.mxu0 0
      %713 = vmatpush1.bf16.msra.mxu0 0
      %714 = vmatprep.subr.bf16.mxu0 0
      %715 = vmatpush1.bf16.msra.mxu0 0
      %716 = vmatprep.subr.bf16.mxu0 0
      %717 = vmatpush1.bf16.msra.mxu0 0
      %718 = vmatprep.subr.bf16.mxu0 0
      %719 = vmatpush1.bf16.msra.mxu0 0
      %720 = vmatprep.subr.bf16.mxu0 0
      %721 = vmatpush1.bf16.msra.mxu0 0
      %722 = vmatprep.subr.bf16.mxu0 0
      %723 = vmatpush1.bf16.msra.mxu0 0
      %724 = vmatprep.subr.bf16.mxu0 0
      %725 = vmatpush1.bf16.msra.mxu0 0
      %726 = vmatprep.subr.bf16.mxu0 0
      %727 = vmatpush1.bf16.msra.mxu0 0
      %728 = vmatprep.subr.bf16.mxu0 0
      %729 = vmatpush1.bf16.msra.mxu0 0
      %730 = vmatprep.subr.bf16.mxu0 0
      %731 = vmatpush1.bf16.msra.mxu0 0
      %732 = vmatprep.subr.bf16.mxu0 0
      %733 = vmatpush1.bf16.msra.mxu0 0
      %734 = vmatprep.subr.bf16.mxu0 0
      %735 = vmatpush1.bf16.msra.mxu0 0
      %736 = vmatprep.subr.bf16.mxu0 0
      %737 = vmatpush1.bf16.msra.mxu0 0
      %738 = vmatprep.mubr.bf16.mxu0 0
      %739 = vmatmul.mubr.bf16.gmra.mrb[0].mxu0 %v695
      %v740 = vpop.f32.mrb[0].mxu0
      %v741 = vadd.f32 0.0, %v740
      %v742 = vpop.f32.mrb[0].mxu0
      %v743 = vpop.f32.mrb[0].mxu0
      %v744 = vadd.f32 0.0, %v743
      %v745 = vpop.f32.mrb[0].mxu0
      %746 = vmatprep.mubr.bf16.mxu0 0
      %747 = vmatmul.mubr.bf16.gmra.mrb[0].mxu0 %v698
      %v748 = vpop.f32.mrb[0].mxu0
      %v749 = vadd.f32 0.0, %v748
      %v750 = vpop.f32.mrb[0].mxu0
      %v751 = vpop.f32.mrb[0].mxu0
      %v752 = vadd.f32 0.0, %v751
      %v753 = vpop.f32.mrb[0].mxu0
      %754 = vmatprep.mubr.bf16.mxu0 0
      %755 = vmatmul.mubr.bf16.gmra.mrb[0].mxu0 %v701
      %v756 = vpop.f32.mrb[0].mxu0
      %v757 = vadd.f32 0.0, %v756
      %v758 = vpop.f32.mrb[0].mxu0
      %v759 = vpop.f32.mrb[0].mxu0
      %v760 = vadd.f32 0.0, %v759
      %v761 = vpop.f32.mrb[0].mxu0
      %762 = vmatprep.mubr.bf16.mxu0 0
      %763 = vmatmul.mubr.bf16.gmra.mrb[0].mxu0 %v704
      %v764 = vpop.f32.mrb[0].mxu0
      %v765 = vadd.f32 0.0, %v764
      %v766 = vpop.f32.mrb[0].mxu0
      %v767 = vpop.f32.mrb[0].mxu0
      %v768 = vadd.f32 0.0, %v767
      %v769 = vpop.f32.mrb[0].mxu0
      %770 = vdwg.mxu0
      %v771 = vld [vmem:[%s3] sm:$0x1]
      %v773 = vlaneseq
      %v774 = vshrl.u32 %v773, 7
      %v775 = vsub.s32 0, %v774
      %v776 = vrot.slane %v771, %v775
      %v778 = vmul.f32 %v741, %v776
      %v779 = vmul.f32 %v744, %v776
      %v780 = vmul.f32 %v749, %v776
      %v781 = vmul.f32 %v752, %v776
      %v782 = vmul.f32 %v757, %v776
      %v783 = vmul.f32 %v760, %v776
      %v784 = vmul.f32 %v765, %v776
      %v785 = vmul.f32 %v768, %v776
      %v786 = vld [vmem:[%s4] sm:$0x1]
      %v788 = vlaneseq
      %v789 = vshrl.u32 %v788, 7
      %v790 = vsub.s32 0, %v789
      %v791 = vrot.slane %v786, %v790
      %v793 = vadd.f32 %v778, %v791
      %v794 = vadd.f32 %v779, %v791
      %v795 = vadd.f32 %v780, %v791
      %v796 = vadd.f32 %v781, %v791
      %v797 = vadd.f32 %v782, %v791
      %v798 = vadd.f32 %v783, %v791
      %v799 = vadd.f32 %v784, %v791
      %v800 = vadd.f32 %v785, %v791
      %v801 = vmax.f32 %v793, 0.0
      %v802 = vmax.f32 %v794, 0.0
      %v803 = vmax.f32 %v795, 0.0
      %v804 = vmax.f32 %v796, 0.0
      %v805 = vmax.f32 %v797, 0.0
      %v806 = vmax.f32 %v798, 0.0
      %v807 = vmax.f32 %v799, 0.0
      %v808 = vmax.f32 %v800, 0.0
      %v809 = vpack.c.bf16 %v802, %v801
      %v810 = vpack.c.bf16 %v804, %v803
      %v811 = vpack.c.bf16 %v806, %v805
      %v812 = vpack.c.bf16 %v808, %v807
      %v813 = vld [vmem:[%s8] sm:$0xf]
      %v814 = vld [vmem:[%s8 + $0x4] sm:$0xf]
      %v815 = vld [vmem:[%s8 + $0x8] sm:$0xf]
      %v816 = vld [vmem:[%s8 + $0xc] sm:$0xf]
      %v817 = vld [vmem:[%s584] sm:$0x1]
      %v819 = vlaneseq
      %v820 = vshrl.u32 %v819, 7
      %v821 = vsub.s32 0, %v820
      %v822 = vrot.slane %v817, %v821
      %v828 = vunpack.c.l.b16 %v813
      %v829 = vunpack.c.l.b16 %v814
      %v830 = vunpack.c.l.b16 %v815
      %v831 = vunpack.c.l.b16 %v816
      %v832 = vpack.c.b16 %v829, %v828
      %v833 = vpack.c.b16 %v831, %v830
      %v837 = vsel %vm693, %v809, 0
      %v840 = vsel %vm693, %v810, 0
      %v843 = vsel %vm693, %v811, 0
      %v846 = vsel %vm693, %v812, 0
      %848 = vmatprep.subr.bf16.mxu0 0
      %849 = vmatpush1.bf16.msra.mxu0 %v832
      %850 = vmatprep.subr.bf16.mxu0 0
      %851 = vmatpush1.bf16.msra.mxu0 %v833
      %852 = vmatprep.subr.bf16.mxu0 0
      %853 = vmatpush1.bf16.msra.mxu0 0
      %854 = vmatprep.subr.bf16.mxu0 0
      %855 = vmatpush1.bf16.msra.mxu0 0
      %856 = vmatprep.subr.bf16.mxu0 0
      %857 = vmatpush1.bf16.msra.mxu0 0
      %858 = vmatprep.subr.bf16.mxu0 0
      %859 = vmatpush1.bf16.msra.mxu0 0
      %860 = vmatprep.subr.bf16.mxu0 0
      %861 = vmatpush1.bf16.msra.mxu0 0
      %862 = vmatprep.subr.bf16.mxu0 0
      %863 = vmatpush1.bf16.msra.mxu0 0
      %864 = vmatprep.subr.bf16.mxu0 0
      %865 = vmatpush1.bf16.msra.mxu0 0
      %866 = vmatprep.subr.bf16.mxu0 0
      %867 = vmatpush1.bf16.msra.mxu0 0
      %868 = vmatprep.subr.bf16.mxu0 0
      %869 = vmatpush1.bf16.msra.mxu0 0
      %870 = vmatprep.subr.bf16.mxu0 0
      %871 = vmatpush1.bf16.msra.mxu0 0
      %872 = vmatprep.subr.bf16.mxu0 0
      %873 = vmatpush1.bf16.msra.mxu0 0
      %874 = vmatprep.subr.bf16.mxu0 0
      %875 = vmatpush1.bf16.msra.mxu0 0
      %876 = vmatprep.subr.bf16.mxu0 0
      %877 = vmatpush1.bf16.msra.mxu0 0
      %878 = vmatprep.subr.bf16.mxu0 0
      %879 = vmatpush1.bf16.msra.mxu0 0
      %880 = vmatprep.mubr.bf16.mxu0 0
      %881 = vmatmul.mubr.bf16.gmra.mrb[0].mxu0 %v837
      %v882 = vpop.f32.mrb[0].mxu0
      %v883 = vadd.f32 %v822, %v882
      %v884 = vpop.f32.mrb[0].mxu0
      %v885 = vpop.f32.mrb[0].mxu0
      %v886 = vadd.f32 %v822, %v885
      %v887 = vpop.f32.mrb[0].mxu0
      %888 = vmatprep.mubr.bf16.mxu0 0
      %889 = vmatmul.mubr.bf16.gmra.mrb[0].mxu0 %v840
      %v890 = vpop.f32.mrb[0].mxu0
      %v891 = vadd.f32 %v822, %v890
      %v892 = vpop.f32.mrb[0].mxu0
      %v893 = vpop.f32.mrb[0].mxu0
      %v894 = vadd.f32 %v822, %v893
      %v895 = vpop.f32.mrb[0].mxu0
      %896 = vmatprep.mubr.bf16.mxu0 0
      %897 = vmatmul.mubr.bf16.gmra.mrb[0].mxu0 %v843
      %v898 = vpop.f32.mrb[0].mxu0
      %v899 = vadd.f32 %v822, %v898
      %v900 = vpop.f32.mrb[0].mxu0
      %v901 = vpop.f32.mrb[0].mxu0
      %v902 = vadd.f32 %v822, %v901
      %v903 = vpop.f32.mrb[0].mxu0
      %904 = vmatprep.mubr.bf16.mxu0 0
      %905 = vmatmul.mubr.bf16.gmra.mrb[0].mxu0 %v846
      %v906 = vpop.f32.mrb[0].mxu0
      %v907 = vadd.f32 %v822, %v906
      %v908 = vpop.f32.mrb[0].mxu0
      %v909 = vpop.f32.mrb[0].mxu0
      %v910 = vadd.f32 %v822, %v909
      %v911 = vpop.f32.mrb[0].mxu0
      %912 = vdwg.mxu0
      %s913 = scalar_lea.vmem %s581, 288
      %v914 = vld [vmem:[%s913 + $0x4] sm:$0xc]
      %v915 = vld [vmem:[%s913 + $0x8] sm:$0x3]
      %v916 = vld [vmem:[%s913 + $0x1c] sm:$0xc]
      %v917 = vld [vmem:[%s913 + $0x20] sm:$0x3]
      %v918 = vld [vmem:[%s913 + $0x34] sm:$0xc]
      %v919 = vld [vmem:[%s913 + $0x38] sm:$0x3]
      %v920 = vld [vmem:[%s913 + $0x4c] sm:$0xc]
      %v921 = vld [vmem:[%s913 + $0x50] sm:$0x3]
      %v922 = vld [vmem:[%s913 + $0x64] sm:$0xc]
      %v923 = vld [vmem:[%s913 + $0x68] sm:$0x3]
      %v924 = vld [vmem:[%s913 + $0x7c] sm:$0xc]
      %v925 = vld [vmem:[%s913 + $0x80] sm:$0x3]
      %v926 = vld [vmem:[%s913 + $0x94] sm:$0xc]
      %v927 = vld [vmem:[%s913 + $0x98] sm:$0x3]
      %v928 = vld [vmem:[%s913 + $0xac] sm:$0xc]
      %v929 = vld [vmem:[%s913 + $0xb0] sm:$0x3]
      %v930 = vunpack.c.l.bf16 %v914
      %v931 = vunpack.c.l.bf16 %v915
      %v932 = vunpack.c.l.bf16 %v916
      %v933 = vunpack.c.l.bf16 %v917
      %v934 = vunpack.c.l.bf16 %v918
      %v935 = vunpack.c.l.bf16 %v919
      %v936 = vunpack.c.l.bf16 %v920
      %v937 = vunpack.c.l.bf16 %v921
      %v938 = vunpack.c.l.bf16 %v922
      %v939 = vunpack.c.l.bf16 %v923
      %v940 = vunpack.c.l.bf16 %v924
      %v941 = vunpack.c.l.bf16 %v925
      %v942 = vunpack.c.l.bf16 %v926
      %v943 = vunpack.c.l.bf16 %v927
      %v944 = vunpack.c.l.bf16 %v928
      %v945 = vunpack.c.l.bf16 %v929
      %vm962 = vcmask 1043456
      %v963 = vrot.slane %v930, 4
      %v964 = vrot.slane %v931, 4
      %v965 = vsel %vm962, %v963, %v964
      %v966 = vrot.slane %v932, 4
      %v967 = vrot.slane %v933, 4
      %v968 = vsel %vm962, %v966, %v967
      %v969 = vrot.slane %v934, 4
      %v970 = vrot.slane %v935, 4
      %v971 = vsel %vm962, %v969, %v970
      %v972 = vrot.slane %v936, 4
      %v973 = vrot.slane %v937, 4
      %v974 = vsel %vm962, %v972, %v973
      %v975 = vrot.slane %v938, 4
      %v976 = vrot.slane %v939, 4
      %v977 = vsel %vm962, %v975, %v976
      %v978 = vrot.slane %v940, 4
      %v979 = vrot.slane %v941, 4
      %v980 = vsel %vm962, %v978, %v979
      %v981 = vrot.slane %v942, 4
      %v982 = vrot.slane %v943, 4
      %v983 = vsel %vm962, %v981, %v982
      %v984 = vrot.slane %v944, 4
      %v985 = vrot.slane %v945, 4
      %v986 = vsel %vm962, %v984, %v985
      %v995 = vpack.c.bf16 %v968, %v965
      %v996 = vpack.c.bf16 %v974, %v971
      %v997 = vpack.c.bf16 %v980, %v977
      %v998 = vpack.c.bf16 %v986, %v983
      %v999 = vld [vmem:[%s5] sm:$0xf]
      %v1000 = vld [vmem:[%s5 + $0x4] sm:$0xf]
      %v1001 = vld [vmem:[%s5 + $0x8] sm:$0xf]
      %v1002 = vld [vmem:[%s5 + $0xc] sm:$0xf]
      %v1003 = vld [vmem:[%s913 + $0x8] sm:$0xe]
      %v1004 = vld [vmem:[%s913 + $0xc] sm:$0x1]
      %v1005 = vld [vmem:[%s913 + $0x20] sm:$0xe]
      %v1006 = vld [vmem:[%s913 + $0x24] sm:$0x1]
      %v1007 = vld [vmem:[%s913 + $0x38] sm:$0xe]
      %v1008 = vld [vmem:[%s913 + $0x3c] sm:$0x1]
      %v1009 = vld [vmem:[%s913 + $0x50] sm:$0xe]
      %v1010 = vld [vmem:[%s913 + $0x54] sm:$0x1]
      %v1011 = vld [vmem:[%s913 + $0x68] sm:$0xe]
      %v1012 = vld [vmem:[%s913 + $0x6c] sm:$0x1]
      %v1013 = vld [vmem:[%s913 + $0x80] sm:$0xe]
      %v1014 = vld [vmem:[%s913 + $0x84] sm:$0x1]
      %v1015 = vld [vmem:[%s913 + $0x98] sm:$0xe]
      %v1016 = vld [vmem:[%s913 + $0x9c] sm:$0x1]
      %v1017 = vld [vmem:[%s913 + $0xb0] sm:$0xe]
      %v1018 = vld [vmem:[%s913 + $0xb4] sm:$0x1]
      %v1019 = vunpack.c.l.bf16 %v1003
      %v1020 = vunpack.c.l.bf16 %v1004
      %v1021 = vunpack.c.l.bf16 %v1005
      %v1022 = vunpack.c.l.bf16 %v1006
      %v1023 = vunpack.c.l.bf16 %v1007
      %v1024 = vunpack.c.l.bf16 %v1008
      %v1025 = vunpack.c.l.bf16 %v1009
      %v1026 = vunpack.c.l.bf16 %v1010
      %v1027 = vunpack.c.l.bf16 %v1011
      %v1028 = vunpack.c.l.bf16 %v1012
      %v1029 = vunpack.c.l.bf16 %v1013
      %v1030 = vunpack.c.l.bf16 %v1014
      %v1031 = vunpack.c.l.bf16 %v1015
      %v1032 = vunpack.c.l.bf16 %v1016
      %v1033 = vunpack.c.l.bf16 %v1017
      %v1034 = vunpack.c.l.bf16 %v1018
      %v1051 = vrot.slane %v1019, 2
      %v1052 = vrot.slane %v1020, 2
      %v1053 = vsel %vm640, %v1051, %v1052
      %v1054 = vrot.slane %v1021, 2
      %v1055 = vrot.slane %v1022, 2
      %v1056 = vsel %vm640, %v1054, %v1055
      %v1057 = vrot.slane %v1023, 2
      %v1058 = vrot.slane %v1024, 2
      %v1059 = vsel %vm640, %v1057, %v1058
      %v1060 = vrot.slane %v1025, 2
      %v1061 = vrot.slane %v1026, 2
      %v1062 = vsel %vm640, %v1060, %v1061
      %v1063 = vrot.slane %v1027, 2
      %v1064 = vrot.slane %v1028, 2
      %v1065 = vsel %vm640, %v1063, %v1064
      %v1066 = vrot.slane %v1029, 2
      %v1067 = vrot.slane %v1030, 2
      %v1068 = vsel %vm640, %v1066, %v1067
      %v1069 = vrot.slane %v1031, 2
      %v1070 = vrot.slane %v1032, 2
      %v1071 = vsel %vm640, %v1069, %v1070
      %v1072 = vrot.slane %v1033, 2
      %v1073 = vrot.slane %v1034, 2
      %v1074 = vsel %vm640, %v1072, %v1073
      %v1083 = vpack.c.bf16 %v1056, %v1053
      %v1084 = vpack.c.bf16 %v1062, %v1059
      %v1085 = vpack.c.bf16 %v1068, %v1065
      %v1086 = vpack.c.bf16 %v1074, %v1071
      %s1087 = scalar_lea.vmem %s5, 16
      %v1088 = vld [vmem:[%s1087] sm:$0xf]
      %v1089 = vld [vmem:[%s1087 + $0x4] sm:$0xf]
      %v1090 = vld [vmem:[%s1087 + $0x8] sm:$0xf]
      %v1091 = vld [vmem:[%s1087 + $0xc] sm:$0xf]
      %v1096 = vunpack.c.l.b16 %v1088
      %v1097 = vunpack.c.l.b16 %v1089
      %v1098 = vunpack.c.l.b16 %v1090
      %v1099 = vunpack.c.l.b16 %v1091
      %v1100 = vpack.c.b16 %v1097, %v1096
      %v1101 = vpack.c.b16 %v1099, %v1098
      %v1105 = vsel %vm693, %v1083, 0
      %v1108 = vsel %vm693, %v1084, 0
      %v1111 = vsel %vm693, %v1085, 0
      %v1114 = vsel %vm693, %v1086, 0
      %1116 = vmatprep.subr.bf16.mxu0 0
      %1117 = vmatpush1.bf16.msra.mxu0 %v1100
      %1118 = vmatprep.subr.bf16.mxu0 0
      %1119 = vmatpush1.bf16.msra.mxu0 %v1101
      %1120 = vmatprep.subr.bf16.mxu0 0
      %1121 = vmatpush1.bf16.msra.mxu0 0
      %1122 = vmatprep.subr.bf16.mxu0 0
      %1123 = vmatpush1.bf16.msra.mxu0 0
      %1124 = vmatprep.subr.bf16.mxu0 0
      %1125 = vmatpush1.bf16.msra.mxu0 0
      %1126 = vmatprep.subr.bf16.mxu0 0
      %1127 = vmatpush1.bf16.msra.mxu0 0
      %1128 = vmatprep.subr.bf16.mxu0 0
      %1129 = vmatpush1.bf16.msra.mxu0 0
      %1130 = vmatprep.subr.bf16.mxu0 0
      %1131 = vmatpush1.bf16.msra.mxu0 0
      %1132 = vmatprep.subr.bf16.mxu0 0
      %1133 = vmatpush1.bf16.msra.mxu0 0
      %1134 = vmatprep.subr.bf16.mxu0 0
      %1135 = vmatpush1.bf16.msra.mxu0 0
      %1136 = vmatprep.subr.bf16.mxu0 0
      %1137 = vmatpush1.bf16.msra.mxu0 0
      %1138 = vmatprep.subr.bf16.mxu0 0
      %1139 = vmatpush1.bf16.msra.mxu0 0
      %1140 = vmatprep.subr.bf16.mxu0 0
      %1141 = vmatpush1.bf16.msra.mxu0 0
      %1142 = vmatprep.subr.bf16.mxu0 0
      %1143 = vmatpush1.bf16.msra.mxu0 0
      %1144 = vmatprep.subr.bf16.mxu0 0
      %1145 = vmatpush1.bf16.msra.mxu0 0
      %1146 = vmatprep.subr.bf16.mxu0 0
      %1147 = vmatpush1.bf16.msra.mxu0 0
      %1148 = vmatprep.mubr.bf16.mxu0 0
      %1149 = vmatmul.mubr.bf16.gmra.mrb[0].mxu0 %v1105
      %v1150 = vpop.f32.mrb[0].mxu0
      %v1151 = vadd.f32 0.0, %v1150
      %v1152 = vpop.f32.mrb[0].mxu0
      %v1153 = vpop.f32.mrb[0].mxu0
      %v1154 = vadd.f32 0.0, %v1153
      %v1155 = vpop.f32.mrb[0].mxu0
      %1156 = vmatprep.mubr.bf16.mxu0 0
      %1157 = vmatmul.mubr.bf16.gmra.mrb[0].mxu0 %v1108
      %v1158 = vpop.f32.mrb[0].mxu0
      %v1159 = vadd.f32 0.0, %v1158
      %v1160 = vpop.f32.mrb[0].mxu0
      %v1161 = vpop.f32.mrb[0].mxu0
      %v1162 = vadd.f32 0.0, %v1161
      %v1163 = vpop.f32.mrb[0].mxu0
      %1164 = vmatprep.mubr.bf16.mxu0 0
      %1165 = vmatmul.mubr.bf16.gmra.mrb[0].mxu0 %v1111
      %v1166 = vpop.f32.mrb[0].mxu0
      %v1167 = vadd.f32 0.0, %v1166
      %v1168 = vpop.f32.mrb[0].mxu0
      %v1169 = vpop.f32.mrb[0].mxu0
      %v1170 = vadd.f32 0.0, %v1169
      %v1171 = vpop.f32.mrb[0].mxu0
      %1172 = vmatprep.mubr.bf16.mxu0 0
      %1173 = vmatmul.mubr.bf16.gmra.mrb[0].mxu0 %v1114
      %v1174 = vpop.f32.mrb[0].mxu0
      %v1175 = vadd.f32 0.0, %v1174
      %v1176 = vpop.f32.mrb[0].mxu0
      %v1177 = vpop.f32.mrb[0].mxu0
      %v1178 = vadd.f32 0.0, %v1177
      %v1179 = vpop.f32.mrb[0].mxu0
      %1180 = vdwg.mxu0
      %v1185 = vunpack.c.l.b16 %v999
      %v1186 = vunpack.c.l.b16 %v1000
      %v1187 = vunpack.c.l.b16 %v1001
      %v1188 = vunpack.c.l.b16 %v1002
      %v1189 = vpack.c.b16 %v1186, %v1185
      %v1190 = vpack.c.b16 %v1188, %v1187
      %v1194 = vsel %vm693, %v995, 0
      %v1197 = vsel %vm693, %v996, 0
      %v1200 = vsel %vm693, %v997, 0
      %v1203 = vsel %vm693, %v998, 0
      %1205 = vmatprep.subr.bf16.mxu0 0
      %1206 = vmatpush1.bf16.msra.mxu0 %v1189
      %1207 = vmatprep.subr.bf16.mxu0 0
      %1208 = vmatpush1.bf16.msra.mxu0 %v1190
      %1209 = vmatprep.subr.bf16.mxu0 0
      %1210 = vmatpush1.bf16.msra.mxu0 0
      %1211 = vmatprep.subr.bf16.mxu0 0
      %1212 = vmatpush1.bf16.msra.mxu0 0
      %1213 = vmatprep.subr.bf16.mxu0 0
      %1214 = vmatpush1.bf16.msra.mxu0 0
      %1215 = vmatprep.subr.bf16.mxu0 0
      %1216 = vmatpush1.bf16.msra.mxu0 0
      %1217 = vmatprep.subr.bf16.mxu0 0
      %1218 = vmatpush1.bf16.msra.mxu0 0
      %1219 = vmatprep.subr.bf16.mxu0 0
      %1220 = vmatpush1.bf16.msra.mxu0 0
      %1221 = vmatprep.subr.bf16.mxu0 0
      %1222 = vmatpush1.bf16.msra.mxu0 0
      %1223 = vmatprep.subr.bf16.mxu0 0
      %1224 = vmatpush1.bf16.msra.mxu0 0
      %1225 = vmatprep.subr.bf16.mxu0 0
      %1226 = vmatpush1.bf16.msra.mxu0 0
      %1227 = vmatprep.subr.bf16.mxu0 0
      %1228 = vmatpush1.bf16.msra.mxu0 0
      %1229 = vmatprep.subr.bf16.mxu0 0
      %1230 = vmatpush1.bf16.msra.mxu0 0
      %1231 = vmatprep.subr.bf16.mxu0 0
      %1232 = vmatpush1.bf16.msra.mxu0 0
      %1233 = vmatprep.subr.bf16.mxu0 0
      %1234 = vmatpush1.bf16.msra.mxu0 0
      %1235 = vmatprep.subr.bf16.mxu0 0
      %1236 = vmatpush1.bf16.msra.mxu0 0
      %1237 = vmatprep.mubr.bf16.mxu0 0
      %1238 = vmatmul.mubr.bf16.gmra.mrb[0].mxu0 %v1194
      %v1239 = vpop.f32.mrb[0].mxu0
      %v1240 = vadd.f32 %v1151, %v1239
      %v1241 = vpop.f32.mrb[0].mxu0
      %v1242 = vpop.f32.mrb[0].mxu0
      %v1243 = vadd.f32 %v1154, %v1242
      %v1244 = vpop.f32.mrb[0].mxu0
      %1245 = vmatprep.mubr.bf16.mxu0 0
      %1246 = vmatmul.mubr.bf16.gmra.mrb[0].mxu0 %v1197
      %v1247 = vpop.f32.mrb[0].mxu0
      %v1248 = vadd.f32 %v1159, %v1247
      %v1249 = vpop.f32.mrb[0].mxu0
      %v1250 = vpop.f32.mrb[0].mxu0
      %v1251 = vadd.f32 %v1162, %v1250
      %v1252 = vpop.f32.mrb[0].mxu0
      %1253 = vmatprep.mubr.bf16.mxu0 0
      %1254 = vmatmul.mubr.bf16.gmra.mrb[0].mxu0 %v1200
      %v1255 = vpop.f32.mrb[0].mxu0
      %v1256 = vadd.f32 %v1167, %v1255
      %v1257 = vpop.f32.mrb[0].mxu0
      %v1258 = vpop.f32.mrb[0].mxu0
      %v1259 = vadd.f32 %v1170, %v1258
      %v1260 = vpop.f32.mrb[0].mxu0
      %1261 = vmatprep.mubr.bf16.mxu0 0
      %1262 = vmatmul.mubr.bf16.gmra.mrb[0].mxu0 %v1203
      %v1263 = vpop.f32.mrb[0].mxu0
      %v1264 = vadd.f32 %v1175, %v1263
      %v1265 = vpop.f32.mrb[0].mxu0
      %v1266 = vpop.f32.mrb[0].mxu0
      %v1267 = vadd.f32 %v1178, %v1266
      %v1268 = vpop.f32.mrb[0].mxu0
      %1269 = vdwg.mxu0
      %v1270 = vld [vmem:[%s913 + $0xc] sm:$0xf]
      %v1271 = vld [vmem:[%s913 + $0x24] sm:$0xf]
      %v1272 = vld [vmem:[%s913 + $0x3c] sm:$0xf]
      %v1273 = vld [vmem:[%s913 + $0x54] sm:$0xf]
      %v1274 = vld [vmem:[%s913 + $0x6c] sm:$0xf]
      %v1275 = vld [vmem:[%s913 + $0x84] sm:$0xf]
      %v1276 = vld [vmem:[%s913 + $0x9c] sm:$0xf]
      %v1277 = vld [vmem:[%s913 + $0xb4] sm:$0xf]
      %v1278 = vunpack.c.l.bf16 %v1270
      %v1279 = vunpack.c.l.bf16 %v1271
      %v1280 = vunpack.c.l.bf16 %v1272
      %v1281 = vunpack.c.l.bf16 %v1273
      %v1282 = vunpack.c.l.bf16 %v1274
      %v1283 = vunpack.c.l.bf16 %v1275
      %v1284 = vunpack.c.l.bf16 %v1276
      %v1285 = vunpack.c.l.bf16 %v1277
      %v1286 = vpack.c.bf16 %v1279, %v1278
      %v1287 = vpack.c.bf16 %v1281, %v1280
      %v1288 = vpack.c.bf16 %v1283, %v1282
      %v1289 = vpack.c.bf16 %v1285, %v1284
      %s1290 = scalar_lea.vmem %s5, 32
      %v1291 = vld [vmem:[%s1290] sm:$0xf]
      %v1292 = vld [vmem:[%s1290 + $0x4] sm:$0xf]
      %v1293 = vld [vmem:[%s1290 + $0x8] sm:$0xf]
      %v1294 = vld [vmem:[%s1290 + $0xc] sm:$0xf]
      %v1299 = vunpack.c.l.b16 %v1291
      %v1300 = vunpack.c.l.b16 %v1292
      %v1301 = vunpack.c.l.b16 %v1293
      %v1302 = vunpack.c.l.b16 %v1294
      %v1303 = vpack.c.b16 %v1300, %v1299
      %v1304 = vpack.c.b16 %v1302, %v1301
      %v1308 = vsel %vm693, %v1286, 0
      %v1311 = vsel %vm693, %v1287, 0
      %v1314 = vsel %vm693, %v1288, 0
      %v1317 = vsel %vm693, %v1289, 0
      %1319 = vmatprep.subr.bf16.mxu0 0
      %1320 = vmatpush1.bf16.msra.mxu0 %v1303
      %1321 = vmatprep.subr.bf16.mxu0 0
      %1322 = vmatpush1.bf16.msra.mxu0 %v1304
      %1323 = vmatprep.subr.bf16.mxu0 0
      %1324 = vmatpush1.bf16.msra.mxu0 0
      %1325 = vmatprep.subr.bf16.mxu0 0
      %1326 = vmatpush1.bf16.msra.mxu0 0
      %1327 = vmatprep.subr.bf16.mxu0 0
      %1328 = vmatpush1.bf16.msra.mxu0 0
      %1329 = vmatprep.subr.bf16.mxu0 0
      %1330 = vmatpush1.bf16.msra.mxu0 0
      %1331 = vmatprep.subr.bf16.mxu0 0
      %1332 = vmatpush1.bf16.msra.mxu0 0
      %1333 = vmatprep.subr.bf16.mxu0 0
      %1334 = vmatpush1.bf16.msra.mxu0 0
      %1335 = vmatprep.subr.bf16.mxu0 0
      %1336 = vmatpush1.bf16.msra.mxu0 0
      %1337 = vmatprep.subr.bf16.mxu0 0
      %1338 = vmatpush1.bf16.msra.mxu0 0
      %1339 = vmatprep.subr.bf16.mxu0 0
      %1340 = vmatpush1.bf16.msra.mxu0 0
      %1341 = vmatprep.subr.bf16.mxu0 0
      %1342 = vmatpush1.bf16.msra.mxu0 0
      %1343 = vmatprep.subr.bf16.mxu0 0
      %1344 = vmatpush1.bf16.msra.mxu0 0
      %1345 = vmatprep.subr.bf16.mxu0 0
      %1346 = vmatpush1.bf16.msra.mxu0 0
      %1347 = vmatprep.subr.bf16.mxu0 0
      %1348 = vmatpush1.bf16.msra.mxu0 0
      %1349 = vmatprep.subr.bf16.mxu0 0
      %1350 = vmatpush1.bf16.msra.mxu0 0
      %1351 = vmatprep.mubr.bf16.mxu0 0
      %1352 = vmatmul.mubr.bf16.gmra.mrb[0].mxu0 %v1308
      %v1353 = vpop.f32.mrb[0].mxu0
      %v1354 = vadd.f32 0.0, %v1353
      %v1355 = vpop.f32.mrb[0].mxu0
      %v1356 = vpop.f32.mrb[0].mxu0
      %v1357 = vadd.f32 0.0, %v1356
      %v1358 = vpop.f32.mrb[0].mxu0
      %1359 = vmatprep.mubr.bf16.mxu0 0
      %1360 = vmatmul.mubr.bf16.gmra.mrb[0].mxu0 %v1311
      %v1361 = vpop.f32.mrb[0].mxu0
      %v1362 = vadd.f32 0.0, %v1361
      %v1363 = vpop.f32.mrb[0].mxu0
      %v1364 = vpop.f32.mrb[0].mxu0
      %v1365 = vadd.f32 0.0, %v1364
      %v1366 = vpop.f32.mrb[0].mxu0
      %1367 = vmatprep.mubr.bf16.mxu0 0
      %1368 = vmatmul.mubr.bf16.gmra.mrb[0].mxu0 %v1314
      %v1369 = vpop.f32.mrb[0].mxu0
      %v1370 = vadd.f32 0.0, %v1369
      %v1371 = vpop.f32.mrb[0].mxu0
      %v1372 = vpop.f32.mrb[0].mxu0
      %v1373 = vadd.f32 0.0, %v1372
      %v1374 = vpop.f32.mrb[0].mxu0
      %1375 = vmatprep.mubr.bf16.mxu0 0
      %1376 = vmatmul.mubr.bf16.gmra.mrb[0].mxu0 %v1317
      %v1377 = vpop.f32.mrb[0].mxu0
      %v1378 = vadd.f32 0.0, %v1377
      %v1379 = vpop.f32.mrb[0].mxu0
      %v1380 = vpop.f32.mrb[0].mxu0
      %v1381 = vadd.f32 0.0, %v1380
      %v1382 = vpop.f32.mrb[0].mxu0
      %1383 = vdwg.mxu0
      %v1384 = vadd.f32 %v1240, %v1354
      %v1385 = vadd.f32 %v1243, %v1357
      %v1386 = vadd.f32 %v1248, %v1362
      %v1387 = vadd.f32 %v1251, %v1365
      %v1388 = vadd.f32 %v1256, %v1370
      %v1389 = vadd.f32 %v1259, %v1373
      %v1390 = vadd.f32 %v1264, %v1378
      %v1391 = vadd.f32 %v1267, %v1381
      %v1392 = vld [vmem:[%s591 + $0x4] sm:$0xc]
      %v1393 = vld [vmem:[%s591 + $0x8] sm:$0x3]
      %v1394 = vld [vmem:[%s591 + $0x1c] sm:$0xc]
      %v1395 = vld [vmem:[%s591 + $0x20] sm:$0x3]
      %v1396 = vld [vmem:[%s591 + $0x34] sm:$0xc]
      %v1397 = vld [vmem:[%s591 + $0x38] sm:$0x3]
      %v1398 = vld [vmem:[%s591 + $0x4c] sm:$0xc]
      %v1399 = vld [vmem:[%s591 + $0x50] sm:$0x3]
      %v1400 = vld [vmem:[%s591 + $0x64] sm:$0xc]
      %v1401 = vld [vmem:[%s591 + $0x68] sm:$0x3]
      %v1402 = vld [vmem:[%s591 + $0x7c] sm:$0xc]
      %v1403 = vld [vmem:[%s591 + $0x80] sm:$0x3]
      %v1404 = vld [vmem:[%s591 + $0x94] sm:$0xc]
      %v1405 = vld [vmem:[%s591 + $0x98] sm:$0x3]
      %v1406 = vld [vmem:[%s591 + $0xac] sm:$0xc]
      %v1407 = vld [vmem:[%s591 + $0xb0] sm:$0x3]
      %v1408 = vunpack.c.l.bf16 %v1392
      %v1409 = vunpack.c.l.bf16 %v1393
      %v1410 = vunpack.c.l.bf16 %v1394
      %v1411 = vunpack.c.l.bf16 %v1395
      %v1412 = vunpack.c.l.bf16 %v1396
      %v1413 = vunpack.c.l.bf16 %v1397
      %v1414 = vunpack.c.l.bf16 %v1398
      %v1415 = vunpack.c.l.bf16 %v1399
      %v1416 = vunpack.c.l.bf16 %v1400
      %v1417 = vunpack.c.l.bf16 %v1401
      %v1418 = vunpack.c.l.bf16 %v1402
      %v1419 = vunpack.c.l.bf16 %v1403
      %v1420 = vunpack.c.l.bf16 %v1404
      %v1421 = vunpack.c.l.bf16 %v1405
      %v1422 = vunpack.c.l.bf16 %v1406
      %v1423 = vunpack.c.l.bf16 %v1407
      %v1440 = vrot.slane %v1408, 4
      %v1441 = vrot.slane %v1409, 4
      %v1442 = vsel %vm962, %v1440, %v1441
      %v1443 = vrot.slane %v1410, 4
      %v1444 = vrot.slane %v1411, 4
      %v1445 = vsel %vm962, %v1443, %v1444
      %v1446 = vrot.slane %v1412, 4
      %v1447 = vrot.slane %v1413, 4
      %v1448 = vsel %vm962, %v1446, %v1447
      %v1449 = vrot.slane %v1414, 4
      %v1450 = vrot.slane %v1415, 4
      %v1451 = vsel %vm962, %v1449, %v1450
      %v1452 = vrot.slane %v1416, 4
      %v1453 = vrot.slane %v1417, 4
      %v1454 = vsel %vm962, %v1452, %v1453
      %v1455 = vrot.slane %v1418, 4
      %v1456 = vrot.slane %v1419, 4
      %v1457 = vsel %vm962, %v1455, %v1456
      %v1458 = vrot.slane %v1420, 4
      %v1459 = vrot.slane %v1421, 4
      %v1460 = vsel %vm962, %v1458, %v1459
      %v1461 = vrot.slane %v1422, 4
      %v1462 = vrot.slane %v1423, 4
      %v1463 = vsel %vm962, %v1461, %v1462
      %v1472 = vpack.c.bf16 %v1445, %v1442
      %v1473 = vpack.c.bf16 %v1451, %v1448
      %v1474 = vpack.c.bf16 %v1457, %v1454
      %v1475 = vpack.c.bf16 %v1463, %v1460
      %s1476 = scalar_lea.vmem %s5, 48
      %v1477 = vld [vmem:[%s1476] sm:$0xf]
      %v1478 = vld [vmem:[%s1476 + $0x4] sm:$0xf]
      %v1479 = vld [vmem:[%s1476 + $0x8] sm:$0xf]
      %v1480 = vld [vmem:[%s1476 + $0xc] sm:$0xf]
      %v1485 = vunpack.c.l.b16 %v1477
      %v1486 = vunpack.c.l.b16 %v1478
      %v1487 = vunpack.c.l.b16 %v1479
      %v1488 = vunpack.c.l.b16 %v1480
      %v1489 = vpack.c.b16 %v1486, %v1485
      %v1490 = vpack.c.b16 %v1488, %v1487
      %v1494 = vsel %vm693, %v1472, 0
      %v1497 = vsel %vm693, %v1473, 0
      %v1500 = vsel %vm693, %v1474, 0
      %v1503 = vsel %vm693, %v1475, 0
      %1505 = vmatprep.subr.bf16.mxu0 0
      %1506 = vmatpush1.bf16.msra.mxu0 %v1489
      %1507 = vmatprep.subr.bf16.mxu0 0
      %1508 = vmatpush1.bf16.msra.mxu0 %v1490
      %1509 = vmatprep.subr.bf16.mxu0 0
      %1510 = vmatpush1.bf16.msra.mxu0 0
      %1511 = vmatprep.subr.bf16.mxu0 0
      %1512 = vmatpush1.bf16.msra.mxu0 0
      %1513 = vmatprep.subr.bf16.mxu0 0
      %1514 = vmatpush1.bf16.msra.mxu0 0
      %1515 = vmatprep.subr.bf16.mxu0 0
      %1516 = vmatpush1.bf16.msra.mxu0 0
      %1517 = vmatprep.subr.bf16.mxu0 0
      %1518 = vmatpush1.bf16.msra.mxu0 0
      %1519 = vmatprep.subr.bf16.mxu0 0
      %1520 = vmatpush1.bf16.msra.mxu0 0
      %1521 = vmatprep.subr.bf16.mxu0 0
      %1522 = vmatpush1.bf16.msra.mxu0 0
      %1523 = vmatprep.subr.bf16.mxu0 0
      %1524 = vmatpush1.bf16.msra.mxu0 0
      %1525 = vmatprep.subr.bf16.mxu0 0
      %1526 = vmatpush1.bf16.msra.mxu0 0
      %1527 = vmatprep.subr.bf16.mxu0 0
      %1528 = vmatpush1.bf16.msra.mxu0 0
      %1529 = vmatprep.subr.bf16.mxu0 0
      %1530 = vmatpush1.bf16.msra.mxu0 0
      %1531 = vmatprep.subr.bf16.mxu0 0
      %1532 = vmatpush1.bf16.msra.mxu0 0
      %1533 = vmatprep.subr.bf16.mxu0 0
      %1534 = vmatpush1.bf16.msra.mxu0 0
      %1535 = vmatprep.subr.bf16.mxu0 0
      %1536 = vmatpush1.bf16.msra.mxu0 0
      %1537 = vmatprep.mubr.bf16.mxu0 0
      %1538 = vmatmul.mubr.bf16.gmra.mrb[0].mxu0 %v1494
      %v1539 = vpop.f32.mrb[0].mxu0
      %v1540 = vadd.f32 0.0, %v1539
      %v1541 = vpop.f32.mrb[0].mxu0
      %v1542 = vpop.f32.mrb[0].mxu0
      %v1543 = vadd.f32 0.0, %v1542
      %v1544 = vpop.f32.mrb[0].mxu0
      %1545 = vmatprep.mubr.bf16.mxu0 0
      %1546 = vmatmul.mubr.bf16.gmra.mrb[0].mxu0 %v1497
      %v1547 = vpop.f32.mrb[0].mxu0
      %v1548 = vadd.f32 0.0, %v1547
      %v1549 = vpop.f32.mrb[0].mxu0
      %v1550 = vpop.f32.mrb[0].mxu0
      %v1551 = vadd.f32 0.0, %v1550
      %v1552 = vpop.f32.mrb[0].mxu0
      %1553 = vmatprep.mubr.bf16.mxu0 0
      %1554 = vmatmul.mubr.bf16.gmra.mrb[0].mxu0 %v1500
      %v1555 = vpop.f32.mrb[0].mxu0
      %v1556 = vadd.f32 0.0, %v1555
      %v1557 = vpop.f32.mrb[0].mxu0
      %v1558 = vpop.f32.mrb[0].mxu0
      %v1559 = vadd.f32 0.0, %v1558
      %v1560 = vpop.f32.mrb[0].mxu0
      %1561 = vmatprep.mubr.bf16.mxu0 0
      %1562 = vmatmul.mubr.bf16.gmra.mrb[0].mxu0 %v1503
      %v1563 = vpop.f32.mrb[0].mxu0
      %v1564 = vadd.f32 0.0, %v1563
      %v1565 = vpop.f32.mrb[0].mxu0
      %v1566 = vpop.f32.mrb[0].mxu0
      %v1567 = vadd.f32 0.0, %v1566
      %v1568 = vpop.f32.mrb[0].mxu0
      %1569 = vdwg.mxu0
      %v1570 = vadd.f32 %v1384, %v1540
      %v1571 = vadd.f32 %v1385, %v1543
      %v1572 = vadd.f32 %v1386, %v1548
      %v1573 = vadd.f32 %v1387, %v1551
      %v1574 = vadd.f32 %v1388, %v1556
      %v1575 = vadd.f32 %v1389, %v1559
      %v1576 = vadd.f32 %v1390, %v1564
      %v1577 = vadd.f32 %v1391, %v1567
      %s1578 = scalar_lea.vmem %s5, 64
      %v1579 = vld [vmem:[%s1578] sm:$0xf]
      %v1580 = vld [vmem:[%s1578 + $0x4] sm:$0xf]
      %v1581 = vld [vmem:[%s1578 + $0x8] sm:$0xf]
      %v1582 = vld [vmem:[%s1578 + $0xc] sm:$0xf]
      %v1587 = vunpack.c.l.b16 %v1579
      %v1588 = vunpack.c.l.b16 %v1580
      %v1589 = vunpack.c.l.b16 %v1581
      %v1590 = vunpack.c.l.b16 %v1582
      %v1591 = vpack.c.b16 %v1588, %v1587
      %v1592 = vpack.c.b16 %v1590, %v1589
      %1595 = vmatprep.subr.bf16.mxu0 0
      %1596 = vmatpush1.bf16.msra.mxu0 %v1591
      %1597 = vmatprep.subr.bf16.mxu0 0
      %1598 = vmatpush1.bf16.msra.mxu0 %v1592
      %1599 = vmatprep.subr.bf16.mxu0 0
      %1600 = vmatpush1.bf16.msra.mxu0 0
      %1601 = vmatprep.subr.bf16.mxu0 0
      %1602 = vmatpush1.bf16.msra.mxu0 0
      %1603 = vmatprep.subr.bf16.mxu0 0
      %1604 = vmatpush1.bf16.msra.mxu0 0
      %1605 = vmatprep.subr.bf16.mxu0 0
      %1606 = vmatpush1.bf16.msra.mxu0 0
      %1607 = vmatprep.subr.bf16.mxu0 0
      %1608 = vmatpush1.bf16.msra.mxu0 0
      %1609 = vmatprep.subr.bf16.mxu0 0
      %1610 = vmatpush1.bf16.msra.mxu0 0
      %1611 = vmatprep.subr.bf16.mxu0 0
      %1612 = vmatpush1.bf16.msra.mxu0 0
      %1613 = vmatprep.subr.bf16.mxu0 0
      %1614 = vmatpush1.bf16.msra.mxu0 0
      %1615 = vmatprep.subr.bf16.mxu0 0
      %1616 = vmatpush1.bf16.msra.mxu0 0
      %1617 = vmatprep.subr.bf16.mxu0 0
      %1618 = vmatpush1.bf16.msra.mxu0 0
      %1619 = vmatprep.subr.bf16.mxu0 0
      %1620 = vmatpush1.bf16.msra.mxu0 0
      %1621 = vmatprep.subr.bf16.mxu0 0
      %1622 = vmatpush1.bf16.msra.mxu0 0
      %1623 = vmatprep.subr.bf16.mxu0 0
      %1624 = vmatpush1.bf16.msra.mxu0 0
      %1625 = vmatprep.subr.bf16.mxu0 0
      %1626 = vmatpush1.bf16.msra.mxu0 0
      %1627 = vmatprep.mubr.bf16.mxu0 0
      %1628 = vmatmul.mubr.bf16.gmra.mrb[0].mxu0 %v695
      %v1629 = vpop.f32.mrb[0].mxu0
      %v1630 = vadd.f32 0.0, %v1629
      %v1631 = vpop.f32.mrb[0].mxu0
      %v1632 = vpop.f32.mrb[0].mxu0
      %v1633 = vadd.f32 0.0, %v1632
      %v1634 = vpop.f32.mrb[0].mxu0
      %1635 = vmatprep.mubr.bf16.mxu0 0
      %1636 = vmatmul.mubr.bf16.gmra.mrb[0].mxu0 %v698
      %v1637 = vpop.f32.mrb[0].mxu0
      %v1638 = vadd.f32 0.0, %v1637
      %v1639 = vpop.f32.mrb[0].mxu0
      %v1640 = vpop.f32.mrb[0].mxu0
      %v1641 = vadd.f32 0.0, %v1640
      %v1642 = vpop.f32.mrb[0].mxu0
      %1643 = vmatprep.mubr.bf16.mxu0 0
      %1644 = vmatmul.mubr.bf16.gmra.mrb[0].mxu0 %v701
      %v1645 = vpop.f32.mrb[0].mxu0
      %v1646 = vadd.f32 0.0, %v1645
      %v1647 = vpop.f32.mrb[0].mxu0
      %v1648 = vpop.f32.mrb[0].mxu0
      %v1649 = vadd.f32 0.0, %v1648
      %v1650 = vpop.f32.mrb[0].mxu0
      %1651 = vmatprep.mubr.bf16.mxu0 0
      %1652 = vmatmul.mubr.bf16.gmra.mrb[0].mxu0 %v704
      %v1653 = vpop.f32.mrb[0].mxu0
      %v1654 = vadd.f32 0.0, %v1653
      %v1655 = vpop.f32.mrb[0].mxu0
      %v1656 = vpop.f32.mrb[0].mxu0
      %v1657 = vadd.f32 0.0, %v1656
      %v1658 = vpop.f32.mrb[0].mxu0
      %1659 = vdwg.mxu0
      %v1660 = vadd.f32 %v1570, %v1630
      %v1661 = vadd.f32 %v1571, %v1633
      %v1662 = vadd.f32 %v1572, %v1638
      %v1663 = vadd.f32 %v1573, %v1641
      %v1664 = vadd.f32 %v1574, %v1646
      %v1665 = vadd.f32 %v1575, %v1649
      %v1666 = vadd.f32 %v1576, %v1654
      %v1667 = vadd.f32 %v1577, %v1657
      %v1668 = vld [vmem:[%s591 + $0xc] sm:$0xf]
      %v1669 = vld [vmem:[%s591 + $0x24] sm:$0xf]
      %v1670 = vld [vmem:[%s591 + $0x3c] sm:$0xf]
      %v1671 = vld [vmem:[%s591 + $0x54] sm:$0xf]
      %v1672 = vld [vmem:[%s591 + $0x6c] sm:$0xf]
      %v1673 = vld [vmem:[%s591 + $0x84] sm:$0xf]
      %v1674 = vld [vmem:[%s591 + $0x9c] sm:$0xf]
      %v1675 = vld [vmem:[%s591 + $0xb4] sm:$0xf]
      %v1676 = vunpack.c.l.bf16 %v1668
      %v1677 = vunpack.c.l.bf16 %v1669
      %v1678 = vunpack.c.l.bf16 %v1670
      %v1679 = vunpack.c.l.bf16 %v1671
      %v1680 = vunpack.c.l.bf16 %v1672
      %v1681 = vunpack.c.l.bf16 %v1673
      %v1682 = vunpack.c.l.bf16 %v1674
      %v1683 = vunpack.c.l.bf16 %v1675
      %v1684 = vpack.c.bf16 %v1677, %v1676
      %v1685 = vpack.c.bf16 %v1679, %v1678
      %v1686 = vpack.c.bf16 %v1681, %v1680
      %v1687 = vpack.c.bf16 %v1683, %v1682
      %s1688 = scalar_lea.vmem %s5, 80
      %v1689 = vld [vmem:[%s1688] sm:$0xf]
      %v1690 = vld [vmem:[%s1688 + $0x4] sm:$0xf]
      %v1691 = vld [vmem:[%s1688 + $0x8] sm:$0xf]
      %v1692 = vld [vmem:[%s1688 + $0xc] sm:$0xf]
      %v1697 = vunpack.c.l.b16 %v1689
      %v1698 = vunpack.c.l.b16 %v1690
      %v1699 = vunpack.c.l.b16 %v1691
      %v1700 = vunpack.c.l.b16 %v1692
      %v1701 = vpack.c.b16 %v1698, %v1697
      %v1702 = vpack.c.b16 %v1700, %v1699
      %v1706 = vsel %vm693, %v1684, 0
      %v1709 = vsel %vm693, %v1685, 0
      %v1712 = vsel %vm693, %v1686, 0
      %v1715 = vsel %vm693, %v1687, 0
      %1717 = vmatprep.subr.bf16.mxu0 0
      %1718 = vmatpush1.bf16.msra.mxu0 %v1701
      %1719 = vmatprep.subr.bf16.mxu0 0
      %1720 = vmatpush1.bf16.msra.mxu0 %v1702
      %1721 = vmatprep.subr.bf16.mxu0 0
      %1722 = vmatpush1.bf16.msra.mxu0 0
      %1723 = vmatprep.subr.bf16.mxu0 0
      %1724 = vmatpush1.bf16.msra.mxu0 0
      %1725 = vmatprep.subr.bf16.mxu0 0
      %1726 = vmatpush1.bf16.msra.mxu0 0
      %1727 = vmatprep.subr.bf16.mxu0 0
      %1728 = vmatpush1.bf16.msra.mxu0 0
      %1729 = vmatprep.subr.bf16.mxu0 0
      %1730 = vmatpush1.bf16.msra.mxu0 0
      %1731 = vmatprep.subr.bf16.mxu0 0
      %1732 = vmatpush1.bf16.msra.mxu0 0
      %1733 = vmatprep.subr.bf16.mxu0 0
      %1734 = vmatpush1.bf16.msra.mxu0 0
      %1735 = vmatprep.subr.bf16.mxu0 0
      %1736 = vmatpush1.bf16.msra.mxu0 0
      %1737 = vmatprep.subr.bf16.mxu0 0
      %1738 = vmatpush1.bf16.msra.mxu0 0
      %1739 = vmatprep.subr.bf16.mxu0 0
      %1740 = vmatpush1.bf16.msra.mxu0 0
      %1741 = vmatprep.subr.bf16.mxu0 0
      %1742 = vmatpush1.bf16.msra.mxu0 0
      %1743 = vmatprep.subr.bf16.mxu0 0
      %1744 = vmatpush1.bf16.msra.mxu0 0
      %1745 = vmatprep.subr.bf16.mxu0 0
      %1746 = vmatpush1.bf16.msra.mxu0 0
      %1747 = vmatprep.subr.bf16.mxu0 0
      %1748 = vmatpush1.bf16.msra.mxu0 0
      %1749 = vmatprep.mubr.bf16.mxu0 0
      %1750 = vmatmul.mubr.bf16.gmra.mrb[0].mxu0 %v1706
      %v1751 = vpop.f32.mrb[0].mxu0
      %v1752 = vadd.f32 0.0, %v1751
      %v1753 = vpop.f32.mrb[0].mxu0
      %v1754 = vpop.f32.mrb[0].mxu0
      %v1755 = vadd.f32 0.0, %v1754
      %v1756 = vpop.f32.mrb[0].mxu0
      %1757 = vmatprep.mubr.bf16.mxu0 0
      %1758 = vmatmul.mubr.bf16.gmra.mrb[0].mxu0 %v1709
      %v1759 = vpop.f32.mrb[0].mxu0
      %v1760 = vadd.f32 0.0, %v1759
      %v1761 = vpop.f32.mrb[0].mxu0
      %v1762 = vpop.f32.mrb[0].mxu0
      %v1763 = vadd.f32 0.0, %v1762
      %v1764 = vpop.f32.mrb[0].mxu0
      %1765 = vmatprep.mubr.bf16.mxu0 0
      %1766 = vmatmul.mubr.bf16.gmra.mrb[0].mxu0 %v1712
      %v1767 = vpop.f32.mrb[0].mxu0
      %v1768 = vadd.f32 0.0, %v1767
      %v1769 = vpop.f32.mrb[0].mxu0
      %v1770 = vpop.f32.mrb[0].mxu0
      %v1771 = vadd.f32 0.0, %v1770
      %v1772 = vpop.f32.mrb[0].mxu0
      %1773 = vmatprep.mubr.bf16.mxu0 0
      %1774 = vmatmul.mubr.bf16.gmra.mrb[0].mxu0 %v1715
      %v1775 = vpop.f32.mrb[0].mxu0
      %v1776 = vadd.f32 0.0, %v1775
      %v1777 = vpop.f32.mrb[0].mxu0
      %v1778 = vpop.f32.mrb[0].mxu0
      %v1779 = vadd.f32 0.0, %v1778
      %v1780 = vpop.f32.mrb[0].mxu0
      %1781 = vdwg.mxu0
      %v1782 = vadd.f32 %v1660, %v1752
      %v1783 = vadd.f32 %v1661, %v1755
      %v1784 = vadd.f32 %v1662, %v1760
      %v1785 = vadd.f32 %v1663, %v1763
      %v1786 = vadd.f32 %v1664, %v1768
      %v1787 = vadd.f32 %v1665, %v1771
      %v1788 = vadd.f32 %v1666, %v1776
      %v1789 = vadd.f32 %v1667, %v1779
      %s1790 = scalar_lea.vmem %s581, 576
      %v1791 = vld [vmem:[%s1790 + $0x4] sm:$0xc]
      %v1792 = vld [vmem:[%s1790 + $0x8] sm:$0x3]
      %v1793 = vld [vmem:[%s1790 + $0x1c] sm:$0xc]
      %v1794 = vld [vmem:[%s1790 + $0x20] sm:$0x3]
      %v1795 = vld [vmem:[%s1790 + $0x34] sm:$0xc]
      %v1796 = vld [vmem:[%s1790 + $0x38] sm:$0x3]
      %v1797 = vld [vmem:[%s1790 + $0x4c] sm:$0xc]
      %v1798 = vld [vmem:[%s1790 + $0x50] sm:$0x3]
      %v1799 = vld [vmem:[%s1790 + $0x64] sm:$0xc]
      %v1800 = vld [vmem:[%s1790 + $0x68] sm:$0x3]
      %v1801 = vld [vmem:[%s1790 + $0x7c] sm:$0xc]
      %v1802 = vld [vmem:[%s1790 + $0x80] sm:$0x3]
      %v1803 = vld [vmem:[%s1790 + $0x94] sm:$0xc]
      %v1804 = vld [vmem:[%s1790 + $0x98] sm:$0x3]
      %v1805 = vld [vmem:[%s1790 + $0xac] sm:$0xc]
      %v1806 = vld [vmem:[%s1790 + $0xb0] sm:$0x3]
      %v1807 = vunpack.c.l.bf16 %v1791
      %v1808 = vunpack.c.l.bf16 %v1792
      %v1809 = vunpack.c.l.bf16 %v1793
      %v1810 = vunpack.c.l.bf16 %v1794
      %v1811 = vunpack.c.l.bf16 %v1795
      %v1812 = vunpack.c.l.bf16 %v1796
      %v1813 = vunpack.c.l.bf16 %v1797
      %v1814 = vunpack.c.l.bf16 %v1798
      %v1815 = vunpack.c.l.bf16 %v1799
      %v1816 = vunpack.c.l.bf16 %v1800
      %v1817 = vunpack.c.l.bf16 %v1801
      %v1818 = vunpack.c.l.bf16 %v1802
      %v1819 = vunpack.c.l.bf16 %v1803
      %v1820 = vunpack.c.l.bf16 %v1804
      %v1821 = vunpack.c.l.bf16 %v1805
      %v1822 = vunpack.c.l.bf16 %v1806
      %v1839 = vrot.slane %v1807, 4
      %v1840 = vrot.slane %v1808, 4
      %v1841 = vsel %vm962, %v1839, %v1840
      %v1842 = vrot.slane %v1809, 4
      %v1843 = vrot.slane %v1810, 4
      %v1844 = vsel %vm962, %v1842, %v1843
      %v1845 = vrot.slane %v1811, 4
      %v1846 = vrot.slane %v1812, 4
      %v1847 = vsel %vm962, %v1845, %v1846
      %v1848 = vrot.slane %v1813, 4
      %v1849 = vrot.slane %v1814, 4
      %v1850 = vsel %vm962, %v1848, %v1849
      %v1851 = vrot.slane %v1815, 4
      %v1852 = vrot.slane %v1816, 4
      %v1853 = vsel %vm962, %v1851, %v1852
      %v1854 = vrot.slane %v1817, 4
      %v1855 = vrot.slane %v1818, 4
      %v1856 = vsel %vm962, %v1854, %v1855
      %v1857 = vrot.slane %v1819, 4
      %v1858 = vrot.slane %v1820, 4
      %v1859 = vsel %vm962, %v1857, %v1858
      %v1860 = vrot.slane %v1821, 4
      %v1861 = vrot.slane %v1822, 4
      %v1862 = vsel %vm962, %v1860, %v1861
      %v1871 = vpack.c.bf16 %v1844, %v1841
      %v1872 = vpack.c.bf16 %v1850, %v1847
      %v1873 = vpack.c.bf16 %v1856, %v1853
      %v1874 = vpack.c.bf16 %v1862, %v1859
      %s1875 = scalar_lea.vmem %s5, 96
      %v1876 = vld [vmem:[%s1875] sm:$0xf]
      %v1877 = vld [vmem:[%s1875 + $0x4] sm:$0xf]
      %v1878 = vld [vmem:[%s1875 + $0x8] sm:$0xf]
      %v1879 = vld [vmem:[%s1875 + $0xc] sm:$0xf]
      %v1884 = vunpack.c.l.b16 %v1876
      %v1885 = vunpack.c.l.b16 %v1877
      %v1886 = vunpack.c.l.b16 %v1878
      %v1887 = vunpack.c.l.b16 %v1879
      %v1888 = vpack.c.b16 %v1885, %v1884
      %v1889 = vpack.c.b16 %v1887, %v1886
      %v1893 = vsel %vm693, %v1871, 0
      %v1896 = vsel %vm693, %v1872, 0
      %v1899 = vsel %vm693, %v1873, 0
      %v1902 = vsel %vm693, %v1874, 0
      %1904 = vmatprep.subr.bf16.mxu0 0
      %1905 = vmatpush1.bf16.msra.mxu0 %v1888
      %1906 = vmatprep.subr.bf16.mxu0 0
      %1907 = vmatpush1.bf16.msra.mxu0 %v1889
      %1908 = vmatprep.subr.bf16.mxu0 0
      %1909 = vmatpush1.bf16.msra.mxu0 0
      %1910 = vmatprep.subr.bf16.mxu0 0
      %1911 = vmatpush1.bf16.msra.mxu0 0
      %1912 = vmatprep.subr.bf16.mxu0 0
      %1913 = vmatpush1.bf16.msra.mxu0 0
      %1914 = vmatprep.subr.bf16.mxu0 0
      %1915 = vmatpush1.bf16.msra.mxu0 0
      %1916 = vmatprep.subr.bf16.mxu0 0
      %1917 = vmatpush1.bf16.msra.mxu0 0
      %1918 = vmatprep.subr.bf16.mxu0 0
      %1919 = vmatpush1.bf16.msra.mxu0 0
      %1920 = vmatprep.subr.bf16.mxu0 0
      %1921 = vmatpush1.bf16.msra.mxu0 0
      %1922 = vmatprep.subr.bf16.mxu0 0
      %1923 = vmatpush1.bf16.msra.mxu0 0
      %1924 = vmatprep.subr.bf16.mxu0 0
      %1925 = vmatpush1.bf16.msra.mxu0 0
      %1926 = vmatprep.subr.bf16.mxu0 0
      %1927 = vmatpush1.bf16.msra.mxu0 0
      %1928 = vmatprep.subr.bf16.mxu0 0
      %1929 = vmatpush1.bf16.msra.mxu0 0
      %1930 = vmatprep.subr.bf16.mxu0 0
      %1931 = vmatpush1.bf16.msra.mxu0 0
      %1932 = vmatprep.subr.bf16.mxu0 0
      %1933 = vmatpush1.bf16.msra.mxu0 0
      %1934 = vmatprep.subr.bf16.mxu0 0
      %1935 = vmatpush1.bf16.msra.mxu0 0
      %1936 = vmatprep.mubr.bf16.mxu0 0
      %1937 = vmatmul.mubr.bf16.gmra.mrb[0].mxu0 %v1893
      %v1938 = vpop.f32.mrb[0].mxu0
      %v1939 = vadd.f32 0.0, %v1938
      %v1940 = vpop.f32.mrb[0].mxu0
      %v1941 = vpop.f32.mrb[0].mxu0
      %v1942 = vadd.f32 0.0, %v1941
      %v1943 = vpop.f32.mrb[0].mxu0
      %1944 = vmatprep.mubr.bf16.mxu0 0
      %1945 = vmatmul.mubr.bf16.gmra.mrb[0].mxu0 %v1896
      %v1946 = vpop.f32.mrb[0].mxu0
      %v1947 = vadd.f32 0.0, %v1946
      %v1948 = vpop.f32.mrb[0].mxu0
      %v1949 = vpop.f32.mrb[0].mxu0
      %v1950 = vadd.f32 0.0, %v1949
      %v1951 = vpop.f32.mrb[0].mxu0
      %1952 = vmatprep.mubr.bf16.mxu0 0
      %1953 = vmatmul.mubr.bf16.gmra.mrb[0].mxu0 %v1899
      %v1954 = vpop.f32.mrb[0].mxu0
      %v1955 = vadd.f32 0.0, %v1954
      %v1956 = vpop.f32.mrb[0].mxu0
      %v1957 = vpop.f32.mrb[0].mxu0
      %v1958 = vadd.f32 0.0, %v1957
      %v1959 = vpop.f32.mrb[0].mxu0
      %1960 = vmatprep.mubr.bf16.mxu0 0
      %1961 = vmatmul.mubr.bf16.gmra.mrb[0].mxu0 %v1902
      %v1962 = vpop.f32.mrb[0].mxu0
      %v1963 = vadd.f32 0.0, %v1962
      %v1964 = vpop.f32.mrb[0].mxu0
      %v1965 = vpop.f32.mrb[0].mxu0
      %v1966 = vadd.f32 0.0, %v1965
      %v1967 = vpop.f32.mrb[0].mxu0
      %1968 = vdwg.mxu0
      %v1969 = vadd.f32 %v1782, %v1939
      %v1970 = vadd.f32 %v1783, %v1942
      %v1971 = vadd.f32 %v1784, %v1947
      %v1972 = vadd.f32 %v1785, %v1950
      %v1973 = vadd.f32 %v1786, %v1955
      %v1974 = vadd.f32 %v1787, %v1958
      %v1975 = vadd.f32 %v1788, %v1963
      %v1976 = vadd.f32 %v1789, %v1966
      %v1977 = vld [vmem:[%s1790 + $0x8] sm:$0xe]
      %v1978 = vld [vmem:[%s1790 + $0xc] sm:$0x1]
      %v1979 = vld [vmem:[%s1790 + $0x20] sm:$0xe]
      %v1980 = vld [vmem:[%s1790 + $0x24] sm:$0x1]
      %v1981 = vld [vmem:[%s1790 + $0x38] sm:$0xe]
      %v1982 = vld [vmem:[%s1790 + $0x3c] sm:$0x1]
      %v1983 = vld [vmem:[%s1790 + $0x50] sm:$0xe]
      %v1984 = vld [vmem:[%s1790 + $0x54] sm:$0x1]
      %v1985 = vld [vmem:[%s1790 + $0x68] sm:$0xe]
      %v1986 = vld [vmem:[%s1790 + $0x6c] sm:$0x1]
      %v1987 = vld [vmem:[%s1790 + $0x80] sm:$0xe]
      %v1988 = vld [vmem:[%s1790 + $0x84] sm:$0x1]
      %v1989 = vld [vmem:[%s1790 + $0x98] sm:$0xe]
      %v1990 = vld [vmem:[%s1790 + $0x9c] sm:$0x1]
      %v1991 = vld [vmem:[%s1790 + $0xb0] sm:$0xe]
      %v1992 = vld [vmem:[%s1790 + $0xb4] sm:$0x1]
      %v1993 = vunpack.c.l.bf16 %v1977
      %v1994 = vunpack.c.l.bf16 %v1978
      %v1995 = vunpack.c.l.bf16 %v1979
      %v1996 = vunpack.c.l.bf16 %v1980
      %v1997 = vunpack.c.l.bf16 %v1981
      %v1998 = vunpack.c.l.bf16 %v1982
      %v1999 = vunpack.c.l.bf16 %v1983
      %v2000 = vunpack.c.l.bf16 %v1984
      %v2001 = vunpack.c.l.bf16 %v1985
      %v2002 = vunpack.c.l.bf16 %v1986
      %v2003 = vunpack.c.l.bf16 %v1987
      %v2004 = vunpack.c.l.bf16 %v1988
      %v2005 = vunpack.c.l.bf16 %v1989
      %v2006 = vunpack.c.l.bf16 %v1990
      %v2007 = vunpack.c.l.bf16 %v1991
      %v2008 = vunpack.c.l.bf16 %v1992
      %v2025 = vrot.slane %v1993, 2
      %v2026 = vrot.slane %v1994, 2
      %v2027 = vsel %vm640, %v2025, %v2026
      %v2028 = vrot.slane %v1995, 2
      %v2029 = vrot.slane %v1996, 2
      %v2030 = vsel %vm640, %v2028, %v2029
      %v2031 = vrot.slane %v1997, 2
      %v2032 = vrot.slane %v1998, 2
      %v2033 = vsel %vm640, %v2031, %v2032
      %v2034 = vrot.slane %v1999, 2
      %v2035 = vrot.slane %v2000, 2
      %v2036 = vsel %vm640, %v2034, %v2035
      %v2037 = vrot.slane %v2001, 2
      %v2038 = vrot.slane %v2002, 2
      %v2039 = vsel %vm640, %v2037, %v2038
      %v2040 = vrot.slane %v2003, 2
      %v2041 = vrot.slane %v2004, 2
      %v2042 = vsel %vm640, %v2040, %v2041
      %v2043 = vrot.slane %v2005, 2
      %v2044 = vrot.slane %v2006, 2
      %v2045 = vsel %vm640, %v2043, %v2044
      %v2046 = vrot.slane %v2007, 2
      %v2047 = vrot.slane %v2008, 2
      %v2048 = vsel %vm640, %v2046, %v2047
      %v2057 = vpack.c.bf16 %v2030, %v2027
      %v2058 = vpack.c.bf16 %v2036, %v2033
      %v2059 = vpack.c.bf16 %v2042, %v2039
      %v2060 = vpack.c.bf16 %v2048, %v2045
      %s2061 = scalar_lea.vmem %s5, 112
      %v2062 = vld [vmem:[%s2061] sm:$0xf]
      %v2063 = vld [vmem:[%s2061 + $0x4] sm:$0xf]
      %v2064 = vld [vmem:[%s2061 + $0x8] sm:$0xf]
      %v2065 = vld [vmem:[%s2061 + $0xc] sm:$0xf]
      %v2070 = vunpack.c.l.b16 %v2062
      %v2071 = vunpack.c.l.b16 %v2063
      %v2072 = vunpack.c.l.b16 %v2064
      %v2073 = vunpack.c.l.b16 %v2065
      %v2074 = vpack.c.b16 %v2071, %v2070
      %v2075 = vpack.c.b16 %v2073, %v2072
      %v2079 = vsel %vm693, %v2057, 0
      %v2082 = vsel %vm693, %v2058, 0
      %v2085 = vsel %vm693, %v2059, 0
      %v2088 = vsel %vm693, %v2060, 0
      %2090 = vmatprep.subr.bf16.mxu0 0
      %2091 = vmatpush1.bf16.msra.mxu0 %v2074
      %2092 = vmatprep.subr.bf16.mxu0 0
      %2093 = vmatpush1.bf16.msra.mxu0 %v2075
      %2094 = vmatprep.subr.bf16.mxu0 0
      %2095 = vmatpush1.bf16.msra.mxu0 0
      %2096 = vmatprep.subr.bf16.mxu0 0
      %2097 = vmatpush1.bf16.msra.mxu0 0
      %2098 = vmatprep.subr.bf16.mxu0 0
      %2099 = vmatpush1.bf16.msra.mxu0 0
      %2100 = vmatprep.subr.bf16.mxu0 0
      %2101 = vmatpush1.bf16.msra.mxu0 0
      %2102 = vmatprep.subr.bf16.mxu0 0
      %2103 = vmatpush1.bf16.msra.mxu0 0
      %2104 = vmatprep.subr.bf16.mxu0 0
      %2105 = vmatpush1.bf16.msra.mxu0 0
      %2106 = vmatprep.subr.bf16.mxu0 0
      %2107 = vmatpush1.bf16.msra.mxu0 0
      %2108 = vmatprep.subr.bf16.mxu0 0
      %2109 = vmatpush1.bf16.msra.mxu0 0
      %2110 = vmatprep.subr.bf16.mxu0 0
      %2111 = vmatpush1.bf16.msra.mxu0 0
      %2112 = vmatprep.subr.bf16.mxu0 0
      %2113 = vmatpush1.bf16.msra.mxu0 0
      %2114 = vmatprep.subr.bf16.mxu0 0
      %2115 = vmatpush1.bf16.msra.mxu0 0
      %2116 = vmatprep.subr.bf16.mxu0 0
      %2117 = vmatpush1.bf16.msra.mxu0 0
      %2118 = vmatprep.subr.bf16.mxu0 0
      %2119 = vmatpush1.bf16.msra.mxu0 0
      %2120 = vmatprep.subr.bf16.mxu0 0
      %2121 = vmatpush1.bf16.msra.mxu0 0
      %2122 = vmatprep.mubr.bf16.mxu0 0
      %2123 = vmatmul.mubr.bf16.gmra.mrb[0].mxu0 %v2079
      %v2124 = vpop.f32.mrb[0].mxu0
      %v2125 = vadd.f32 0.0, %v2124
      %v2126 = vpop.f32.mrb[0].mxu0
      %v2127 = vpop.f32.mrb[0].mxu0
      %v2128 = vadd.f32 0.0, %v2127
      %v2129 = vpop.f32.mrb[0].mxu0
      %2130 = vmatprep.mubr.bf16.mxu0 0
      %2131 = vmatmul.mubr.bf16.gmra.mrb[0].mxu0 %v2082
      %v2132 = vpop.f32.mrb[0].mxu0
      %v2133 = vadd.f32 0.0, %v2132
      %v2134 = vpop.f32.mrb[0].mxu0
      %v2135 = vpop.f32.mrb[0].mxu0
      %v2136 = vadd.f32 0.0, %v2135
      %v2137 = vpop.f32.mrb[0].mxu0
      %2138 = vmatprep.mubr.bf16.mxu0 0
      %2139 = vmatmul.mubr.bf16.gmra.mrb[0].mxu0 %v2085
      %v2140 = vpop.f32.mrb[0].mxu0
      %v2141 = vadd.f32 0.0, %v2140
      %v2142 = vpop.f32.mrb[0].mxu0
      %v2143 = vpop.f32.mrb[0].mxu0
      %v2144 = vadd.f32 0.0, %v2143
      %v2145 = vpop.f32.mrb[0].mxu0
      %2146 = vmatprep.mubr.bf16.mxu0 0
      %2147 = vmatmul.mubr.bf16.gmra.mrb[0].mxu0 %v2088
      %v2148 = vpop.f32.mrb[0].mxu0
      %v2149 = vadd.f32 0.0, %v2148
      %v2150 = vpop.f32.mrb[0].mxu0
      %v2151 = vpop.f32.mrb[0].mxu0
      %v2152 = vadd.f32 0.0, %v2151
      %v2153 = vpop.f32.mrb[0].mxu0
      %2154 = vdwg.mxu0
      %v2155 = vadd.f32 %v1969, %v2125
      %v2156 = vadd.f32 %v1970, %v2128
      %v2157 = vadd.f32 %v1971, %v2133
      %v2158 = vadd.f32 %v1972, %v2136
      %v2159 = vadd.f32 %v1973, %v2141
      %v2160 = vadd.f32 %v1974, %v2144
      %v2161 = vadd.f32 %v1975, %v2149
      %v2162 = vadd.f32 %v1976, %v2152
      %v2163 = vld [vmem:[%s1790 + $0xc] sm:$0xf]
      %v2164 = vld [vmem:[%s1790 + $0x24] sm:$0xf]
      %v2165 = vld [vmem:[%s1790 + $0x3c] sm:$0xf]
      %v2166 = vld [vmem:[%s1790 + $0x54] sm:$0xf]
      %v2167 = vld [vmem:[%s1790 + $0x6c] sm:$0xf]
      %v2168 = vld [vmem:[%s1790 + $0x84] sm:$0xf]
      %v2169 = vld [vmem:[%s1790 + $0x9c] sm:$0xf]
      %v2170 = vld [vmem:[%s1790 + $0xb4] sm:$0xf]
      %v2171 = vunpack.c.l.bf16 %v2163
      %v2172 = vunpack.c.l.bf16 %v2164
      %v2173 = vunpack.c.l.bf16 %v2165
      %v2174 = vunpack.c.l.bf16 %v2166
      %v2175 = vunpack.c.l.bf16 %v2167
      %v2176 = vunpack.c.l.bf16 %v2168
      %v2177 = vunpack.c.l.bf16 %v2169
      %v2178 = vunpack.c.l.bf16 %v2170
      %v2179 = vpack.c.bf16 %v2172, %v2171
      %v2180 = vpack.c.bf16 %v2174, %v2173
      %v2181 = vpack.c.bf16 %v2176, %v2175
      %v2182 = vpack.c.bf16 %v2178, %v2177
      %s2183 = scalar_lea.vmem %s5, 128
      %v2184 = vld [vmem:[%s2183] sm:$0xf]
      %v2185 = vld [vmem:[%s2183 + $0x4] sm:$0xf]
      %v2186 = vld [vmem:[%s2183 + $0x8] sm:$0xf]
      %v2187 = vld [vmem:[%s2183 + $0xc] sm:$0xf]
      %v2192 = vunpack.c.l.b16 %v2184
      %v2193 = vunpack.c.l.b16 %v2185
      %v2194 = vunpack.c.l.b16 %v2186
      %v2195 = vunpack.c.l.b16 %v2187
      %v2196 = vpack.c.b16 %v2193, %v2192
      %v2197 = vpack.c.b16 %v2195, %v2194
      %v2201 = vsel %vm693, %v2179, 0
      %v2204 = vsel %vm693, %v2180, 0
      %v2207 = vsel %vm693, %v2181, 0
      %v2210 = vsel %vm693, %v2182, 0
      %2212 = vmatprep.subr.bf16.mxu0 0
      %2213 = vmatpush1.bf16.msra.mxu0 %v2196
      %2214 = vmatprep.subr.bf16.mxu0 0
      %2215 = vmatpush1.bf16.msra.mxu0 %v2197
      %2216 = vmatprep.subr.bf16.mxu0 0
      %2217 = vmatpush1.bf16.msra.mxu0 0
      %2218 = vmatprep.subr.bf16.mxu0 0
      %2219 = vmatpush1.bf16.msra.mxu0 0
      %2220 = vmatprep.subr.bf16.mxu0 0
      %2221 = vmatpush1.bf16.msra.mxu0 0
      %2222 = vmatprep.subr.bf16.mxu0 0
      %2223 = vmatpush1.bf16.msra.mxu0 0
      %2224 = vmatprep.subr.bf16.mxu0 0
      %2225 = vmatpush1.bf16.msra.mxu0 0
      %2226 = vmatprep.subr.bf16.mxu0 0
      %2227 = vmatpush1.bf16.msra.mxu0 0
      %2228 = vmatprep.subr.bf16.mxu0 0
      %2229 = vmatpush1.bf16.msra.mxu0 0
      %2230 = vmatprep.subr.bf16.mxu0 0
      %2231 = vmatpush1.bf16.msra.mxu0 0
      %2232 = vmatprep.subr.bf16.mxu0 0
      %2233 = vmatpush1.bf16.msra.mxu0 0
      %2234 = vmatprep.subr.bf16.mxu0 0
      %2235 = vmatpush1.bf16.msra.mxu0 0
      %2236 = vmatprep.subr.bf16.mxu0 0
      %2237 = vmatpush1.bf16.msra.mxu0 0
      %2238 = vmatprep.subr.bf16.mxu0 0
      %2239 = vmatpush1.bf16.msra.mxu0 0
      %2240 = vmatprep.subr.bf16.mxu0 0
      %2241 = vmatpush1.bf16.msra.mxu0 0
      %2242 = vmatprep.subr.bf16.mxu0 0
      %2243 = vmatpush1.bf16.msra.mxu0 0
      %2244 = vmatprep.mubr.bf16.mxu0 0
      %2245 = vmatmul.mubr.bf16.gmra.mrb[0].mxu0 %v2201
      %v2246 = vpop.f32.mrb[0].mxu0
      %v2247 = vadd.f32 0.0, %v2246
      %v2248 = vpop.f32.mrb[0].mxu0
      %v2249 = vpop.f32.mrb[0].mxu0
      %v2250 = vadd.f32 0.0, %v2249
      %v2251 = vpop.f32.mrb[0].mxu0
      %2252 = vmatprep.mubr.bf16.mxu0 0
      %2253 = vmatmul.mubr.bf16.gmra.mrb[0].mxu0 %v2204
      %v2254 = vpop.f32.mrb[0].mxu0
      %v2255 = vadd.f32 0.0, %v2254
      %v2256 = vpop.f32.mrb[0].mxu0
      %v2257 = vpop.f32.mrb[0].mxu0
      %v2258 = vadd.f32 0.0, %v2257
      %v2259 = vpop.f32.mrb[0].mxu0
      %2260 = vmatprep.mubr.bf16.mxu0 0
      %2261 = vmatmul.mubr.bf16.gmra.mrb[0].mxu0 %v2207
      %v2262 = vpop.f32.mrb[0].mxu0
      %v2263 = vadd.f32 0.0, %v2262
      %v2264 = vpop.f32.mrb[0].mxu0
      %v2265 = vpop.f32.mrb[0].mxu0
      %v2266 = vadd.f32 0.0, %v2265
      %v2267 = vpop.f32.mrb[0].mxu0
      %2268 = vmatprep.mubr.bf16.mxu0 0
      %2269 = vmatmul.mubr.bf16.gmra.mrb[0].mxu0 %v2210
      %v2270 = vpop.f32.mrb[0].mxu0
      %v2271 = vadd.f32 0.0, %v2270
      %v2272 = vpop.f32.mrb[0].mxu0
      %v2273 = vpop.f32.mrb[0].mxu0
      %v2274 = vadd.f32 0.0, %v2273
      %v2275 = vpop.f32.mrb[0].mxu0
      %2276 = vdwg.mxu0
      %v2277 = vadd.f32 %v2155, %v2247
      %v2278 = vadd.f32 %v2156, %v2250
      %v2279 = vadd.f32 %v2157, %v2255
      %v2280 = vadd.f32 %v2158, %v2258
      %v2281 = vadd.f32 %v2159, %v2263
      %v2282 = vadd.f32 %v2160, %v2266
      %v2283 = vadd.f32 %v2161, %v2271
      %v2284 = vadd.f32 %v2162, %v2274
      %v2285 = vld [vmem:[%s6] sm:$0x1]
      %v2287 = vlaneseq
      %v2288 = vshrl.u32 %v2287, 7
      %v2289 = vsub.s32 0, %v2288
      %v2290 = vrot.slane %v2285, %v2289
      %v2292 = vmul.f32 %v2277, %v2290
      %v2293 = vmul.f32 %v2278, %v2290
      %v2294 = vmul.f32 %v2279, %v2290
      %v2295 = vmul.f32 %v2280, %v2290
      %v2296 = vmul.f32 %v2281, %v2290
      %v2297 = vmul.f32 %v2282, %v2290
      %v2298 = vmul.f32 %v2283, %v2290
      %v2299 = vmul.f32 %v2284, %v2290
      %v2300 = vld [vmem:[%s7] sm:$0x1]
      %v2302 = vlaneseq
      %v2303 = vshrl.u32 %v2302, 7
      %v2304 = vsub.s32 0, %v2303
      %v2305 = vrot.slane %v2300, %v2304
      %v2307 = vadd.f32 %v2292, %v2305
      %v2308 = vadd.f32 %v2293, %v2305
      %v2309 = vadd.f32 %v2294, %v2305
      %v2310 = vadd.f32 %v2295, %v2305
      %v2311 = vadd.f32 %v2296, %v2305
      %v2312 = vadd.f32 %v2297, %v2305
      %v2313 = vadd.f32 %v2298, %v2305
      %v2314 = vadd.f32 %v2299, %v2305
      %v2315 = vmax.f32 %v2307, 0.0
      %v2316 = vmax.f32 %v2308, 0.0
      %v2317 = vmax.f32 %v2309, 0.0
      %v2318 = vmax.f32 %v2310, 0.0
      %v2319 = vmax.f32 %v2311, 0.0
      %v2320 = vmax.f32 %v2312, 0.0
      %v2321 = vmax.f32 %v2313, 0.0
      %v2322 = vmax.f32 %v2314, 0.0
      %v2323 = vpack.c.bf16 %v2316, %v2315
      %v2324 = vpack.c.bf16 %v2318, %v2317
      %v2325 = vpack.c.bf16 %v2320, %v2319
      %v2326 = vpack.c.bf16 %v2322, %v2321
      %s2327 = scalar_lea.vmem %s8, 16
      %v2328 = vld [vmem:[%s2327] sm:$0xf]
      %v2329 = vld [vmem:[%s2327 + $0x4] sm:$0xf]
      %v2330 = vld [vmem:[%s2327 + $0x8] sm:$0xf]
      %v2331 = vld [vmem:[%s2327 + $0xc] sm:$0xf]
      %v2336 = vunpack.c.l.b16 %v2328
      %v2337 = vunpack.c.l.b16 %v2329
      %v2338 = vunpack.c.l.b16 %v2330
      %v2339 = vunpack.c.l.b16 %v2331
      %v2340 = vpack.c.b16 %v2337, %v2336
      %v2341 = vpack.c.b16 %v2339, %v2338
      %v2345 = vsel %vm693, %v2323, 0
      %v2348 = vsel %vm693, %v2324, 0
      %v2351 = vsel %vm693, %v2325, 0
      %v2354 = vsel %vm693, %v2326, 0
      %2356 = vmatprep.subr.bf16.mxu0 0
      %2357 = vmatpush1.bf16.msra.mxu0 %v2340
      %2358 = vmatprep.subr.bf16.mxu0 0
      %2359 = vmatpush1.bf16.msra.mxu0 %v2341
      %2360 = vmatprep.subr.bf16.mxu0 0
      %2361 = vmatpush1.bf16.msra.mxu0 0
      %2362 = vmatprep.subr.bf16.mxu0 0
      %2363 = vmatpush1.bf16.msra.mxu0 0
      %2364 = vmatprep.subr.bf16.mxu0 0
      %2365 = vmatpush1.bf16.msra.mxu0 0
      %2366 = vmatprep.subr.bf16.mxu0 0
      %2367 = vmatpush1.bf16.msra.mxu0 0
      %2368 = vmatprep.subr.bf16.mxu0 0
      %2369 = vmatpush1.bf16.msra.mxu0 0
      %2370 = vmatprep.subr.bf16.mxu0 0
      %2371 = vmatpush1.bf16.msra.mxu0 0
      %2372 = vmatprep.subr.bf16.mxu0 0
      %2373 = vmatpush1.bf16.msra.mxu0 0
      %2374 = vmatprep.subr.bf16.mxu0 0
      %2375 = vmatpush1.bf16.msra.mxu0 0
      %2376 = vmatprep.subr.bf16.mxu0 0
      %2377 = vmatpush1.bf16.msra.mxu0 0
      %2378 = vmatprep.subr.bf16.mxu0 0
      %2379 = vmatpush1.bf16.msra.mxu0 0
      %2380 = vmatprep.subr.bf16.mxu0 0
      %2381 = vmatpush1.bf16.msra.mxu0 0
      %2382 = vmatprep.subr.bf16.mxu0 0
      %2383 = vmatpush1.bf16.msra.mxu0 0
      %2384 = vmatprep.subr.bf16.mxu0 0
      %2385 = vmatpush1.bf16.msra.mxu0 0
      %2386 = vmatprep.subr.bf16.mxu0 0
      %2387 = vmatpush1.bf16.msra.mxu0 0
      %2388 = vmatprep.mubr.bf16.mxu0 0
      %2389 = vmatmul.mubr.bf16.gmra.mrb[0].mxu0 %v2345
      %v2390 = vpop.f32.mrb[0].mxu0
      %v2391 = vadd.f32 0.0, %v2390
      %v2392 = vpop.f32.mrb[0].mxu0
      %v2393 = vpop.f32.mrb[0].mxu0
      %v2394 = vadd.f32 0.0, %v2393
      %v2395 = vpop.f32.mrb[0].mxu0
      %2396 = vmatprep.mubr.bf16.mxu0 0
      %2397 = vmatmul.mubr.bf16.gmra.mrb[0].mxu0 %v2348
      %v2398 = vpop.f32.mrb[0].mxu0
      %v2399 = vadd.f32 0.0, %v2398
      %v2400 = vpop.f32.mrb[0].mxu0
      %v2401 = vpop.f32.mrb[0].mxu0
      %v2402 = vadd.f32 0.0, %v2401
      %v2403 = vpop.f32.mrb[0].mxu0
      %2404 = vmatprep.mubr.bf16.mxu0 0
      %2405 = vmatmul.mubr.bf16.gmra.mrb[0].mxu0 %v2351
      %v2406 = vpop.f32.mrb[0].mxu0
      %v2407 = vadd.f32 0.0, %v2406
      %v2408 = vpop.f32.mrb[0].mxu0
      %v2409 = vpop.f32.mrb[0].mxu0
      %v2410 = vadd.f32 0.0, %v2409
      %v2411 = vpop.f32.mrb[0].mxu0
      %2412 = vmatprep.mubr.bf16.mxu0 0
      %2413 = vmatmul.mubr.bf16.gmra.mrb[0].mxu0 %v2354
      %v2414 = vpop.f32.mrb[0].mxu0
      %v2415 = vadd.f32 0.0, %v2414
      %v2416 = vpop.f32.mrb[0].mxu0
      %v2417 = vpop.f32.mrb[0].mxu0
      %v2418 = vadd.f32 0.0, %v2417
      %v2419 = vpop.f32.mrb[0].mxu0
      %2420 = vdwg.mxu0
      %v2421 = vadd.f32 %v883, %v2391
      %v2422 = vadd.f32 %v886, %v2394
      %v2423 = vadd.f32 %v891, %v2399
      %v2424 = vadd.f32 %v894, %v2402
      %v2425 = vadd.f32 %v899, %v2407
      %v2426 = vadd.f32 %v902, %v2410
      %v2427 = vadd.f32 %v907, %v2415
      %v2428 = vadd.f32 %v910, %v2418
      %s2429 = scalar_lea.vmem %s581, 144
      %v2430 = vld [vmem:[%s2429] sm:$0x8]
      %v2431 = vld [vmem:[%s2429 + $0x4] sm:$0x7]
      %v2432 = vld [vmem:[%s2429 + $0x18] sm:$0x8]
      %v2433 = vld [vmem:[%s2429 + $0x1c] sm:$0x7]
      %v2434 = vld [vmem:[%s2429 + $0x30] sm:$0x8]
      %v2435 = vld [vmem:[%s2429 + $0x34] sm:$0x7]
      %v2436 = vld [vmem:[%s2429 + $0x48] sm:$0x8]
      %v2437 = vld [vmem:[%s2429 + $0x4c] sm:$0x7]
      %v2438 = vld [vmem:[%s2429 + $0x60] sm:$0x8]
      %v2439 = vld [vmem:[%s2429 + $0x64] sm:$0x7]
      %v2440 = vld [vmem:[%s2429 + $0x78] sm:$0x8]
      %v2441 = vld [vmem:[%s2429 + $0x7c] sm:$0x7]
      %v2442 = vld [vmem:[%s2429 + $0x90] sm:$0x8]
      %v2443 = vld [vmem:[%s2429 + $0x94] sm:$0x7]
      %v2444 = vld [vmem:[%s2429 + $0xa8] sm:$0x8]
      %v2445 = vld [vmem:[%s2429 + $0xac] sm:$0x7]
      %v2446 = vunpack.c.l.bf16 %v2430
      %v2447 = vunpack.c.l.bf16 %v2431
      %v2448 = vunpack.c.l.bf16 %v2432
      %v2449 = vunpack.c.l.bf16 %v2433
      %v2450 = vunpack.c.l.bf16 %v2434
      %v2451 = vunpack.c.l.bf16 %v2435
      %v2452 = vunpack.c.l.bf16 %v2436
      %v2453 = vunpack.c.l.bf16 %v2437
      %v2454 = vunpack.c.l.bf16 %v2438
      %v2455 = vunpack.c.l.bf16 %v2439
      %v2456 = vunpack.c.l.bf16 %v2440
      %v2457 = vunpack.c.l.bf16 %v2441
      %v2458 = vunpack.c.l.bf16 %v2442
      %v2459 = vunpack.c.l.bf16 %v2443
      %v2460 = vunpack.c.l.bf16 %v2444
      %v2461 = vunpack.c.l.bf16 %v2445
      %vm2478 = vcmask 1041408
      %v2479 = vrot.slane %v2446, 6
      %v2480 = vrot.slane %v2447, 6
      %v2481 = vsel %vm2478, %v2479, %v2480
      %v2482 = vrot.slane %v2448, 6
      %v2483 = vrot.slane %v2449, 6
      %v2484 = vsel %vm2478, %v2482, %v2483
      %v2485 = vrot.slane %v2450, 6
      %v2486 = vrot.slane %v2451, 6
      %v2487 = vsel %vm2478, %v2485, %v2486
      %v2488 = vrot.slane %v2452, 6
      %v2489 = vrot.slane %v2453, 6
      %v2490 = vsel %vm2478, %v2488, %v2489
      %v2491 = vrot.slane %v2454, 6
      %v2492 = vrot.slane %v2455, 6
      %v2493 = vsel %vm2478, %v2491, %v2492
      %v2494 = vrot.slane %v2456, 6
      %v2495 = vrot.slane %v2457, 6
      %v2496 = vsel %vm2478, %v2494, %v2495
      %v2497 = vrot.slane %v2458, 6
      %v2498 = vrot.slane %v2459, 6
      %v2499 = vsel %vm2478, %v2497, %v2498
      %v2500 = vrot.slane %v2460, 6
      %v2501 = vrot.slane %v2461, 6
      %v2502 = vsel %vm2478, %v2500, %v2501
      %v2511 = vpack.c.bf16 %v2484, %v2481
      %v2512 = vpack.c.bf16 %v2490, %v2487
      %v2513 = vpack.c.bf16 %v2496, %v2493
      %v2514 = vpack.c.bf16 %v2502, %v2499
      %s2515 = scalar_lea.vmem %s5, 144
      %v2516 = vld [vmem:[%s2515] sm:$0xf]
      %v2517 = vld [vmem:[%s2515 + $0x4] sm:$0xf]
      %v2518 = vld [vmem:[%s2515 + $0x8] sm:$0xf]
      %v2519 = vld [vmem:[%s2515 + $0xc] sm:$0xf]
      %v2520 = vld [vmem:[%s2429 + $0x8] sm:$0xe]
      %v2521 = vld [vmem:[%s2429 + $0xc] sm:$0x1]
      %v2522 = vld [vmem:[%s2429 + $0x20] sm:$0xe]
      %v2523 = vld [vmem:[%s2429 + $0x24] sm:$0x1]
      %v2524 = vld [vmem:[%s2429 + $0x38] sm:$0xe]
      %v2525 = vld [vmem:[%s2429 + $0x3c] sm:$0x1]
      %v2526 = vld [vmem:[%s2429 + $0x50] sm:$0xe]
      %v2527 = vld [vmem:[%s2429 + $0x54] sm:$0x1]
      %v2528 = vld [vmem:[%s2429 + $0x68] sm:$0xe]
      %v2529 = vld [vmem:[%s2429 + $0x6c] sm:$0x1]
      %v2530 = vld [vmem:[%s2429 + $0x80] sm:$0xe]
      %v2531 = vld [vmem:[%s2429 + $0x84] sm:$0x1]
      %v2532 = vld [vmem:[%s2429 + $0x98] sm:$0xe]
      %v2533 = vld [vmem:[%s2429 + $0x9c] sm:$0x1]
      %v2534 = vld [vmem:[%s2429 + $0xb0] sm:$0xe]
      %v2535 = vld [vmem:[%s2429 + $0xb4] sm:$0x1]
      %v2536 = vunpack.c.l.bf16 %v2520
      %v2537 = vunpack.c.l.bf16 %v2521
      %v2538 = vunpack.c.l.bf16 %v2522
      %v2539 = vunpack.c.l.bf16 %v2523
      %v2540 = vunpack.c.l.bf16 %v2524
      %v2541 = vunpack.c.l.bf16 %v2525
      %v2542 = vunpack.c.l.bf16 %v2526
      %v2543 = vunpack.c.l.bf16 %v2527
      %v2544 = vunpack.c.l.bf16 %v2528
      %v2545 = vunpack.c.l.bf16 %v2529
      %v2546 = vunpack.c.l.bf16 %v2530
      %v2547 = vunpack.c.l.bf16 %v2531
      %v2548 = vunpack.c.l.bf16 %v2532
      %v2549 = vunpack.c.l.bf16 %v2533
      %v2550 = vunpack.c.l.bf16 %v2534
      %v2551 = vunpack.c.l.bf16 %v2535
      %v2568 = vrot.slane %v2536, 2
      %v2569 = vrot.slane %v2537, 2
      %v2570 = vsel %vm640, %v2568, %v2569
      %v2571 = vrot.slane %v2538, 2
      %v2572 = vrot.slane %v2539, 2
      %v2573 = vsel %vm640, %v2571, %v2572
      %v2574 = vrot.slane %v2540, 2
      %v2575 = vrot.slane %v2541, 2
      %v2576 = vsel %vm640, %v2574, %v2575
      %v2577 = vrot.slane %v2542, 2
      %v2578 = vrot.slane %v2543, 2
      %v2579 = vsel %vm640, %v2577, %v2578
      %v2580 = vrot.slane %v2544, 2
      %v2581 = vrot.slane %v2545, 2
      %v2582 = vsel %vm640, %v2580, %v2581
      %v2583 = vrot.slane %v2546, 2
      %v2584 = vrot.slane %v2547, 2
      %v2585 = vsel %vm640, %v2583, %v2584
      %v2586 = vrot.slane %v2548, 2
      %v2587 = vrot.slane %v2549, 2
      %v2588 = vsel %vm640, %v2586, %v2587
      %v2589 = vrot.slane %v2550, 2
      %v2590 = vrot.slane %v2551, 2
      %v2591 = vsel %vm640, %v2589, %v2590
      %v2600 = vpack.c.bf16 %v2573, %v2570
      %v2601 = vpack.c.bf16 %v2579, %v2576
      %v2602 = vpack.c.bf16 %v2585, %v2582
      %v2603 = vpack.c.bf16 %v2591, %v2588
      %s2604 = scalar_lea.vmem %s5, 160
      %v2605 = vld [vmem:[%s2604] sm:$0xf]
      %v2606 = vld [vmem:[%s2604 + $0x4] sm:$0xf]
      %v2607 = vld [vmem:[%s2604 + $0x8] sm:$0xf]
      %v2608 = vld [vmem:[%s2604 + $0xc] sm:$0xf]
      %v2613 = vunpack.c.l.b16 %v2605
      %v2614 = vunpack.c.l.b16 %v2606
      %v2615 = vunpack.c.l.b16 %v2607
      %v2616 = vunpack.c.l.b16 %v2608
      %v2617 = vpack.c.b16 %v2614, %v2613
      %v2618 = vpack.c.b16 %v2616, %v2615
      %v2622 = vsel %vm693, %v2600, 0
      %v2625 = vsel %vm693, %v2601, 0
      %v2628 = vsel %vm693, %v2602, 0
      %v2631 = vsel %vm693, %v2603, 0
      %2633 = vmatprep.subr.bf16.mxu0 0
      %2634 = vmatpush1.bf16.msra.mxu0 %v2617
      %2635 = vmatprep.subr.bf16.mxu0 0
      %2636 = vmatpush1.bf16.msra.mxu0 %v2618
      %2637 = vmatprep.subr.bf16.mxu0 0
      %2638 = vmatpush1.bf16.msra.mxu0 0
      %2639 = vmatprep.subr.bf16.mxu0 0
      %2640 = vmatpush1.bf16.msra.mxu0 0
      %2641 = vmatprep.subr.bf16.mxu0 0
      %2642 = vmatpush1.bf16.msra.mxu0 0
      %2643 = vmatprep.subr.bf16.mxu0 0
      %2644 = vmatpush1.bf16.msra.mxu0 0
      %2645 = vmatprep.subr.bf16.mxu0 0
      %2646 = vmatpush1.bf16.msra.mxu0 0
      %2647 = vmatprep.subr.bf16.mxu0 0
      %2648 = vmatpush1.bf16.msra.mxu0 0
      %2649 = vmatprep.subr.bf16.mxu0 0
      %2650 = vmatpush1.bf16.msra.mxu0 0
      %2651 = vmatprep.subr.bf16.mxu0 0
      %2652 = vmatpush1.bf16.msra.mxu0 0
      %2653 = vmatprep.subr.bf16.mxu0 0
      %2654 = vmatpush1.bf16.msra.mxu0 0
      %2655 = vmatprep.subr.bf16.mxu0 0
      %2656 = vmatpush1.bf16.msra.mxu0 0
      %2657 = vmatprep.subr.bf16.mxu0 0
      %2658 = vmatpush1.bf16.msra.mxu0 0
      %2659 = vmatprep.subr.bf16.mxu0 0
      %2660 = vmatpush1.bf16.msra.mxu0 0
      %2661 = vmatprep.subr.bf16.mxu0 0
      %2662 = vmatpush1.bf16.msra.mxu0 0
      %2663 = vmatprep.subr.bf16.mxu0 0
      %2664 = vmatpush1.bf16.msra.mxu0 0
      %2665 = vmatprep.mubr.bf16.mxu0 0
      %2666 = vmatmul.mubr.bf16.gmra.mrb[0].mxu0 %v2622
      %v2667 = vpop.f32.mrb[0].mxu0
      %v2668 = vadd.f32 0.0, %v2667
      %v2669 = vpop.f32.mrb[0].mxu0
      %v2670 = vpop.f32.mrb[0].mxu0
      %v2671 = vadd.f32 0.0, %v2670
      %v2672 = vpop.f32.mrb[0].mxu0
      %2673 = vmatprep.mubr.bf16.mxu0 0
      %2674 = vmatmul.mubr.bf16.gmra.mrb[0].mxu0 %v2625
      %v2675 = vpop.f32.mrb[0].mxu0
      %v2676 = vadd.f32 0.0, %v2675
      %v2677 = vpop.f32.mrb[0].mxu0
      %v2678 = vpop.f32.mrb[0].mxu0
      %v2679 = vadd.f32 0.0, %v2678
      %v2680 = vpop.f32.mrb[0].mxu0
      %2681 = vmatprep.mubr.bf16.mxu0 0
      %2682 = vmatmul.mubr.bf16.gmra.mrb[0].mxu0 %v2628
      %v2683 = vpop.f32.mrb[0].mxu0
      %v2684 = vadd.f32 0.0, %v2683
      %v2685 = vpop.f32.mrb[0].mxu0
      %v2686 = vpop.f32.mrb[0].mxu0
      %v2687 = vadd.f32 0.0, %v2686
      %v2688 = vpop.f32.mrb[0].mxu0
      %2689 = vmatprep.mubr.bf16.mxu0 0
      %2690 = vmatmul.mubr.bf16.gmra.mrb[0].mxu0 %v2631
      %v2691 = vpop.f32.mrb[0].mxu0
      %v2692 = vadd.f32 0.0, %v2691
      %v2693 = vpop.f32.mrb[0].mxu0
      %v2694 = vpop.f32.mrb[0].mxu0
      %v2695 = vadd.f32 0.0, %v2694
      %v2696 = vpop.f32.mrb[0].mxu0
      %2697 = vdwg.mxu0
      %v2702 = vunpack.c.l.b16 %v2516
      %v2703 = vunpack.c.l.b16 %v2517
      %v2704 = vunpack.c.l.b16 %v2518
      %v2705 = vunpack.c.l.b16 %v2519
      %v2706 = vpack.c.b16 %v2703, %v2702
      %v2707 = vpack.c.b16 %v2705, %v2704
      %v2711 = vsel %vm693, %v2511, 0
      %v2714 = vsel %vm693, %v2512, 0
      %v2717 = vsel %vm693, %v2513, 0
      %v2720 = vsel %vm693, %v2514, 0
      %2722 = vmatprep.subr.bf16.mxu0 0
      %2723 = vmatpush1.bf16.msra.mxu0 %v2706
      %2724 = vmatprep.subr.bf16.mxu0 0
      %2725 = vmatpush1.bf16.msra.mxu0 %v2707
      %2726 = vmatprep.subr.bf16.mxu0 0
      %2727 = vmatpush1.bf16.msra.mxu0 0
      %2728 = vmatprep.subr.bf16.mxu0 0
      %2729 = vmatpush1.bf16.msra.mxu0 0
      %2730 = vmatprep.subr.bf16.mxu0 0
      %2731 = vmatpush1.bf16.msra.mxu0 0
      %2732 = vmatprep.subr.bf16.mxu0 0
      %2733 = vmatpush1.bf16.msra.mxu0 0
      %2734 = vmatprep.subr.bf16.mxu0 0
      %2735 = vmatpush1.bf16.msra.mxu0 0
      %2736 = vmatprep.subr.bf16.mxu0 0
      %2737 = vmatpush1.bf16.msra.mxu0 0
      %2738 = vmatprep.subr.bf16.mxu0 0
      %2739 = vmatpush1.bf16.msra.mxu0 0
      %2740 = vmatprep.subr.bf16.mxu0 0
      %2741 = vmatpush1.bf16.msra.mxu0 0
      %2742 = vmatprep.subr.bf16.mxu0 0
      %2743 = vmatpush1.bf16.msra.mxu0 0
      %2744 = vmatprep.subr.bf16.mxu0 0
      %2745 = vmatpush1.bf16.msra.mxu0 0
      %2746 = vmatprep.subr.bf16.mxu0 0
      %2747 = vmatpush1.bf16.msra.mxu0 0
      %2748 = vmatprep.subr.bf16.mxu0 0
      %2749 = vmatpush1.bf16.msra.mxu0 0
      %2750 = vmatprep.subr.bf16.mxu0 0
      %2751 = vmatpush1.bf16.msra.mxu0 0
      %2752 = vmatprep.subr.bf16.mxu0 0
      %2753 = vmatpush1.bf16.msra.mxu0 0
      %2754 = vmatprep.mubr.bf16.mxu0 0
      %2755 = vmatmul.mubr.bf16.gmra.mrb[0].mxu0 %v2711
      %v2756 = vpop.f32.mrb[0].mxu0
      %v2757 = vadd.f32 %v2668, %v2756
      %v2758 = vpop.f32.mrb[0].mxu0
      %v2759 = vpop.f32.mrb[0].mxu0
      %v2760 = vadd.f32 %v2671, %v2759
      %v2761 = vpop.f32.mrb[0].mxu0
      %2762 = vmatprep.mubr.bf16.mxu0 0
      %2763 = vmatmul.mubr.bf16.gmra.mrb[0].mxu0 %v2714
      %v2764 = vpop.f32.mrb[0].mxu0
      %v2765 = vadd.f32 %v2676, %v2764
      %v2766 = vpop.f32.mrb[0].mxu0
      %v2767 = vpop.f32.mrb[0].mxu0
      %v2768 = vadd.f32 %v2679, %v2767
      %v2769 = vpop.f32.mrb[0].mxu0
      %2770 = vmatprep.mubr.bf16.mxu0 0
      %2771 = vmatmul.mubr.bf16.gmra.mrb[0].mxu0 %v2717
      %v2772 = vpop.f32.mrb[0].mxu0
      %v2773 = vadd.f32 %v2684, %v2772
      %v2774 = vpop.f32.mrb[0].mxu0
      %v2775 = vpop.f32.mrb[0].mxu0
      %v2776 = vadd.f32 %v2687, %v2775
      %v2777 = vpop.f32.mrb[0].mxu0
      %2778 = vmatprep.mubr.bf16.mxu0 0
      %2779 = vmatmul.mubr.bf16.gmra.mrb[0].mxu0 %v2720
      %v2780 = vpop.f32.mrb[0].mxu0
      %v2781 = vadd.f32 %v2692, %v2780
      %v2782 = vpop.f32.mrb[0].mxu0
      %v2783 = vpop.f32.mrb[0].mxu0
      %v2784 = vadd.f32 %v2695, %v2783
      %v2785 = vpop.f32.mrb[0].mxu0
      %2786 = vdwg.mxu0
      %v2787 = vld [vmem:[%s2429 + $0xc] sm:$0x8]
      %v2788 = vld [vmem:[%s2429 + $0x10] sm:$0x7]
      %v2789 = vld [vmem:[%s2429 + $0x24] sm:$0x8]
      %v2790 = vld [vmem:[%s2429 + $0x28] sm:$0x7]
      %v2791 = vld [vmem:[%s2429 + $0x3c] sm:$0x8]
      %v2792 = vld [vmem:[%s2429 + $0x40] sm:$0x7]
      %v2793 = vld [vmem:[%s2429 + $0x54] sm:$0x8]
      %v2794 = vld [vmem:[%s2429 + $0x58] sm:$0x7]
      %v2795 = vld [vmem:[%s2429 + $0x6c] sm:$0x8]
      %v2796 = vld [vmem:[%s2429 + $0x70] sm:$0x7]
      %v2797 = vld [vmem:[%s2429 + $0x84] sm:$0x8]
      %v2798 = vld [vmem:[%s2429 + $0x88] sm:$0x7]
      %v2799 = vld [vmem:[%s2429 + $0x9c] sm:$0x8]
      %v2800 = vld [vmem:[%s2429 + $0xa0] sm:$0x7]
      %v2801 = vld [vmem:[%s2429 + $0xb4] sm:$0x8]
      %v2802 = vld [vmem:[%s2429 + $0xb8] sm:$0x7]
      %v2803 = vunpack.c.l.bf16 %v2787
      %v2804 = vunpack.c.l.bf16 %v2788
      %v2805 = vunpack.c.l.bf16 %v2789
      %v2806 = vunpack.c.l.bf16 %v2790
      %v2807 = vunpack.c.l.bf16 %v2791
      %v2808 = vunpack.c.l.bf16 %v2792
      %v2809 = vunpack.c.l.bf16 %v2793
      %v2810 = vunpack.c.l.bf16 %v2794
      %v2811 = vunpack.c.l.bf16 %v2795
      %v2812 = vunpack.c.l.bf16 %v2796
      %v2813 = vunpack.c.l.bf16 %v2797
      %v2814 = vunpack.c.l.bf16 %v2798
      %v2815 = vunpack.c.l.bf16 %v2799
      %v2816 = vunpack.c.l.bf16 %v2800
      %v2817 = vunpack.c.l.bf16 %v2801
      %v2818 = vunpack.c.l.bf16 %v2802
      %v2835 = vrot.slane %v2803, 6
      %v2836 = vrot.slane %v2804, 6
      %v2837 = vsel %vm2478, %v2835, %v2836
      %v2838 = vrot.slane %v2805, 6
      %v2839 = vrot.slane %v2806, 6
      %v2840 = vsel %vm2478, %v2838, %v2839
      %v2841 = vrot.slane %v2807, 6
      %v2842 = vrot.slane %v2808, 6
      %v2843 = vsel %vm2478, %v2841, %v2842
      %v2844 = vrot.slane %v2809, 6
      %v2845 = vrot.slane %v2810, 6
      %v2846 = vsel %vm2478, %v2844, %v2845
      %v2847 = vrot.slane %v2811, 6
      %v2848 = vrot.slane %v2812, 6
      %v2849 = vsel %vm2478, %v2847, %v2848
      %v2850 = vrot.slane %v2813, 6
      %v2851 = vrot.slane %v2814, 6
      %v2852 = vsel %vm2478, %v2850, %v2851
      %v2853 = vrot.slane %v2815, 6
      %v2854 = vrot.slane %v2816, 6
      %v2855 = vsel %vm2478, %v2853, %v2854
      %v2856 = vrot.slane %v2817, 6
      %v2857 = vrot.slane %v2818, 6
      %v2858 = vsel %vm2478, %v2856, %v2857
      %v2867 = vpack.c.bf16 %v2840, %v2837
      %v2868 = vpack.c.bf16 %v2846, %v2843
      %v2869 = vpack.c.bf16 %v2852, %v2849
      %v2870 = vpack.c.bf16 %v2858, %v2855
      %s2871 = scalar_lea.vmem %s5, 176
      %v2872 = vld [vmem:[%s2871] sm:$0xf]
      %v2873 = vld [vmem:[%s2871 + $0x4] sm:$0xf]
      %v2874 = vld [vmem:[%s2871 + $0x8] sm:$0xf]
      %v2875 = vld [vmem:[%s2871 + $0xc] sm:$0xf]
      %v2880 = vunpack.c.l.b16 %v2872
      %v2881 = vunpack.c.l.b16 %v2873
      %v2882 = vunpack.c.l.b16 %v2874
      %v2883 = vunpack.c.l.b16 %v2875
      %v2884 = vpack.c.b16 %v2881, %v2880
      %v2885 = vpack.c.b16 %v2883, %v2882
      %v2889 = vsel %vm693, %v2867, 0
      %v2892 = vsel %vm693, %v2868, 0
      %v2895 = vsel %vm693, %v2869, 0
      %v2898 = vsel %vm693, %v2870, 0
      %2900 = vmatprep.subr.bf16.mxu0 0
      %2901 = vmatpush1.bf16.msra.mxu0 %v2884
      %2902 = vmatprep.subr.bf16.mxu0 0
      %2903 = vmatpush1.bf16.msra.mxu0 %v2885
      %2904 = vmatprep.subr.bf16.mxu0 0
      %2905 = vmatpush1.bf16.msra.mxu0 0
      %2906 = vmatprep.subr.bf16.mxu0 0
      %2907 = vmatpush1.bf16.msra.mxu0 0
      %2908 = vmatprep.subr.bf16.mxu0 0
      %2909 = vmatpush1.bf16.msra.mxu0 0
      %2910 = vmatprep.subr.bf16.mxu0 0
      %2911 = vmatpush1.bf16.msra.mxu0 0
      %2912 = vmatprep.subr.bf16.mxu0 0
      %2913 = vmatpush1.bf16.msra.mxu0 0
      %2914 = vmatprep.subr.bf16.mxu0 0
      %2915 = vmatpush1.bf16.msra.mxu0 0
      %2916 = vmatprep.subr.bf16.mxu0 0
      %2917 = vmatpush1.bf16.msra.mxu0 0
      %2918 = vmatprep.subr.bf16.mxu0 0
      %2919 = vmatpush1.bf16.msra.mxu0 0
      %2920 = vmatprep.subr.bf16.mxu0 0
      %2921 = vmatpush1.bf16.msra.mxu0 0
      %2922 = vmatprep.subr.bf16.mxu0 0
      %2923 = vmatpush1.bf16.msra.mxu0 0
      %2924 = vmatprep.subr.bf16.mxu0 0
      %2925 = vmatpush1.bf16.msra.mxu0 0
      %2926 = vmatprep.subr.bf16.mxu0 0
      %2927 = vmatpush1.bf16.msra.mxu0 0
      %2928 = vmatprep.subr.bf16.mxu0 0
      %2929 = vmatpush1.bf16.msra.mxu0 0
      %2930 = vmatprep.subr.bf16.mxu0 0
      %2931 = vmatpush1.bf16.msra.mxu0 0
      %2932 = vmatprep.mubr.bf16.mxu0 0
      %2933 = vmatmul.mubr.bf16.gmra.mrb[0].mxu0 %v2889
      %v2934 = vpop.f32.mrb[0].mxu0
      %v2935 = vadd.f32 0.0, %v2934
      %v2936 = vpop.f32.mrb[0].mxu0
      %v2937 = vpop.f32.mrb[0].mxu0
      %v2938 = vadd.f32 0.0, %v2937
      %v2939 = vpop.f32.mrb[0].mxu0
      %2940 = vmatprep.mubr.bf16.mxu0 0
      %2941 = vmatmul.mubr.bf16.gmra.mrb[0].mxu0 %v2892
      %v2942 = vpop.f32.mrb[0].mxu0
      %v2943 = vadd.f32 0.0, %v2942
      %v2944 = vpop.f32.mrb[0].mxu0
      %v2945 = vpop.f32.mrb[0].mxu0
      %v2946 = vadd.f32 0.0, %v2945
      %v2947 = vpop.f32.mrb[0].mxu0
      %2948 = vmatprep.mubr.bf16.mxu0 0
      %2949 = vmatmul.mubr.bf16.gmra.mrb[0].mxu0 %v2895
      %v2950 = vpop.f32.mrb[0].mxu0
      %v2951 = vadd.f32 0.0, %v2950
      %v2952 = vpop.f32.mrb[0].mxu0
      %v2953 = vpop.f32.mrb[0].mxu0
      %v2954 = vadd.f32 0.0, %v2953
      %v2955 = vpop.f32.mrb[0].mxu0
      %2956 = vmatprep.mubr.bf16.mxu0 0
      %2957 = vmatmul.mubr.bf16.gmra.mrb[0].mxu0 %v2898
      %v2958 = vpop.f32.mrb[0].mxu0
      %v2959 = vadd.f32 0.0, %v2958
      %v2960 = vpop.f32.mrb[0].mxu0
      %v2961 = vpop.f32.mrb[0].mxu0
      %v2962 = vadd.f32 0.0, %v2961
      %v2963 = vpop.f32.mrb[0].mxu0
      %2964 = vdwg.mxu0
      %v2965 = vadd.f32 %v2757, %v2935
      %v2966 = vadd.f32 %v2760, %v2938
      %v2967 = vadd.f32 %v2765, %v2943
      %v2968 = vadd.f32 %v2768, %v2946
      %v2969 = vadd.f32 %v2773, %v2951
      %v2970 = vadd.f32 %v2776, %v2954
      %v2971 = vadd.f32 %v2781, %v2959
      %v2972 = vadd.f32 %v2784, %v2962
      %v2973 = vld [vmem:[%s591] sm:$0x8]
      %v2974 = vld [vmem:[%s591 + $0x4] sm:$0x7]
      %v2975 = vld [vmem:[%s591 + $0x18] sm:$0x8]
      %v2976 = vld [vmem:[%s591 + $0x1c] sm:$0x7]
      %v2977 = vld [vmem:[%s591 + $0x30] sm:$0x8]
      %v2978 = vld [vmem:[%s591 + $0x34] sm:$0x7]
      %v2979 = vld [vmem:[%s591 + $0x48] sm:$0x8]
      %v2980 = vld [vmem:[%s591 + $0x4c] sm:$0x7]
      %v2981 = vld [vmem:[%s591 + $0x60] sm:$0x8]
      %v2982 = vld [vmem:[%s591 + $0x64] sm:$0x7]
      %v2983 = vld [vmem:[%s591 + $0x78] sm:$0x8]
      %v2984 = vld [vmem:[%s591 + $0x7c] sm:$0x7]
      %v2985 = vld [vmem:[%s591 + $0x90] sm:$0x8]
      %v2986 = vld [vmem:[%s591 + $0x94] sm:$0x7]
      %v2987 = vld [vmem:[%s591 + $0xa8] sm:$0x8]
      %v2988 = vld [vmem:[%s591 + $0xac] sm:$0x7]
      %v2989 = vunpack.c.l.bf16 %v2973
      %v2990 = vunpack.c.l.bf16 %v2974
      %v2991 = vunpack.c.l.bf16 %v2975
      %v2992 = vunpack.c.l.bf16 %v2976
      %v2993 = vunpack.c.l.bf16 %v2977
      %v2994 = vunpack.c.l.bf16 %v2978
      %v2995 = vunpack.c.l.bf16 %v2979
      %v2996 = vunpack.c.l.bf16 %v2980
      %v2997 = vunpack.c.l.bf16 %v2981
      %v2998 = vunpack.c.l.bf16 %v2982
      %v2999 = vunpack.c.l.bf16 %v2983
      %v3000 = vunpack.c.l.bf16 %v2984
      %v3001 = vunpack.c.l.bf16 %v2985
      %v3002 = vunpack.c.l.bf16 %v2986
      %v3003 = vunpack.c.l.bf16 %v2987
      %v3004 = vunpack.c.l.bf16 %v2988
      %v3021 = vrot.slane %v2989, 6
      %v3022 = vrot.slane %v2990, 6
      %v3023 = vsel %vm2478, %v3021, %v3022
      %v3024 = vrot.slane %v2991, 6
      %v3025 = vrot.slane %v2992, 6
      %v3026 = vsel %vm2478, %v3024, %v3025
      %v3027 = vrot.slane %v2993, 6
      %v3028 = vrot.slane %v2994, 6
      %v3029 = vsel %vm2478, %v3027, %v3028
      %v3030 = vrot.slane %v2995, 6
      %v3031 = vrot.slane %v2996, 6
      %v3032 = vsel %vm2478, %v3030, %v3031
      %v3033 = vrot.slane %v2997, 6
      %v3034 = vrot.slane %v2998, 6
      %v3035 = vsel %vm2478, %v3033, %v3034
      %v3036 = vrot.slane %v2999, 6
      %v3037 = vrot.slane %v3000, 6
      %v3038 = vsel %vm2478, %v3036, %v3037
      %v3039 = vrot.slane %v3001, 6
      %v3040 = vrot.slane %v3002, 6
      %v3041 = vsel %vm2478, %v3039, %v3040
      %v3042 = vrot.slane %v3003, 6
      %v3043 = vrot.slane %v3004, 6
      %v3044 = vsel %vm2478, %v3042, %v3043
      %v3053 = vpack.c.bf16 %v3026, %v3023
      %v3054 = vpack.c.bf16 %v3032, %v3029
      %v3055 = vpack.c.bf16 %v3038, %v3035
      %v3056 = vpack.c.bf16 %v3044, %v3041
      %s3057 = scalar_lea.vmem %s5, 192
      %v3058 = vld [vmem:[%s3057] sm:$0xf]
      %v3059 = vld [vmem:[%s3057 + $0x4] sm:$0xf]
      %v3060 = vld [vmem:[%s3057 + $0x8] sm:$0xf]
      %v3061 = vld [vmem:[%s3057 + $0xc] sm:$0xf]
      %v3066 = vunpack.c.l.b16 %v3058
      %v3067 = vunpack.c.l.b16 %v3059
      %v3068 = vunpack.c.l.b16 %v3060
      %v3069 = vunpack.c.l.b16 %v3061
      %v3070 = vpack.c.b16 %v3067, %v3066
      %v3071 = vpack.c.b16 %v3069, %v3068
      %v3075 = vsel %vm693, %v3053, 0
      %v3078 = vsel %vm693, %v3054, 0
      %v3081 = vsel %vm693, %v3055, 0
      %v3084 = vsel %vm693, %v3056, 0
      %3086 = vmatprep.subr.bf16.mxu0 0
      %3087 = vmatpush1.bf16.msra.mxu0 %v3070
      %3088 = vmatprep.subr.bf16.mxu0 0
      %3089 = vmatpush1.bf16.msra.mxu0 %v3071
      %3090 = vmatprep.subr.bf16.mxu0 0
      %3091 = vmatpush1.bf16.msra.mxu0 0
      %3092 = vmatprep.subr.bf16.mxu0 0
      %3093 = vmatpush1.bf16.msra.mxu0 0
      %3094 = vmatprep.subr.bf16.mxu0 0
      %3095 = vmatpush1.bf16.msra.mxu0 0
      %3096 = vmatprep.subr.bf16.mxu0 0
      %3097 = vmatpush1.bf16.msra.mxu0 0
      %3098 = vmatprep.subr.bf16.mxu0 0
      %3099 = vmatpush1.bf16.msra.mxu0 0
      %3100 = vmatprep.subr.bf16.mxu0 0
      %3101 = vmatpush1.bf16.msra.mxu0 0
      %3102 = vmatprep.subr.bf16.mxu0 0
      %3103 = vmatpush1.bf16.msra.mxu0 0
      %3104 = vmatprep.subr.bf16.mxu0 0
      %3105 = vmatpush1.bf16.msra.mxu0 0
      %3106 = vmatprep.subr.bf16.mxu0 0
      %3107 = vmatpush1.bf16.msra.mxu0 0
      %3108 = vmatprep.subr.bf16.mxu0 0
      %3109 = vmatpush1.bf16.msra.mxu0 0
      %3110 = vmatprep.subr.bf16.mxu0 0
      %3111 = vmatpush1.bf16.msra.mxu0 0
      %3112 = vmatprep.subr.bf16.mxu0 0
      %3113 = vmatpush1.bf16.msra.mxu0 0
      %3114 = vmatprep.subr.bf16.mxu0 0
      %3115 = vmatpush1.bf16.msra.mxu0 0
      %3116 = vmatprep.subr.bf16.mxu0 0
      %3117 = vmatpush1.bf16.msra.mxu0 0
      %3118 = vmatprep.mubr.bf16.mxu0 0
      %3119 = vmatmul.mubr.bf16.gmra.mrb[0].mxu0 %v3075
      %v3120 = vpop.f32.mrb[0].mxu0
      %v3121 = vadd.f32 0.0, %v3120
      %v3122 = vpop.f32.mrb[0].mxu0
      %v3123 = vpop.f32.mrb[0].mxu0
      %v3124 = vadd.f32 0.0, %v3123
      %v3125 = vpop.f32.mrb[0].mxu0
      %3126 = vmatprep.mubr.bf16.mxu0 0
      %3127 = vmatmul.mubr.bf16.gmra.mrb[0].mxu0 %v3078
      %v3128 = vpop.f32.mrb[0].mxu0
      %v3129 = vadd.f32 0.0, %v3128
      %v3130 = vpop.f32.mrb[0].mxu0
      %v3131 = vpop.f32.mrb[0].mxu0
      %v3132 = vadd.f32 0.0, %v3131
      %v3133 = vpop.f32.mrb[0].mxu0
      %3134 = vmatprep.mubr.bf16.mxu0 0
      %3135 = vmatmul.mubr.bf16.gmra.mrb[0].mxu0 %v3081
      %v3136 = vpop.f32.mrb[0].mxu0
      %v3137 = vadd.f32 0.0, %v3136
      %v3138 = vpop.f32.mrb[0].mxu0
      %v3139 = vpop.f32.mrb[0].mxu0
      %v3140 = vadd.f32 0.0, %v3139
      %v3141 = vpop.f32.mrb[0].mxu0
      %3142 = vmatprep.mubr.bf16.mxu0 0
      %3143 = vmatmul.mubr.bf16.gmra.mrb[0].mxu0 %v3084
      %v3144 = vpop.f32.mrb[0].mxu0
      %v3145 = vadd.f32 0.0, %v3144
      %v3146 = vpop.f32.mrb[0].mxu0
      %v3147 = vpop.f32.mrb[0].mxu0
      %v3148 = vadd.f32 0.0, %v3147
      %v3149 = vpop.f32.mrb[0].mxu0
      %3150 = vdwg.mxu0
      %v3151 = vadd.f32 %v2965, %v3121
      %v3152 = vadd.f32 %v2966, %v3124
      %v3153 = vadd.f32 %v2967, %v3129
      %v3154 = vadd.f32 %v2968, %v3132
      %v3155 = vadd.f32 %v2969, %v3137
      %v3156 = vadd.f32 %v2970, %v3140
      %v3157 = vadd.f32 %v2971, %v3145
      %v3158 = vadd.f32 %v2972, %v3148
      %s3159 = scalar_lea.vmem %s5, 208
      %v3160 = vld [vmem:[%s3159] sm:$0xf]
      %v3161 = vld [vmem:[%s3159 + $0x4] sm:$0xf]
      %v3162 = vld [vmem:[%s3159 + $0x8] sm:$0xf]
      %v3163 = vld [vmem:[%s3159 + $0xc] sm:$0xf]
      %v3168 = vunpack.c.l.b16 %v3160
      %v3169 = vunpack.c.l.b16 %v3161
      %v3170 = vunpack.c.l.b16 %v3162
      %v3171 = vunpack.c.l.b16 %v3163
      %v3172 = vpack.c.b16 %v3169, %v3168
      %v3173 = vpack.c.b16 %v3171, %v3170
      %3176 = vmatprep.subr.bf16.mxu0 0
      %3177 = vmatpush1.bf16.msra.mxu0 %v3172
      %3178 = vmatprep.subr.bf16.mxu0 0
      %3179 = vmatpush1.bf16.msra.mxu0 %v3173
      %3180 = vmatprep.subr.bf16.mxu0 0
      %3181 = vmatpush1.bf16.msra.mxu0 0
      %3182 = vmatprep.subr.bf16.mxu0 0
      %3183 = vmatpush1.bf16.msra.mxu0 0
      %3184 = vmatprep.subr.bf16.mxu0 0
      %3185 = vmatpush1.bf16.msra.mxu0 0
      %3186 = vmatprep.subr.bf16.mxu0 0
      %3187 = vmatpush1.bf16.msra.mxu0 0
      %3188 = vmatprep.subr.bf16.mxu0 0
      %3189 = vmatpush1.bf16.msra.mxu0 0
      %3190 = vmatprep.subr.bf16.mxu0 0
      %3191 = vmatpush1.bf16.msra.mxu0 0
      %3192 = vmatprep.subr.bf16.mxu0 0
      %3193 = vmatpush1.bf16.msra.mxu0 0
      %3194 = vmatprep.subr.bf16.mxu0 0
      %3195 = vmatpush1.bf16.msra.mxu0 0
      %3196 = vmatprep.subr.bf16.mxu0 0
      %3197 = vmatpush1.bf16.msra.mxu0 0
      %3198 = vmatprep.subr.bf16.mxu0 0
      %3199 = vmatpush1.bf16.msra.mxu0 0
      %3200 = vmatprep.subr.bf16.mxu0 0
      %3201 = vmatpush1.bf16.msra.mxu0 0
      %3202 = vmatprep.subr.bf16.mxu0 0
      %3203 = vmatpush1.bf16.msra.mxu0 0
      %3204 = vmatprep.subr.bf16.mxu0 0
      %3205 = vmatpush1.bf16.msra.mxu0 0
      %3206 = vmatprep.subr.bf16.mxu0 0
      %3207 = vmatpush1.bf16.msra.mxu0 0
      %3208 = vmatprep.mubr.bf16.mxu0 0
      %3209 = vmatmul.mubr.bf16.gmra.mrb[0].mxu0 %v695
      %v3210 = vpop.f32.mrb[0].mxu0
      %v3211 = vadd.f32 0.0, %v3210
      %v3212 = vpop.f32.mrb[0].mxu0
      %v3213 = vpop.f32.mrb[0].mxu0
      %v3214 = vadd.f32 0.0, %v3213
      %v3215 = vpop.f32.mrb[0].mxu0
      %3216 = vmatprep.mubr.bf16.mxu0 0
      %3217 = vmatmul.mubr.bf16.gmra.mrb[0].mxu0 %v698
      %v3218 = vpop.f32.mrb[0].mxu0
      %v3219 = vadd.f32 0.0, %v3218
      %v3220 = vpop.f32.mrb[0].mxu0
      %v3221 = vpop.f32.mrb[0].mxu0
      %v3222 = vadd.f32 0.0, %v3221
      %v3223 = vpop.f32.mrb[0].mxu0
      %3224 = vmatprep.mubr.bf16.mxu0 0
      %3225 = vmatmul.mubr.bf16.gmra.mrb[0].mxu0 %v701
      %v3226 = vpop.f32.mrb[0].mxu0
      %v3227 = vadd.f32 0.0, %v3226
      %v3228 = vpop.f32.mrb[0].mxu0
      %v3229 = vpop.f32.mrb[0].mxu0
      %v3230 = vadd.f32 0.0, %v3229
      %v3231 = vpop.f32.mrb[0].mxu0
      %3232 = vmatprep.mubr.bf16.mxu0 0
      %3233 = vmatmul.mubr.bf16.gmra.mrb[0].mxu0 %v704
      %v3234 = vpop.f32.mrb[0].mxu0
      %v3235 = vadd.f32 0.0, %v3234
      %v3236 = vpop.f32.mrb[0].mxu0
      %v3237 = vpop.f32.mrb[0].mxu0
      %v3238 = vadd.f32 0.0, %v3237
      %v3239 = vpop.f32.mrb[0].mxu0
      %3240 = vdwg.mxu0
      %v3241 = vadd.f32 %v3151, %v3211
      %v3242 = vadd.f32 %v3152, %v3214
      %v3243 = vadd.f32 %v3153, %v3219
      %v3244 = vadd.f32 %v3154, %v3222
      %v3245 = vadd.f32 %v3155, %v3227
      %v3246 = vadd.f32 %v3156, %v3230
      %v3247 = vadd.f32 %v3157, %v3235
      %v3248 = vadd.f32 %v3158, %v3238
      %v3249 = vld [vmem:[%s591 + $0xc] sm:$0x8]
      %v3250 = vld [vmem:[%s591 + $0x10] sm:$0x7]
      %v3251 = vld [vmem:[%s591 + $0x24] sm:$0x8]
      %v3252 = vld [vmem:[%s591 + $0x28] sm:$0x7]
      %v3253 = vld [vmem:[%s591 + $0x3c] sm:$0x8]
      %v3254 = vld [vmem:[%s591 + $0x40] sm:$0x7]
      %v3255 = vld [vmem:[%s591 + $0x54] sm:$0x8]
      %v3256 = vld [vmem:[%s591 + $0x58] sm:$0x7]
      %v3257 = vld [vmem:[%s591 + $0x6c] sm:$0x8]
      %v3258 = vld [vmem:[%s591 + $0x70] sm:$0x7]
      %v3259 = vld [vmem:[%s591 + $0x84] sm:$0x8]
      %v3260 = vld [vmem:[%s591 + $0x88] sm:$0x7]
      %v3261 = vld [vmem:[%s591 + $0x9c] sm:$0x8]
      %v3262 = vld [vmem:[%s591 + $0xa0] sm:$0x7]
      %v3263 = vld [vmem:[%s591 + $0xb4] sm:$0x8]
      %v3264 = vld [vmem:[%s591 + $0xb8] sm:$0x7]
      %v3265 = vunpack.c.l.bf16 %v3249
      %v3266 = vunpack.c.l.bf16 %v3250
      %v3267 = vunpack.c.l.bf16 %v3251
      %v3268 = vunpack.c.l.bf16 %v3252
      %v3269 = vunpack.c.l.bf16 %v3253
      %v3270 = vunpack.c.l.bf16 %v3254
      %v3271 = vunpack.c.l.bf16 %v3255
      %v3272 = vunpack.c.l.bf16 %v3256
      %v3273 = vunpack.c.l.bf16 %v3257
      %v3274 = vunpack.c.l.bf16 %v3258
      %v3275 = vunpack.c.l.bf16 %v3259
      %v3276 = vunpack.c.l.bf16 %v3260
      %v3277 = vunpack.c.l.bf16 %v3261
      %v3278 = vunpack.c.l.bf16 %v3262
      %v3279 = vunpack.c.l.bf16 %v3263
      %v3280 = vunpack.c.l.bf16 %v3264
      %v3297 = vrot.slane %v3265, 6
      %v3298 = vrot.slane %v3266, 6
      %v3299 = vsel %vm2478, %v3297, %v3298
      %v3300 = vrot.slane %v3267, 6
      %v3301 = vrot.slane %v3268, 6
      %v3302 = vsel %vm2478, %v3300, %v3301
      %v3303 = vrot.slane %v3269, 6
      %v3304 = vrot.slane %v3270, 6
      %v3305 = vsel %vm2478, %v3303, %v3304
      %v3306 = vrot.slane %v3271, 6
      %v3307 = vrot.slane %v3272, 6
      %v3308 = vsel %vm2478, %v3306, %v3307
      %v3309 = vrot.slane %v3273, 6
      %v3310 = vrot.slane %v3274, 6
      %v3311 = vsel %vm2478, %v3309, %v3310
      %v3312 = vrot.slane %v3275, 6
      %v3313 = vrot.slane %v3276, 6
      %v3314 = vsel %vm2478, %v3312, %v3313
      %v3315 = vrot.slane %v3277, 6
      %v3316 = vrot.slane %v3278, 6
      %v3317 = vsel %vm2478, %v3315, %v3316
      %v3318 = vrot.slane %v3279, 6
      %v3319 = vrot.slane %v3280, 6
      %v3320 = vsel %vm2478, %v3318, %v3319
      %v3329 = vpack.c.bf16 %v3302, %v3299
      %v3330 = vpack.c.bf16 %v3308, %v3305
      %v3331 = vpack.c.bf16 %v3314, %v3311
      %v3332 = vpack.c.bf16 %v3320, %v3317
      %s3333 = scalar_lea.vmem %s5, 224
      %v3334 = vld [vmem:[%s3333] sm:$0xf]
      %v3335 = vld [vmem:[%s3333 + $0x4] sm:$0xf]
      %v3336 = vld [vmem:[%s3333 + $0x8] sm:$0xf]
      %v3337 = vld [vmem:[%s3333 + $0xc] sm:$0xf]
      %v3342 = vunpack.c.l.b16 %v3334
      %v3343 = vunpack.c.l.b16 %v3335
      %v3344 = vunpack.c.l.b16 %v3336
      %v3345 = vunpack.c.l.b16 %v3337
      %v3346 = vpack.c.b16 %v3343, %v3342
      %v3347 = vpack.c.b16 %v3345, %v3344
      %v3351 = vsel %vm693, %v3329, 0
      %v3354 = vsel %vm693, %v3330, 0
      %v3357 = vsel %vm693, %v3331, 0
      %v3360 = vsel %vm693, %v3332, 0
      %3362 = vmatprep.subr.bf16.mxu0 0
      %3363 = vmatpush1.bf16.msra.mxu0 %v3346
      %3364 = vmatprep.subr.bf16.mxu0 0
      %3365 = vmatpush1.bf16.msra.mxu0 %v3347
      %3366 = vmatprep.subr.bf16.mxu0 0
      %3367 = vmatpush1.bf16.msra.mxu0 0
      %3368 = vmatprep.subr.bf16.mxu0 0
      %3369 = vmatpush1.bf16.msra.mxu0 0
      %3370 = vmatprep.subr.bf16.mxu0 0
      %3371 = vmatpush1.bf16.msra.mxu0 0
      %3372 = vmatprep.subr.bf16.mxu0 0
      %3373 = vmatpush1.bf16.msra.mxu0 0
      %3374 = vmatprep.subr.bf16.mxu0 0
      %3375 = vmatpush1.bf16.msra.mxu0 0
      %3376 = vmatprep.subr.bf16.mxu0 0
      %3377 = vmatpush1.bf16.msra.mxu0 0
      %3378 = vmatprep.subr.bf16.mxu0 0
      %3379 = vmatpush1.bf16.msra.mxu0 0
      %3380 = vmatprep.subr.bf16.mxu0 0
      %3381 = vmatpush1.bf16.msra.mxu0 0
      %3382 = vmatprep.subr.bf16.mxu0 0
      %3383 = vmatpush1.bf16.msra.mxu0 0
      %3384 = vmatprep.subr.bf16.mxu0 0
      %3385 = vmatpush1.bf16.msra.mxu0 0
      %3386 = vmatprep.subr.bf16.mxu0 0
      %3387 = vmatpush1.bf16.msra.mxu0 0
      %3388 = vmatprep.subr.bf16.mxu0 0
      %3389 = vmatpush1.bf16.msra.mxu0 0
      %3390 = vmatprep.subr.bf16.mxu0 0
      %3391 = vmatpush1.bf16.msra.mxu0 0
      %3392 = vmatprep.subr.bf16.mxu0 0
      %3393 = vmatpush1.bf16.msra.mxu0 0
      %3394 = vmatprep.mubr.bf16.mxu0 0
      %3395 = vmatmul.mubr.bf16.gmra.mrb[0].mxu0 %v3351
      %v3396 = vpop.f32.mrb[0].mxu0
      %v3397 = vadd.f32 0.0, %v3396
      %v3398 = vpop.f32.mrb[0].mxu0
      %v3399 = vpop.f32.mrb[0].mxu0
      %v3400 = vadd.f32 0.0, %v3399
      %v3401 = vpop.f32.mrb[0].mxu0
      %3402 = vmatprep.mubr.bf16.mxu0 0
      %3403 = vmatmul.mubr.bf16.gmra.mrb[0].mxu0 %v3354
      %v3404 = vpop.f32.mrb[0].mxu0
      %v3405 = vadd.f32 0.0, %v3404
      %v3406 = vpop.f32.mrb[0].mxu0
      %v3407 = vpop.f32.mrb[0].mxu0
      %v3408 = vadd.f32 0.0, %v3407
      %v3409 = vpop.f32.mrb[0].mxu0
      %3410 = vmatprep.mubr.bf16.mxu0 0
      %3411 = vmatmul.mubr.bf16.gmra.mrb[0].mxu0 %v3357
      %v3412 = vpop.f32.mrb[0].mxu0
      %v3413 = vadd.f32 0.0, %v3412
      %v3414 = vpop.f32.mrb[0].mxu0
      %v3415 = vpop.f32.mrb[0].mxu0
      %v3416 = vadd.f32 0.0, %v3415
      %v3417 = vpop.f32.mrb[0].mxu0
      %3418 = vmatprep.mubr.bf16.mxu0 0
      %3419 = vmatmul.mubr.bf16.gmra.mrb[0].mxu0 %v3360
      %v3420 = vpop.f32.mrb[0].mxu0
      %v3421 = vadd.f32 0.0, %v3420
      %v3422 = vpop.f32.mrb[0].mxu0
      %v3423 = vpop.f32.mrb[0].mxu0
      %v3424 = vadd.f32 0.0, %v3423
      %v3425 = vpop.f32.mrb[0].mxu0
      %3426 = vdwg.mxu0
      %v3427 = vadd.f32 %v3241, %v3397
      %v3428 = vadd.f32 %v3242, %v3400
      %v3429 = vadd.f32 %v3243, %v3405
      %v3430 = vadd.f32 %v3244, %v3408
      %v3431 = vadd.f32 %v3245, %v3413
      %v3432 = vadd.f32 %v3246, %v3416
      %v3433 = vadd.f32 %v3247, %v3421
      %v3434 = vadd.f32 %v3248, %v3424
      %s3435 = scalar_lea.vmem %s581, 720
      %v3436 = vld [vmem:[%s3435] sm:$0x8]
      %v3437 = vld [vmem:[%s3435 + $0x4] sm:$0x7]
      %v3438 = vld [vmem:[%s3435 + $0x18] sm:$0x8]
      %v3439 = vld [vmem:[%s3435 + $0x1c] sm:$0x7]
      %v3440 = vld [vmem:[%s3435 + $0x30] sm:$0x8]
      %v3441 = vld [vmem:[%s3435 + $0x34] sm:$0x7]
      %v3442 = vld [vmem:[%s3435 + $0x48] sm:$0x8]
      %v3443 = vld [vmem:[%s3435 + $0x4c] sm:$0x7]
      %v3444 = vld [vmem:[%s3435 + $0x60] sm:$0x8]
      %v3445 = vld [vmem:[%s3435 + $0x64] sm:$0x7]
      %v3446 = vld [vmem:[%s3435 + $0x78] sm:$0x8]
      %v3447 = vld [vmem:[%s3435 + $0x7c] sm:$0x7]
      %v3448 = vld [vmem:[%s3435 + $0x90] sm:$0x8]
      %v3449 = vld [vmem:[%s3435 + $0x94] sm:$0x7]
      %v3450 = vld [vmem:[%s3435 + $0xa8] sm:$0x8]
      %v3451 = vld [vmem:[%s3435 + $0xac] sm:$0x7]
      %v3452 = vunpack.c.l.bf16 %v3436
      %v3453 = vunpack.c.l.bf16 %v3437
      %v3454 = vunpack.c.l.bf16 %v3438
      %v3455 = vunpack.c.l.bf16 %v3439
      %v3456 = vunpack.c.l.bf16 %v3440
      %v3457 = vunpack.c.l.bf16 %v3441
      %v3458 = vunpack.c.l.bf16 %v3442
      %v3459 = vunpack.c.l.bf16 %v3443
      %v3460 = vunpack.c.l.bf16 %v3444
      %v3461 = vunpack.c.l.bf16 %v3445
      %v3462 = vunpack.c.l.bf16 %v3446
      %v3463 = vunpack.c.l.bf16 %v3447
      %v3464 = vunpack.c.l.bf16 %v3448
      %v3465 = vunpack.c.l.bf16 %v3449
      %v3466 = vunpack.c.l.bf16 %v3450
      %v3467 = vunpack.c.l.bf16 %v3451
      %v3484 = vrot.slane %v3452, 6
      %v3485 = vrot.slane %v3453, 6
      %v3486 = vsel %vm2478, %v3484, %v3485
      %v3487 = vrot.slane %v3454, 6
      %v3488 = vrot.slane %v3455, 6
      %v3489 = vsel %vm2478, %v3487, %v3488
      %v3490 = vrot.slane %v3456, 6
      %v3491 = vrot.slane %v3457, 6
      %v3492 = vsel %vm2478, %v3490, %v3491
      %v3493 = vrot.slane %v3458, 6
      %v3494 = vrot.slane %v3459, 6
      %v3495 = vsel %vm2478, %v3493, %v3494
      %v3496 = vrot.slane %v3460, 6
      %v3497 = vrot.slane %v3461, 6
      %v3498 = vsel %vm2478, %v3496, %v3497
      %v3499 = vrot.slane %v3462, 6
      %v3500 = vrot.slane %v3463, 6
      %v3501 = vsel %vm2478, %v3499, %v3500
      %v3502 = vrot.slane %v3464, 6
      %v3503 = vrot.slane %v3465, 6
      %v3504 = vsel %vm2478, %v3502, %v3503
      %v3505 = vrot.slane %v3466, 6
      %v3506 = vrot.slane %v3467, 6
      %v3507 = vsel %vm2478, %v3505, %v3506
      %v3516 = vpack.c.bf16 %v3489, %v3486
      %v3517 = vpack.c.bf16 %v3495, %v3492
      %v3518 = vpack.c.bf16 %v3501, %v3498
      %v3519 = vpack.c.bf16 %v3507, %v3504
      %s3520 = scalar_lea.vmem %s5, 240
      %v3521 = vld [vmem:[%s3520] sm:$0xf]
      %v3522 = vld [vmem:[%s3520 + $0x4] sm:$0xf]
      %v3523 = vld [vmem:[%s3520 + $0x8] sm:$0xf]
      %v3524 = vld [vmem:[%s3520 + $0xc] sm:$0xf]
      %v3529 = vunpack.c.l.b16 %v3521
      %v3530 = vunpack.c.l.b16 %v3522
      %v3531 = vunpack.c.l.b16 %v3523
      %v3532 = vunpack.c.l.b16 %v3524
      %v3533 = vpack.c.b16 %v3530, %v3529
      %v3534 = vpack.c.b16 %v3532, %v3531
      %v3538 = vsel %vm693, %v3516, 0
      %v3541 = vsel %vm693, %v3517, 0
      %v3544 = vsel %vm693, %v3518, 0
      %v3547 = vsel %vm693, %v3519, 0
      %3549 = vmatprep.subr.bf16.mxu0 0
      %3550 = vmatpush1.bf16.msra.mxu0 %v3533
      %3551 = vmatprep.subr.bf16.mxu0 0
      %3552 = vmatpush1.bf16.msra.mxu0 %v3534
      %3553 = vmatprep.subr.bf16.mxu0 0
      %3554 = vmatpush1.bf16.msra.mxu0 0
      %3555 = vmatprep.subr.bf16.mxu0 0
      %3556 = vmatpush1.bf16.msra.mxu0 0
      %3557 = vmatprep.subr.bf16.mxu0 0
      %3558 = vmatpush1.bf16.msra.mxu0 0
      %3559 = vmatprep.subr.bf16.mxu0 0
      %3560 = vmatpush1.bf16.msra.mxu0 0
      %3561 = vmatprep.subr.bf16.mxu0 0
      %3562 = vmatpush1.bf16.msra.mxu0 0
      %3563 = vmatprep.subr.bf16.mxu0 0
      %3564 = vmatpush1.bf16.msra.mxu0 0
      %3565 = vmatprep.subr.bf16.mxu0 0
      %3566 = vmatpush1.bf16.msra.mxu0 0
      %3567 = vmatprep.subr.bf16.mxu0 0
      %3568 = vmatpush1.bf16.msra.mxu0 0
      %3569 = vmatprep.subr.bf16.mxu0 0
      %3570 = vmatpush1.bf16.msra.mxu0 0
      %3571 = vmatprep.subr.bf16.mxu0 0
      %3572 = vmatpush1.bf16.msra.mxu0 0
      %3573 = vmatprep.subr.bf16.mxu0 0
      %3574 = vmatpush1.bf16.msra.mxu0 0
      %3575 = vmatprep.subr.bf16.mxu0 0
      %3576 = vmatpush1.bf16.msra.mxu0 0
      %3577 = vmatprep.subr.bf16.mxu0 0
      %3578 = vmatpush1.bf16.msra.mxu0 0
      %3579 = vmatprep.subr.bf16.mxu0 0
      %3580 = vmatpush1.bf16.msra.mxu0 0
      %3581 = vmatprep.mubr.bf16.mxu0 0
      %3582 = vmatmul.mubr.bf16.gmra.mrb[0].mxu0 %v3538
      %v3583 = vpop.f32.mrb[0].mxu0
      %v3584 = vadd.f32 0.0, %v3583
      %v3585 = vpop.f32.mrb[0].mxu0
      %v3586 = vpop.f32.mrb[0].mxu0
      %v3587 = vadd.f32 0.0, %v3586
      %v3588 = vpop.f32.mrb[0].mxu0
      %3589 = vmatprep.mubr.bf16.mxu0 0
      %3590 = vmatmul.mubr.bf16.gmra.mrb[0].mxu0 %v3541
      %v3591 = vpop.f32.mrb[0].mxu0
      %v3592 = vadd.f32 0.0, %v3591
      %v3593 = vpop.f32.mrb[0].mxu0
      %v3594 = vpop.f32.mrb[0].mxu0
      %v3595 = vadd.f32 0.0, %v3594
      %v3596 = vpop.f32.mrb[0].mxu0
      %3597 = vmatprep.mubr.bf16.mxu0 0
      %3598 = vmatmul.mubr.bf16.gmra.mrb[0].mxu0 %v3544
      %v3599 = vpop.f32.mrb[0].mxu0
      %v3600 = vadd.f32 0.0, %v3599
      %v3601 = vpop.f32.mrb[0].mxu0
      %v3602 = vpop.f32.mrb[0].mxu0
      %v3603 = vadd.f32 0.0, %v3602
      %v3604 = vpop.f32.mrb[0].mxu0
      %3605 = vmatprep.mubr.bf16.mxu0 0
      %3606 = vmatmul.mubr.bf16.gmra.mrb[0].mxu0 %v3547
      %v3607 = vpop.f32.mrb[0].mxu0
      %v3608 = vadd.f32 0.0, %v3607
      %v3609 = vpop.f32.mrb[0].mxu0
      %v3610 = vpop.f32.mrb[0].mxu0
      %v3611 = vadd.f32 0.0, %v3610
      %v3612 = vpop.f32.mrb[0].mxu0
      %3613 = vdwg.mxu0
      %v3614 = vadd.f32 %v3427, %v3584
      %v3615 = vadd.f32 %v3428, %v3587
      %v3616 = vadd.f32 %v3429, %v3592
      %v3617 = vadd.f32 %v3430, %v3595
      %v3618 = vadd.f32 %v3431, %v3600
      %v3619 = vadd.f32 %v3432, %v3603
      %v3620 = vadd.f32 %v3433, %v3608
      %v3621 = vadd.f32 %v3434, %v3611
      %v3622 = vld [vmem:[%s3435 + $0x8] sm:$0xe]
      %v3623 = vld [vmem:[%s3435 + $0xc] sm:$0x1]
      %v3624 = vld [vmem:[%s3435 + $0x20] sm:$0xe]
      %v3625 = vld [vmem:[%s3435 + $0x24] sm:$0x1]
      %v3626 = vld [vmem:[%s3435 + $0x38] sm:$0xe]
      %v3627 = vld [vmem:[%s3435 + $0x3c] sm:$0x1]
      %v3628 = vld [vmem:[%s3435 + $0x50] sm:$0xe]
      %v3629 = vld [vmem:[%s3435 + $0x54] sm:$0x1]
      %v3630 = vld [vmem:[%s3435 + $0x68] sm:$0xe]
      %v3631 = vld [vmem:[%s3435 + $0x6c] sm:$0x1]
      %v3632 = vld [vmem:[%s3435 + $0x80] sm:$0xe]
      %v3633 = vld [vmem:[%s3435 + $0x84] sm:$0x1]
      %v3634 = vld [vmem:[%s3435 + $0x98] sm:$0xe]
      %v3635 = vld [vmem:[%s3435 + $0x9c] sm:$0x1]
      %v3636 = vld [vmem:[%s3435 + $0xb0] sm:$0xe]
      %v3637 = vld [vmem:[%s3435 + $0xb4] sm:$0x1]
      %v3638 = vunpack.c.l.bf16 %v3622
      %v3639 = vunpack.c.l.bf16 %v3623
      %v3640 = vunpack.c.l.bf16 %v3624
      %v3641 = vunpack.c.l.bf16 %v3625
      %v3642 = vunpack.c.l.bf16 %v3626
      %v3643 = vunpack.c.l.bf16 %v3627
      %v3644 = vunpack.c.l.bf16 %v3628
      %v3645 = vunpack.c.l.bf16 %v3629
      %v3646 = vunpack.c.l.bf16 %v3630
      %v3647 = vunpack.c.l.bf16 %v3631
      %v3648 = vunpack.c.l.bf16 %v3632
      %v3649 = vunpack.c.l.bf16 %v3633
      %v3650 = vunpack.c.l.bf16 %v3634
      %v3651 = vunpack.c.l.bf16 %v3635
      %v3652 = vunpack.c.l.bf16 %v3636
      %v3653 = vunpack.c.l.bf16 %v3637
      %v3670 = vrot.slane %v3638, 2
      %v3671 = vrot.slane %v3639, 2
      %v3672 = vsel %vm640, %v3670, %v3671
      %v3673 = vrot.slane %v3640, 2
      %v3674 = vrot.slane %v3641, 2
      %v3675 = vsel %vm640, %v3673, %v3674
      %v3676 = vrot.slane %v3642, 2
      %v3677 = vrot.slane %v3643, 2
      %v3678 = vsel %vm640, %v3676, %v3677
      %v3679 = vrot.slane %v3644, 2
      %v3680 = vrot.slane %v3645, 2
      %v3681 = vsel %vm640, %v3679, %v3680
      %v3682 = vrot.slane %v3646, 2
      %v3683 = vrot.slane %v3647, 2
      %v3684 = vsel %vm640, %v3682, %v3683
      %v3685 = vrot.slane %v3648, 2
      %v3686 = vrot.slane %v3649, 2
      %v3687 = vsel %vm640, %v3685, %v3686
      %v3688 = vrot.slane %v3650, 2
      %v3689 = vrot.slane %v3651, 2
      %v3690 = vsel %vm640, %v3688, %v3689
      %v3691 = vrot.slane %v3652, 2
      %v3692 = vrot.slane %v3653, 2
      %v3693 = vsel %vm640, %v3691, %v3692
      %v3702 = vpack.c.bf16 %v3675, %v3672
      %v3703 = vpack.c.bf16 %v3681, %v3678
      %v3704 = vpack.c.bf16 %v3687, %v3684
      %v3705 = vpack.c.bf16 %v3693, %v3690
      %s3706 = scalar_lea.vmem %s5, 256
      %v3707 = vld [vmem:[%s3706] sm:$0xf]
      %v3708 = vld [vmem:[%s3706 + $0x4] sm:$0xf]
      %v3709 = vld [vmem:[%s3706 + $0x8] sm:$0xf]
      %v3710 = vld [vmem:[%s3706 + $0xc] sm:$0xf]
      %v3715 = vunpack.c.l.b16 %v3707
      %v3716 = vunpack.c.l.b16 %v3708
      %v3717 = vunpack.c.l.b16 %v3709
      %v3718 = vunpack.c.l.b16 %v3710
      %v3719 = vpack.c.b16 %v3716, %v3715
      %v3720 = vpack.c.b16 %v3718, %v3717
      %v3724 = vsel %vm693, %v3702, 0
      %v3727 = vsel %vm693, %v3703, 0
      %v3730 = vsel %vm693, %v3704, 0
      %v3733 = vsel %vm693, %v3705, 0
      %3735 = vmatprep.subr.bf16.mxu0 0
      %3736 = vmatpush1.bf16.msra.mxu0 %v3719
      %3737 = vmatprep.subr.bf16.mxu0 0
      %3738 = vmatpush1.bf16.msra.mxu0 %v3720
      %3739 = vmatprep.subr.bf16.mxu0 0
      %3740 = vmatpush1.bf16.msra.mxu0 0
      %3741 = vmatprep.subr.bf16.mxu0 0
      %3742 = vmatpush1.bf16.msra.mxu0 0
      %3743 = vmatprep.subr.bf16.mxu0 0
      %3744 = vmatpush1.bf16.msra.mxu0 0
      %3745 = vmatprep.subr.bf16.mxu0 0
      %3746 = vmatpush1.bf16.msra.mxu0 0
      %3747 = vmatprep.subr.bf16.mxu0 0
      %3748 = vmatpush1.bf16.msra.mxu0 0
      %3749 = vmatprep.subr.bf16.mxu0 0
      %3750 = vmatpush1.bf16.msra.mxu0 0
      %3751 = vmatprep.subr.bf16.mxu0 0
      %3752 = vmatpush1.bf16.msra.mxu0 0
      %3753 = vmatprep.subr.bf16.mxu0 0
      %3754 = vmatpush1.bf16.msra.mxu0 0
      %3755 = vmatprep.subr.bf16.mxu0 0
      %3756 = vmatpush1.bf16.msra.mxu0 0
      %3757 = vmatprep.subr.bf16.mxu0 0
      %3758 = vmatpush1.bf16.msra.mxu0 0
      %3759 = vmatprep.subr.bf16.mxu0 0
      %3760 = vmatpush1.bf16.msra.mxu0 0
      %3761 = vmatprep.subr.bf16.mxu0 0
      %3762 = vmatpush1.bf16.msra.mxu0 0
      %3763 = vmatprep.subr.bf16.mxu0 0
      %3764 = vmatpush1.bf16.msra.mxu0 0
      %3765 = vmatprep.subr.bf16.mxu0 0
      %3766 = vmatpush1.bf16.msra.mxu0 0
      %3767 = vmatprep.mubr.bf16.mxu0 0
      %3768 = vmatmul.mubr.bf16.gmra.mrb[0].mxu0 %v3724
      %v3769 = vpop.f32.mrb[0].mxu0
      %v3770 = vadd.f32 0.0, %v3769
      %v3771 = vpop.f32.mrb[0].mxu0
      %v3772 = vpop.f32.mrb[0].mxu0
      %v3773 = vadd.f32 0.0, %v3772
      %v3774 = vpop.f32.mrb[0].mxu0
      %3775 = vmatprep.mubr.bf16.mxu0 0
      %3776 = vmatmul.mubr.bf16.gmra.mrb[0].mxu0 %v3727
      %v3777 = vpop.f32.mrb[0].mxu0
      %v3778 = vadd.f32 0.0, %v3777
      %v3779 = vpop.f32.mrb[0].mxu0
      %v3780 = vpop.f32.mrb[0].mxu0
      %v3781 = vadd.f32 0.0, %v3780
      %v3782 = vpop.f32.mrb[0].mxu0
      %3783 = vmatprep.mubr.bf16.mxu0 0
      %3784 = vmatmul.mubr.bf16.gmra.mrb[0].mxu0 %v3730
      %v3785 = vpop.f32.mrb[0].mxu0
      %v3786 = vadd.f32 0.0, %v3785
      %v3787 = vpop.f32.mrb[0].mxu0
      %v3788 = vpop.f32.mrb[0].mxu0
      %v3789 = vadd.f32 0.0, %v3788
      %v3790 = vpop.f32.mrb[0].mxu0
      %3791 = vmatprep.mubr.bf16.mxu0 0
      %3792 = vmatmul.mubr.bf16.gmra.mrb[0].mxu0 %v3733
      %v3793 = vpop.f32.mrb[0].mxu0
      %v3794 = vadd.f32 0.0, %v3793
      %v3795 = vpop.f32.mrb[0].mxu0
      %v3796 = vpop.f32.mrb[0].mxu0
      %v3797 = vadd.f32 0.0, %v3796
      %v3798 = vpop.f32.mrb[0].mxu0
      %3799 = vdwg.mxu0
      %v3800 = vadd.f32 %v3614, %v3770
      %v3801 = vadd.f32 %v3615, %v3773
      %v3802 = vadd.f32 %v3616, %v3778
      %v3803 = vadd.f32 %v3617, %v3781
      %v3804 = vadd.f32 %v3618, %v3786
      %v3805 = vadd.f32 %v3619, %v3789
      %v3806 = vadd.f32 %v3620, %v3794
      %v3807 = vadd.f32 %v3621, %v3797
      %v3808 = vld [vmem:[%s3435 + $0xc] sm:$0x8]
      %v3809 = vld [vmem:[%s3435 + $0x10] sm:$0x7]
      %v3810 = vld [vmem:[%s3435 + $0x24] sm:$0x8]
      %v3811 = vld [vmem:[%s3435 + $0x28] sm:$0x7]
      %v3812 = vld [vmem:[%s3435 + $0x3c] sm:$0x8]
      %v3813 = vld [vmem:[%s3435 + $0x40] sm:$0x7]
      %v3814 = vld [vmem:[%s3435 + $0x54] sm:$0x8]
      %v3815 = vld [vmem:[%s3435 + $0x58] sm:$0x7]
      %v3816 = vld [vmem:[%s3435 + $0x6c] sm:$0x8]
      %v3817 = vld [vmem:[%s3435 + $0x70] sm:$0x7]
      %v3818 = vld [vmem:[%s3435 + $0x84] sm:$0x8]
      %v3819 = vld [vmem:[%s3435 + $0x88] sm:$0x7]
      %v3820 = vld [vmem:[%s3435 + $0x9c] sm:$0x8]
      %v3821 = vld [vmem:[%s3435 + $0xa0] sm:$0x7]
      %v3822 = vld [vmem:[%s3435 + $0xb4] sm:$0x8]
      %v3823 = vld [vmem:[%s3435 + $0xb8] sm:$0x7]
      %v3824 = vunpack.c.l.bf16 %v3808
      %v3825 = vunpack.c.l.bf16 %v3809
      %v3826 = vunpack.c.l.bf16 %v3810
      %v3827 = vunpack.c.l.bf16 %v3811
      %v3828 = vunpack.c.l.bf16 %v3812
      %v3829 = vunpack.c.l.bf16 %v3813
      %v3830 = vunpack.c.l.bf16 %v3814
      %v3831 = vunpack.c.l.bf16 %v3815
      %v3832 = vunpack.c.l.bf16 %v3816
      %v3833 = vunpack.c.l.bf16 %v3817
      %v3834 = vunpack.c.l.bf16 %v3818
      %v3835 = vunpack.c.l.bf16 %v3819
      %v3836 = vunpack.c.l.bf16 %v3820
      %v3837 = vunpack.c.l.bf16 %v3821
      %v3838 = vunpack.c.l.bf16 %v3822
      %v3839 = vunpack.c.l.bf16 %v3823
      %v3856 = vrot.slane %v3824, 6
      %v3857 = vrot.slane %v3825, 6
      %v3858 = vsel %vm2478, %v3856, %v3857
      %v3859 = vrot.slane %v3826, 6
      %v3860 = vrot.slane %v3827, 6
      %v3861 = vsel %vm2478, %v3859, %v3860
      %v3862 = vrot.slane %v3828, 6
      %v3863 = vrot.slane %v3829, 6
      %v3864 = vsel %vm2478, %v3862, %v3863
      %v3865 = vrot.slane %v3830, 6
      %v3866 = vrot.slane %v3831, 6
      %v3867 = vsel %vm2478, %v3865, %v3866
      %v3868 = vrot.slane %v3832, 6
      %v3869 = vrot.slane %v3833, 6
      %v3870 = vsel %vm2478, %v3868, %v3869
      %v3871 = vrot.slane %v3834, 6
      %v3872 = vrot.slane %v3835, 6
      %v3873 = vsel %vm2478, %v3871, %v3872
      %v3874 = vrot.slane %v3836, 6
      %v3875 = vrot.slane %v3837, 6
      %v3876 = vsel %vm2478, %v3874, %v3875
      %v3877 = vrot.slane %v3838, 6
      %v3878 = vrot.slane %v3839, 6
      %v3879 = vsel %vm2478, %v3877, %v3878
      %v3888 = vpack.c.bf16 %v3861, %v3858
      %v3889 = vpack.c.bf16 %v3867, %v3864
      %v3890 = vpack.c.bf16 %v3873, %v3870
      %v3891 = vpack.c.bf16 %v3879, %v3876
      %s3892 = scalar_lea.vmem %s5, 272
      %v3893 = vld [vmem:[%s3892] sm:$0xf]
      %v3894 = vld [vmem:[%s3892 + $0x4] sm:$0xf]
      %v3895 = vld [vmem:[%s3892 + $0x8] sm:$0xf]
      %v3896 = vld [vmem:[%s3892 + $0xc] sm:$0xf]
      %v3901 = vunpack.c.l.b16 %v3893
      %v3902 = vunpack.c.l.b16 %v3894
      %v3903 = vunpack.c.l.b16 %v3895
      %v3904 = vunpack.c.l.b16 %v3896
      %v3905 = vpack.c.b16 %v3902, %v3901
      %v3906 = vpack.c.b16 %v3904, %v3903
      %v3910 = vsel %vm693, %v3888, 0
      %v3913 = vsel %vm693, %v3889, 0
      %v3916 = vsel %vm693, %v3890, 0
      %v3919 = vsel %vm693, %v3891, 0
      %3921 = vmatprep.subr.bf16.mxu0 0
      %3922 = vmatpush1.bf16.msra.mxu0 %v3905
      %3923 = vmatprep.subr.bf16.mxu0 0
      %3924 = vmatpush1.bf16.msra.mxu0 %v3906
      %3925 = vmatprep.subr.bf16.mxu0 0
      %3926 = vmatpush1.bf16.msra.mxu0 0
      %3927 = vmatprep.subr.bf16.mxu0 0
      %3928 = vmatpush1.bf16.msra.mxu0 0
      %3929 = vmatprep.subr.bf16.mxu0 0
      %3930 = vmatpush1.bf16.msra.mxu0 0
      %3931 = vmatprep.subr.bf16.mxu0 0
      %3932 = vmatpush1.bf16.msra.mxu0 0
      %3933 = vmatprep.subr.bf16.mxu0 0
      %3934 = vmatpush1.bf16.msra.mxu0 0
      %3935 = vmatprep.subr.bf16.mxu0 0
      %3936 = vmatpush1.bf16.msra.mxu0 0
      %3937 = vmatprep.subr.bf16.mxu0 0
      %3938 = vmatpush1.bf16.msra.mxu0 0
      %3939 = vmatprep.subr.bf16.mxu0 0
      %3940 = vmatpush1.bf16.msra.mxu0 0
      %3941 = vmatprep.subr.bf16.mxu0 0
      %3942 = vmatpush1.bf16.msra.mxu0 0
      %3943 = vmatprep.subr.bf16.mxu0 0
      %3944 = vmatpush1.bf16.msra.mxu0 0
      %3945 = vmatprep.subr.bf16.mxu0 0
      %3946 = vmatpush1.bf16.msra.mxu0 0
      %3947 = vmatprep.subr.bf16.mxu0 0
      %3948 = vmatpush1.bf16.msra.mxu0 0
      %3949 = vmatprep.subr.bf16.mxu0 0
      %3950 = vmatpush1.bf16.msra.mxu0 0
      %3951 = vmatprep.subr.bf16.mxu0 0
      %3952 = vmatpush1.bf16.msra.mxu0 0
      %3953 = vmatprep.mubr.bf16.mxu0 0
      %3954 = vmatmul.mubr.bf16.gmra.mrb[0].mxu0 %v3910
      %v3955 = vpop.f32.mrb[0].mxu0
      %v3956 = vadd.f32 0.0, %v3955
      %v3957 = vpop.f32.mrb[0].mxu0
      %v3958 = vpop.f32.mrb[0].mxu0
      %v3959 = vadd.f32 0.0, %v3958
      %v3960 = vpop.f32.mrb[0].mxu0
      %3961 = vmatprep.mubr.bf16.mxu0 0
      %3962 = vmatmul.mubr.bf16.gmra.mrb[0].mxu0 %v3913
      %v3963 = vpop.f32.mrb[0].mxu0
      %v3964 = vadd.f32 0.0, %v3963
      %v3965 = vpop.f32.mrb[0].mxu0
      %v3966 = vpop.f32.mrb[0].mxu0
      %v3967 = vadd.f32 0.0, %v3966
      %v3968 = vpop.f32.mrb[0].mxu0
      %3969 = vmatprep.mubr.bf16.mxu0 0
      %3970 = vmatmul.mubr.bf16.gmra.mrb[0].mxu0 %v3916
      %v3971 = vpop.f32.mrb[0].mxu0
      %v3972 = vadd.f32 0.0, %v3971
      %v3973 = vpop.f32.mrb[0].mxu0
      %v3974 = vpop.f32.mrb[0].mxu0
      %v3975 = vadd.f32 0.0, %v3974
      %v3976 = vpop.f32.mrb[0].mxu0
      %3977 = vmatprep.mubr.bf16.mxu0 0
      %3978 = vmatmul.mubr.bf16.gmra.mrb[0].mxu0 %v3919
      %v3979 = vpop.f32.mrb[0].mxu0
      %v3980 = vadd.f32 0.0, %v3979
      %v3981 = vpop.f32.mrb[0].mxu0
      %v3982 = vpop.f32.mrb[0].mxu0
      %v3983 = vadd.f32 0.0, %v3982
      %v3984 = vpop.f32.mrb[0].mxu0
      %3985 = vdwg.mxu0
      %v3986 = vadd.f32 %v3800, %v3956
      %v3987 = vadd.f32 %v3801, %v3959
      %v3988 = vadd.f32 %v3802, %v3964
      %v3989 = vadd.f32 %v3803, %v3967
      %v3990 = vadd.f32 %v3804, %v3972
      %v3991 = vadd.f32 %v3805, %v3975
      %v3992 = vadd.f32 %v3806, %v3980
      %v3993 = vadd.f32 %v3807, %v3983
      %s3994 = scalar_lea.vmem %s6, 1
      %v3995 = vld [vmem:[%s3994] sm:$0x1]
      %v3997 = vlaneseq
      %v3998 = vshrl.u32 %v3997, 7
      %v3999 = vsub.s32 0, %v3998
      %v4000 = vrot.slane %v3995, %v3999
      %v4002 = vmul.f32 %v3986, %v4000
      %v4003 = vmul.f32 %v3987, %v4000
      %v4004 = vmul.f32 %v3988, %v4000
      %v4005 = vmul.f32 %v3989, %v4000
      %v4006 = vmul.f32 %v3990, %v4000
      %v4007 = vmul.f32 %v3991, %v4000
      %v4008 = vmul.f32 %v3992, %v4000
      %v4009 = vmul.f32 %v3993, %v4000
      %s4010 = scalar_lea.vmem %s7, 1
      %v4011 = vld [vmem:[%s4010] sm:$0x1]
      %v4013 = vlaneseq
      %v4014 = vshrl.u32 %v4013, 7
      %v4015 = vsub.s32 0, %v4014
      %v4016 = vrot.slane %v4011, %v4015
      %v4018 = vadd.f32 %v4002, %v4016
      %v4019 = vadd.f32 %v4003, %v4016
      %v4020 = vadd.f32 %v4004, %v4016
      %v4021 = vadd.f32 %v4005, %v4016
      %v4022 = vadd.f32 %v4006, %v4016
      %v4023 = vadd.f32 %v4007, %v4016
      %v4024 = vadd.f32 %v4008, %v4016
      %v4025 = vadd.f32 %v4009, %v4016
      %v4026 = vmax.f32 %v4018, 0.0
      %v4027 = vmax.f32 %v4019, 0.0
      %v4028 = vmax.f32 %v4020, 0.0
      %v4029 = vmax.f32 %v4021, 0.0
      %v4030 = vmax.f32 %v4022, 0.0
      %v4031 = vmax.f32 %v4023, 0.0
      %v4032 = vmax.f32 %v4024, 0.0
      %v4033 = vmax.f32 %v4025, 0.0
      %v4034 = vpack.c.bf16 %v4027, %v4026
      %v4035 = vpack.c.bf16 %v4029, %v4028
      %v4036 = vpack.c.bf16 %v4031, %v4030
      %v4037 = vpack.c.bf16 %v4033, %v4032
      %s4038 = scalar_lea.vmem %s8, 32
      %v4039 = vld [vmem:[%s4038] sm:$0xf]
      %v4040 = vld [vmem:[%s4038 + $0x4] sm:$0xf]
      %v4041 = vld [vmem:[%s4038 + $0x8] sm:$0xf]
      %v4042 = vld [vmem:[%s4038 + $0xc] sm:$0xf]
      %v4047 = vunpack.c.l.b16 %v4039
      %v4048 = vunpack.c.l.b16 %v4040
      %v4049 = vunpack.c.l.b16 %v4041
      %v4050 = vunpack.c.l.b16 %v4042
      %v4051 = vpack.c.b16 %v4048, %v4047
      %v4052 = vpack.c.b16 %v4050, %v4049
      %v4056 = vsel %vm693, %v4034, 0
      %v4059 = vsel %vm693, %v4035, 0
      %v4062 = vsel %vm693, %v4036, 0
      %v4065 = vsel %vm693, %v4037, 0
      %4067 = vmatprep.subr.bf16.mxu0 0
      %4068 = vmatpush1.bf16.msra.mxu0 %v4051
      %4069 = vmatprep.subr.bf16.mxu0 0
      %4070 = vmatpush1.bf16.msra.mxu0 %v4052
      %4071 = vmatprep.subr.bf16.mxu0 0
      %4072 = vmatpush1.bf16.msra.mxu0 0
      %4073 = vmatprep.subr.bf16.mxu0 0
      %4074 = vmatpush1.bf16.msra.mxu0 0
      %4075 = vmatprep.subr.bf16.mxu0 0
      %4076 = vmatpush1.bf16.msra.mxu0 0
      %4077 = vmatprep.subr.bf16.mxu0 0
      %4078 = vmatpush1.bf16.msra.mxu0 0
      %4079 = vmatprep.subr.bf16.mxu0 0
      %4080 = vmatpush1.bf16.msra.mxu0 0
      %4081 = vmatprep.subr.bf16.mxu0 0
      %4082 = vmatpush1.bf16.msra.mxu0 0
      %4083 = vmatprep.subr.bf16.mxu0 0
      %4084 = vmatpush1.bf16.msra.mxu0 0
      %4085 = vmatprep.subr.bf16.mxu0 0
      %4086 = vmatpush1.bf16.msra.mxu0 0
      %4087 = vmatprep.subr.bf16.mxu0 0
      %4088 = vmatpush1.bf16.msra.mxu0 0
      %4089 = vmatprep.subr.bf16.mxu0 0
      %4090 = vmatpush1.bf16.msra.mxu0 0
      %4091 = vmatprep.subr.bf16.mxu0 0
      %4092 = vmatpush1.bf16.msra.mxu0 0
      %4093 = vmatprep.subr.bf16.mxu0 0
      %4094 = vmatpush1.bf16.msra.mxu0 0
      %4095 = vmatprep.subr.bf16.mxu0 0
      %4096 = vmatpush1.bf16.msra.mxu0 0
      %4097 = vmatprep.subr.bf16.mxu0 0
      %4098 = vmatpush1.bf16.msra.mxu0 0
      %4099 = vmatprep.mubr.bf16.mxu0 0
      %4100 = vmatmul.mubr.bf16.gmra.mrb[0].mxu0 %v4056
      %v4101 = vpop.f32.mrb[0].mxu0
      %v4102 = vadd.f32 0.0, %v4101
      %v4103 = vpop.f32.mrb[0].mxu0
      %v4104 = vpop.f32.mrb[0].mxu0
      %v4105 = vadd.f32 0.0, %v4104
      %v4106 = vpop.f32.mrb[0].mxu0
      %4107 = vmatprep.mubr.bf16.mxu0 0
      %4108 = vmatmul.mubr.bf16.gmra.mrb[0].mxu0 %v4059
      %v4109 = vpop.f32.mrb[0].mxu0
      %v4110 = vadd.f32 0.0, %v4109
      %v4111 = vpop.f32.mrb[0].mxu0
      %v4112 = vpop.f32.mrb[0].mxu0
      %v4113 = vadd.f32 0.0, %v4112
      %v4114 = vpop.f32.mrb[0].mxu0
      %4115 = vmatprep.mubr.bf16.mxu0 0
      %4116 = vmatmul.mubr.bf16.gmra.mrb[0].mxu0 %v4062
      %v4117 = vpop.f32.mrb[0].mxu0
      %v4118 = vadd.f32 0.0, %v4117
      %v4119 = vpop.f32.mrb[0].mxu0
      %v4120 = vpop.f32.mrb[0].mxu0
      %v4121 = vadd.f32 0.0, %v4120
      %v4122 = vpop.f32.mrb[0].mxu0
      %4123 = vmatprep.mubr.bf16.mxu0 0
      %4124 = vmatmul.mubr.bf16.gmra.mrb[0].mxu0 %v4065
      %v4125 = vpop.f32.mrb[0].mxu0
      %v4126 = vadd.f32 0.0, %v4125
      %v4127 = vpop.f32.mrb[0].mxu0
      %v4128 = vpop.f32.mrb[0].mxu0
      %v4129 = vadd.f32 0.0, %v4128
      %v4130 = vpop.f32.mrb[0].mxu0
      %4131 = vdwg.mxu0
      %v4132 = vadd.f32 %v2421, %v4102
      %v4133 = vadd.f32 %v2422, %v4105
      %v4134 = vadd.f32 %v2423, %v4110
      %v4135 = vadd.f32 %v2424, %v4113
      %v4136 = vadd.f32 %v2425, %v4118
      %v4137 = vadd.f32 %v2426, %v4121
      %v4138 = vadd.f32 %v2427, %v4126
      %v4139 = vadd.f32 %v2428, %v4129
      %v4140 = vld [vmem:[%s581] sm:$0xf]
      %v4141 = vld [vmem:[%s581 + $0x18] sm:$0xf]
      %v4142 = vld [vmem:[%s581 + $0x30] sm:$0xf]
      %v4143 = vld [vmem:[%s581 + $0x48] sm:$0xf]
      %v4144 = vld [vmem:[%s581 + $0x60] sm:$0xf]
      %v4145 = vld [vmem:[%s581 + $0x78] sm:$0xf]
      %v4146 = vld [vmem:[%s581 + $0x90] sm:$0xf]
      %v4147 = vld [vmem:[%s581 + $0xa8] sm:$0xf]
      %v4148 = vunpack.c.l.bf16 %v4140
      %v4149 = vunpack.c.l.bf16 %v4141
      %v4150 = vunpack.c.l.bf16 %v4142
      %v4151 = vunpack.c.l.bf16 %v4143
      %v4152 = vunpack.c.l.bf16 %v4144
      %v4153 = vunpack.c.l.bf16 %v4145
      %v4154 = vunpack.c.l.bf16 %v4146
      %v4155 = vunpack.c.l.bf16 %v4147
      %v4156 = vpack.c.bf16 %v4149, %v4148
      %v4157 = vpack.c.bf16 %v4151, %v4150
      %v4158 = vpack.c.bf16 %v4153, %v4152
      %v4159 = vpack.c.bf16 %v4155, %v4154
      %s4160 = scalar_lea.vmem %s5, 288
      %v4161 = vld [vmem:[%s4160] sm:$0xf]
      %v4162 = vld [vmem:[%s4160 + $0x4] sm:$0xf]
      %v4163 = vld [vmem:[%s4160 + $0x8] sm:$0xf]
      %v4164 = vld [vmem:[%s4160 + $0xc] sm:$0xf]
      %v4165 = vld [vmem:[%s581 + $0x8] sm:$0xe]
      %v4166 = vld [vmem:[%s581 + $0xc] sm:$0x1]
      %v4167 = vld [vmem:[%s581 + $0x20] sm:$0xe]
      %v4168 = vld [vmem:[%s581 + $0x24] sm:$0x1]
      %v4169 = vld [vmem:[%s581 + $0x38] sm:$0xe]
      %v4170 = vld [vmem:[%s581 + $0x3c] sm:$0x1]
      %v4171 = vld [vmem:[%s581 + $0x50] sm:$0xe]
      %v4172 = vld [vmem:[%s581 + $0x54] sm:$0x1]
      %v4173 = vld [vmem:[%s581 + $0x68] sm:$0xe]
      %v4174 = vld [vmem:[%s581 + $0x6c] sm:$0x1]
      %v4175 = vld [vmem:[%s581 + $0x80] sm:$0xe]
      %v4176 = vld [vmem:[%s581 + $0x84] sm:$0x1]
      %v4177 = vld [vmem:[%s581 + $0x98] sm:$0xe]
      %v4178 = vld [vmem:[%s581 + $0x9c] sm:$0x1]
      %v4179 = vld [vmem:[%s581 + $0xb0] sm:$0xe]
      %v4180 = vld [vmem:[%s581 + $0xb4] sm:$0x1]
      %v4181 = vunpack.c.l.bf16 %v4165
      %v4182 = vunpack.c.l.bf16 %v4166
      %v4183 = vunpack.c.l.bf16 %v4167
      %v4184 = vunpack.c.l.bf16 %v4168
      %v4185 = vunpack.c.l.bf16 %v4169
      %v4186 = vunpack.c.l.bf16 %v4170
      %v4187 = vunpack.c.l.bf16 %v4171
      %v4188 = vunpack.c.l.bf16 %v4172
      %v4189 = vunpack.c.l.bf16 %v4173
      %v4190 = vunpack.c.l.bf16 %v4174
      %v4191 = vunpack.c.l.bf16 %v4175
      %v4192 = vunpack.c.l.bf16 %v4176
      %v4193 = vunpack.c.l.bf16 %v4177
      %v4194 = vunpack.c.l.bf16 %v4178
      %v4195 = vunpack.c.l.bf16 %v4179
      %v4196 = vunpack.c.l.bf16 %v4180
      %v4213 = vrot.slane %v4181, 2
      %v4214 = vrot.slane %v4182, 2
      %v4215 = vsel %vm640, %v4213, %v4214
      %v4216 = vrot.slane %v4183, 2
      %v4217 = vrot.slane %v4184, 2
      %v4218 = vsel %vm640, %v4216, %v4217
      %v4219 = vrot.slane %v4185, 2
      %v4220 = vrot.slane %v4186, 2
      %v4221 = vsel %vm640, %v4219, %v4220
      %v4222 = vrot.slane %v4187, 2
      %v4223 = vrot.slane %v4188, 2
      %v4224 = vsel %vm640, %v4222, %v4223
      %v4225 = vrot.slane %v4189, 2
      %v4226 = vrot.slane %v4190, 2
      %v4227 = vsel %vm640, %v4225, %v4226
      %v4228 = vrot.slane %v4191, 2
      %v4229 = vrot.slane %v4192, 2
      %v4230 = vsel %vm640, %v4228, %v4229
      %v4231 = vrot.slane %v4193, 2
      %v4232 = vrot.slane %v4194, 2
      %v4233 = vsel %vm640, %v4231, %v4232
      %v4234 = vrot.slane %v4195, 2
      %v4235 = vrot.slane %v4196, 2
      %v4236 = vsel %vm640, %v4234, %v4235
      %v4245 = vpack.c.bf16 %v4218, %v4215
      %v4246 = vpack.c.bf16 %v4224, %v4221
      %v4247 = vpack.c.bf16 %v4230, %v4227
      %v4248 = vpack.c.bf16 %v4236, %v4233
      %s4249 = scalar_lea.vmem %s5, 304
      %v4250 = vld [vmem:[%s4249] sm:$0xf]
      %v4251 = vld [vmem:[%s4249 + $0x4] sm:$0xf]
      %v4252 = vld [vmem:[%s4249 + $0x8] sm:$0xf]
      %v4253 = vld [vmem:[%s4249 + $0xc] sm:$0xf]
      %v4258 = vunpack.c.l.b16 %v4250
      %v4259 = vunpack.c.l.b16 %v4251
      %v4260 = vunpack.c.l.b16 %v4252
      %v4261 = vunpack.c.l.b16 %v4253
      %v4262 = vpack.c.b16 %v4259, %v4258
      %v4263 = vpack.c.b16 %v4261, %v4260
      %v4267 = vsel %vm693, %v4245, 0
      %v4270 = vsel %vm693, %v4246, 0
      %v4273 = vsel %vm693, %v4247, 0
      %v4276 = vsel %vm693, %v4248, 0
      %4278 = vmatprep.subr.bf16.mxu0 0
      %4279 = vmatpush1.bf16.msra.mxu0 %v4262
      %4280 = vmatprep.subr.bf16.mxu0 0
      %4281 = vmatpush1.bf16.msra.mxu0 %v4263
      %4282 = vmatprep.subr.bf16.mxu0 0
      %4283 = vmatpush1.bf16.msra.mxu0 0
      %4284 = vmatprep.subr.bf16.mxu0 0
      %4285 = vmatpush1.bf16.msra.mxu0 0
      %4286 = vmatprep.subr.bf16.mxu0 0
      %4287 = vmatpush1.bf16.msra.mxu0 0
      %4288 = vmatprep.subr.bf16.mxu0 0
      %4289 = vmatpush1.bf16.msra.mxu0 0
      %4290 = vmatprep.subr.bf16.mxu0 0
      %4291 = vmatpush1.bf16.msra.mxu0 0
      %4292 = vmatprep.subr.bf16.mxu0 0
      %4293 = vmatpush1.bf16.msra.mxu0 0
      %4294 = vmatprep.subr.bf16.mxu0 0
      %4295 = vmatpush1.bf16.msra.mxu0 0
      %4296 = vmatprep.subr.bf16.mxu0 0
      %4297 = vmatpush1.bf16.msra.mxu0 0
      %4298 = vmatprep.subr.bf16.mxu0 0
      %4299 = vmatpush1.bf16.msra.mxu0 0
      %4300 = vmatprep.subr.bf16.mxu0 0
      %4301 = vmatpush1.bf16.msra.mxu0 0
      %4302 = vmatprep.subr.bf16.mxu0 0
      %4303 = vmatpush1.bf16.msra.mxu0 0
      %4304 = vmatprep.subr.bf16.mxu0 0
      %4305 = vmatpush1.bf16.msra.mxu0 0
      %4306 = vmatprep.subr.bf16.mxu0 0
      %4307 = vmatpush1.bf16.msra.mxu0 0
      %4308 = vmatprep.subr.bf16.mxu0 0
      %4309 = vmatpush1.bf16.msra.mxu0 0
      %4310 = vmatprep.mubr.bf16.mxu0 0
      %4311 = vmatmul.mubr.bf16.gmra.mrb[0].mxu0 %v4267
      %v4312 = vpop.f32.mrb[0].mxu0
      %v4313 = vadd.f32 0.0, %v4312
      %v4314 = vpop.f32.mrb[0].mxu0
      %v4315 = vpop.f32.mrb[0].mxu0
      %v4316 = vadd.f32 0.0, %v4315
      %v4317 = vpop.f32.mrb[0].mxu0
      %4318 = vmatprep.mubr.bf16.mxu0 0
      %4319 = vmatmul.mubr.bf16.gmra.mrb[0].mxu0 %v4270
      %v4320 = vpop.f32.mrb[0].mxu0
      %v4321 = vadd.f32 0.0, %v4320
      %v4322 = vpop.f32.mrb[0].mxu0
      %v4323 = vpop.f32.mrb[0].mxu0
      %v4324 = vadd.f32 0.0, %v4323
      %v4325 = vpop.f32.mrb[0].mxu0
      %4326 = vmatprep.mubr.bf16.mxu0 0
      %4327 = vmatmul.mubr.bf16.gmra.mrb[0].mxu0 %v4273
      %v4328 = vpop.f32.mrb[0].mxu0
      %v4329 = vadd.f32 0.0, %v4328
      %v4330 = vpop.f32.mrb[0].mxu0
      %v4331 = vpop.f32.mrb[0].mxu0
      %v4332 = vadd.f32 0.0, %v4331
      %v4333 = vpop.f32.mrb[0].mxu0
      %4334 = vmatprep.mubr.bf16.mxu0 0
      %4335 = vmatmul.mubr.bf16.gmra.mrb[0].mxu0 %v4276
      %v4336 = vpop.f32.mrb[0].mxu0
      %v4337 = vadd.f32 0.0, %v4336
      %v4338 = vpop.f32.mrb[0].mxu0
      %v4339 = vpop.f32.mrb[0].mxu0
      %v4340 = vadd.f32 0.0, %v4339
      %v4341 = vpop.f32.mrb[0].mxu0
      %4342 = vdwg.mxu0
      %v4347 = vunpack.c.l.b16 %v4161
      %v4348 = vunpack.c.l.b16 %v4162
      %v4349 = vunpack.c.l.b16 %v4163
      %v4350 = vunpack.c.l.b16 %v4164
      %v4351 = vpack.c.b16 %v4348, %v4347
      %v4352 = vpack.c.b16 %v4350, %v4349
      %v4356 = vsel %vm693, %v4156, 0
      %v4359 = vsel %vm693, %v4157, 0
      %v4362 = vsel %vm693, %v4158, 0
      %v4365 = vsel %vm693, %v4159, 0
      %4367 = vmatprep.subr.bf16.mxu0 0
      %4368 = vmatpush1.bf16.msra.mxu0 %v4351
      %4369 = vmatprep.subr.bf16.mxu0 0
      %4370 = vmatpush1.bf16.msra.mxu0 %v4352
      %4371 = vmatprep.subr.bf16.mxu0 0
      %4372 = vmatpush1.bf16.msra.mxu0 0
      %4373 = vmatprep.subr.bf16.mxu0 0
      %4374 = vmatpush1.bf16.msra.mxu0 0
      %4375 = vmatprep.subr.bf16.mxu0 0
      %4376 = vmatpush1.bf16.msra.mxu0 0
      %4377 = vmatprep.subr.bf16.mxu0 0
      %4378 = vmatpush1.bf16.msra.mxu0 0
      %4379 = vmatprep.subr.bf16.mxu0 0
      %4380 = vmatpush1.bf16.msra.mxu0 0
      %4381 = vmatprep.subr.bf16.mxu0 0
      %4382 = vmatpush1.bf16.msra.mxu0 0
      %4383 = vmatprep.subr.bf16.mxu0 0
      %4384 = vmatpush1.bf16.msra.mxu0 0
      %4385 = vmatprep.subr.bf16.mxu0 0
      %4386 = vmatpush1.bf16.msra.mxu0 0
      %4387 = vmatprep.subr.bf16.mxu0 0
      %4388 = vmatpush1.bf16.msra.mxu0 0
      %4389 = vmatprep.subr.bf16.mxu0 0
      %4390 = vmatpush1.bf16.msra.mxu0 0
      %4391 = vmatprep.subr.bf16.mxu0 0
      %4392 = vmatpush1.bf16.msra.mxu0 0
      %4393 = vmatprep.subr.bf16.mxu0 0
      %4394 = vmatpush1.bf16.msra.mxu0 0
      %4395 = vmatprep.subr.bf16.mxu0 0
      %4396 = vmatpush1.bf16.msra.mxu0 0
      %4397 = vmatprep.subr.bf16.mxu0 0
      %4398 = vmatpush1.bf16.msra.mxu0 0
      %4399 = vmatprep.mubr.bf16.mxu0 0
      %4400 = vmatmul.mubr.bf16.gmra.mrb[0].mxu0 %v4356
      %v4401 = vpop.f32.mrb[0].mxu0
      %v4402 = vadd.f32 %v4313, %v4401
      %v4403 = vpop.f32.mrb[0].mxu0
      %v4404 = vpop.f32.mrb[0].mxu0
      %v4405 = vadd.f32 %v4316, %v4404
      %v4406 = vpop.f32.mrb[0].mxu0
      %4407 = vmatprep.mubr.bf16.mxu0 0
      %4408 = vmatmul.mubr.bf16.gmra.mrb[0].mxu0 %v4359
      %v4409 = vpop.f32.mrb[0].mxu0
      %v4410 = vadd.f32 %v4321, %v4409
      %v4411 = vpop.f32.mrb[0].mxu0
      %v4412 = vpop.f32.mrb[0].mxu0
      %v4413 = vadd.f32 %v4324, %v4412
      %v4414 = vpop.f32.mrb[0].mxu0
      %4415 = vmatprep.mubr.bf16.mxu0 0
      %4416 = vmatmul.mubr.bf16.gmra.mrb[0].mxu0 %v4362
      %v4417 = vpop.f32.mrb[0].mxu0
      %v4418 = vadd.f32 %v4329, %v4417
      %v4419 = vpop.f32.mrb[0].mxu0
      %v4420 = vpop.f32.mrb[0].mxu0
      %v4421 = vadd.f32 %v4332, %v4420
      %v4422 = vpop.f32.mrb[0].mxu0
      %4423 = vmatprep.mubr.bf16.mxu0 0
      %4424 = vmatmul.mubr.bf16.gmra.mrb[0].mxu0 %v4365
      %v4425 = vpop.f32.mrb[0].mxu0
      %v4426 = vadd.f32 %v4337, %v4425
      %v4427 = vpop.f32.mrb[0].mxu0
      %v4428 = vpop.f32.mrb[0].mxu0
      %v4429 = vadd.f32 %v4340, %v4428
      %v4430 = vpop.f32.mrb[0].mxu0
      %4431 = vdwg.mxu0
      %v4432 = vld [vmem:[%s581 + $0x10] sm:$0xc]
      %v4433 = vld [vmem:[%s581 + $0x14] sm:$0x3]
      %v4434 = vld [vmem:[%s581 + $0x28] sm:$0xc]
      %v4435 = vld [vmem:[%s581 + $0x2c] sm:$0x3]
      %v4436 = vld [vmem:[%s581 + $0x40] sm:$0xc]
      %v4437 = vld [vmem:[%s581 + $0x44] sm:$0x3]
      %v4438 = vld [vmem:[%s581 + $0x58] sm:$0xc]
      %v4439 = vld [vmem:[%s581 + $0x5c] sm:$0x3]
      %v4440 = vld [vmem:[%s581 + $0x70] sm:$0xc]
      %v4441 = vld [vmem:[%s581 + $0x74] sm:$0x3]
      %v4442 = vld [vmem:[%s581 + $0x88] sm:$0xc]
      %v4443 = vld [vmem:[%s581 + $0x8c] sm:$0x3]
      %v4444 = vld [vmem:[%s581 + $0xa0] sm:$0xc]
      %v4445 = vld [vmem:[%s581 + $0xa4] sm:$0x3]
      %v4446 = vld [vmem:[%s581 + $0xb8] sm:$0xc]
      %v4447 = vld [vmem:[%s581 + $0xbc] sm:$0x3]
      %v4448 = vunpack.c.l.bf16 %v4432
      %v4449 = vunpack.c.l.bf16 %v4433
      %v4450 = vunpack.c.l.bf16 %v4434
      %v4451 = vunpack.c.l.bf16 %v4435
      %v4452 = vunpack.c.l.bf16 %v4436
      %v4453 = vunpack.c.l.bf16 %v4437
      %v4454 = vunpack.c.l.bf16 %v4438
      %v4455 = vunpack.c.l.bf16 %v4439
      %v4456 = vunpack.c.l.bf16 %v4440
      %v4457 = vunpack.c.l.bf16 %v4441
      %v4458 = vunpack.c.l.bf16 %v4442
      %v4459 = vunpack.c.l.bf16 %v4443
      %v4460 = vunpack.c.l.bf16 %v4444
      %v4461 = vunpack.c.l.bf16 %v4445
      %v4462 = vunpack.c.l.bf16 %v4446
      %v4463 = vunpack.c.l.bf16 %v4447
      %v4480 = vrot.slane %v4448, 4
      %v4481 = vrot.slane %v4449, 4
      %v4482 = vsel %vm962, %v4480, %v4481
      %v4483 = vrot.slane %v4450, 4
      %v4484 = vrot.slane %v4451, 4
      %v4485 = vsel %vm962, %v4483, %v4484
      %v4486 = vrot.slane %v4452, 4
      %v4487 = vrot.slane %v4453, 4
      %v4488 = vsel %vm962, %v4486, %v4487
      %v4489 = vrot.slane %v4454, 4
      %v4490 = vrot.slane %v4455, 4
      %v4491 = vsel %vm962, %v4489, %v4490
      %v4492 = vrot.slane %v4456, 4
      %v4493 = vrot.slane %v4457, 4
      %v4494 = vsel %vm962, %v4492, %v4493
      %v4495 = vrot.slane %v4458, 4
      %v4496 = vrot.slane %v4459, 4
      %v4497 = vsel %vm962, %v4495, %v4496
      %v4498 = vrot.slane %v4460, 4
      %v4499 = vrot.slane %v4461, 4
      %v4500 = vsel %vm962, %v4498, %v4499
      %v4501 = vrot.slane %v4462, 4
      %v4502 = vrot.slane %v4463, 4
      %v4503 = vsel %vm962, %v4501, %v4502
      %v4512 = vpack.c.bf16 %v4485, %v4482
      %v4513 = vpack.c.bf16 %v4491, %v4488
      %v4514 = vpack.c.bf16 %v4497, %v4494
      %v4515 = vpack.c.bf16 %v4503, %v4500
      %s4516 = scalar_lea.vmem %s5, 320
      %v4517 = vld [vmem:[%s4516] sm:$0xf]
      %v4518 = vld [vmem:[%s4516 + $0x4] sm:$0xf]
      %v4519 = vld [vmem:[%s4516 + $0x8] sm:$0xf]
      %v4520 = vld [vmem:[%s4516 + $0xc] sm:$0xf]
      %v4525 = vunpack.c.l.b16 %v4517
      %v4526 = vunpack.c.l.b16 %v4518
      %v4527 = vunpack.c.l.b16 %v4519
      %v4528 = vunpack.c.l.b16 %v4520
      %v4529 = vpack.c.b16 %v4526, %v4525
      %v4530 = vpack.c.b16 %v4528, %v4527
      %v4534 = vsel %vm693, %v4512, 0
      %v4537 = vsel %vm693, %v4513, 0
      %v4540 = vsel %vm693, %v4514, 0
      %v4543 = vsel %vm693, %v4515, 0
      %4545 = vmatprep.subr.bf16.mxu0 0
      %4546 = vmatpush1.bf16.msra.mxu0 %v4529
      %4547 = vmatprep.subr.bf16.mxu0 0
      %4548 = vmatpush1.bf16.msra.mxu0 %v4530
      %4549 = vmatprep.subr.bf16.mxu0 0
      %4550 = vmatpush1.bf16.msra.mxu0 0
      %4551 = vmatprep.subr.bf16.mxu0 0
      %4552 = vmatpush1.bf16.msra.mxu0 0
      %4553 = vmatprep.subr.bf16.mxu0 0
      %4554 = vmatpush1.bf16.msra.mxu0 0
      %4555 = vmatprep.subr.bf16.mxu0 0
      %4556 = vmatpush1.bf16.msra.mxu0 0
      %4557 = vmatprep.subr.bf16.mxu0 0
      %4558 = vmatpush1.bf16.msra.mxu0 0
      %4559 = vmatprep.subr.bf16.mxu0 0
      %4560 = vmatpush1.bf16.msra.mxu0 0
      %4561 = vmatprep.subr.bf16.mxu0 0
      %4562 = vmatpush1.bf16.msra.mxu0 0
      %4563 = vmatprep.subr.bf16.mxu0 0
      %4564 = vmatpush1.bf16.msra.mxu0 0
      %4565 = vmatprep.subr.bf16.mxu0 0
      %4566 = vmatpush1.bf16.msra.mxu0 0
      %4567 = vmatprep.subr.bf16.mxu0 0
      %4568 = vmatpush1.bf16.msra.mxu0 0
      %4569 = vmatprep.subr.bf16.mxu0 0
      %4570 = vmatpush1.bf16.msra.mxu0 0
      %4571 = vmatprep.subr.bf16.mxu0 0
      %4572 = vmatpush1.bf16.msra.mxu0 0
      %4573 = vmatprep.subr.bf16.mxu0 0
      %4574 = vmatpush1.bf16.msra.mxu0 0
      %4575 = vmatprep.subr.bf16.mxu0 0
      %4576 = vmatpush1.bf16.msra.mxu0 0
      %4577 = vmatprep.mubr.bf16.mxu0 0
      %4578 = vmatmul.mubr.bf16.gmra.mrb[0].mxu0 %v4534
      %v4579 = vpop.f32.mrb[0].mxu0
      %v4580 = vadd.f32 0.0, %v4579
      %v4581 = vpop.f32.mrb[0].mxu0
      %v4582 = vpop.f32.mrb[0].mxu0
      %v4583 = vadd.f32 0.0, %v4582
      %v4584 = vpop.f32.mrb[0].mxu0
      %4585 = vmatprep.mubr.bf16.mxu0 0
      %4586 = vmatmul.mubr.bf16.gmra.mrb[0].mxu0 %v4537
      %v4587 = vpop.f32.mrb[0].mxu0
      %v4588 = vadd.f32 0.0, %v4587
      %v4589 = vpop.f32.mrb[0].mxu0
      %v4590 = vpop.f32.mrb[0].mxu0
      %v4591 = vadd.f32 0.0, %v4590
      %v4592 = vpop.f32.mrb[0].mxu0
      %4593 = vmatprep.mubr.bf16.mxu0 0
      %4594 = vmatmul.mubr.bf16.gmra.mrb[0].mxu0 %v4540
      %v4595 = vpop.f32.mrb[0].mxu0
      %v4596 = vadd.f32 0.0, %v4595
      %v4597 = vpop.f32.mrb[0].mxu0
      %v4598 = vpop.f32.mrb[0].mxu0
      %v4599 = vadd.f32 0.0, %v4598
      %v4600 = vpop.f32.mrb[0].mxu0
      %4601 = vmatprep.mubr.bf16.mxu0 0
      %4602 = vmatmul.mubr.bf16.gmra.mrb[0].mxu0 %v4543
      %v4603 = vpop.f32.mrb[0].mxu0
      %v4604 = vadd.f32 0.0, %v4603
      %v4605 = vpop.f32.mrb[0].mxu0
      %v4606 = vpop.f32.mrb[0].mxu0
      %v4607 = vadd.f32 0.0, %v4606
      %v4608 = vpop.f32.mrb[0].mxu0
      %4609 = vdwg.mxu0
      %v4610 = vadd.f32 %v4402, %v4580
      %v4611 = vadd.f32 %v4405, %v4583
      %v4612 = vadd.f32 %v4410, %v4588
      %v4613 = vadd.f32 %v4413, %v4591
      %v4614 = vadd.f32 %v4418, %v4596
      %v4615 = vadd.f32 %v4421, %v4599
      %v4616 = vadd.f32 %v4426, %v4604
      %v4617 = vadd.f32 %v4429, %v4607
      %v4618 = vld [vmem:[%s591] sm:$0xf]
      %v4619 = vld [vmem:[%s591 + $0x18] sm:$0xf]
      %v4620 = vld [vmem:[%s591 + $0x30] sm:$0xf]
      %v4621 = vld [vmem:[%s591 + $0x48] sm:$0xf]
      %v4622 = vld [vmem:[%s591 + $0x60] sm:$0xf]
      %v4623 = vld [vmem:[%s591 + $0x78] sm:$0xf]
      %v4624 = vld [vmem:[%s591 + $0x90] sm:$0xf]
      %v4625 = vld [vmem:[%s591 + $0xa8] sm:$0xf]
      %v4626 = vunpack.c.l.bf16 %v4618
      %v4627 = vunpack.c.l.bf16 %v4619
      %v4628 = vunpack.c.l.bf16 %v4620
      %v4629 = vunpack.c.l.bf16 %v4621
      %v4630 = vunpack.c.l.bf16 %v4622
      %v4631 = vunpack.c.l.bf16 %v4623
      %v4632 = vunpack.c.l.bf16 %v4624
      %v4633 = vunpack.c.l.bf16 %v4625
      %v4634 = vpack.c.bf16 %v4627, %v4626
      %v4635 = vpack.c.bf16 %v4629, %v4628
      %v4636 = vpack.c.bf16 %v4631, %v4630
      %v4637 = vpack.c.bf16 %v4633, %v4632
      %s4638 = scalar_lea.vmem %s5, 336
      %v4639 = vld [vmem:[%s4638] sm:$0xf]
      %v4640 = vld [vmem:[%s4638 + $0x4] sm:$0xf]
      %v4641 = vld [vmem:[%s4638 + $0x8] sm:$0xf]
      %v4642 = vld [vmem:[%s4638 + $0xc] sm:$0xf]
      %v4647 = vunpack.c.l.b16 %v4639
      %v4648 = vunpack.c.l.b16 %v4640
      %v4649 = vunpack.c.l.b16 %v4641
      %v4650 = vunpack.c.l.b16 %v4642
      %v4651 = vpack.c.b16 %v4648, %v4647
      %v4652 = vpack.c.b16 %v4650, %v4649
      %v4656 = vsel %vm693, %v4634, 0
      %v4659 = vsel %vm693, %v4635, 0
      %v4662 = vsel %vm693, %v4636, 0
      %v4665 = vsel %vm693, %v4637, 0
      %4667 = vmatprep.subr.bf16.mxu0 0
      %4668 = vmatpush1.bf16.msra.mxu0 %v4651
      %4669 = vmatprep.subr.bf16.mxu0 0
      %4670 = vmatpush1.bf16.msra.mxu0 %v4652
      %4671 = vmatprep.subr.bf16.mxu0 0
      %4672 = vmatpush1.bf16.msra.mxu0 0
      %4673 = vmatprep.subr.bf16.mxu0 0
      %4674 = vmatpush1.bf16.msra.mxu0 0
      %4675 = vmatprep.subr.bf16.mxu0 0
      %4676 = vmatpush1.bf16.msra.mxu0 0
      %4677 = vmatprep.subr.bf16.mxu0 0
      %4678 = vmatpush1.bf16.msra.mxu0 0
      %4679 = vmatprep.subr.bf16.mxu0 0
      %4680 = vmatpush1.bf16.msra.mxu0 0
      %4681 = vmatprep.subr.bf16.mxu0 0
      %4682 = vmatpush1.bf16.msra.mxu0 0
      %4683 = vmatprep.subr.bf16.mxu0 0
      %4684 = vmatpush1.bf16.msra.mxu0 0
      %4685 = vmatprep.subr.bf16.mxu0 0
      %4686 = vmatpush1.bf16.msra.mxu0 0
      %4687 = vmatprep.subr.bf16.mxu0 0
      %4688 = vmatpush1.bf16.msra.mxu0 0
      %4689 = vmatprep.subr.bf16.mxu0 0
      %4690 = vmatpush1.bf16.msra.mxu0 0
      %4691 = vmatprep.subr.bf16.mxu0 0
      %4692 = vmatpush1.bf16.msra.mxu0 0
      %4693 = vmatprep.subr.bf16.mxu0 0
      %4694 = vmatpush1.bf16.msra.mxu0 0
      %4695 = vmatprep.subr.bf16.mxu0 0
      %4696 = vmatpush1.bf16.msra.mxu0 0
      %4697 = vmatprep.subr.bf16.mxu0 0
      %4698 = vmatpush1.bf16.msra.mxu0 0
      %4699 = vmatprep.mubr.bf16.mxu0 0
      %4700 = vmatmul.mubr.bf16.gmra.mrb[0].mxu0 %v4656
      %v4701 = vpop.f32.mrb[0].mxu0
      %v4702 = vadd.f32 0.0, %v4701
      %v4703 = vpop.f32.mrb[0].mxu0
      %v4704 = vpop.f32.mrb[0].mxu0
      %v4705 = vadd.f32 0.0, %v4704
      %v4706 = vpop.f32.mrb[0].mxu0
      %4707 = vmatprep.mubr.bf16.mxu0 0
      %4708 = vmatmul.mubr.bf16.gmra.mrb[0].mxu0 %v4659
      %v4709 = vpop.f32.mrb[0].mxu0
      %v4710 = vadd.f32 0.0, %v4709
      %v4711 = vpop.f32.mrb[0].mxu0
      %v4712 = vpop.f32.mrb[0].mxu0
      %v4713 = vadd.f32 0.0, %v4712
      %v4714 = vpop.f32.mrb[0].mxu0
      %4715 = vmatprep.mubr.bf16.mxu0 0
      %4716 = vmatmul.mubr.bf16.gmra.mrb[0].mxu0 %v4662
      %v4717 = vpop.f32.mrb[0].mxu0
      %v4718 = vadd.f32 0.0, %v4717
      %v4719 = vpop.f32.mrb[0].mxu0
      %v4720 = vpop.f32.mrb[0].mxu0
      %v4721 = vadd.f32 0.0, %v4720
      %v4722 = vpop.f32.mrb[0].mxu0
      %4723 = vmatprep.mubr.bf16.mxu0 0
      %4724 = vmatmul.mubr.bf16.gmra.mrb[0].mxu0 %v4665
      %v4725 = vpop.f32.mrb[0].mxu0
      %v4726 = vadd.f32 0.0, %v4725
      %v4727 = vpop.f32.mrb[0].mxu0
      %v4728 = vpop.f32.mrb[0].mxu0
      %v4729 = vadd.f32 0.0, %v4728
      %v4730 = vpop.f32.mrb[0].mxu0
      %4731 = vdwg.mxu0
      %v4732 = vadd.f32 %v4610, %v4702
      %v4733 = vadd.f32 %v4611, %v4705
      %v4734 = vadd.f32 %v4612, %v4710
      %v4735 = vadd.f32 %v4613, %v4713
      %v4736 = vadd.f32 %v4614, %v4718
      %v4737 = vadd.f32 %v4615, %v4721
      %v4738 = vadd.f32 %v4616, %v4726
      %v4739 = vadd.f32 %v4617, %v4729
      %s4740 = scalar_lea.vmem %s5, 352
      %v4741 = vld [vmem:[%s4740] sm:$0xf]
      %v4742 = vld [vmem:[%s4740 + $0x4] sm:$0xf]
      %v4743 = vld [vmem:[%s4740 + $0x8] sm:$0xf]
      %v4744 = vld [vmem:[%s4740 + $0xc] sm:$0xf]
      %v4749 = vunpack.c.l.b16 %v4741
      %v4750 = vunpack.c.l.b16 %v4742
      %v4751 = vunpack.c.l.b16 %v4743
      %v4752 = vunpack.c.l.b16 %v4744
      %v4753 = vpack.c.b16 %v4750, %v4749
      %v4754 = vpack.c.b16 %v4752, %v4751
      %4757 = vmatprep.subr.bf16.mxu0 0
      %4758 = vmatpush1.bf16.msra.mxu0 %v4753
      %4759 = vmatprep.subr.bf16.mxu0 0
      %4760 = vmatpush1.bf16.msra.mxu0 %v4754
      %4761 = vmatprep.subr.bf16.mxu0 0
      %4762 = vmatpush1.bf16.msra.mxu0 0
      %4763 = vmatprep.subr.bf16.mxu0 0
      %4764 = vmatpush1.bf16.msra.mxu0 0
      %4765 = vmatprep.subr.bf16.mxu0 0
      %4766 = vmatpush1.bf16.msra.mxu0 0
      %4767 = vmatprep.subr.bf16.mxu0 0
      %4768 = vmatpush1.bf16.msra.mxu0 0
      %4769 = vmatprep.subr.bf16.mxu0 0
      %4770 = vmatpush1.bf16.msra.mxu0 0
      %4771 = vmatprep.subr.bf16.mxu0 0
      %4772 = vmatpush1.bf16.msra.mxu0 0
      %4773 = vmatprep.subr.bf16.mxu0 0
      %4774 = vmatpush1.bf16.msra.mxu0 0
      %4775 = vmatprep.subr.bf16.mxu0 0
      %4776 = vmatpush1.bf16.msra.mxu0 0
      %4777 = vmatprep.subr.bf16.mxu0 0
      %4778 = vmatpush1.bf16.msra.mxu0 0
      %4779 = vmatprep.subr.bf16.mxu0 0
      %4780 = vmatpush1.bf16.msra.mxu0 0
      %4781 = vmatprep.subr.bf16.mxu0 0
      %4782 = vmatpush1.bf16.msra.mxu0 0
      %4783 = vmatprep.subr.bf16.mxu0 0
      %4784 = vmatpush1.bf16.msra.mxu0 0
      %4785 = vmatprep.subr.bf16.mxu0 0
      %4786 = vmatpush1.bf16.msra.mxu0 0
      %4787 = vmatprep.subr.bf16.mxu0 0
      %4788 = vmatpush1.bf16.msra.mxu0 0
      %4789 = vmatprep.mubr.bf16.mxu0 0
      %4790 = vmatmul.mubr.bf16.gmra.mrb[0].mxu0 %v695
      %v4791 = vpop.f32.mrb[0].mxu0
      %v4792 = vadd.f32 0.0, %v4791
      %v4793 = vpop.f32.mrb[0].mxu0
      %v4794 = vpop.f32.mrb[0].mxu0
      %v4795 = vadd.f32 0.0, %v4794
      %v4796 = vpop.f32.mrb[0].mxu0
      %4797 = vmatprep.mubr.bf16.mxu0 0
      %4798 = vmatmul.mubr.bf16.gmra.mrb[0].mxu0 %v698
      %v4799 = vpop.f32.mrb[0].mxu0
      %v4800 = vadd.f32 0.0, %v4799
      %v4801 = vpop.f32.mrb[0].mxu0
      %v4802 = vpop.f32.mrb[0].mxu0
      %v4803 = vadd.f32 0.0, %v4802
      %v4804 = vpop.f32.mrb[0].mxu0
      %4805 = vmatprep.mubr.bf16.mxu0 0
      %4806 = vmatmul.mubr.bf16.gmra.mrb[0].mxu0 %v701
      %v4807 = vpop.f32.mrb[0].mxu0
      %v4808 = vadd.f32 0.0, %v4807
      %v4809 = vpop.f32.mrb[0].mxu0
      %v4810 = vpop.f32.mrb[0].mxu0
      %v4811 = vadd.f32 0.0, %v4810
      %v4812 = vpop.f32.mrb[0].mxu0
      %4813 = vmatprep.mubr.bf16.mxu0 0
      %4814 = vmatmul.mubr.bf16.gmra.mrb[0].mxu0 %v704
      %v4815 = vpop.f32.mrb[0].mxu0
      %v4816 = vadd.f32 0.0, %v4815
      %v4817 = vpop.f32.mrb[0].mxu0
      %v4818 = vpop.f32.mrb[0].mxu0
      %v4819 = vadd.f32 0.0, %v4818
      %v4820 = vpop.f32.mrb[0].mxu0
      %4821 = vdwg.mxu0
      %v4822 = vadd.f32 %v4732, %v4792
      %v4823 = vadd.f32 %v4733, %v4795
      %v4824 = vadd.f32 %v4734, %v4800
      %v4825 = vadd.f32 %v4735, %v4803
      %v4826 = vadd.f32 %v4736, %v4808
      %v4827 = vadd.f32 %v4737, %v4811
      %v4828 = vadd.f32 %v4738, %v4816
      %v4829 = vadd.f32 %v4739, %v4819
      %v4830 = vld [vmem:[%s591 + $0x10] sm:$0xc]
      %v4831 = vld [vmem:[%s591 + $0x14] sm:$0x3]
      %v4832 = vld [vmem:[%s591 + $0x28] sm:$0xc]
      %v4833 = vld [vmem:[%s591 + $0x2c] sm:$0x3]
      %v4834 = vld [vmem:[%s591 + $0x40] sm:$0xc]
      %v4835 = vld [vmem:[%s591 + $0x44] sm:$0x3]
      %v4836 = vld [vmem:[%s591 + $0x58] sm:$0xc]
      %v4837 = vld [vmem:[%s591 + $0x5c] sm:$0x3]
      %v4838 = vld [vmem:[%s591 + $0x70] sm:$0xc]
      %v4839 = vld [vmem:[%s591 + $0x74] sm:$0x3]
      %v4840 = vld [vmem:[%s591 + $0x88] sm:$0xc]
      %v4841 = vld [vmem:[%s591 + $0x8c] sm:$0x3]
      %v4842 = vld [vmem:[%s591 + $0xa0] sm:$0xc]
      %v4843 = vld [vmem:[%s591 + $0xa4] sm:$0x3]
      %v4844 = vld [vmem:[%s591 + $0xb8] sm:$0xc]
      %v4845 = vld [vmem:[%s591 + $0xbc] sm:$0x3]
      %v4846 = vunpack.c.l.bf16 %v4830
      %v4847 = vunpack.c.l.bf16 %v4831
      %v4848 = vunpack.c.l.bf16 %v4832
      %v4849 = vunpack.c.l.bf16 %v4833
      %v4850 = vunpack.c.l.bf16 %v4834
      %v4851 = vunpack.c.l.bf16 %v4835
      %v4852 = vunpack.c.l.bf16 %v4836
      %v4853 = vunpack.c.l.bf16 %v4837
      %v4854 = vunpack.c.l.bf16 %v4838
      %v4855 = vunpack.c.l.bf16 %v4839
      %v4856 = vunpack.c.l.bf16 %v4840
      %v4857 = vunpack.c.l.bf16 %v4841
      %v4858 = vunpack.c.l.bf16 %v4842
      %v4859 = vunpack.c.l.bf16 %v4843
      %v4860 = vunpack.c.l.bf16 %v4844
      %v4861 = vunpack.c.l.bf16 %v4845
      %v4878 = vrot.slane %v4846, 4
      %v4879 = vrot.slane %v4847, 4
      %v4880 = vsel %vm962, %v4878, %v4879
      %v4881 = vrot.slane %v4848, 4
      %v4882 = vrot.slane %v4849, 4
      %v4883 = vsel %vm962, %v4881, %v4882
      %v4884 = vrot.slane %v4850, 4
      %v4885 = vrot.slane %v4851, 4
      %v4886 = vsel %vm962, %v4884, %v4885
      %v4887 = vrot.slane %v4852, 4
      %v4888 = vrot.slane %v4853, 4
      %v4889 = vsel %vm962, %v4887, %v4888
      %v4890 = vrot.slane %v4854, 4
      %v4891 = vrot.slane %v4855, 4
      %v4892 = vsel %vm962, %v4890, %v4891
      %v4893 = vrot.slane %v4856, 4
      %v4894 = vrot.slane %v4857, 4
      %v4895 = vsel %vm962, %v4893, %v4894
      %v4896 = vrot.slane %v4858, 4
      %v4897 = vrot.slane %v4859, 4
      %v4898 = vsel %vm962, %v4896, %v4897
      %v4899 = vrot.slane %v4860, 4
      %v4900 = vrot.slane %v4861, 4
      %v4901 = vsel %vm962, %v4899, %v4900
      %v4910 = vpack.c.bf16 %v4883, %v4880
      %v4911 = vpack.c.bf16 %v4889, %v4886
      %v4912 = vpack.c.bf16 %v4895, %v4892
      %v4913 = vpack.c.bf16 %v4901, %v4898
      %s4914 = scalar_lea.vmem %s5, 368
      %v4915 = vld [vmem:[%s4914] sm:$0xf]
      %v4916 = vld [vmem:[%s4914 + $0x4] sm:$0xf]
      %v4917 = vld [vmem:[%s4914 + $0x8] sm:$0xf]
      %v4918 = vld [vmem:[%s4914 + $0xc] sm:$0xf]
      %v4923 = vunpack.c.l.b16 %v4915
      %v4924 = vunpack.c.l.b16 %v4916
      %v4925 = vunpack.c.l.b16 %v4917
      %v4926 = vunpack.c.l.b16 %v4918
      %v4927 = vpack.c.b16 %v4924, %v4923
      %v4928 = vpack.c.b16 %v4926, %v4925
      %v4932 = vsel %vm693, %v4910, 0
      %v4935 = vsel %vm693, %v4911, 0
      %v4938 = vsel %vm693, %v4912, 0
      %v4941 = vsel %vm693, %v4913, 0
      %4943 = vmatprep.subr.bf16.mxu0 0
      %4944 = vmatpush1.bf16.msra.mxu0 %v4927
      %4945 = vmatprep.subr.bf16.mxu0 0
      %4946 = vmatpush1.bf16.msra.mxu0 %v4928
      %4947 = vmatprep.subr.bf16.mxu0 0
      %4948 = vmatpush1.bf16.msra.mxu0 0
      %4949 = vmatprep.subr.bf16.mxu0 0
      %4950 = vmatpush1.bf16.msra.mxu0 0
      %4951 = vmatprep.subr.bf16.mxu0 0
      %4952 = vmatpush1.bf16.msra.mxu0 0
      %4953 = vmatprep.subr.bf16.mxu0 0
      %4954 = vmatpush1.bf16.msra.mxu0 0
      %4955 = vmatprep.subr.bf16.mxu0 0
      %4956 = vmatpush1.bf16.msra.mxu0 0
      %4957 = vmatprep.subr.bf16.mxu0 0
      %4958 = vmatpush1.bf16.msra.mxu0 0
      %4959 = vmatprep.subr.bf16.mxu0 0
      %4960 = vmatpush1.bf16.msra.mxu0 0
      %4961 = vmatprep.subr.bf16.mxu0 0
      %4962 = vmatpush1.bf16.msra.mxu0 0
      %4963 = vmatprep.subr.bf16.mxu0 0
      %4964 = vmatpush1.bf16.msra.mxu0 0
      %4965 = vmatprep.subr.bf16.mxu0 0
      %4966 = vmatpush1.bf16.msra.mxu0 0
      %4967 = vmatprep.subr.bf16.mxu0 0
      %4968 = vmatpush1.bf16.msra.mxu0 0
      %4969 = vmatprep.subr.bf16.mxu0 0
      %4970 = vmatpush1.bf16.msra.mxu0 0
      %4971 = vmatprep.subr.bf16.mxu0 0
      %4972 = vmatpush1.bf16.msra.mxu0 0
      %4973 = vmatprep.subr.bf16.mxu0 0
      %4974 = vmatpush1.bf16.msra.mxu0 0
      %4975 = vmatprep.mubr.bf16.mxu0 0
      %4976 = vmatmul.mubr.bf16.gmra.mrb[0].mxu0 %v4932
      %v4977 = vpop.f32.mrb[0].mxu0
      %v4978 = vadd.f32 0.0, %v4977
      %v4979 = vpop.f32.mrb[0].mxu0
      %v4980 = vpop.f32.mrb[0].mxu0
      %v4981 = vadd.f32 0.0, %v4980
      %v4982 = vpop.f32.mrb[0].mxu0
      %4983 = vmatprep.mubr.bf16.mxu0 0
      %4984 = vmatmul.mubr.bf16.gmra.mrb[0].mxu0 %v4935
      %v4985 = vpop.f32.mrb[0].mxu0
      %v4986 = vadd.f32 0.0, %v4985
      %v4987 = vpop.f32.mrb[0].mxu0
      %v4988 = vpop.f32.mrb[0].mxu0
      %v4989 = vadd.f32 0.0, %v4988
      %v4990 = vpop.f32.mrb[0].mxu0
      %4991 = vmatprep.mubr.bf16.mxu0 0
      %4992 = vmatmul.mubr.bf16.gmra.mrb[0].mxu0 %v4938
      %v4993 = vpop.f32.mrb[0].mxu0
      %v4994 = vadd.f32 0.0, %v4993
      %v4995 = vpop.f32.mrb[0].mxu0
      %v4996 = vpop.f32.mrb[0].mxu0
      %v4997 = vadd.f32 0.0, %v4996
      %v4998 = vpop.f32.mrb[0].mxu0
      %4999 = vmatprep.mubr.bf16.mxu0 0
      %5000 = vmatmul.mubr.bf16.gmra.mrb[0].mxu0 %v4941
      %v5001 = vpop.f32.mrb[0].mxu0
      %v5002 = vadd.f32 0.0, %v5001
      %v5003 = vpop.f32.mrb[0].mxu0
      %v5004 = vpop.f32.mrb[0].mxu0
      %v5005 = vadd.f32 0.0, %v5004
      %v5006 = vpop.f32.mrb[0].mxu0
      %5007 = vdwg.mxu0
      %v5008 = vadd.f32 %v4822, %v4978
      %v5009 = vadd.f32 %v4823, %v4981
      %v5010 = vadd.f32 %v4824, %v4986
      %v5011 = vadd.f32 %v4825, %v4989
      %v5012 = vadd.f32 %v4826, %v4994
      %v5013 = vadd.f32 %v4827, %v4997
      %v5014 = vadd.f32 %v4828, %v5002
      %v5015 = vadd.f32 %v4829, %v5005
      %s5016 = scalar_lea.vmem %s581, 864
      %v5017 = vld [vmem:[%s5016] sm:$0xf]
      %v5018 = vld [vmem:[%s5016 + $0x18] sm:$0xf]
      %v5019 = vld [vmem:[%s5016 + $0x30] sm:$0xf]
      %v5020 = vld [vmem:[%s5016 + $0x48] sm:$0xf]
      %v5021 = vld [vmem:[%s5016 + $0x60] sm:$0xf]
      %v5022 = vld [vmem:[%s5016 + $0x78] sm:$0xf]
      %v5023 = vld [vmem:[%s5016 + $0x90] sm:$0xf]
      %v5024 = vld [vmem:[%s5016 + $0xa8] sm:$0xf]
      %v5025 = vunpack.c.l.bf16 %v5017
      %v5026 = vunpack.c.l.bf16 %v5018
      %v5027 = vunpack.c.l.bf16 %v5019
      %v5028 = vunpack.c.l.bf16 %v5020
      %v5029 = vunpack.c.l.bf16 %v5021
      %v5030 = vunpack.c.l.bf16 %v5022
      %v5031 = vunpack.c.l.bf16 %v5023
      %v5032 = vunpack.c.l.bf16 %v5024
      %v5033 = vpack.c.bf16 %v5026, %v5025
      %v5034 = vpack.c.bf16 %v5028, %v5027
      %v5035 = vpack.c.bf16 %v5030, %v5029
      %v5036 = vpack.c.bf16 %v5032, %v5031
      %s5037 = scalar_lea.vmem %s5, 384
      %v5038 = vld [vmem:[%s5037] sm:$0xf]
      %v5039 = vld [vmem:[%s5037 + $0x4] sm:$0xf]
      %v5040 = vld [vmem:[%s5037 + $0x8] sm:$0xf]
      %v5041 = vld [vmem:[%s5037 + $0xc] sm:$0xf]
      %v5046 = vunpack.c.l.b16 %v5038
      %v5047 = vunpack.c.l.b16 %v5039
      %v5048 = vunpack.c.l.b16 %v5040
      %v5049 = vunpack.c.l.b16 %v5041
      %v5050 = vpack.c.b16 %v5047, %v5046
      %v5051 = vpack.c.b16 %v5049, %v5048
      %v5055 = vsel %vm693, %v5033, 0
      %v5058 = vsel %vm693, %v5034, 0
      %v5061 = vsel %vm693, %v5035, 0
      %v5064 = vsel %vm693, %v5036, 0
      %5066 = vmatprep.subr.bf16.mxu0 0
      %5067 = vmatpush1.bf16.msra.mxu0 %v5050
      %5068 = vmatprep.subr.bf16.mxu0 0
      %5069 = vmatpush1.bf16.msra.mxu0 %v5051
      %5070 = vmatprep.subr.bf16.mxu0 0
      %5071 = vmatpush1.bf16.msra.mxu0 0
      %5072 = vmatprep.subr.bf16.mxu0 0
      %5073 = vmatpush1.bf16.msra.mxu0 0
      %5074 = vmatprep.subr.bf16.mxu0 0
      %5075 = vmatpush1.bf16.msra.mxu0 0
      %5076 = vmatprep.subr.bf16.mxu0 0
      %5077 = vmatpush1.bf16.msra.mxu0 0
      %5078 = vmatprep.subr.bf16.mxu0 0
      %5079 = vmatpush1.bf16.msra.mxu0 0
      %5080 = vmatprep.subr.bf16.mxu0 0
      %5081 = vmatpush1.bf16.msra.mxu0 0
      %5082 = vmatprep.subr.bf16.mxu0 0
      %5083 = vmatpush1.bf16.msra.mxu0 0
      %5084 = vmatprep.subr.bf16.mxu0 0
      %5085 = vmatpush1.bf16.msra.mxu0 0
      %5086 = vmatprep.subr.bf16.mxu0 0
      %5087 = vmatpush1.bf16.msra.mxu0 0
      %5088 = vmatprep.subr.bf16.mxu0 0
      %5089 = vmatpush1.bf16.msra.mxu0 0
      %5090 = vmatprep.subr.bf16.mxu0 0
      %5091 = vmatpush1.bf16.msra.mxu0 0
      %5092 = vmatprep.subr.bf16.mxu0 0
      %5093 = vmatpush1.bf16.msra.mxu0 0
      %5094 = vmatprep.subr.bf16.mxu0 0
      %5095 = vmatpush1.bf16.msra.mxu0 0
      %5096 = vmatprep.subr.bf16.mxu0 0
      %5097 = vmatpush1.bf16.msra.mxu0 0
      %5098 = vmatprep.mubr.bf16.mxu0 0
      %5099 = vmatmul.mubr.bf16.gmra.mrb[0].mxu0 %v5055
      %v5100 = vpop.f32.mrb[0].mxu0
      %v5101 = vadd.f32 0.0, %v5100
      %v5102 = vpop.f32.mrb[0].mxu0
      %v5103 = vpop.f32.mrb[0].mxu0
      %v5104 = vadd.f32 0.0, %v5103
      %v5105 = vpop.f32.mrb[0].mxu0
      %5106 = vmatprep.mubr.bf16.mxu0 0
      %5107 = vmatmul.mubr.bf16.gmra.mrb[0].mxu0 %v5058
      %v5108 = vpop.f32.mrb[0].mxu0
      %v5109 = vadd.f32 0.0, %v5108
      %v5110 = vpop.f32.mrb[0].mxu0
      %v5111 = vpop.f32.mrb[0].mxu0
      %v5112 = vadd.f32 0.0, %v5111
      %v5113 = vpop.f32.mrb[0].mxu0
      %5114 = vmatprep.mubr.bf16.mxu0 0
      %5115 = vmatmul.mubr.bf16.gmra.mrb[0].mxu0 %v5061
      %v5116 = vpop.f32.mrb[0].mxu0
      %v5117 = vadd.f32 0.0, %v5116
      %v5118 = vpop.f32.mrb[0].mxu0
      %v5119 = vpop.f32.mrb[0].mxu0
      %v5120 = vadd.f32 0.0, %v5119
      %v5121 = vpop.f32.mrb[0].mxu0
      %5122 = vmatprep.mubr.bf16.mxu0 0
      %5123 = vmatmul.mubr.bf16.gmra.mrb[0].mxu0 %v5064
      %v5124 = vpop.f32.mrb[0].mxu0
      %v5125 = vadd.f32 0.0, %v5124
      %v5126 = vpop.f32.mrb[0].mxu0
      %v5127 = vpop.f32.mrb[0].mxu0
      %v5128 = vadd.f32 0.0, %v5127
      %v5129 = vpop.f32.mrb[0].mxu0
      %5130 = vdwg.mxu0
      %v5131 = vadd.f32 %v5008, %v5101
      %v5132 = vadd.f32 %v5009, %v5104
      %v5133 = vadd.f32 %v5010, %v5109
      %v5134 = vadd.f32 %v5011, %v5112
      %v5135 = vadd.f32 %v5012, %v5117
      %v5136 = vadd.f32 %v5013, %v5120
      %v5137 = vadd.f32 %v5014, %v5125
      %v5138 = vadd.f32 %v5015, %v5128
      %v5139 = vld [vmem:[%s5016 + $0x8] sm:$0xe]
      %v5140 = vld [vmem:[%s5016 + $0xc] sm:$0x1]
      %v5141 = vld [vmem:[%s5016 + $0x20] sm:$0xe]
      %v5142 = vld [vmem:[%s5016 + $0x24] sm:$0x1]
      %v5143 = vld [vmem:[%s5016 + $0x38] sm:$0xe]
      %v5144 = vld [vmem:[%s5016 + $0x3c] sm:$0x1]
      %v5145 = vld [vmem:[%s5016 + $0x50] sm:$0xe]
      %v5146 = vld [vmem:[%s5016 + $0x54] sm:$0x1]
      %v5147 = vld [vmem:[%s5016 + $0x68] sm:$0xe]
      %v5148 = vld [vmem:[%s5016 + $0x6c] sm:$0x1]
      %v5149 = vld [vmem:[%s5016 + $0x80] sm:$0xe]
      %v5150 = vld [vmem:[%s5016 + $0x84] sm:$0x1]
      %v5151 = vld [vmem:[%s5016 + $0x98] sm:$0xe]
      %v5152 = vld [vmem:[%s5016 + $0x9c] sm:$0x1]
      %v5153 = vld [vmem:[%s5016 + $0xb0] sm:$0xe]
      %v5154 = vld [vmem:[%s5016 + $0xb4] sm:$0x1]
      %v5155 = vunpack.c.l.bf16 %v5139
      %v5156 = vunpack.c.l.bf16 %v5140
      %v5157 = vunpack.c.l.bf16 %v5141
      %v5158 = vunpack.c.l.bf16 %v5142
      %v5159 = vunpack.c.l.bf16 %v5143
      %v5160 = vunpack.c.l.bf16 %v5144
      %v5161 = vunpack.c.l.bf16 %v5145
      %v5162 = vunpack.c.l.bf16 %v5146
      %v5163 = vunpack.c.l.bf16 %v5147
      %v5164 = vunpack.c.l.bf16 %v5148
      %v5165 = vunpack.c.l.bf16 %v5149
      %v5166 = vunpack.c.l.bf16 %v5150
      %v5167 = vunpack.c.l.bf16 %v5151
      %v5168 = vunpack.c.l.bf16 %v5152
      %v5169 = vunpack.c.l.bf16 %v5153
      %v5170 = vunpack.c.l.bf16 %v5154
      %v5187 = vrot.slane %v5155, 2
      %v5188 = vrot.slane %v5156, 2
      %v5189 = vsel %vm640, %v5187, %v5188
      %v5190 = vrot.slane %v5157, 2
      %v5191 = vrot.slane %v5158, 2
      %v5192 = vsel %vm640, %v5190, %v5191
      %v5193 = vrot.slane %v5159, 2
      %v5194 = vrot.slane %v5160, 2
      %v5195 = vsel %vm640, %v5193, %v5194
      %v5196 = vrot.slane %v5161, 2
      %v5197 = vrot.slane %v5162, 2
      %v5198 = vsel %vm640, %v5196, %v5197
      %v5199 = vrot.slane %v5163, 2
      %v5200 = vrot.slane %v5164, 2
      %v5201 = vsel %vm640, %v5199, %v5200
      %v5202 = vrot.slane %v5165, 2
      %v5203 = vrot.slane %v5166, 2
      %v5204 = vsel %vm640, %v5202, %v5203
      %v5205 = vrot.slane %v5167, 2
      %v5206 = vrot.slane %v5168, 2
      %v5207 = vsel %vm640, %v5205, %v5206
      %v5208 = vrot.slane %v5169, 2
      %v5209 = vrot.slane %v5170, 2
      %v5210 = vsel %vm640, %v5208, %v5209
      %v5219 = vpack.c.bf16 %v5192, %v5189
      %v5220 = vpack.c.bf16 %v5198, %v5195
      %v5221 = vpack.c.bf16 %v5204, %v5201
      %v5222 = vpack.c.bf16 %v5210, %v5207
      %s5223 = scalar_lea.vmem %s5, 400
      %v5224 = vld [vmem:[%s5223] sm:$0xf]
      %v5225 = vld [vmem:[%s5223 + $0x4] sm:$0xf]
      %v5226 = vld [vmem:[%s5223 + $0x8] sm:$0xf]
      %v5227 = vld [vmem:[%s5223 + $0xc] sm:$0xf]
      %v5232 = vunpack.c.l.b16 %v5224
      %v5233 = vunpack.c.l.b16 %v5225
      %v5234 = vunpack.c.l.b16 %v5226
      %v5235 = vunpack.c.l.b16 %v5227
      %v5236 = vpack.c.b16 %v5233, %v5232
      %v5237 = vpack.c.b16 %v5235, %v5234
      %v5241 = vsel %vm693, %v5219, 0
      %v5244 = vsel %vm693, %v5220, 0
      %v5247 = vsel %vm693, %v5221, 0
      %v5250 = vsel %vm693, %v5222, 0
      %5252 = vmatprep.subr.bf16.mxu0 0
      %5253 = vmatpush1.bf16.msra.mxu0 %v5236
      %5254 = vmatprep.subr.bf16.mxu0 0
      %5255 = vmatpush1.bf16.msra.mxu0 %v5237
      %5256 = vmatprep.subr.bf16.mxu0 0
      %5257 = vmatpush1.bf16.msra.mxu0 0
      %5258 = vmatprep.subr.bf16.mxu0 0
      %5259 = vmatpush1.bf16.msra.mxu0 0
      %5260 = vmatprep.subr.bf16.mxu0 0
      %5261 = vmatpush1.bf16.msra.mxu0 0
      %5262 = vmatprep.subr.bf16.mxu0 0
      %5263 = vmatpush1.bf16.msra.mxu0 0
      %5264 = vmatprep.subr.bf16.mxu0 0
      %5265 = vmatpush1.bf16.msra.mxu0 0
      %5266 = vmatprep.subr.bf16.mxu0 0
      %5267 = vmatpush1.bf16.msra.mxu0 0
      %5268 = vmatprep.subr.bf16.mxu0 0
      %5269 = vmatpush1.bf16.msra.mxu0 0
      %5270 = vmatprep.subr.bf16.mxu0 0
      %5271 = vmatpush1.bf16.msra.mxu0 0
      %5272 = vmatprep.subr.bf16.mxu0 0
      %5273 = vmatpush1.bf16.msra.mxu0 0
      %5274 = vmatprep.subr.bf16.mxu0 0
      %5275 = vmatpush1.bf16.msra.mxu0 0
      %5276 = vmatprep.subr.bf16.mxu0 0
      %5277 = vmatpush1.bf16.msra.mxu0 0
      %5278 = vmatprep.subr.bf16.mxu0 0
      %5279 = vmatpush1.bf16.msra.mxu0 0
      %5280 = vmatprep.subr.bf16.mxu0 0
      %5281 = vmatpush1.bf16.msra.mxu0 0
      %5282 = vmatprep.subr.bf16.mxu0 0
      %5283 = vmatpush1.bf16.msra.mxu0 0
      %5284 = vmatprep.mubr.bf16.mxu0 0
      %5285 = vmatmul.mubr.bf16.gmra.mrb[0].mxu0 %v5241
      %v5286 = vpop.f32.mrb[0].mxu0
      %v5287 = vadd.f32 0.0, %v5286
      %v5288 = vpop.f32.mrb[0].mxu0
      %v5289 = vpop.f32.mrb[0].mxu0
      %v5290 = vadd.f32 0.0, %v5289
      %v5291 = vpop.f32.mrb[0].mxu0
      %5292 = vmatprep.mubr.bf16.mxu0 0
      %5293 = vmatmul.mubr.bf16.gmra.mrb[0].mxu0 %v5244
      %v5294 = vpop.f32.mrb[0].mxu0
      %v5295 = vadd.f32 0.0, %v5294
      %v5296 = vpop.f32.mrb[0].mxu0
      %v5297 = vpop.f32.mrb[0].mxu0
      %v5298 = vadd.f32 0.0, %v5297
      %v5299 = vpop.f32.mrb[0].mxu0
      %5300 = vmatprep.mubr.bf16.mxu0 0
      %5301 = vmatmul.mubr.bf16.gmra.mrb[0].mxu0 %v5247
      %v5302 = vpop.f32.mrb[0].mxu0
      %v5303 = vadd.f32 0.0, %v5302
      %v5304 = vpop.f32.mrb[0].mxu0
      %v5305 = vpop.f32.mrb[0].mxu0
      %v5306 = vadd.f32 0.0, %v5305
      %v5307 = vpop.f32.mrb[0].mxu0
      %5308 = vmatprep.mubr.bf16.mxu0 0
      %5309 = vmatmul.mubr.bf16.gmra.mrb[0].mxu0 %v5250
      %v5310 = vpop.f32.mrb[0].mxu0
      %v5311 = vadd.f32 0.0, %v5310
      %v5312 = vpop.f32.mrb[0].mxu0
      %v5313 = vpop.f32.mrb[0].mxu0
      %v5314 = vadd.f32 0.0, %v5313
      %v5315 = vpop.f32.mrb[0].mxu0
      %5316 = vdwg.mxu0
      %v5317 = vadd.f32 %v5131, %v5287
      %v5318 = vadd.f32 %v5132, %v5290
      %v5319 = vadd.f32 %v5133, %v5295
      %v5320 = vadd.f32 %v5134, %v5298
      %v5321 = vadd.f32 %v5135, %v5303
      %v5322 = vadd.f32 %v5136, %v5306
      %v5323 = vadd.f32 %v5137, %v5311
      %v5324 = vadd.f32 %v5138, %v5314
      %v5325 = vld [vmem:[%s5016 + $0x10] sm:$0xc]
      %v5326 = vld [vmem:[%s5016 + $0x14] sm:$0x3]
      %v5327 = vld [vmem:[%s5016 + $0x28] sm:$0xc]
      %v5328 = vld [vmem:[%s5016 + $0x2c] sm:$0x3]
      %v5329 = vld [vmem:[%s5016 + $0x40] sm:$0xc]
      %v5330 = vld [vmem:[%s5016 + $0x44] sm:$0x3]
      %v5331 = vld [vmem:[%s5016 + $0x58] sm:$0xc]
      %v5332 = vld [vmem:[%s5016 + $0x5c] sm:$0x3]
      %v5333 = vld [vmem:[%s5016 + $0x70] sm:$0xc]
      %v5334 = vld [vmem:[%s5016 + $0x74] sm:$0x3]
      %v5335 = vld [vmem:[%s5016 + $0x88] sm:$0xc]
      %v5336 = vld [vmem:[%s5016 + $0x8c] sm:$0x3]
      %v5337 = vld [vmem:[%s5016 + $0xa0] sm:$0xc]
      %v5338 = vld [vmem:[%s5016 + $0xa4] sm:$0x3]
      %v5339 = vld [vmem:[%s5016 + $0xb8] sm:$0xc]
      %v5340 = vld [vmem:[%s5016 + $0xbc] sm:$0x3]
      %v5341 = vunpack.c.l.bf16 %v5325
      %v5342 = vunpack.c.l.bf16 %v5326
      %v5343 = vunpack.c.l.bf16 %v5327
      %v5344 = vunpack.c.l.bf16 %v5328
      %v5345 = vunpack.c.l.bf16 %v5329
      %v5346 = vunpack.c.l.bf16 %v5330
      %v5347 = vunpack.c.l.bf16 %v5331
      %v5348 = vunpack.c.l.bf16 %v5332
      %v5349 = vunpack.c.l.bf16 %v5333
      %v5350 = vunpack.c.l.bf16 %v5334
      %v5351 = vunpack.c.l.bf16 %v5335
      %v5352 = vunpack.c.l.bf16 %v5336
      %v5353 = vunpack.c.l.bf16 %v5337
      %v5354 = vunpack.c.l.bf16 %v5338
      %v5355 = vunpack.c.l.bf16 %v5339
      %v5356 = vunpack.c.l.bf16 %v5340
      %v5373 = vrot.slane %v5341, 4
      %v5374 = vrot.slane %v5342, 4
      %v5375 = vsel %vm962, %v5373, %v5374
      %v5376 = vrot.slane %v5343, 4
      %v5377 = vrot.slane %v5344, 4
      %v5378 = vsel %vm962, %v5376, %v5377
      %v5379 = vrot.slane %v5345, 4
      %v5380 = vrot.slane %v5346, 4
      %v5381 = vsel %vm962, %v5379, %v5380
      %v5382 = vrot.slane %v5347, 4
      %v5383 = vrot.slane %v5348, 4
      %v5384 = vsel %vm962, %v5382, %v5383
      %v5385 = vrot.slane %v5349, 4
      %v5386 = vrot.slane %v5350, 4
      %v5387 = vsel %vm962, %v5385, %v5386
      %v5388 = vrot.slane %v5351, 4
      %v5389 = vrot.slane %v5352, 4
      %v5390 = vsel %vm962, %v5388, %v5389
      %v5391 = vrot.slane %v5353, 4
      %v5392 = vrot.slane %v5354, 4
      %v5393 = vsel %vm962, %v5391, %v5392
      %v5394 = vrot.slane %v5355, 4
      %v5395 = vrot.slane %v5356, 4
      %v5396 = vsel %vm962, %v5394, %v5395
      %v5405 = vpack.c.bf16 %v5378, %v5375
      %v5406 = vpack.c.bf16 %v5384, %v5381
      %v5407 = vpack.c.bf16 %v5390, %v5387
      %v5408 = vpack.c.bf16 %v5396, %v5393
      %s5409 = scalar_lea.vmem %s5, 416
      %v5410 = vld [vmem:[%s5409] sm:$0xf]
      %v5411 = vld [vmem:[%s5409 + $0x4] sm:$0xf]
      %v5412 = vld [vmem:[%s5409 + $0x8] sm:$0xf]
      %v5413 = vld [vmem:[%s5409 + $0xc] sm:$0xf]
      %v5418 = vunpack.c.l.b16 %v5410
      %v5419 = vunpack.c.l.b16 %v5411
      %v5420 = vunpack.c.l.b16 %v5412
      %v5421 = vunpack.c.l.b16 %v5413
      %v5422 = vpack.c.b16 %v5419, %v5418
      %v5423 = vpack.c.b16 %v5421, %v5420
      %v5427 = vsel %vm693, %v5405, 0
      %v5430 = vsel %vm693, %v5406, 0
      %v5433 = vsel %vm693, %v5407, 0
      %v5436 = vsel %vm693, %v5408, 0
      %5438 = vmatprep.subr.bf16.mxu0 0
      %5439 = vmatpush1.bf16.msra.mxu0 %v5422
      %5440 = vmatprep.subr.bf16.mxu0 0
      %5441 = vmatpush1.bf16.msra.mxu0 %v5423
      %5442 = vmatprep.subr.bf16.mxu0 0
      %5443 = vmatpush1.bf16.msra.mxu0 0
      %5444 = vmatprep.subr.bf16.mxu0 0
      %5445 = vmatpush1.bf16.msra.mxu0 0
      %5446 = vmatprep.subr.bf16.mxu0 0
      %5447 = vmatpush1.bf16.msra.mxu0 0
      %5448 = vmatprep.subr.bf16.mxu0 0
      %5449 = vmatpush1.bf16.msra.mxu0 0
      %5450 = vmatprep.subr.bf16.mxu0 0
      %5451 = vmatpush1.bf16.msra.mxu0 0
      %5452 = vmatprep.subr.bf16.mxu0 0
      %5453 = vmatpush1.bf16.msra.mxu0 0
      %5454 = vmatprep.subr.bf16.mxu0 0
      %5455 = vmatpush1.bf16.msra.mxu0 0
      %5456 = vmatprep.subr.bf16.mxu0 0
      %5457 = vmatpush1.bf16.msra.mxu0 0
      %5458 = vmatprep.subr.bf16.mxu0 0
      %5459 = vmatpush1.bf16.msra.mxu0 0
      %5460 = vmatprep.subr.bf16.mxu0 0
      %5461 = vmatpush1.bf16.msra.mxu0 0
      %5462 = vmatprep.subr.bf16.mxu0 0
      %5463 = vmatpush1.bf16.msra.mxu0 0
      %5464 = vmatprep.subr.bf16.mxu0 0
      %5465 = vmatpush1.bf16.msra.mxu0 0
      %5466 = vmatprep.subr.bf16.mxu0 0
      %5467 = vmatpush1.bf16.msra.mxu0 0
      %5468 = vmatprep.subr.bf16.mxu0 0
      %5469 = vmatpush1.bf16.msra.mxu0 0
      %5470 = vmatprep.mubr.bf16.mxu0 0
      %5471 = vmatmul.mubr.bf16.gmra.mrb[0].mxu0 %v5427
      %v5472 = vpop.f32.mrb[0].mxu0
      %v5473 = vadd.f32 0.0, %v5472
      %v5474 = vpop.f32.mrb[0].mxu0
      %v5475 = vpop.f32.mrb[0].mxu0
      %v5476 = vadd.f32 0.0, %v5475
      %v5477 = vpop.f32.mrb[0].mxu0
      %5478 = vmatprep.mubr.bf16.mxu0 0
      %5479 = vmatmul.mubr.bf16.gmra.mrb[0].mxu0 %v5430
      %v5480 = vpop.f32.mrb[0].mxu0
      %v5481 = vadd.f32 0.0, %v5480
      %v5482 = vpop.f32.mrb[0].mxu0
      %v5483 = vpop.f32.mrb[0].mxu0
      %v5484 = vadd.f32 0.0, %v5483
      %v5485 = vpop.f32.mrb[0].mxu0
      %5486 = vmatprep.mubr.bf16.mxu0 0
      %5487 = vmatmul.mubr.bf16.gmra.mrb[0].mxu0 %v5433
      %v5488 = vpop.f32.mrb[0].mxu0
      %v5489 = vadd.f32 0.0, %v5488
      %v5490 = vpop.f32.mrb[0].mxu0
      %v5491 = vpop.f32.mrb[0].mxu0
      %v5492 = vadd.f32 0.0, %v5491
      %v5493 = vpop.f32.mrb[0].mxu0
      %5494 = vmatprep.mubr.bf16.mxu0 0
      %5495 = vmatmul.mubr.bf16.gmra.mrb[0].mxu0 %v5436
      %v5496 = vpop.f32.mrb[0].mxu0
      %v5497 = vadd.f32 0.0, %v5496
      %v5498 = vpop.f32.mrb[0].mxu0
      %v5499 = vpop.f32.mrb[0].mxu0
      %v5500 = vadd.f32 0.0, %v5499
      %v5501 = vpop.f32.mrb[0].mxu0
      %5502 = vdwg.mxu0
      %v5503 = vadd.f32 %v5317, %v5473
      %v5504 = vadd.f32 %v5318, %v5476
      %v5505 = vadd.f32 %v5319, %v5481
      %v5506 = vadd.f32 %v5320, %v5484
      %v5507 = vadd.f32 %v5321, %v5489
      %v5508 = vadd.f32 %v5322, %v5492
      %v5509 = vadd.f32 %v5323, %v5497
      %v5510 = vadd.f32 %v5324, %v5500
      %s5511 = scalar_lea.vmem %s6, 2
      %v5512 = vld [vmem:[%s5511] sm:$0x1]
      %v5514 = vlaneseq
      %v5515 = vshrl.u32 %v5514, 7
      %v5516 = vsub.s32 0, %v5515
      %v5517 = vrot.slane %v5512, %v5516
      %v5519 = vmul.f32 %v5503, %v5517
      %v5520 = vmul.f32 %v5504, %v5517
      %v5521 = vmul.f32 %v5505, %v5517
      %v5522 = vmul.f32 %v5506, %v5517
      %v5523 = vmul.f32 %v5507, %v5517
      %v5524 = vmul.f32 %v5508, %v5517
      %v5525 = vmul.f32 %v5509, %v5517
      %v5526 = vmul.f32 %v5510, %v5517
      %s5527 = scalar_lea.vmem %s7, 2
      %v5528 = vld [vmem:[%s5527] sm:$0x1]
      %v5530 = vlaneseq
      %v5531 = vshrl.u32 %v5530, 7
      %v5532 = vsub.s32 0, %v5531
      %v5533 = vrot.slane %v5528, %v5532
      %v5535 = vadd.f32 %v5519, %v5533
      %v5536 = vadd.f32 %v5520, %v5533
      %v5537 = vadd.f32 %v5521, %v5533
      %v5538 = vadd.f32 %v5522, %v5533
      %v5539 = vadd.f32 %v5523, %v5533
      %v5540 = vadd.f32 %v5524, %v5533
      %v5541 = vadd.f32 %v5525, %v5533
      %v5542 = vadd.f32 %v5526, %v5533
      %v5543 = vmax.f32 %v5535, 0.0
      %v5544 = vmax.f32 %v5536, 0.0
      %v5545 = vmax.f32 %v5537, 0.0
      %v5546 = vmax.f32 %v5538, 0.0
      %v5547 = vmax.f32 %v5539, 0.0
      %v5548 = vmax.f32 %v5540, 0.0
      %v5549 = vmax.f32 %v5541, 0.0
      %v5550 = vmax.f32 %v5542, 0.0
      %v5551 = vpack.c.bf16 %v5544, %v5543
      %v5552 = vpack.c.bf16 %v5546, %v5545
      %v5553 = vpack.c.bf16 %v5548, %v5547
      %v5554 = vpack.c.bf16 %v5550, %v5549
      %s5555 = scalar_lea.vmem %s8, 48
      %v5556 = vld [vmem:[%s5555] sm:$0xf]
      %v5557 = vld [vmem:[%s5555 + $0x4] sm:$0xf]
      %v5558 = vld [vmem:[%s5555 + $0x8] sm:$0xf]
      %v5559 = vld [vmem:[%s5555 + $0xc] sm:$0xf]
      %v5564 = vunpack.c.l.b16 %v5556
      %v5565 = vunpack.c.l.b16 %v5557
      %v5566 = vunpack.c.l.b16 %v5558
      %v5567 = vunpack.c.l.b16 %v5559
      %v5568 = vpack.c.b16 %v5565, %v5564
      %v5569 = vpack.c.b16 %v5567, %v5566
      %v5573 = vsel %vm693, %v5551, 0
      %v5576 = vsel %vm693, %v5552, 0
      %v5579 = vsel %vm693, %v5553, 0
      %v5582 = vsel %vm693, %v5554, 0
      %5584 = vmatprep.subr.bf16.mxu0 0
      %5585 = vmatpush1.bf16.msra.mxu0 %v5568
      %5586 = vmatprep.subr.bf16.mxu0 0
      %5587 = vmatpush1.bf16.msra.mxu0 %v5569
      %5588 = vmatprep.subr.bf16.mxu0 0
      %5589 = vmatpush1.bf16.msra.mxu0 0
      %5590 = vmatprep.subr.bf16.mxu0 0
      %5591 = vmatpush1.bf16.msra.mxu0 0
      %5592 = vmatprep.subr.bf16.mxu0 0
      %5593 = vmatpush1.bf16.msra.mxu0 0
      %5594 = vmatprep.subr.bf16.mxu0 0
      %5595 = vmatpush1.bf16.msra.mxu0 0
      %5596 = vmatprep.subr.bf16.mxu0 0
      %5597 = vmatpush1.bf16.msra.mxu0 0
      %5598 = vmatprep.subr.bf16.mxu0 0
      %5599 = vmatpush1.bf16.msra.mxu0 0
      %5600 = vmatprep.subr.bf16.mxu0 0
      %5601 = vmatpush1.bf16.msra.mxu0 0
      %5602 = vmatprep.subr.bf16.mxu0 0
      %5603 = vmatpush1.bf16.msra.mxu0 0
      %5604 = vmatprep.subr.bf16.mxu0 0
      %5605 = vmatpush1.bf16.msra.mxu0 0
      %5606 = vmatprep.subr.bf16.mxu0 0
      %5607 = vmatpush1.bf16.msra.mxu0 0
      %5608 = vmatprep.subr.bf16.mxu0 0
      %5609 = vmatpush1.bf16.msra.mxu0 0
      %5610 = vmatprep.subr.bf16.mxu0 0
      %5611 = vmatpush1.bf16.msra.mxu0 0
      %5612 = vmatprep.subr.bf16.mxu0 0
      %5613 = vmatpush1.bf16.msra.mxu0 0
      %5614 = vmatprep.subr.bf16.mxu0 0
      %5615 = vmatpush1.bf16.msra.mxu0 0
      %5616 = vmatprep.mubr.bf16.mxu0 0
      %5617 = vmatmul.mubr.bf16.gmra.mrb[0].mxu0 %v5573
      %v5618 = vpop.f32.mrb[0].mxu0
      %v5619 = vadd.f32 0.0, %v5618
      %v5620 = vpop.f32.mrb[0].mxu0
      %v5621 = vpop.f32.mrb[0].mxu0
      %v5622 = vadd.f32 0.0, %v5621
      %v5623 = vpop.f32.mrb[0].mxu0
      %5624 = vmatprep.mubr.bf16.mxu0 0
      %5625 = vmatmul.mubr.bf16.gmra.mrb[0].mxu0 %v5576
      %v5626 = vpop.f32.mrb[0].mxu0
      %v5627 = vadd.f32 0.0, %v5626
      %v5628 = vpop.f32.mrb[0].mxu0
      %v5629 = vpop.f32.mrb[0].mxu0
      %v5630 = vadd.f32 0.0, %v5629
      %v5631 = vpop.f32.mrb[0].mxu0
      %5632 = vmatprep.mubr.bf16.mxu0 0
      %5633 = vmatmul.mubr.bf16.gmra.mrb[0].mxu0 %v5579
      %v5634 = vpop.f32.mrb[0].mxu0
      %v5635 = vadd.f32 0.0, %v5634
      %v5636 = vpop.f32.mrb[0].mxu0
      %v5637 = vpop.f32.mrb[0].mxu0
      %v5638 = vadd.f32 0.0, %v5637
      %v5639 = vpop.f32.mrb[0].mxu0
      %5640 = vmatprep.mubr.bf16.mxu0 0
      %5641 = vmatmul.mubr.bf16.gmra.mrb[0].mxu0 %v5582
      %v5642 = vpop.f32.mrb[0].mxu0
      %v5643 = vadd.f32 0.0, %v5642
      %v5644 = vpop.f32.mrb[0].mxu0
      %v5645 = vpop.f32.mrb[0].mxu0
      %v5646 = vadd.f32 0.0, %v5645
      %v5647 = vpop.f32.mrb[0].mxu0
      %5648 = vdwg.mxu0
      %v5649 = vadd.f32 %v4132, %v5619
      %v5650 = vadd.f32 %v4133, %v5622
      %v5651 = vadd.f32 %v4134, %v5627
      %v5652 = vadd.f32 %v4135, %v5630
      %v5653 = vadd.f32 %v4136, %v5635
      %v5654 = vadd.f32 %v4137, %v5638
      %v5655 = vadd.f32 %v4138, %v5643
      %v5656 = vadd.f32 %v4139, %v5646
      %v5657 = vld [vmem:[%s9] sm:$0x1]
      %v5659 = vlaneseq
      %v5660 = vshrl.u32 %v5659, 7
      %v5661 = vsub.s32 0, %v5660
      %v5662 = vrot.slane %v5657, %v5661
      %v5664 = vmul.f32 %v5649, %v5662
      %v5665 = vmul.f32 %v5650, %v5662
      %v5666 = vmul.f32 %v5651, %v5662
      %v5667 = vmul.f32 %v5652, %v5662
      %v5668 = vmul.f32 %v5653, %v5662
      %v5669 = vmul.f32 %v5654, %v5662
      %v5670 = vmul.f32 %v5655, %v5662
      %v5671 = vmul.f32 %v5656, %v5662
      %v5672 = vld [vmem:[%s10] sm:$0x1]
      %v5674 = vlaneseq
      %v5675 = vshrl.u32 %v5674, 7
      %v5676 = vsub.s32 0, %v5675
      %v5677 = vrot.slane %v5672, %v5676
      %v5679 = vadd.f32 %v5664, %v5677
      %v5680 = vadd.f32 %v5665, %v5677
      %v5681 = vadd.f32 %v5666, %v5677
      %v5682 = vadd.f32 %v5667, %v5677
      %v5683 = vadd.f32 %v5668, %v5677
      %v5684 = vadd.f32 %v5669, %v5677
      %v5685 = vadd.f32 %v5670, %v5677
      %v5686 = vadd.f32 %v5671, %v5677
      %v5687 = vmax.f32 %v5679, 0.0
      %v5688 = vmax.f32 %v5680, 0.0
      %v5689 = vmax.f32 %v5681, 0.0
      %v5690 = vmax.f32 %v5682, 0.0
      %v5691 = vmax.f32 %v5683, 0.0
      %v5692 = vmax.f32 %v5684, 0.0
      %v5693 = vmax.f32 %v5685, 0.0
      %v5694 = vmax.f32 %v5686, 0.0
      %v5695 = vpack.c.bf16 %v5688, %v5687
      %v5696 = vpack.c.bf16 %v5690, %v5689
      %v5697 = vpack.c.bf16 %v5692, %v5691
      %v5698 = vpack.c.bf16 %v5694, %v5693
      %v5699 = vld [vmem:[%s11] sm:$0xf]
      %v5700 = vld [vmem:[%s11 + $0x4] sm:$0xf]
      %v5701 = vld [vmem:[%s11 + $0x8] sm:$0xf]
      %v5702 = vld [vmem:[%s11 + $0xc] sm:$0xf]
      %v5703 = vld [vmem:[%s12] sm:$0x1]
      %v5705 = vlaneseq
      %v5706 = vshrl.u32 %v5705, 7
      %v5707 = vsub.s32 0, %v5706
      %v5708 = vrot.slane %v5703, %v5707
      %v5714 = vunpack.c.l.b16 %v5699
      %v5715 = vunpack.c.l.b16 %v5700
      %v5716 = vunpack.c.l.b16 %v5701
      %v5717 = vunpack.c.l.b16 %v5702
      %v5718 = vpack.c.b16 %v5715, %v5714
      %v5719 = vpack.c.b16 %v5717, %v5716
      %v5723 = vsel %vm693, %v5695, 0
      %v5726 = vsel %vm693, %v5696, 0
      %v5729 = vsel %vm693, %v5697, 0
      %v5732 = vsel %vm693, %v5698, 0
      %5734 = vmatprep.subr.bf16.mxu0 0
      %5735 = vmatpush1.bf16.msra.mxu0 %v5718
      %5736 = vmatprep.subr.bf16.mxu0 0
      %5737 = vmatpush1.bf16.msra.mxu0 %v5719
      %5738 = vmatprep.subr.bf16.mxu0 0
      %5739 = vmatpush1.bf16.msra.mxu0 0
      %5740 = vmatprep.subr.bf16.mxu0 0
      %5741 = vmatpush1.bf16.msra.mxu0 0
      %5742 = vmatprep.subr.bf16.mxu0 0
      %5743 = vmatpush1.bf16.msra.mxu0 0
      %5744 = vmatprep.subr.bf16.mxu0 0
      %5745 = vmatpush1.bf16.msra.mxu0 0
      %5746 = vmatprep.subr.bf16.mxu0 0
      %5747 = vmatpush1.bf16.msra.mxu0 0
      %5748 = vmatprep.subr.bf16.mxu0 0
      %5749 = vmatpush1.bf16.msra.mxu0 0
      %5750 = vmatprep.subr.bf16.mxu0 0
      %5751 = vmatpush1.bf16.msra.mxu0 0
      %5752 = vmatprep.subr.bf16.mxu0 0
      %5753 = vmatpush1.bf16.msra.mxu0 0
      %5754 = vmatprep.subr.bf16.mxu0 0
      %5755 = vmatpush1.bf16.msra.mxu0 0
      %5756 = vmatprep.subr.bf16.mxu0 0
      %5757 = vmatpush1.bf16.msra.mxu0 0
      %5758 = vmatprep.subr.bf16.mxu0 0
      %5759 = vmatpush1.bf16.msra.mxu0 0
      %5760 = vmatprep.subr.bf16.mxu0 0
      %5761 = vmatpush1.bf16.msra.mxu0 0
      %5762 = vmatprep.subr.bf16.mxu0 0
      %5763 = vmatpush1.bf16.msra.mxu0 0
      %5764 = vmatprep.subr.bf16.mxu0 0
      %5765 = vmatpush1.bf16.msra.mxu0 0
      %5766 = vmatprep.mubr.bf16.mxu0 0
      %5767 = vmatmul.mubr.bf16.gmra.mrb[0].mxu0 %v5723
      %v5768 = vpop.f32.mrb[0].mxu0
      %v5769 = vadd.f32 %v5708, %v5768
      %v5770 = vpop.f32.mrb[0].mxu0
      %v5771 = vpop.f32.mrb[0].mxu0
      %v5772 = vadd.f32 %v5708, %v5771
      %v5773 = vpop.f32.mrb[0].mxu0
      %5774 = vmatprep.mubr.bf16.mxu0 0
      %5775 = vmatmul.mubr.bf16.gmra.mrb[0].mxu0 %v5726
      %v5776 = vpop.f32.mrb[0].mxu0
      %v5777 = vadd.f32 %v5708, %v5776
      %v5778 = vpop.f32.mrb[0].mxu0
      %v5779 = vpop.f32.mrb[0].mxu0
      %v5780 = vadd.f32 %v5708, %v5779
      %v5781 = vpop.f32.mrb[0].mxu0
      %5782 = vmatprep.mubr.bf16.mxu0 0
      %5783 = vmatmul.mubr.bf16.gmra.mrb[0].mxu0 %v5729
      %v5784 = vpop.f32.mrb[0].mxu0
      %v5785 = vadd.f32 %v5708, %v5784
      %v5786 = vpop.f32.mrb[0].mxu0
      %v5787 = vpop.f32.mrb[0].mxu0
      %v5788 = vadd.f32 %v5708, %v5787
      %v5789 = vpop.f32.mrb[0].mxu0
      %5790 = vmatprep.mubr.bf16.mxu0 0
      %5791 = vmatmul.mubr.bf16.gmra.mrb[0].mxu0 %v5732
      %v5792 = vpop.f32.mrb[0].mxu0
      %v5793 = vadd.f32 %v5708, %v5792
      %v5794 = vpop.f32.mrb[0].mxu0
      %v5795 = vpop.f32.mrb[0].mxu0
      %v5796 = vadd.f32 %v5708, %v5795
      %v5797 = vpop.f32.mrb[0].mxu0
      %5798 = vdwg.mxu0
      %v5799 = vld [vmem:[%s13] sm:$0xf]
      %v5800 = vld [vmem:[%s13 + $0x4] sm:$0xf]
      %v5801 = vld [vmem:[%s13 + $0x8] sm:$0xf]
      %v5802 = vld [vmem:[%s13 + $0xc] sm:$0xf]
      %v5807 = vunpack.c.l.b16 %v5799
      %v5808 = vunpack.c.l.b16 %v5800
      %v5809 = vunpack.c.l.b16 %v5801
      %v5810 = vunpack.c.l.b16 %v5802
      %v5811 = vpack.c.b16 %v5808, %v5807
      %v5812 = vpack.c.b16 %v5810, %v5809
      %5815 = vmatprep.subr.bf16.mxu0 0
      %5816 = vmatpush1.bf16.msra.mxu0 %v5811
      %5817 = vmatprep.subr.bf16.mxu0 0
      %5818 = vmatpush1.bf16.msra.mxu0 %v5812
      %5819 = vmatprep.subr.bf16.mxu0 0
      %5820 = vmatpush1.bf16.msra.mxu0 0
      %5821 = vmatprep.subr.bf16.mxu0 0
      %5822 = vmatpush1.bf16.msra.mxu0 0
      %5823 = vmatprep.subr.bf16.mxu0 0
      %5824 = vmatpush1.bf16.msra.mxu0 0
      %5825 = vmatprep.subr.bf16.mxu0 0
      %5826 = vmatpush1.bf16.msra.mxu0 0
      %5827 = vmatprep.subr.bf16.mxu0 0
      %5828 = vmatpush1.bf16.msra.mxu0 0
      %5829 = vmatprep.subr.bf16.mxu0 0
      %5830 = vmatpush1.bf16.msra.mxu0 0
      %5831 = vmatprep.subr.bf16.mxu0 0
      %5832 = vmatpush1.bf16.msra.mxu0 0
      %5833 = vmatprep.subr.bf16.mxu0 0
      %5834 = vmatpush1.bf16.msra.mxu0 0
      %5835 = vmatprep.subr.bf16.mxu0 0
      %5836 = vmatpush1.bf16.msra.mxu0 0
      %5837 = vmatprep.subr.bf16.mxu0 0
      %5838 = vmatpush1.bf16.msra.mxu0 0
      %5839 = vmatprep.subr.bf16.mxu0 0
      %5840 = vmatpush1.bf16.msra.mxu0 0
      %5841 = vmatprep.subr.bf16.mxu0 0
      %5842 = vmatpush1.bf16.msra.mxu0 0
      %5843 = vmatprep.subr.bf16.mxu0 0
      %5844 = vmatpush1.bf16.msra.mxu0 0
      %5845 = vmatprep.subr.bf16.mxu0 0
      %5846 = vmatpush1.bf16.msra.mxu0 0
      %5847 = vmatprep.mubr.bf16.mxu0 0
      %5848 = vmatmul.mubr.bf16.gmra.mrb[0].mxu0 %v695
      %v5849 = vpop.f32.mrb[0].mxu0
      %v5850 = vadd.f32 0.0, %v5849
      %v5851 = vpop.f32.mrb[0].mxu0
      %v5852 = vpop.f32.mrb[0].mxu0
      %v5853 = vadd.f32 0.0, %v5852
      %v5854 = vpop.f32.mrb[0].mxu0
      %5855 = vmatprep.mubr.bf16.mxu0 0
      %5856 = vmatmul.mubr.bf16.gmra.mrb[0].mxu0 %v698
      %v5857 = vpop.f32.mrb[0].mxu0
      %v5858 = vadd.f32 0.0, %v5857
      %v5859 = vpop.f32.mrb[0].mxu0
      %v5860 = vpop.f32.mrb[0].mxu0
      %v5861 = vadd.f32 0.0, %v5860
      %v5862 = vpop.f32.mrb[0].mxu0
      %5863 = vmatprep.mubr.bf16.mxu0 0
      %5864 = vmatmul.mubr.bf16.gmra.mrb[0].mxu0 %v701
      %v5865 = vpop.f32.mrb[0].mxu0
      %v5866 = vadd.f32 0.0, %v5865
      %v5867 = vpop.f32.mrb[0].mxu0
      %v5868 = vpop.f32.mrb[0].mxu0
      %v5869 = vadd.f32 0.0, %v5868
      %v5870 = vpop.f32.mrb[0].mxu0
      %5871 = vmatprep.mubr.bf16.mxu0 0
      %5872 = vmatmul.mubr.bf16.gmra.mrb[0].mxu0 %v704
      %v5873 = vpop.f32.mrb[0].mxu0
      %v5874 = vadd.f32 0.0, %v5873
      %v5875 = vpop.f32.mrb[0].mxu0
      %v5876 = vpop.f32.mrb[0].mxu0
      %v5877 = vadd.f32 0.0, %v5876
      %v5878 = vpop.f32.mrb[0].mxu0
      %5879 = vdwg.mxu0
      %v5880 = vld [vmem:[%s14] sm:$0x1]
      %v5882 = vlaneseq
      %v5883 = vshrl.u32 %v5882, 7
      %v5884 = vsub.s32 0, %v5883
      %v5885 = vrot.slane %v5880, %v5884
      %v5887 = vmul.f32 %v5850, %v5885
      %v5888 = vmul.f32 %v5853, %v5885
      %v5889 = vmul.f32 %v5858, %v5885
      %v5890 = vmul.f32 %v5861, %v5885
      %v5891 = vmul.f32 %v5866, %v5885
      %v5892 = vmul.f32 %v5869, %v5885
      %v5893 = vmul.f32 %v5874, %v5885
      %v5894 = vmul.f32 %v5877, %v5885
      %v5895 = vld [vmem:[%s15] sm:$0x1]
      %v5897 = vlaneseq
      %v5898 = vshrl.u32 %v5897, 7
      %v5899 = vsub.s32 0, %v5898
      %v5900 = vrot.slane %v5895, %v5899
      %v5902 = vadd.f32 %v5887, %v5900
      %v5903 = vadd.f32 %v5888, %v5900
      %v5904 = vadd.f32 %v5889, %v5900
      %v5905 = vadd.f32 %v5890, %v5900
      %v5906 = vadd.f32 %v5891, %v5900
      %v5907 = vadd.f32 %v5892, %v5900
      %v5908 = vadd.f32 %v5893, %v5900
      %v5909 = vadd.f32 %v5894, %v5900
      %v5910 = vmax.f32 %v5902, 0.0
      %v5911 = vmax.f32 %v5903, 0.0
      %v5912 = vmax.f32 %v5904, 0.0
      %v5913 = vmax.f32 %v5905, 0.0
      %v5914 = vmax.f32 %v5906, 0.0
      %v5915 = vmax.f32 %v5907, 0.0
      %v5916 = vmax.f32 %v5908, 0.0
      %v5917 = vmax.f32 %v5909, 0.0
      %v5918 = vpack.c.bf16 %v5911, %v5910
      %v5919 = vpack.c.bf16 %v5913, %v5912
      %v5920 = vpack.c.bf16 %v5915, %v5914
      %v5921 = vpack.c.bf16 %v5917, %v5916
      %v5922 = vld [vmem:[%s16] sm:$0xf]
      %v5923 = vld [vmem:[%s16 + $0x4] sm:$0xf]
      %v5924 = vld [vmem:[%s16 + $0x8] sm:$0xf]
      %v5925 = vld [vmem:[%s16 + $0xc] sm:$0xf]
      %v5926 = vld [vmem:[%s17] sm:$0x1]
      %v5928 = vlaneseq
      %v5929 = vshrl.u32 %v5928, 7
      %v5930 = vsub.s32 0, %v5929
      %v5931 = vrot.slane %v5926, %v5930
      %v5937 = vunpack.c.l.b16 %v5922
      %v5938 = vunpack.c.l.b16 %v5923
      %v5939 = vunpack.c.l.b16 %v5924
      %v5940 = vunpack.c.l.b16 %v5925
      %v5941 = vpack.c.b16 %v5938, %v5937
      %v5942 = vpack.c.b16 %v5940, %v5939
      %v5946 = vsel %vm693, %v5918, 0
      %v5949 = vsel %vm693, %v5919, 0
      %v5952 = vsel %vm693, %v5920, 0
      %v5955 = vsel %vm693, %v5921, 0
      %5957 = vmatprep.subr.bf16.mxu0 0
      %5958 = vmatpush1.bf16.msra.mxu0 %v5941
      %5959 = vmatprep.subr.bf16.mxu0 0
      %5960 = vmatpush1.bf16.msra.mxu0 %v5942
      %5961 = vmatprep.subr.bf16.mxu0 0
      %5962 = vmatpush1.bf16.msra.mxu0 0
      %5963 = vmatprep.subr.bf16.mxu0 0
      %5964 = vmatpush1.bf16.msra.mxu0 0
      %5965 = vmatprep.subr.bf16.mxu0 0
      %5966 = vmatpush1.bf16.msra.mxu0 0
      %5967 = vmatprep.subr.bf16.mxu0 0
      %5968 = vmatpush1.bf16.msra.mxu0 0
      %5969 = vmatprep.subr.bf16.mxu0 0
      %5970 = vmatpush1.bf16.msra.mxu0 0
      %5971 = vmatprep.subr.bf16.mxu0 0
      %5972 = vmatpush1.bf16.msra.mxu0 0
      %5973 = vmatprep.subr.bf16.mxu0 0
      %5974 = vmatpush1.bf16.msra.mxu0 0
      %5975 = vmatprep.subr.bf16.mxu0 0
      %5976 = vmatpush1.bf16.msra.mxu0 0
      %5977 = vmatprep.subr.bf16.mxu0 0
      %5978 = vmatpush1.bf16.msra.mxu0 0
      %5979 = vmatprep.subr.bf16.mxu0 0
      %5980 = vmatpush1.bf16.msra.mxu0 0
      %5981 = vmatprep.subr.bf16.mxu0 0
      %5982 = vmatpush1.bf16.msra.mxu0 0
      %5983 = vmatprep.subr.bf16.mxu0 0
      %5984 = vmatpush1.bf16.msra.mxu0 0
      %5985 = vmatprep.subr.bf16.mxu0 0
      %5986 = vmatpush1.bf16.msra.mxu0 0
      %5987 = vmatprep.subr.bf16.mxu0 0
      %5988 = vmatpush1.bf16.msra.mxu0 0
      %5989 = vmatprep.mubr.bf16.mxu0 0
      %5990 = vmatmul.mubr.bf16.gmra.mrb[0].mxu0 %v5946
      %v5991 = vpop.f32.mrb[0].mxu0
      %v5992 = vadd.f32 %v5931, %v5991
      %v5993 = vpop.f32.mrb[0].mxu0
      %v5994 = vpop.f32.mrb[0].mxu0
      %v5995 = vadd.f32 %v5931, %v5994
      %v5996 = vpop.f32.mrb[0].mxu0
      %5997 = vmatprep.mubr.bf16.mxu0 0
      %5998 = vmatmul.mubr.bf16.gmra.mrb[0].mxu0 %v5949
      %v5999 = vpop.f32.mrb[0].mxu0
      %v6000 = vadd.f32 %v5931, %v5999
      %v6001 = vpop.f32.mrb[0].mxu0
      %v6002 = vpop.f32.mrb[0].mxu0
      %v6003 = vadd.f32 %v5931, %v6002
      %v6004 = vpop.f32.mrb[0].mxu0
      %6005 = vmatprep.mubr.bf16.mxu0 0
      %6006 = vmatmul.mubr.bf16.gmra.mrb[0].mxu0 %v5952
      %v6007 = vpop.f32.mrb[0].mxu0
      %v6008 = vadd.f32 %v5931, %v6007
      %v6009 = vpop.f32.mrb[0].mxu0
      %v6010 = vpop.f32.mrb[0].mxu0
      %v6011 = vadd.f32 %v5931, %v6010
      %v6012 = vpop.f32.mrb[0].mxu0
      %6013 = vmatprep.mubr.bf16.mxu0 0
      %6014 = vmatmul.mubr.bf16.gmra.mrb[0].mxu0 %v5955
      %v6015 = vpop.f32.mrb[0].mxu0
      %v6016 = vadd.f32 %v5931, %v6015
      %v6017 = vpop.f32.mrb[0].mxu0
      %v6018 = vpop.f32.mrb[0].mxu0
      %v6019 = vadd.f32 %v5931, %v6018
      %v6020 = vpop.f32.mrb[0].mxu0
      %6021 = vdwg.mxu0
      %v6022 = vmul.f32 %v5992, %v5992
      %v6023 = vmul.f32 %v5995, %v5995
      %v6024 = vmul.f32 %v6000, %v6000
      %v6025 = vmul.f32 %v6003, %v6003
      %v6026 = vmul.f32 %v6008, %v6008
      %v6027 = vmul.f32 %v6011, %v6011
      %v6028 = vmul.f32 %v6016, %v6016
      %v6029 = vmul.f32 %v6019, %v6019
      %6030 = vadd.xlane.f32.xlu0 %v6022
      %v6031 = vpop.xlane.xlu0 %6030
      %6032 = vadd.xlane.f32.xlu0 %v6023
      %v6033 = vpop.xlane.xlu0 %6032
      %6034 = vadd.xlane.f32.xlu0 %v6024
      %v6035 = vpop.xlane.xlu0 %6034
      %6036 = vadd.xlane.f32.xlu0 %v6025
      %v6037 = vpop.xlane.xlu0 %6036
      %6038 = vadd.xlane.f32.xlu0 %v6026
      %v6039 = vpop.xlane.xlu0 %6038
      %6040 = vadd.xlane.f32.xlu0 %v6027
      %v6041 = vpop.xlane.xlu0 %6040
      %6042 = vadd.xlane.f32.xlu0 %v6028
      %v6043 = vpop.xlane.xlu0 %6042
      %6044 = vadd.xlane.f32.xlu0 %v6029
      %v6045 = vpop.xlane.xlu0 %6044
      %v6046 = vrsqrt.pop %v6031
      %v6047 = vmul.f32 %v6031, %v6046
      %vm6048 = vcmp.eq.f32.partialorder %v6031, inf
      %v6049 = vsel %vm6048, %v6031, %v6047
      %vm6050 = vcmp.eq.f32.partialorder %v6031, 0.0
      %v6051 = vand.u32 %v6031, 2147483648
      %v6052 = vsel %vm6050, %v6051, %v6049
      %v6053 = vrsqrt.pop %v6033
      %v6054 = vmul.f32 %v6033, %v6053
      %vm6055 = vcmp.eq.f32.partialorder %v6033, inf
      %v6056 = vsel %vm6055, %v6033, %v6054
      %vm6057 = vcmp.eq.f32.partialorder %v6033, 0.0
      %v6058 = vand.u32 %v6033, 2147483648
      %v6059 = vsel %vm6057, %v6058, %v6056
      %v6060 = vrsqrt.pop %v6035
      %v6061 = vmul.f32 %v6035, %v6060
      %vm6062 = vcmp.eq.f32.partialorder %v6035, inf
      %v6063 = vsel %vm6062, %v6035, %v6061
      %vm6064 = vcmp.eq.f32.partialorder %v6035, 0.0
      %v6065 = vand.u32 %v6035, 2147483648
      %v6066 = vsel %vm6064, %v6065, %v6063
      %v6067 = vrsqrt.pop %v6037
      %v6068 = vmul.f32 %v6037, %v6067
      %vm6069 = vcmp.eq.f32.partialorder %v6037, inf
      %v6070 = vsel %vm6069, %v6037, %v6068
      %vm6071 = vcmp.eq.f32.partialorder %v6037, 0.0
      %v6072 = vand.u32 %v6037, 2147483648
      %v6073 = vsel %vm6071, %v6072, %v6070
      %v6074 = vrsqrt.pop %v6039
      %v6075 = vmul.f32 %v6039, %v6074
      %vm6076 = vcmp.eq.f32.partialorder %v6039, inf
      %v6077 = vsel %vm6076, %v6039, %v6075
      %vm6078 = vcmp.eq.f32.partialorder %v6039, 0.0
      %v6079 = vand.u32 %v6039, 2147483648
      %v6080 = vsel %vm6078, %v6079, %v6077
      %v6081 = vrsqrt.pop %v6041
      %v6082 = vmul.f32 %v6041, %v6081
      %vm6083 = vcmp.eq.f32.partialorder %v6041, inf
      %v6084 = vsel %vm6083, %v6041, %v6082
      %vm6085 = vcmp.eq.f32.partialorder %v6041, 0.0
      %v6086 = vand.u32 %v6041, 2147483648
      %v6087 = vsel %vm6085, %v6086, %v6084
      %v6088 = vrsqrt.pop %v6043
      %v6089 = vmul.f32 %v6043, %v6088
      %vm6090 = vcmp.eq.f32.partialorder %v6043, inf
      %v6091 = vsel %vm6090, %v6043, %v6089
      %vm6092 = vcmp.eq.f32.partialorder %v6043, 0.0
      %v6093 = vand.u32 %v6043, 2147483648
      %v6094 = vsel %vm6092, %v6093, %v6091
      %v6095 = vrsqrt.pop %v6045
      %v6096 = vmul.f32 %v6045, %v6095
      %vm6097 = vcmp.eq.f32.partialorder %v6045, inf
      %v6098 = vsel %vm6097, %v6045, %v6096
      %vm6099 = vcmp.eq.f32.partialorder %v6045, 0.0
      %v6100 = vand.u32 %v6045, 2147483648
      %v6101 = vsel %vm6099, %v6100, %v6098
      %v6102 = vmax.f32 %v6052, 1e-12
      %v6103 = vmax.f32 %v6059, 1e-12
      %v6104 = vmax.f32 %v6066, 1e-12
      %v6105 = vmax.f32 %v6073, 1e-12
      %v6106 = vmax.f32 %v6080, 1e-12
      %v6107 = vmax.f32 %v6087, 1e-12
      %v6108 = vmax.f32 %v6094, 1e-12
      %v6109 = vmax.f32 %v6101, 1e-12
      %v6110 = vrcp.pop %v6102
      %v6111 = vmul.f32 %v5992, %v6110
      %v6112 = vrcp.pop %v6103
      %v6113 = vmul.f32 %v5995, %v6112
      %v6114 = vrcp.pop %v6104
      %v6115 = vmul.f32 %v6000, %v6114
      %v6116 = vrcp.pop %v6105
      %v6117 = vmul.f32 %v6003, %v6116
      %v6118 = vrcp.pop %v6106
      %v6119 = vmul.f32 %v6008, %v6118
      %v6120 = vrcp.pop %v6107
      %v6121 = vmul.f32 %v6011, %v6120
      %v6122 = vrcp.pop %v6108
      %v6123 = vmul.f32 %v6016, %v6122
      %v6124 = vrcp.pop %v6109
      %v6125 = vmul.f32 %v6019, %v6124
      %v6126 = vadd.f32 %v5769, %v6111
      %v6127 = vadd.f32 %v5772, %v6113
      %v6128 = vadd.f32 %v5777, %v6115
      %v6129 = vadd.f32 %v5780, %v6117
      %v6130 = vadd.f32 %v5785, %v6119
      %v6131 = vadd.f32 %v5788, %v6121
      %v6132 = vadd.f32 %v5793, %v6123
      %v6133 = vadd.f32 %v5796, %v6125
      %6134 = vst [vmem:[%s589] sm:$0xff] %v6126
      %6135 = vst [vmem:[%s589 + $0x8] sm:$0xff] %v6127
      %6136 = vst [vmem:[%s589 + $0x10] sm:$0xff] %v6128
      %6137 = vst [vmem:[%s589 + $0x18] sm:$0xff] %v6129
      %6138 = vst [vmem:[%s589 + $0x20] sm:$0xff] %v6130
      %6139 = vst [vmem:[%s589 + $0x28] sm:$0xff] %v6131
      %6140 = vst [vmem:[%s589 + $0x30] sm:$0xff] %v6132
      %6141 = vst [vmem:[%s589 + $0x38] sm:$0xff] %v6133
      %p6142 = scmp.lt.s32.totalorder %s29, 1
      %s6143 = scalar_select %p6142, %s29, 1
      %s6144 = smul.addr %s6143, 8
      %s6145 = smul.addr %s6144, 8
      %s6146 = scalar_lea.vmem %s18, %s6145
      // Predicated region
      $region93: #{forward.3} parent=91 // pred_check
        %p6147 = pneg %p435
      $region94: #{forward.3} parent=91 // pred_check_branch
        %6149 = sbr.rel (%p6147) target = $region96
      $region95: #{forward.3} parent=91 // pred_region
        _
      $region96: #{forward.3} parent=91 // pred_fallthru
        _
    $region92: #{forward.3} parent=5 // pred_fallthru
      _
    %p6150 = scmp.le.s32.totalorder 2, %s24
    // Predicated region
    $region97: #{forward.3} parent=5 // pred_check
      %p6151 = pneg %p6150
    $region98: #{forward.3} parent=5 // pred_check_branch
      %6153 = sbr.rel (%p6151) target = $region100
    $region99: #{forward.3} parent=5 // pred_region
      %s6154 = ssub.s32 %s24, 2
      // Predicated region
      $region101: #{forward.3} parent=99 // pred_check
        %p6155 = pneg %p441
      $region102: #{forward.3} parent=99 // pred_check_branch
        %6157 = sbr.rel (%p6155) target = $region104
      $region103: #{forward.3} parent=99 // pred_region
        %p6158 = scmp.lt.s32.totalorder %s30, 1
        %s6159 = scalar_select %p6158, %s30, 1
        %s6160 = smul.addr %s6159, 8
        %s6161 = smul.addr %s6160, 8
        %s6162 = scalar_lea.vmem %s18, %s6161
      $region104: #{forward.3} parent=99 // pred_fallthru
        _
    $region100: #{forward.3} parent=5 // pred_fallthru
      _
  $region6: #{forward.3} parent=0 // loop_footer
    %s28 = sadd.s32 1, %s24
  $region7: #{forward.3} parent=0 // loop_footer_branch
    %23 = sbr.rel target = $region3
  $region8: #{forward.3} parent=0 // loop_exit
    _

</llo_original>
